<compile_context>
chip_gen: v6e
topology: v6e:2x2x1
jax: 0.10.0
libtpu: 0.0.40
codegen_flags: <defaults>
</compile_context>

<pallas_src>
import math
from functools import partial

import jax
import jax.numpy as jnp
from jax import lax
from jax.experimental import pallas as pl
from jax.experimental.pallas import tpu as pltpu

# ----------------------------- model config (small) -----------------------------
D_MODEL = 32
N_HEADS = 4
D_HEAD = D_MODEL // N_HEADS
D_FFN = 64
VOCAB = 50
VPAD = 128            # lane-dense padded vocab-head width (multiple of 128)
N_ENC = 2
N_DEC = 2
CTC_WEIGHT = 0.3
LSM = 0.1
BLANK = 0
IGNORE = -1
SOS = VOCAB - 1
EOS = VOCAB - 1
NEG_BIAS = -1e9       # additive mask bias (f32-safe)
VMEM_LIMIT = 48 * 1024 * 1024   # safe scoped-VMEM limit across v5e/v6e/v7x


def _cparams(*sem):
    return pltpu.CompilerParams(dimension_semantics=sem, vmem_limit_bytes=VMEM_LIMIT)


# ----------------------------- in-kernel helpers ---------------------------------
def _layernorm(x, g, b, eps=1e-12):
    mu = jnp.mean(x, axis=-1, keepdims=True)
    var = jnp.mean((x - mu) ** 2, axis=-1, keepdims=True)
    return (x - mu) * lax.rsqrt(var + eps) * g + b


def _mha_block(xq, xkv, bias, wqkv, bqkv, wo, bo, scale):
    """Fused multi-head attention on VMEM-resident activations.

    xq: (Tq, D) f32, xkv: (Tk, D) f32, bias: additive mask, (1, Tk) or (Tq, Tk).
    wqkv: (D, 3D) bf16 (cols = [Q | K | V], heads contiguous inside each block),
    bqkv: (1, 3D) f32, wo: (D, D) bf16, bo: (1, D) f32.
    QKV projection is one matmul when xq is xkv (self-attn); heads are concatenated
    before a single output-projection matmul. Score/PV matmuls use bf16 operands
    with f32 accumulation.
    """
    D = D_MODEL
    if xq is xkv:
        qkv = jnp.dot(xq.astype(jnp.bfloat16), wqkv,
                      preferred_element_type=jnp.float32) + bqkv
        q, k, v = qkv[:, 0:D], qkv[:, D:2 * D], qkv[:, 2 * D:3 * D]
    else:
        q = jnp.dot(xq.astype(jnp.bfloat16), wqkv[:, 0:D],
                    preferred_element_type=jnp.float32) + bqkv[:, 0:D]
        kv = jnp.dot(xkv.astype(jnp.bfloat16), wqkv[:, D:3 * D],
                     preferred_element_type=jnp.float32) + bqkv[:, D:3 * D]
        k, v = kv[:, 0:D], kv[:, D:2 * D]

    heads = []
    for h in range(N_HEADS):
        lo, hi = h * D_HEAD, (h + 1) * D_HEAD
        qh = q[:, lo:hi].astype(jnp.bfloat16)
        kh = k[:, lo:hi].astype(jnp.bfloat16)
        vh = v[:, lo:hi].astype(jnp.bfloat16)
        s = lax.dot_general(qh, kh, (((1,), (1,)), ((), ())),
                            preferred_element_type=jnp.float32) * scale + bias
        m = jnp.max(s, axis=-1, keepdims=True)
        p = jnp.exp(s - m)
        p = p * pl.reciprocal(jnp.sum(p, axis=-1, keepdims=True), approx=True)
        heads.append(jnp.dot(p.astype(jnp.bfloat16), vh,
                             preferred_element_type=jnp.float32))
    o = jnp.concatenate(heads, axis=-1).astype(jnp.bfloat16)      # (Tq, H*Dh)
    return jnp.dot(o, wo, preferred_element_type=jnp.float32) + bo


def _ffn_block(x, w1, b1, w2, b2):
    h = jnp.dot(x.astype(jnp.bfloat16), w1, preferred_element_type=jnp.float32)
    h = jnp.maximum(h + b1, 0.0)
    return jnp.dot(h.astype(jnp.bfloat16), w2, preferred_element_type=jnp.float32) + b2


# ----------------------------- Pallas kernels ------------------------------------
def _enc_stack_kernel(scale, x_ref, kbias_ref,
                      ln_ref, wqkv_ref, bqkv_ref, wo_ref, bo_ref,
                      w1_ref, b1_ref, w2_ref, b2_ref,
                      o_ref, x_sc):
    # grid = (batch, layer); activation carried across the layer axis in VMEM scratch.
    l = pl.program_id(1)

    @pl.when(l == 0)
    def _():
        x_sc[...] = x_ref[0].astype(jnp.float32)

    x = x_sc[...]                                   # (T, D) f32
    kbias = kbias_ref[0]                            # (1, T) additive key-validity bias
    ln = ln_ref[0]                                  # (4, D): g1,b1,g2,b2
    xn = _layernorm(x, ln[0:1], ln[1:2])
    x = x + _mha_block(xn, xn, kbias, wqkv_ref[0], bqkv_ref[0], wo_ref[0], bo_ref[0], scale)
    xn = _layernorm(x, ln[2:3], ln[3:4])
    x = x + _ffn_block(xn, w1_ref[0], b1_ref[0], w2_ref[0], b2_ref[0])
    x_sc[...] = x

    @pl.when(l == pl.num_programs(1) - 1)
    def _():
        o_ref[0] = x.astype(o_ref.dtype)


def _dec_stack_kernel(scale, y_ref, enc_ref, dkbias_ref, ekbias_ref,
                      ln_ref,
                      swqkv_ref, sbqkv_ref, swo_ref, sbo_ref,
                      cwqkv_ref, cbqkv_ref, cwo_ref, cbo_ref,
                      w1_ref, b1_ref, w2_ref, b2_ref,
                      o_ref, y_sc):
    l = pl.program_id(1)
    Ld = y_ref.shape[1]

    @pl.when(l == 0)
    def _():
        y_sc[...] = y_ref[0].astype(jnp.float32)

    y = y_sc[...]                                   # (Ld, D) f32
    e = enc_ref[0].astype(jnp.float32)              # (T, D)
    dkb = dkbias_ref[0]                             # (1, Ld)
    ekb = ekbias_ref[0]                             # (1, T)
    # causal mask built in-kernel (no (B,Ld,Ld) host tensor / DMA).
    row = lax.broadcasted_iota(jnp.int32, (Ld, Ld), 0)
    col = lax.broadcasted_iota(jnp.int32, (Ld, Ld), 1)
    self_bias = jnp.where(col <= row, 0.0, NEG_BIAS) + dkb

    ln = ln_ref[0]                                  # (6, D)
    yn = _layernorm(y, ln[0:1], ln[1:2])
    y = y + _mha_block(yn, yn, self_bias, swqkv_ref[0], sbqkv_ref[0], swo_ref[0],
                       sbo_ref[0], scale)
    yn = _layernorm(y, ln[2:3], ln[3:4])
    y = y + _mha_block(yn, e, ekb, cwqkv_ref[0], cbqkv_ref[0], cwo_ref[0],
                       cbo_ref[0], scale)
    yn = _layernorm(y, ln[4:5], ln[5:6])
    y = y + _ffn_block(yn, w1_ref[0], b1_ref[0], w2_ref[0], b2_ref[0])
    y_sc[...] = y

    @pl.when(l == pl.num_programs(1) - 1)
    def _():
        o_ref[0] = y.astype(o_ref.dtype)


def _linear_kernel(act, x_ref, w_ref, b_ref, o_ref):
    acc = jnp.dot(x_ref[...].astype(jnp.bfloat16), w_ref[...],
                  preferred_element_type=jnp.float32) + b_ref[...]
    if act == "relu":
        acc = jnp.maximum(acc, 0.0)
    o_ref[...] = acc.astype(o_ref.dtype)


def _ln_head_kernel(with_xn, x_ref, g_ref, b_ref, w_ref, hb_ref, *o_refs):
    # Fused: LayerNorm -> linear head (lane-dense, VPAD=128) -> log_softmax.
    # Padded vocab slots carry a -1e9 bias so they vanish from the softmax.
    # with_xn=False skips the normed-x output entirely (Pallas outputs can't be DCE'd).
    x = x_ref[...].astype(jnp.float32)
    xn = _layernorm(x, g_ref[...], b_ref[...])
    if with_xn:
        o_refs[0][...] = xn.astype(o_refs[0].dtype)
    logits = jnp.dot(xn.astype(jnp.bfloat16), w_ref[...],
                     preferred_element_type=jnp.float32) + hb_ref[...]
    m = jnp.max(logits, axis=-1, keepdims=True)
    z = logits - m
    lse = jnp.log(jnp.sum(jnp.exp(z), axis=-1, keepdims=True))
    lp_ref = o_refs[-1]
    lp_ref[...] = (z - lse).astype(lp_ref.dtype)


# ----------------------------- pallas_call wrappers -------------------------------
def pallas_linear(x, w, b, act=None):
    # TODO(synk): at real OWSM sizes, tile the M axis ("parallel" grid) and fuse the conv
    # patch extraction into the kernel (strided ref reads) instead of host-side im2col.
    M, K = x.shape
    N = w.shape[1]
    return pl.pallas_call(
        partial(_linear_kernel, act),
        out_shape=jax.ShapeDtypeStruct((M, N), jnp.float32),
        grid=(1,),
        in_specs=[pl.BlockSpec((M, K), lambda i: (0, 0)),
                  pl.BlockSpec((K, N), lambda i: (0, 0)),
                  pl.BlockSpec((1, N), lambda i: (0, 0))],
        out_specs=pl.BlockSpec((M, N), lambda i: (0, 0)),
        compiler_params=_cparams("arbitrary"),
    )(x, w, b)


def pallas_ln_head(x, g, b, w, hb, with_xn=True):
    # TODO(synk): at real vocab (~50k) tile the vocab axis with a two-pass log-sum-exp.
    M, D = x.shape
    V = w.shape[1]
    out_shape = ((jax.ShapeDtypeStruct((M, D), jnp.bfloat16),) if with_xn else ()) \
        + (jax.ShapeDtypeStruct((M, V), jnp.float32),)
    out_specs = ((pl.BlockSpec((M, D), lambda i: (0, 0)),) if with_xn else ()) \
        + (pl.BlockSpec((M, V), lambda i: (0, 0)),)
    res = pl.pallas_call(
        partial(_ln_head_kernel, with_xn),
        out_shape=out_shape,
        grid=(1,),
        in_specs=[pl.BlockSpec((M, D), lambda i: (0, 0)),
                  pl.BlockSpec((1, D), lambda i: (0, 0)),
                  pl.BlockSpec((1, D), lambda i: (0, 0)),
                  pl.BlockSpec((D, V), lambda i: (0, 0)),
                  pl.BlockSpec((1, V), lambda i: (0, 0))],
        out_specs=out_specs,
        compiler_params=_cparams("arbitrary"),
    )(x, g, b, w, hb)
    return res if with_xn else res[0]


def _wspec(w):
    nd = w.ndim
    return pl.BlockSpec((1,) + w.shape[1:],
                        lambda b, l, nd=nd: (l,) + (0,) * (nd - 1))


def pallas_encoder_stack(params, x, enc_kbias):
    # TODO(synk): at real OWSM sizes (T~1.5k, D=1024) tile the Tq axis flash-style instead
    # of holding the whole (T,D) activation / (T,T) scores resident.
    B, T, D = x.shape
    ws = [params["enc_ln"],
          params["enc_att_wqkv"], params["enc_att_bqkv"],
          params["enc_att_wo"], params["enc_att_bo"],
          params["enc_ff_w1"], params["enc_ff_b1"],
          params["enc_ff_w2"], params["enc_ff_b2"]]
    return pl.pallas_call(
        partial(_enc_stack_kernel, 1.0 / math.sqrt(D_HEAD)),
        out_shape=jax.ShapeDtypeStruct((B, T, D), jnp.bfloat16),
        grid=(B, N_ENC),
        in_specs=[pl.BlockSpec((1, T, D), lambda b, l: (b, 0, 0)),
                  pl.BlockSpec((1, 1, T), lambda b, l: (b, 0, 0))]
                 + [_wspec(w) for w in ws],
        out_specs=pl.BlockSpec((1, T, D), lambda b, l: (b, 0, 0)),
        scratch_shapes=[pltpu.VMEM((T, D), jnp.float32)],
        compiler_params=_cparams("parallel", "arbitrary"),
    )(x, enc_kbias, *ws)


def pallas_decoder_stack(params, y, enc_out, dec_kbias, enc_kbias):
    B, Ld, D = y.shape
    T = enc_out.shape[1]
    ws = [params["dec_ln"],
          params["dec_self_wqkv"], params["dec_self_bqkv"],
          params["dec_self_wo"], params["dec_self_bo"],
          params["dec_src_wqkv"], params["dec_src_bqkv"],
          params["dec_src_wo"], params["dec_src_bo"],
          params["dec_ff_w1"], params["dec_ff_b1"],
          params["dec_ff_w2"], params["dec_ff_b2"]]
    return pl.pallas_call(
        partial(_dec_stack_kernel, 1.0 / math.sqrt(D_HEAD)),
        out_shape=jax.ShapeDtypeStruct((B, Ld, D), jnp.bfloat16),
        grid=(B, N_DEC),
        in_specs=[pl.BlockSpec((1, Ld, D), lambda b, l: (b, 0, 0)),
                  pl.BlockSpec((1, T, D), lambda b, l: (b, 0, 0)),
                  pl.BlockSpec((1, 1, Ld), lambda b, l: (b, 0, 0)),
                  pl.BlockSpec((1, 1, T), lambda b, l: (b, 0, 0))]
                 + [_wspec(w) for w in ws],
        out_specs=pl.BlockSpec((1, Ld, D), lambda b, l: (b, 0, 0)),
        scratch_shapes=[pltpu.VMEM((Ld, D), jnp.float32)],
        compiler_params=_cparams("parallel", "arbitrary"),
    )(y, enc_out, dec_kbias, enc_kbias, *ws)


# ----------------------------- parameters ---------------------------------------
def init_params(seed, idim):
    # TODO(synk): real OWSM loads pretrained HF weights; here weights are deterministic synthetic.
    key = jax.random.PRNGKey(seed)
    cnt = [0]

    def nrm(shape, scale=0.02, dtype=jnp.float32):
        cnt[0] += 1
        w = scale * jax.random.normal(jax.random.fold_in(key, cnt[0]), shape, jnp.float32)
        return w.astype(dtype)

    p = {}
    C = D_MODEL
    # conv weights stored directly in im2col-matmul layout (rows = c_in*9 + kh*3 + kw).
    p["conv1_w"] = nrm((1 * 3 * 3, C), dtype=jnp.bfloat16)
    p["conv1_b"] = jnp.zeros((1, C), jnp.float32)
    p["conv2_w"] = nrm((C * 3 * 3, C), dtype=jnp.bfloat16)
    p["conv2_b"] = jnp.zeros((1, C), jnp.float32)
    f2 = ((idim - 1) // 2 - 1) // 2
    p["sub_w"] = nrm((C * f2, D_MODEL), dtype=jnp.bfloat16)
    p["sub_b"] = jnp.zeros((1, D_MODEL), jnp.float32)

    def ln_stack(L, n_pairs):
        row = jnp.stack([jnp.ones((D_MODEL,), jnp.float32),
                         jnp.zeros((D_MODEL,), jnp.float32)])        # (2, D): g, b
        return jnp.tile(row, (L, n_pairs, 1))                        # (L, 2*n_pairs, D)

    def attn_stack(pre, L):
        p[pre + "_wqkv"] = nrm((L, D_MODEL, 3 * D_MODEL), dtype=jnp.bfloat16)
        p[pre + "_bqkv"] = jnp.zeros((L, 1, 3 * D_MODEL), jnp.float32)
        p[pre + "_wo"] = nrm((L, D_MODEL, D_MODEL), dtype=jnp.bfloat16)
        p[pre + "_bo"] = jnp.zeros((L, 1, D_MODEL), jnp.float32)

    def ffn_stack(pre, L):
        p[pre + "_w1"] = nrm((L, D_MODEL, D_FFN), dtype=jnp.bfloat16)
        p[pre + "_b1"] = jnp.zeros((L, 1, D_FFN), jnp.float32)
        p[pre + "_w2"] = nrm((L, D_FFN, D_MODEL), dtype=jnp.bfloat16)
        p[pre + "_b2"] = jnp.zeros((L, 1, D_MODEL), jnp.float32)

    def padded_head(wname, bname):
        w = nrm((D_MODEL, VOCAB))
        p[wname] = jnp.pad(w, ((0, 0), (0, VPAD - VOCAB))).astype(jnp.bfloat16)
        p[bname] = jnp.concatenate(
            [jnp.zeros((1, VOCAB), jnp.float32),
             jnp.full((1, VPAD - VOCAB), NEG_BIAS, jnp.float32)], axis=1)

    p["enc_ln"] = ln_stack(N_ENC, 2)
    attn_stack("enc_att", N_ENC)
    ffn_stack("enc_ff", N_ENC)
    p["enc_final_g"] = jnp.ones((1, D_MODEL), jnp.float32)
    p["enc_final_b"] = jnp.zeros((1, D_MODEL), jnp.float32)
    padded_head("ctc_w", "ctc_b")

    p["embed"] = nrm((VOCAB, D_MODEL), scale=1.0)
    p["dec_ln"] = ln_stack(N_DEC, 3)
    attn_stack("dec_self", N_DEC)
    attn_stack("dec_src", N_DEC)
    ffn_stack("dec_ff", N_DEC)
    p["dec_final_g"] = jnp.ones((1, D_MODEL), jnp.float32)
    p["dec_final_b"] = jnp.zeros((1, D_MODEL), jnp.float32)
    padded_head("out_w", "out_b")
    return p


# ----------------------------- model pieces -------------------------------------
def im2col(x, kh, kw, stride):
    # x: (B, C, H, W) -> patches (B, OH, OW, C*kh*kw), flatten order (c, i, j)
    B, C, H, W = x.shape
    OH = (H - kh) // stride + 1
    OW = (W - kw) // stride + 1
    cols = []
    for i in range(kh):
        for j in range(kw):
            cols.append(x[:, :, i:i + stride * (OH - 1) + 1:stride,
                             j:j + stride * (OW - 1) + 1:stride])
    p = jnp.stack(cols, axis=2)                                   # (B, C, kh*kw, OH, OW)
    p = jnp.transpose(p, (0, 3, 4, 1, 2)).reshape(B, OH, OW, C * kh * kw)
    return p, OH, OW


def conv2d_subsample(params, speech):
    B, T, F = speech.shape
    C = D_MODEL
    x = speech[:, None, :, :]                                     # NCHW view (B, 1, T, F)
    p1, t1, f1 = im2col(x, 3, 3, 2)
    y = pallas_linear(p1.reshape(-1, p1.shape[-1]), params["conv1_w"], params["conv1_b"],
                      act="relu")
    x = y.reshape(B, t1, f1, C).transpose(0, 3, 1, 2)             # (B, C, t1, f1)
    p2, t2, f2 = im2col(x, 3, 3, 2)
    y = pallas_linear(p2.reshape(-1, p2.shape[-1]), params["conv2_w"], params["conv2_b"],
                      act="relu")
    # torch: x.transpose(1,2).view(b, t, c*f)  -> flatten (C, F') last
    x = y.reshape(B, t2, f2, C).transpose(0, 1, 3, 2).reshape(B, t2, C * f2)
    x = pallas_linear(x.reshape(-1, C * f2), params["sub_w"], params["sub_b"])
    return x.reshape(B, t2, D_MODEL), t2


def sinusoid_pe(T, d):
    pos = jnp.arange(T, dtype=jnp.float32)[:, None]
    i = jnp.arange(0, d, 2, dtype=jnp.float32)[None, :]
    angle = pos / jnp.power(10000.0, i / d)
    pe = jnp.zeros((T, d), jnp.float32)
    pe = pe.at[:, 0::2].set(jnp.sin(angle))
    pe = pe.at[:, 1::2].set(jnp.cos(angle))
    return pe


# ----------------------------- losses (plain-JAX glue) ---------------------------
def ctc_loss(log_probs, input_lengths, labels, label_lengths, blank=0):
    # CTC forward (alpha) recursion; log_probs: (B, T, V) log-softmax.
    B, T, V = log_probs.shape
    L = labels.shape[1]
    S = 2 * L + 1
    NEG = -1e30
    ext = jnp.full((B, S), blank, jnp.int32).at[:, 1::2].set(labels)
    prev2 = jnp.concatenate([jnp.full((B, 2), -2, jnp.int32), ext[:, :-2]], axis=1)
    allow_skip = (ext != blank) & (ext != prev2)

    lp0 = log_probs[:, 0, :]
    alpha = jnp.full((B, S), NEG, jnp.float32)
    alpha = alpha.at[:, 0].set(lp0[:, blank])
    alpha = alpha.at[:, 1].set(jnp.take_along_axis(lp0, ext[:, 1:2], axis=1)[:, 0])

    lp_seq = jnp.transpose(log_probs, (1, 0, 2))  # (T, B, V)

    def scan_fn(alpha, xs):
        t, lp_t = xs
        a0 = alpha
        a1 = jnp.concatenate([jnp.full((B, 1), NEG, jnp.float32), alpha[:, :-1]], axis=1)
        a2 = jnp.concatenate([jnp.full((B, 2), NEG, jnp.float32), alpha[:, :-2]], axis=1)
        a2 = jnp.where(allow_skip, a2, NEG)
        m = jnp.maximum(jnp.maximum(a0, a1), a2)
        new = m + jnp.log(jnp.exp(a0 - m) + jnp.exp(a1 - m) + jnp.exp(a2 - m))
        new = new + jnp.take_along_axis(lp_t, ext, axis=1)
        keep = (t < input_lengths)[:, None]
        return jnp.where(keep, new, alpha), None

    alpha, _ = lax.scan(scan_fn, alpha, (jnp.arange(1, T), lp_seq[1:]))
    i_last = 2 * label_lengths
    i_prev = jnp.maximum(2 * label_lengths - 1, 0)
    a_last = jnp.take_along_axis(alpha, i_last[:, None], axis=1)[:, 0]
    a_prev = jnp.take_along_axis(alpha, i_prev[:, None], axis=1)[:, 0]
    m = jnp.maximum(a_last, a_prev)
    ll = m + jnp.log(jnp.exp(a_last - m) + jnp.exp(a_prev - m))
    return -ll


def label_smoothing_loss(logp, tgt):
    B, Ld, V = logp.shape
    valid = tgt != IGNORE
    tgt_c = jnp.where(valid, tgt, 0)
    nll = -jnp.take_along_axis(logp, tgt_c[..., None], axis=-1)[..., 0]
    total = jnp.sum(logp, axis=-1)
    smooth = -(total + nll) / (V - 1)
    loss_tok = (1.0 - LSM) * nll + LSM * smooth
    loss_tok = jnp.where(valid, loss_tok, 0.0)
    loss = jnp.sum(loss_tok) / B                    # ESPnet normalize_length=False
    pred = jnp.argmax(logp, axis=-1)
    acc = jnp.sum(jnp.where(valid, (pred == tgt_c).astype(jnp.float32), 0.0)) \
        / jnp.maximum(jnp.sum(valid), 1)
    return loss, acc


# ----------------------------- full forward --------------------------------------
def forward(params, speech, speech_lengths, text, text_lengths,
            text_ctc, text_ctc_lengths, text_prev, text_prev_lengths):
    B = speech.shape[0]

    # ---- encoder front-end ----
    # TODO(synk): SpecAug / utterance normalization / dropout (train mode) omitted.
    x, T_enc = conv2d_subsample(params, speech)
    enc_lens = ((speech_lengths - 1) // 2 - 1) // 2
    pe = sinusoid_pe(T_enc, D_MODEL)
    x = x * math.sqrt(D_MODEL) + pe[None]

    # Key-validity additive bias only (B, 1, T); full (T,T) bias built by broadcast in-kernel.
    enc_valid = jnp.arange(T_enc)[None, :] < enc_lens[:, None]
    enc_kbias = jnp.where(enc_valid, 0.0, NEG_BIAS).astype(jnp.float32)[:, None, :]

    # ---- encoder stack (one pallas_call, grid=(B, N_ENC)) ----
    x = pallas_encoder_stack(params, x.astype(jnp.bfloat16), enc_kbias)     # bf16 (B,T,D)

    # ---- encoder final LN + CTC head + log_softmax (fused, lane-dense) ----
    enc_out2d, ctc_logp_pad = pallas_ln_head(
        x.reshape(-1, D_MODEL), params["enc_final_g"], params["enc_final_b"],
        params["ctc_w"], params["ctc_b"], with_xn=True)
    enc_out = enc_out2d.reshape(B, T_enc, D_MODEL)                           # bf16
    ctc_logp = ctc_logp_pad[:, :VOCAB].reshape(B, T_enc, VOCAB)
    loss_ctc = jnp.mean(ctc_loss(ctc_logp, enc_lens, text_ctc, text_ctc_lengths, BLANK))

    # ---- attention decoder branch ----
    # TODO(synk): exact ESPnet-S2T prompt bookkeeping (<sop>/<sos>/<na> tokens, per-sample
    # prompt packing) is simplified to [sos] + text_prev + text with prompt targets ignored.
    Lp = text_prev.shape[1]
    Lt = text.shape[1]
    Ld = 1 + Lp + Lt
    prev_in = jnp.where(jnp.arange(Lp)[None, :] < text_prev_lengths[:, None], text_prev, 0)
    text_in = jnp.where(jnp.arange(Lt)[None, :] < text_lengths[:, None], text, 0)
    dec_in = jnp.concatenate([jnp.full((B, 1), SOS, jnp.int32), prev_in, text_in], axis=1)

    tgt = jnp.full((B, Ld), IGNORE, jnp.int32)
    tgt = tgt.at[:, Lp:Lp + Lt].set(
        jnp.where(jnp.arange(Lt)[None, :] < text_lengths[:, None], text, IGNORE))
    tgt = tgt.at[jnp.arange(B), Lp + text_lengths].set(EOS)

    pos = jnp.arange(Ld)
    dec_valid = ((pos == 0)[None, :]
                 | (((pos >= 1) & (pos < 1 + Lp))[None, :]
                    & ((pos - 1)[None, :] < text_prev_lengths[:, None]))
                 | ((pos >= 1 + Lp)[None, :]
                    & ((pos - 1 - Lp)[None, :] < text_lengths[:, None])))
    dec_kbias = jnp.where(dec_valid, 0.0, NEG_BIAS).astype(jnp.float32)[:, None, :]

    pe_d = sinusoid_pe(Ld, D_MODEL)
    y = params["embed"][dec_in] * math.sqrt(D_MODEL) + pe_d[None]

    # ---- decoder stack (one pallas_call, grid=(B, N_DEC)) ----
    y = pallas_decoder_stack(params, y.astype(jnp.bfloat16), enc_out, dec_kbias, enc_kbias)

    # ---- decoder final LN + output head + log_softmax (fused; no unused xn output) ----
    logp_pad = pallas_ln_head(
        y.reshape(-1, D_MODEL), params["dec_final_g"], params["dec_final_b"],
        params["out_w"], params["out_b"], with_xn=False)
    logp = logp_pad[:, :VOCAB].reshape(B, Ld, VOCAB)
    loss_att, acc = label_smoothing_loss(logp, tgt)

    loss = CTC_WEIGHT * loss_ctc + (1.0 - CTC_WEIGHT) * loss_att
    stats = {"loss": loss, "loss_att": loss_att, "loss_ctc": loss_ctc, "acc": acc}
    weight = jnp.array(B, jnp.float32)
    return loss, stats, weight


# ----------------------------- main ----------------------------------------------
if __name__ == "__main__":
    B, T, F = 2, 32, 20       # speech: (batch, frames, feat-dim)
    Lt, Lp, Lc = 6, 4, 4      # text, text_prev, text_ctc padded lengths
    key = jax.random.PRNGKey(0)
    ks = jax.random.split(key, 8)
    speech = jax.random.normal(ks[0], (B, T, F), jnp.float32)
    speech_lengths = jnp.array([32, 30], jnp.int32)
    text = jax.random.randint(ks[1], (B, Lt), 1, VOCAB - 1, jnp.int32)
    text_lengths = jnp.array([6, 5], jnp.int32)
    text_ctc = jax.random.randint(ks[2], (B, Lc), 1, VOCAB - 1, jnp.int32)
    text_ctc_lengths = jnp.array([3, 2], jnp.int32)
    text_prev = jax.random.randint(ks[3], (B, Lp), 1, VOCAB - 1, jnp.int32)
    text_prev_lengths = jnp.array([4, 3], jnp.int32)

    params = init_params(0, F)

    fwd = jax.jit(forward)
    loss, stats, weight = fwd(params, speech, speech_lengths, text, text_lengths,
                              text_ctc, text_ctc_lengths, text_prev, text_prev_lengths)
    jax.block_until_ready((loss, stats, weight))
    print("loss=%.4f loss_att=%.4f loss_ctc=%.4f acc=%.3f batch=%d"
          % (float(loss), float(stats["loss_att"]), float(stats["loss_ctc"]),
             float(stats["acc"]), int(weight)))
    print("KERNEL_OK")
</pallas_src>

<mosaic_0001>
module attributes {stable_mosaic.version = 11 : i64} {
  func.func @_linear_kernel(%arg0: i32, %arg1: memref<270x9xf32, #tpu.memory_space<vmem>>, %arg2: memref<9x32xbf16, #tpu.memory_space<vmem>>, %arg3: memref<1x32xf32, #tpu.memory_space<vmem>>, %arg4: memref<270x32xf32, #tpu.memory_space<vmem>>) attributes {dimension_semantics = [#tpu.dimension_semantics<arbitrary>], iteration_bounds = array<i64: 1>, scalar_prefetch = 0 : i64, scratch_operands = 0 : i64, tpu.core_type = #tpu.core_type<tc>, window_params = [{pipeline_mode = #tpu.pipeline_mode<synchronous>, transform_indices = @transform_0, window_bounds = array<i64: 270, 9>}, {pipeline_mode = #tpu.pipeline_mode<synchronous>, transform_indices = @transform_1, window_bounds = array<i64: 9, 32>}, {pipeline_mode = #tpu.pipeline_mode<synchronous>, transform_indices = @transform_2, window_bounds = array<i64: 1, 32>}, {pipeline_mode = #tpu.pipeline_mode<synchronous>, transform_indices = @transform_3, window_bounds = array<i64: 270, 32>}]} {
    %c0 = arith.constant 0 : index
    %c0_0 = arith.constant 0 : index
    %0 = vector.load %arg1[%c0, %c0_0] : memref<270x9xf32, #tpu.memory_space<vmem>>, vector<270x9xf32>
    %1 = arith.truncf %0 : vector<270x9xf32> to vector<270x9xbf16>
    %c0_1 = arith.constant 0 : index
    %c0_2 = arith.constant 0 : index
    %2 = vector.load %arg2[%c0_1, %c0_2] : memref<9x32xbf16, #tpu.memory_space<vmem>>, vector<9x32xbf16>
    %cst = arith.constant dense<0.000000e+00> : vector<270x32xf32>
    %3 = tpu.matmul %1, %2, %cst {dimension_numbers = #tpu.dot_dimension_numbers<[1], [0], [0], [1], [0, 0, 1, 1], [], []>} : vector<270x9xbf16>, vector<9x32xbf16>, vector<270x32xf32> -> vector<270x32xf32>
    %c0_3 = arith.constant 0 : index
    %c0_4 = arith.constant 0 : index
    %4 = vector.load %arg3[%c0_3, %c0_4] : memref<1x32xf32, #tpu.memory_space<vmem>>, vector<1x32xf32>
    %5 = vector.broadcast %4 : vector<1x32xf32> to vector<270x32xf32>
    %6 = arith.addf %3, %5 : vector<270x32xf32>
    %cst_5 = arith.constant 0.000000e+00 : f32
    %7 = vector.broadcast %cst_5 : f32 to vector<270x32xf32>
    %8 = arith.maximumf %6, %7 : vector<270x32xf32>
    %c0_6 = arith.constant 0 : index
    %c0_7 = arith.constant 0 : index
    %9 = vector.load %arg4[%c0_6, %c0_7] : memref<270x32xf32, #tpu.memory_space<vmem>>, vector<270x32xf32>
    tpu.vector_store %arg4[%c0_6, %c0_7], %8 {strides = array<i32>} : memref<270x32xf32, #tpu.memory_space<vmem>>, vector<270x32xf32>,
    return
  }
  func.func @transform_0(%arg0: i32) -> (i32, i32) {
    %c0_i32 = arith.constant 0 : i32
    %c0_i32_0 = arith.constant 0 : i32
    %c0_i32_1 = arith.constant 0 : i32
    return %c0_i32, %c0_i32_0 : i32, i32
  }
  func.func @transform_1(%arg0: i32) -> (i32, i32) {
    %c0_i32 = arith.constant 0 : i32
    %c0_i32_0 = arith.constant 0 : i32
    %c0_i32_1 = arith.constant 0 : i32
    return %c0_i32, %c0_i32_0 : i32, i32
  }
  func.func @transform_2(%arg0: i32) -> (i32, i32) {
    %c0_i32 = arith.constant 0 : i32
    %c0_i32_0 = arith.constant 0 : i32
    %c0_i32_1 = arith.constant 0 : i32
    return %c0_i32, %c0_i32_0 : i32, i32
  }
  func.func @transform_3(%arg0: i32) -> (i32, i32) {
    %c0_i32 = arith.constant 0 : i32
    %c0_i32_0 = arith.constant 0 : i32
    %c0_i32_1 = arith.constant 0 : i32
    return %c0_i32, %c0_i32_0 : i32, i32
  }
}

module attributes {stable_mosaic.version = 11 : i64} {
  func.func @_linear_kernel(%arg0: i32, %arg1: memref<56x288xf32, #tpu.memory_space<vmem>>, %arg2: memref<288x32xbf16, #tpu.memory_space<vmem>>, %arg3: memref<1x32xf32, #tpu.memory_space<vmem>>, %arg4: memref<56x32xf32, #tpu.memory_space<vmem>>) attributes {dimension_semantics = [#tpu.dimension_semantics<arbitrary>], iteration_bounds = array<i64: 1>, scalar_prefetch = 0 : i64, scratch_operands = 0 : i64, tpu.core_type = #tpu.core_type<tc>, window_params = [{pipeline_mode = #tpu.pipeline_mode<synchronous>, transform_indices = @transform_0, window_bounds = array<i64: 56, 288>}, {pipeline_mode = #tpu.pipeline_mode<synchronous>, transform_indices = @transform_1, window_bounds = array<i64: 288, 32>}, {pipeline_mode = #tpu.pipeline_mode<synchronous>, transform_indices = @transform_2, window_bounds = array<i64: 1, 32>}, {pipeline_mode = #tpu.pipeline_mode<synchronous>, transform_indices = @transform_3, window_bounds = array<i64: 56, 32>}]} {
    %c0 = arith.constant 0 : index
    %c0_0 = arith.constant 0 : index
    %0 = vector.load %arg1[%c0, %c0_0] : memref<56x288xf32, #tpu.memory_space<vmem>>, vector<56x288xf32>
    %1 = arith.truncf %0 : vector<56x288xf32> to vector<56x288xbf16>
    %c0_1 = arith.constant 0 : index
    %c0_2 = arith.constant 0 : index
    %2 = vector.load %arg2[%c0_1, %c0_2] : memref<288x32xbf16, #tpu.memory_space<vmem>>, vector<288x32xbf16>
    %cst = arith.constant dense<0.000000e+00> : vector<56x32xf32>
    %3 = tpu.matmul %1, %2, %cst {dimension_numbers = #tpu.dot_dimension_numbers<[1], [0], [0], [1], [0, 0, 1, 1], [], []>} : vector<56x288xbf16>, vector<288x32xbf16>, vector<56x32xf32> -> vector<56x32xf32>
    %c0_3 = arith.constant 0 : index
    %c0_4 = arith.constant 0 : index
    %4 = vector.load %arg3[%c0_3, %c0_4] : memref<1x32xf32, #tpu.memory_space<vmem>>, vector<1x32xf32>
    %5 = vector.broadcast %4 : vector<1x32xf32> to vector<56x32xf32>
    %6 = arith.addf %3, %5 : vector<56x32xf32>
    %cst_5 = arith.constant 0.000000e+00 : f32
    %7 = vector.broadcast %cst_5 : f32 to vector<56x32xf32>
    %8 = arith.maximumf %6, %7 : vector<56x32xf32>
    %c0_6 = arith.constant 0 : index
    %c0_7 = arith.constant 0 : index
    %9 = vector.load %arg4[%c0_6, %c0_7] : memref<56x32xf32, #tpu.memory_space<vmem>>, vector<56x32xf32>
    tpu.vector_store %arg4[%c0_6, %c0_7], %8 {strides = array<i32>} : memref<56x32xf32, #tpu.memory_space<vmem>>, vector<56x32xf32>,
    return
  }
  func.func @transform_0(%arg0: i32) -> (i32, i32) {
    %c0_i32 = arith.constant 0 : i32
    %c0_i32_0 = arith.constant 0 : i32
    %c0_i32_1 = arith.constant 0 : i32
    return %c0_i32, %c0_i32_0 : i32, i32
  }
  func.func @transform_1(%arg0: i32) -> (i32, i32) {
    %c0_i32 = arith.constant 0 : i32
    %c0_i32_0 = arith.constant 0 : i32
    %c0_i32_1 = arith.constant 0 : i32
    return %c0_i32, %c0_i32_0 : i32, i32
  }
  func.func @transform_2(%arg0: i32) -> (i32, i32) {
    %c0_i32 = arith.constant 0 : i32
    %c0_i32_0 = arith.constant 0 : i32
    %c0_i32_1 = arith.constant 0 : i32
    return %c0_i32, %c0_i32_0 : i32, i32
  }
  func.func @transform_3(%arg0: i32) -> (i32, i32) {
    %c0_i32 = arith.constant 0 : i32
    %c0_i32_0 = arith.constant 0 : i32
    %c0_i32_1 = arith.constant 0 : i32
    return %c0_i32, %c0_i32_0 : i32, i32
  }
}

module attributes {stable_mosaic.version = 11 : i64} {
  func.func @_linear_kernel(%arg0: i32, %arg1: memref<14x128xf32, #tpu.memory_space<vmem>>, %arg2: memref<128x32xbf16, #tpu.memory_space<vmem>>, %arg3: memref<1x32xf32, #tpu.memory_space<vmem>>, %arg4: memref<14x32xf32, #tpu.memory_space<vmem>>) attributes {dimension_semantics = [#tpu.dimension_semantics<arbitrary>], iteration_bounds = array<i64: 1>, scalar_prefetch = 0 : i64, scratch_operands = 0 : i64, tpu.core_type = #tpu.core_type<tc>, window_params = [{pipeline_mode = #tpu.pipeline_mode<synchronous>, transform_indices = @transform_0, window_bounds = array<i64: 14, 128>}, {pipeline_mode = #tpu.pipeline_mode<synchronous>, transform_indices = @transform_1, window_bounds = array<i64: 128, 32>}, {pipeline_mode = #tpu.pipeline_mode<synchronous>, transform_indices = @transform_2, window_bounds = array<i64: 1, 32>}, {pipeline_mode = #tpu.pipeline_mode<synchronous>, transform_indices = @transform_3, window_bounds = array<i64: 14, 32>}]} {
    %c0 = arith.constant 0 : index
    %c0_0 = arith.constant 0 : index
    %0 = vector.load %arg1[%c0, %c0_0] : memref<14x128xf32, #tpu.memory_space<vmem>>, vector<14x128xf32>
    %1 = arith.truncf %0 : vector<14x128xf32> to vector<14x128xbf16>
    %c0_1 = arith.constant 0 : index
    %c0_2 = arith.constant 0 : index
    %2 = vector.load %arg2[%c0_1, %c0_2] : memref<128x32xbf16, #tpu.memory_space<vmem>>, vector<128x32xbf16>
    %cst = arith.constant dense<0.000000e+00> : vector<14x32xf32>
    %3 = tpu.matmul %1, %2, %cst {dimension_numbers = #tpu.dot_dimension_numbers<[1], [0], [0], [1], [0, 0, 1, 1], [], []>} : vector<14x128xbf16>, vector<128x32xbf16>, vector<14x32xf32> -> vector<14x32xf32>
    %c0_3 = arith.constant 0 : index
    %c0_4 = arith.constant 0 : index
    %4 = vector.load %arg3[%c0_3, %c0_4] : memref<1x32xf32, #tpu.memory_space<vmem>>, vector<1x32xf32>
    %5 = vector.broadcast %4 : vector<1x32xf32> to vector<14x32xf32>
    %6 = arith.addf %3, %5 : vector<14x32xf32>
    %c0_5 = arith.constant 0 : index
    %c0_6 = arith.constant 0 : index
    %7 = vector.load %arg4[%c0_5, %c0_6] : memref<14x32xf32, #tpu.memory_space<vmem>>, vector<14x32xf32>
    tpu.vector_store %arg4[%c0_5, %c0_6], %6 {strides = array<i32>} : memref<14x32xf32, #tpu.memory_space<vmem>>, vector<14x32xf32>,
    return
  }
  func.func @transform_0(%arg0: i32) -> (i32, i32) {
    %c0_i32 = arith.constant 0 : i32
    %c0_i32_0 = arith.constant 0 : i32
    %c0_i32_1 = arith.constant 0 : i32
    return %c0_i32, %c0_i32_0 : i32, i32
  }
  func.func @transform_1(%arg0: i32) -> (i32, i32) {
    %c0_i32 = arith.constant 0 : i32
    %c0_i32_0 = arith.constant 0 : i32
    %c0_i32_1 = arith.constant 0 : i32
    return %c0_i32, %c0_i32_0 : i32, i32
  }
  func.func @transform_2(%arg0: i32) -> (i32, i32) {
    %c0_i32 = arith.constant 0 : i32
    %c0_i32_0 = arith.constant 0 : i32
    %c0_i32_1 = arith.constant 0 : i32
    return %c0_i32, %c0_i32_0 : i32, i32
  }
  func.func @transform_3(%arg0: i32) -> (i32, i32) {
    %c0_i32 = arith.constant 0 : i32
    %c0_i32_0 = arith.constant 0 : i32
    %c0_i32_1 = arith.constant 0 : i32
    return %c0_i32, %c0_i32_0 : i32, i32
  }
}

module attributes {stable_mosaic.version = 11 : i64} {
  func.func @_enc_stack_kernel(%arg0: i32, %arg1: i32, %arg2: memref<1x7x32xbf16, #tpu.memory_space<vmem>>, %arg3: memref<1x1x7xf32, #tpu.memory_space<vmem>>, %arg4: memref<1x4x32xf32, #tpu.memory_space<vmem>>, %arg5: memref<1x32x96xbf16, #tpu.memory_space<vmem>>, %arg6: memref<1x1x96xf32, #tpu.memory_space<vmem>>, %arg7: memref<1x32x32xbf16, #tpu.memory_space<vmem>>, %arg8: memref<1x1x32xf32, #tpu.memory_space<vmem>>, %arg9: memref<1x32x64xbf16, #tpu.memory_space<vmem>>, %arg10: memref<1x1x64xf32, #tpu.memory_space<vmem>>, %arg11: memref<1x64x32xbf16, #tpu.memory_space<vmem>>, %arg12: memref<1x1x32xf32, #tpu.memory_space<vmem>>, %arg13: memref<1x7x32xbf16, #tpu.memory_space<vmem>>, %arg14: memref<7x32xf32, #tpu.memory_space<vmem>>) attributes {dimension_semantics = [#tpu.dimension_semantics<parallel>, #tpu.dimension_semantics<arbitrary>], iteration_bounds = array<i64: 2, 2>, scalar_prefetch = 0 : i64, scratch_operands = 1 : i64, tpu.core_type = #tpu.core_type<tc>, window_params = [{transform_indices = @transform_0, window_bounds = array<i64: 1, 7, 32>}, {transform_indices = @transform_1, window_bounds = array<i64: 1, 1, 7>}, {transform_indices = @transform_2, window_bounds = array<i64: 1, 4, 32>}, {transform_indices = @transform_3, window_bounds = array<i64: 1, 32, 96>}, {transform_indices = @transform_4, window_bounds = array<i64: 1, 1, 96>}, {transform_indices = @transform_5, window_bounds = array<i64: 1, 32, 32>}, {transform_indices = @transform_6, window_bounds = array<i64: 1, 1, 32>}, {transform_indices = @transform_7, window_bounds = array<i64: 1, 32, 64>}, {transform_indices = @transform_8, window_bounds = array<i64: 1, 1, 64>}, {transform_indices = @transform_9, window_bounds = array<i64: 1, 64, 32>}, {transform_indices = @transform_10, window_bounds = array<i64: 1, 1, 32>}, {transform_indices = @transform_11, window_bounds = array<i64: 1, 7, 32>}]} {
    %c0_i32 = arith.constant 0 : i32
    %0 = arith.cmpi eq, %arg1, %c0_i32 : i32
    %1 = arith.extui %0 : i1 to i32
    %c0_i32_0 = arith.constant 0 : i32
    %2 = arith.cmpi ne, %1, %c0_i32_0 : i32
    scf.if %2 {
      %c0_69 = arith.constant 0 : index
      %c0_70 = arith.constant 0 : index
      %c0_71 = arith.constant 0 : index
      %192 = vector.load %arg2[%c0_69, %c0_70, %c0_71] : memref<1x7x32xbf16, #tpu.memory_space<vmem>>, vector<1x7x32xbf16>
      %193 = vector.shape_cast %192 : vector<1x7x32xbf16> to vector<7x32xbf16>
      %194 = arith.extf %193 : vector<7x32xbf16> to vector<7x32xf32>
      %c0_72 = arith.constant 0 : index
      %c0_73 = arith.constant 0 : index
      %195 = vector.load %arg14[%c0_72, %c0_73] : memref<7x32xf32, #tpu.memory_space<vmem>>, vector<7x32xf32>
      tpu.vector_store %arg14[%c0_72, %c0_73], %194 {strides = array<i32>} : memref<7x32xf32, #tpu.memory_space<vmem>>, vector<7x32xf32>,
    } else {
    }
    %c0 = arith.constant 0 : index
    %c0_1 = arith.constant 0 : index
    %3 = vector.load %arg14[%c0, %c0_1] : memref<7x32xf32, #tpu.memory_space<vmem>>, vector<7x32xf32>
    %c0_2 = arith.constant 0 : index
    %c0_3 = arith.constant 0 : index
    %c0_4 = arith.constant 0 : index
    %4 = vector.load %arg3[%c0_2, %c0_3, %c0_4] : memref<1x1x7xf32, #tpu.memory_space<vmem>>, vector<1x1x7xf32>
    %5 = vector.shape_cast %4 : vector<1x1x7xf32> to vector<1x7xf32>
    %c0_5 = arith.constant 0 : index
    %c0_6 = arith.constant 0 : index
    %c0_7 = arith.constant 0 : index
    %6 = vector.load %arg4[%c0_5, %c0_6, %c0_7] : memref<1x4x32xf32, #tpu.memory_space<vmem>>, vector<1x4x32xf32>
    %7 = vector.shape_cast %6 : vector<1x4x32xf32> to vector<4x32xf32>
    %8 = vector.extract_strided_slice %7 {offsets = [0, 0], sizes = [1, 32], strides = [1, 1]} : vector<4x32xf32> to vector<1x32xf32>
    %9 = vector.extract_strided_slice %7 {offsets = [1, 0], sizes = [1, 32], strides = [1, 1]} : vector<4x32xf32> to vector<1x32xf32>
    %cst = arith.constant dense<0.000000e+00> : vector<7xf32>
    %10 = vector.multi_reduction <add>, %3, %cst [1] : vector<7x32xf32> to vector<7xf32>
    %11 = vector.shape_cast %10 : vector<7xf32> to vector<7x1xf32>
    %cst_8 = arith.constant 3.200000e+01 : f32
    %12 = vector.broadcast %cst_8 : f32 to vector<7x1xf32>
    %13 = arith.divf %11, %12 : vector<7x1xf32>
    %14 = vector.broadcast %13 : vector<7x1xf32> to vector<7x32xf32>
    %15 = arith.subf %3, %14 : vector<7x32xf32>
    %16 = arith.mulf %15, %15 : vector<7x32xf32>
    %cst_9 = arith.constant dense<0.000000e+00> : vector<7xf32>
    %17 = vector.multi_reduction <add>, %16, %cst_9 [1] : vector<7x32xf32> to vector<7xf32>
    %18 = vector.shape_cast %17 : vector<7xf32> to vector<7x1xf32>
    %cst_10 = arith.constant 3.200000e+01 : f32
    %19 = vector.broadcast %cst_10 : f32 to vector<7x1xf32>
    %20 = arith.divf %18, %19 : vector<7x1xf32>
    %21 = vector.broadcast %13 : vector<7x1xf32> to vector<7x32xf32>
    %22 = arith.subf %3, %21 : vector<7x32xf32>
    %cst_11 = arith.constant 9.99999996E-13 : f32
    %23 = vector.broadcast %cst_11 : f32 to vector<7x1xf32>
    %24 = arith.addf %20, %23 : vector<7x1xf32>
    %25 = math.rsqrt %24 : vector<7x1xf32>
    %26 = vector.broadcast %25 : vector<7x1xf32> to vector<7x32xf32>
    %27 = arith.mulf %22, %26 : vector<7x32xf32>
    %28 = vector.broadcast %8 : vector<1x32xf32> to vector<7x32xf32>
    %29 = arith.mulf %27, %28 : vector<7x32xf32>
    %30 = vector.broadcast %9 : vector<1x32xf32> to vector<7x32xf32>
    %31 = arith.addf %29, %30 : vector<7x32xf32>
    %c0_12 = arith.constant 0 : index
    %c0_13 = arith.constant 0 : index
    %c0_14 = arith.constant 0 : index
    %32 = vector.load %arg5[%c0_12, %c0_13, %c0_14] : memref<1x32x96xbf16, #tpu.memory_space<vmem>>, vector<1x32x96xbf16>
    %33 = vector.shape_cast %32 : vector<1x32x96xbf16> to vector<32x96xbf16>
    %c0_15 = arith.constant 0 : index
    %c0_16 = arith.constant 0 : index
    %c0_17 = arith.constant 0 : index
    %34 = vector.load %arg6[%c0_15, %c0_16, %c0_17] : memref<1x1x96xf32, #tpu.memory_space<vmem>>, vector<1x1x96xf32>
    %35 = vector.shape_cast %34 : vector<1x1x96xf32> to vector<1x96xf32>
    %c0_18 = arith.constant 0 : index
    %c0_19 = arith.constant 0 : index
    %c0_20 = arith.constant 0 : index
    %36 = vector.load %arg7[%c0_18, %c0_19, %c0_20] : memref<1x32x32xbf16, #tpu.memory_space<vmem>>, vector<1x32x32xbf16>
    %37 = vector.shape_cast %36 : vector<1x32x32xbf16> to vector<32x32xbf16>
    %c0_21 = arith.constant 0 : index
    %c0_22 = arith.constant 0 : index
    %c0_23 = arith.constant 0 : index
    %38 = vector.load %arg8[%c0_21, %c0_22, %c0_23] : memref<1x1x32xf32, #tpu.memory_space<vmem>>, vector<1x1x32xf32>
    %39 = vector.shape_cast %38 : vector<1x1x32xf32> to vector<1x32xf32>
    %40 = arith.truncf %31 : vector<7x32xf32> to vector<7x32xbf16>
    %cst_24 = arith.constant dense<0.000000e+00> : vector<7x96xf32>
    %41 = tpu.matmul %40, %33, %cst_24 {dimension_numbers = #tpu.dot_dimension_numbers<[1], [0], [0], [1], [0, 0, 1, 1], [], []>} : vector<7x32xbf16>, vector<32x96xbf16>, vector<7x96xf32> -> vector<7x96xf32>
    %42 = vector.broadcast %35 : vector<1x96xf32> to vector<7x96xf32>
    %43 = arith.addf %41, %42 : vector<7x96xf32>
    %44 = vector.extract_strided_slice %43 {offsets = [0, 0], sizes = [7, 32], strides = [1, 1]} : vector<7x96xf32> to vector<7x32xf32>
    %45 = vector.extract_strided_slice %43 {offsets = [0, 32], sizes = [7, 32], strides = [1, 1]} : vector<7x96xf32> to vector<7x32xf32>
    %46 = vector.extract_strided_slice %43 {offsets = [0, 64], sizes = [7, 32], strides = [1, 1]} : vector<7x96xf32> to vector<7x32xf32>
    %47 = vector.extract_strided_slice %44 {offsets = [0, 0], sizes = [7, 8], strides = [1, 1]} : vector<7x32xf32> to vector<7x8xf32>
    %48 = arith.truncf %47 : vector<7x8xf32> to vector<7x8xbf16>
    %49 = vector.extract_strided_slice %45 {offsets = [0, 0], sizes = [7, 8], strides = [1, 1]} : vector<7x32xf32> to vector<7x8xf32>
    %50 = arith.truncf %49 : vector<7x8xf32> to vector<7x8xbf16>
    %51 = vector.extract_strided_slice %46 {offsets = [0, 0], sizes = [7, 8], strides = [1, 1]} : vector<7x32xf32> to vector<7x8xf32>
    %52 = arith.truncf %51 : vector<7x8xf32> to vector<7x8xbf16>
    %cst_25 = arith.constant dense<0.000000e+00> : vector<7x7xf32>
    %53 = tpu.matmul %48, %50, %cst_25 {dimension_numbers = #tpu.dot_dimension_numbers<[1], [1], [0], [0], [0, 0, 1, 0], [], []>} : vector<7x8xbf16>, vector<7x8xbf16>, vector<7x7xf32> -> vector<7x7xf32>
    %cst_26 = arith.constant 0.353553385 : f32
    %54 = vector.broadcast %cst_26 : f32 to vector<7x7xf32>
    %55 = arith.mulf %53, %54 : vector<7x7xf32>
    %56 = vector.broadcast %5 : vector<1x7xf32> to vector<7x7xf32>
    %57 = arith.addf %55, %56 : vector<7x7xf32>
    %cst_27 = arith.constant dense<0xFF800000> : vector<7xf32>
    %58 = vector.multi_reduction <maximumf>, %57, %cst_27 [1] : vector<7x7xf32> to vector<7xf32>
    %59 = vector.shape_cast %58 : vector<7xf32> to vector<7x1xf32>
    %60 = vector.broadcast %59 : vector<7x1xf32> to vector<7x7xf32>
    %61 = arith.subf %57, %60 : vector<7x7xf32>
    %62 = math.exp %61 : vector<7x7xf32>
    %cst_28 = arith.constant dense<0.000000e+00> : vector<7xf32>
    %63 = vector.multi_reduction <add>, %62, %cst_28 [1] : vector<7x7xf32> to vector<7xf32>
    %64 = vector.shape_cast %63 : vector<7xf32> to vector<7x1xf32>
    %65 = tpu.reciprocal %64 {approx = true} : vector<7x1xf32> -> vector<7x1xf32>
    %66 = vector.broadcast %65 : vector<7x1xf32> to vector<7x7xf32>
    %67 = arith.mulf %62, %66 : vector<7x7xf32>
    %68 = arith.truncf %67 : vector<7x7xf32> to vector<7x7xbf16>
    %cst_29 = arith.constant dense<0.000000e+00> : vector<7x8xf32>
    %69 = tpu.matmul %68, %52, %cst_29 {dimension_numbers = #tpu.dot_dimension_numbers<[1], [0], [0], [1], [0, 0, 1, 1], [], []>} : vector<7x7xbf16>, vector<7x8xbf16>, vector<7x8xf32> -> vector<7x8xf32>
    %70 = vector.extract_strided_slice %44 {offsets = [0, 8], sizes = [7, 8], strides = [1, 1]} : vector<7x32xf32> to vector<7x8xf32>
    %71 = arith.truncf %70 : vector<7x8xf32> to vector<7x8xbf16>
    %72 = vector.extract_strided_slice %45 {offsets = [0, 8], sizes = [7, 8], strides = [1, 1]} : vector<7x32xf32> to vector<7x8xf32>
    %73 = arith.truncf %72 : vector<7x8xf32> to vector<7x8xbf16>
    %74 = vector.extract_strided_slice %46 {offsets = [0, 8], sizes = [7, 8], strides = [1, 1]} : vector<7x32xf32> to vector<7x8xf32>
    %75 = arith.truncf %74 : vector<7x8xf32> to vector<7x8xbf16>
    %cst_30 = arith.constant dense<0.000000e+00> : vector<7x7xf32>
    %76 = tpu.matmul %71, %73, %cst_30 {dimension_numbers = #tpu.dot_dimension_numbers<[1], [1], [0], [0], [0, 0, 1, 0], [], []>} : vector<7x8xbf16>, vector<7x8xbf16>, vector<7x7xf32> -> vector<7x7xf32>
    %cst_31 = arith.constant 0.353553385 : f32
    %77 = vector.broadcast %cst_31 : f32 to vector<7x7xf32>
    %78 = arith.mulf %76, %77 : vector<7x7xf32>
    %79 = vector.broadcast %5 : vector<1x7xf32> to vector<7x7xf32>
    %80 = arith.addf %78, %79 : vector<7x7xf32>
    %cst_32 = arith.constant dense<0xFF800000> : vector<7xf32>
    %81 = vector.multi_reduction <maximumf>, %80, %cst_32 [1] : vector<7x7xf32> to vector<7xf32>
    %82 = vector.shape_cast %81 : vector<7xf32> to vector<7x1xf32>
    %83 = vector.broadcast %82 : vector<7x1xf32> to vector<7x7xf32>
    %84 = arith.subf %80, %83 : vector<7x7xf32>
    %85 = math.exp %84 : vector<7x7xf32>
    %cst_33 = arith.constant dense<0.000000e+00> : vector<7xf32>
    %86 = vector.multi_reduction <add>, %85, %cst_33 [1] : vector<7x7xf32> to vector<7xf32>
    %87 = vector.shape_cast %86 : vector<7xf32> to vector<7x1xf32>
    %88 = tpu.reciprocal %87 {approx = true} : vector<7x1xf32> -> vector<7x1xf32>
    %89 = vector.broadcast %88 : vector<7x1xf32> to vector<7x7xf32>
    %90 = arith.mulf %85, %89 : vector<7x7xf32>
    %91 = arith.truncf %90 : vector<7x7xf32> to vector<7x7xbf16>
    %cst_34 = arith.constant dense<0.000000e+00> : vector<7x8xf32>
    %92 = tpu.matmul %91, %75, %cst_34 {dimension_numbers = #tpu.dot_dimension_numbers<[1], [0], [0], [1], [0, 0, 1, 1], [], []>} : vector<7x7xbf16>, vector<7x8xbf16>, vector<7x8xf32> -> vector<7x8xf32>
    %93 = vector.extract_strided_slice %44 {offsets = [0, 16], sizes = [7, 8], strides = [1, 1]} : vector<7x32xf32> to vector<7x8xf32>
    %94 = arith.truncf %93 : vector<7x8xf32> to vector<7x8xbf16>
    %95 = vector.extract_strided_slice %45 {offsets = [0, 16], sizes = [7, 8], strides = [1, 1]} : vector<7x32xf32> to vector<7x8xf32>
    %96 = arith.truncf %95 : vector<7x8xf32> to vector<7x8xbf16>
    %97 = vector.extract_strided_slice %46 {offsets = [0, 16], sizes = [7, 8], strides = [1, 1]} : vector<7x32xf32> to vector<7x8xf32>
    %98 = arith.truncf %97 : vector<7x8xf32> to vector<7x8xbf16>
    %cst_35 = arith.constant dense<0.000000e+00> : vector<7x7xf32>
    %99 = tpu.matmul %94, %96, %cst_35 {dimension_numbers = #tpu.dot_dimension_numbers<[1], [1], [0], [0], [0, 0, 1, 0], [], []>} : vector<7x8xbf16>, vector<7x8xbf16>, vector<7x7xf32> -> vector<7x7xf32>
    %cst_36 = arith.constant 0.353553385 : f32
    %100 = vector.broadcast %cst_36 : f32 to vector<7x7xf32>
    %101 = arith.mulf %99, %100 : vector<7x7xf32>
    %102 = vector.broadcast %5 : vector<1x7xf32> to vector<7x7xf32>
    %103 = arith.addf %101, %102 : vector<7x7xf32>
    %cst_37 = arith.constant dense<0xFF800000> : vector<7xf32>
    %104 = vector.multi_reduction <maximumf>, %103, %cst_37 [1] : vector<7x7xf32> to vector<7xf32>
    %105 = vector.shape_cast %104 : vector<7xf32> to vector<7x1xf32>
    %106 = vector.broadcast %105 : vector<7x1xf32> to vector<7x7xf32>
    %107 = arith.subf %103, %106 : vector<7x7xf32>
    %108 = math.exp %107 : vector<7x7xf32>
    %cst_38 = arith.constant dense<0.000000e+00> : vector<7xf32>
    %109 = vector.multi_reduction <add>, %108, %cst_38 [1] : vector<7x7xf32> to vector<7xf32>
    %110 = vector.shape_cast %109 : vector<7xf32> to vector<7x1xf32>
    %111 = tpu.reciprocal %110 {approx = true} : vector<7x1xf32> -> vector<7x1xf32>
    %112 = vector.broadcast %111 : vector<7x1xf32> to vector<7x7xf32>
    %113 = arith.mulf %108, %112 : vector<7x7xf32>
    %114 = arith.truncf %113 : vector<7x7xf32> to vector<7x7xbf16>
    %cst_39 = arith.constant dense<0.000000e+00> : vector<7x8xf32>
    %115 = tpu.matmul %114, %98, %cst_39 {dimension_numbers = #tpu.dot_dimension_numbers<[1], [0], [0], [1], [0, 0, 1, 1], [], []>} : vector<7x7xbf16>, vector<7x8xbf16>, vector<7x8xf32> -> vector<7x8xf32>
    %116 = vector.extract_strided_slice %44 {offsets = [0, 24], sizes = [7, 8], strides = [1, 1]} : vector<7x32xf32> to vector<7x8xf32>
    %117 = arith.truncf %116 : vector<7x8xf32> to vector<7x8xbf16>
    %118 = vector.extract_strided_slice %45 {offsets = [0, 24], sizes = [7, 8], strides = [1, 1]} : vector<7x32xf32> to vector<7x8xf32>
    %119 = arith.truncf %118 : vector<7x8xf32> to vector<7x8xbf16>
    %120 = vector.extract_strided_slice %46 {offsets = [0, 24], sizes = [7, 8], strides = [1, 1]} : vector<7x32xf32> to vector<7x8xf32>
    %121 = arith.truncf %120 : vector<7x8xf32> to vector<7x8xbf16>
    %cst_40 = arith.constant dense<0.000000e+00> : vector<7x7xf32>
    %122 = tpu.matmul %117, %119, %cst_40 {dimension_numbers = #tpu.dot_dimension_numbers<[1], [1], [0], [0], [0, 0, 1, 0], [], []>} : vector<7x8xbf16>, vector<7x8xbf16>, vector<7x7xf32> -> vector<7x7xf32>
    %cst_41 = arith.constant 0.353553385 : f32
    %123 = vector.broadcast %cst_41 : f32 to vector<7x7xf32>
    %124 = arith.mulf %122, %123 : vector<7x7xf32>
    %125 = vector.broadcast %5 : vector<1x7xf32> to vector<7x7xf32>
    %126 = arith.addf %124, %125 : vector<7x7xf32>
    %cst_42 = arith.constant dense<0xFF800000> : vector<7xf32>
    %127 = vector.multi_reduction <maximumf>, %126, %cst_42 [1] : vector<7x7xf32> to vector<7xf32>
    %128 = vector.shape_cast %127 : vector<7xf32> to vector<7x1xf32>
    %129 = vector.broadcast %128 : vector<7x1xf32> to vector<7x7xf32>
    %130 = arith.subf %126, %129 : vector<7x7xf32>
    %131 = math.exp %130 : vector<7x7xf32>
    %cst_43 = arith.constant dense<0.000000e+00> : vector<7xf32>
    %132 = vector.multi_reduction <add>, %131, %cst_43 [1] : vector<7x7xf32> to vector<7xf32>
    %133 = vector.shape_cast %132 : vector<7xf32> to vector<7x1xf32>
    %134 = tpu.reciprocal %133 {approx = true} : vector<7x1xf32> -> vector<7x1xf32>
    %135 = vector.broadcast %134 : vector<7x1xf32> to vector<7x7xf32>
    %136 = arith.mulf %131, %135 : vector<7x7xf32>
    %137 = arith.truncf %136 : vector<7x7xf32> to vector<7x7xbf16>
    %cst_44 = arith.constant dense<0.000000e+00> : vector<7x8xf32>
    %138 = tpu.matmul %137, %121, %cst_44 {dimension_numbers = #tpu.dot_dimension_numbers<[1], [0], [0], [1], [0, 0, 1, 1], [], []>} : vector<7x7xbf16>, vector<7x8xbf16>, vector<7x8xf32> -> vector<7x8xf32>
    %139 = tpu.concatenate %69, %92, %115, %138 in 1 : vector<7x8xf32>, vector<7x8xf32>, vector<7x8xf32>, vector<7x8xf32> -> vector<7x32xf32>
    %140 = arith.truncf %139 : vector<7x32xf32> to vector<7x32xbf16>
    %cst_45 = arith.constant dense<0.000000e+00> : vector<7x32xf32>
    %141 = tpu.matmul %140, %37, %cst_45 {dimension_numbers = #tpu.dot_dimension_numbers<[1], [0], [0], [1], [0, 0, 1, 1], [], []>} : vector<7x32xbf16>, vector<32x32xbf16>, vector<7x32xf32> -> vector<7x32xf32>
    %142 = vector.broadcast %39 : vector<1x32xf32> to vector<7x32xf32>
    %143 = arith.addf %141, %142 : vector<7x32xf32>
    %144 = arith.addf %3, %143 : vector<7x32xf32>
    %145 = vector.extract_strided_slice %7 {offsets = [2, 0], sizes = [1, 32], strides = [1, 1]} : vector<4x32xf32> to vector<1x32xf32>
    %146 = vector.extract_strided_slice %7 {offsets = [3, 0], sizes = [1, 32], strides = [1, 1]} : vector<4x32xf32> to vector<1x32xf32>
    %cst_46 = arith.constant dense<0.000000e+00> : vector<7xf32>
    %147 = vector.multi_reduction <add>, %144, %cst_46 [1] : vector<7x32xf32> to vector<7xf32>
    %148 = vector.shape_cast %147 : vector<7xf32> to vector<7x1xf32>
    %cst_47 = arith.constant 3.200000e+01 : f32
    %149 = vector.broadcast %cst_47 : f32 to vector<7x1xf32>
    %150 = arith.divf %148, %149 : vector<7x1xf32>
    %151 = vector.broadcast %150 : vector<7x1xf32> to vector<7x32xf32>
    %152 = arith.subf %144, %151 : vector<7x32xf32>
    %153 = arith.mulf %152, %152 : vector<7x32xf32>
    %cst_48 = arith.constant dense<0.000000e+00> : vector<7xf32>
    %154 = vector.multi_reduction <add>, %153, %cst_48 [1] : vector<7x32xf32> to vector<7xf32>
    %155 = vector.shape_cast %154 : vector<7xf32> to vector<7x1xf32>
    %cst_49 = arith.constant 3.200000e+01 : f32
    %156 = vector.broadcast %cst_49 : f32 to vector<7x1xf32>
    %157 = arith.divf %155, %156 : vector<7x1xf32>
    %158 = vector.broadcast %150 : vector<7x1xf32> to vector<7x32xf32>
    %159 = arith.subf %144, %158 : vector<7x32xf32>
    %cst_50 = arith.constant 9.99999996E-13 : f32
    %160 = vector.broadcast %cst_50 : f32 to vector<7x1xf32>
    %161 = arith.addf %157, %160 : vector<7x1xf32>
    %162 = math.rsqrt %161 : vector<7x1xf32>
    %163 = vector.broadcast %162 : vector<7x1xf32> to vector<7x32xf32>
    %164 = arith.mulf %159, %163 : vector<7x32xf32>
    %165 = vector.broadcast %145 : vector<1x32xf32> to vector<7x32xf32>
    %166 = arith.mulf %164, %165 : vector<7x32xf32>
    %167 = vector.broadcast %146 : vector<1x32xf32> to vector<7x32xf32>
    %168 = arith.addf %166, %167 : vector<7x32xf32>
    %c0_51 = arith.constant 0 : index
    %c0_52 = arith.constant 0 : index
    %c0_53 = arith.constant 0 : index
    %169 = vector.load %arg9[%c0_51, %c0_52, %c0_53] : memref<1x32x64xbf16, #tpu.memory_space<vmem>>, vector<1x32x64xbf16>
    %170 = vector.shape_cast %169 : vector<1x32x64xbf16> to vector<32x64xbf16>
    %c0_54 = arith.constant 0 : index
    %c0_55 = arith.constant 0 : index
    %c0_56 = arith.constant 0 : index
    %171 = vector.load %arg10[%c0_54, %c0_55, %c0_56] : memref<1x1x64xf32, #tpu.memory_space<vmem>>, vector<1x1x64xf32>
    %172 = vector.shape_cast %171 : vector<1x1x64xf32> to vector<1x64xf32>
    %c0_57 = arith.constant 0 : index
    %c0_58 = arith.constant 0 : index
    %c0_59 = arith.constant 0 : index
    %173 = vector.load %arg11[%c0_57, %c0_58, %c0_59] : memref<1x64x32xbf16, #tpu.memory_space<vmem>>, vector<1x64x32xbf16>
    %174 = vector.shape_cast %173 : vector<1x64x32xbf16> to vector<64x32xbf16>
    %c0_60 = arith.constant 0 : index
    %c0_61 = arith.constant 0 : index
    %c0_62 = arith.constant 0 : index
    %175 = vector.load %arg12[%c0_60, %c0_61, %c0_62] : memref<1x1x32xf32, #tpu.memory_space<vmem>>, vector<1x1x32xf32>
    %176 = vector.shape_cast %175 : vector<1x1x32xf32> to vector<1x32xf32>
    %177 = arith.truncf %168 : vector<7x32xf32> to vector<7x32xbf16>
    %cst_63 = arith.constant dense<0.000000e+00> : vector<7x64xf32>
    %178 = tpu.matmul %177, %170, %cst_63 {dimension_numbers = #tpu.dot_dimension_numbers<[1], [0], [0], [1], [0, 0, 1, 1], [], []>} : vector<7x32xbf16>, vector<32x64xbf16>, vector<7x64xf32> -> vector<7x64xf32>
    %179 = vector.broadcast %172 : vector<1x64xf32> to vector<7x64xf32>
    %180 = arith.addf %178, %179 : vector<7x64xf32>
    %cst_64 = arith.constant 0.000000e+00 : f32
    %181 = vector.broadcast %cst_64 : f32 to vector<7x64xf32>
    %182 = arith.maximumf %180, %181 : vector<7x64xf32>
    %183 = arith.truncf %182 : vector<7x64xf32> to vector<7x64xbf16>
    %cst_65 = arith.constant dense<0.000000e+00> : vector<7x32xf32>
    %184 = tpu.matmul %183, %174, %cst_65 {dimension_numbers = #tpu.dot_dimension_numbers<[1], [0], [0], [1], [0, 0, 1, 1], [], []>} : vector<7x64xbf16>, vector<64x32xbf16>, vector<7x32xf32> -> vector<7x32xf32>
    %185 = vector.broadcast %176 : vector<1x32xf32> to vector<7x32xf32>
    %186 = arith.addf %184, %185 : vector<7x32xf32>
    %187 = arith.addf %144, %186 : vector<7x32xf32>
    %c0_66 = arith.constant 0 : index
    %c0_67 = arith.constant 0 : index
    %188 = vector.load %arg14[%c0_66, %c0_67] : memref<7x32xf32, #tpu.memory_space<vmem>>, vector<7x32xf32>
    tpu.vector_store %arg14[%c0_66, %c0_67], %187 {strides = array<i32>} : memref<7x32xf32, #tpu.memory_space<vmem>>, vector<7x32xf32>,
    %c1_i32 = arith.constant 1 : i32
    %189 = arith.cmpi eq, %arg1, %c1_i32 : i32
    %190 = arith.extui %189 : i1 to i32
    %c0_i32_68 = arith.constant 0 : i32
    %191 = arith.cmpi ne, %190, %c0_i32_68 : i32
    scf.if %191 {
      %192 = arith.truncf %187 : vector<7x32xf32> to vector<7x32xbf16>
      %c0_69 = arith.constant 0 : index
      %c0_70 = arith.constant 0 : index
      %c0_71 = arith.constant 0 : index
      %193 = vector.load %arg13[%c0_69, %c0_70, %c0_71] : memref<1x7x32xbf16, #tpu.memory_space<vmem>>, vector<1x7x32xbf16>
      %194 = vector.shape_cast %193 : vector<1x7x32xbf16> to vector<7x32xbf16>
      %195 = vector.shape_cast %192 : vector<7x32xbf16> to vector<1x7x32xbf16>
      tpu.vector_store %arg13[%c0_69, %c0_70, %c0_71], %195 {strides = array<i32>} : memref<1x7x32xbf16, #tpu.memory_space<vmem>>, vector<1x7x32xbf16>,
    } else {
    }
    return
  }
  func.func @transform_0(%arg0: i32, %arg1: i32) -> (i32, i32, i32) {
    %c0_i32 = arith.constant 0 : i32
    %c0_i32_0 = arith.constant 0 : i32
    %c0_i32_1 = arith.constant 0 : i32
    return %arg0, %c0_i32, %c0_i32_0 : i32, i32, i32
  }
  func.func @transform_1(%arg0: i32, %arg1: i32) -> (i32, i32, i32) {
    %c0_i32 = arith.constant 0 : i32
    %c0_i32_0 = arith.constant 0 : i32
    %c0_i32_1 = arith.constant 0 : i32
    return %arg0, %c0_i32, %c0_i32_0 : i32, i32, i32
  }
  func.func @transform_2(%arg0: i32, %arg1: i32) -> (i32, i32, i32) {
    %c0_i32 = arith.constant 0 : i32
    %c0_i32_0 = arith.constant 0 : i32
    %c0_i32_1 = arith.constant 0 : i32
    return %arg1, %c0_i32, %c0_i32_0 : i32, i32, i32
  }
  func.func @transform_3(%arg0: i32, %arg1: i32) -> (i32, i32, i32) {
    %c0_i32 = arith.constant 0 : i32
    %c0_i32_0 = arith.constant 0 : i32
    %c0_i32_1 = arith.constant 0 : i32
    return %arg1, %c0_i32, %c0_i32_0 : i32, i32, i32
  }
  func.func @transform_4(%arg0: i32, %arg1: i32) -> (i32, i32, i32) {
    %c0_i32 = arith.constant 0 : i32
    %c0_i32_0 = arith.constant 0 : i32
    %c0_i32_1 = arith.constant 0 : i32
    return %arg1, %c0_i32, %c0_i32_0 : i32, i32, i32
  }
  func.func @transform_5(%arg0: i32, %arg1: i32) -> (i32, i32, i32) {
    %c0_i32 = arith.constant 0 : i32
    %c0_i32_0 = arith.constant 0 : i32
    %c0_i32_1 = arith.constant 0 : i32
    return %arg1, %c0_i32, %c0_i32_0 : i32, i32, i32
  }
  func.func @transform_6(%arg0: i32, %arg1: i32) -> (i32, i32, i32) {
    %c0_i32 = arith.constant 0 : i32
    %c0_i32_0 = arith.constant 0 : i32
    %c0_i32_1 = arith.constant 0 : i32
    return %arg1, %c0_i32, %c0_i32_0 : i32, i32, i32
  }
  func.func @transform_7(%arg0: i32, %arg1: i32) -> (i32, i32, i32) {
    %c0_i32 = arith.constant 0 : i32
    %c0_i32_0 = arith.constant 0 : i32
    %c0_i32_1 = arith.constant 0 : i32
    return %arg1, %c0_i32, %c0_i32_0 : i32, i32, i32
  }
  func.func @transform_8(%arg0: i32, %arg1: i32) -> (i32, i32, i32) {
    %c0_i32 = arith.constant 0 : i32
    %c0_i32_0 = arith.constant 0 : i32
    %c0_i32_1 = arith.constant 0 : i32
    return %arg1, %c0_i32, %c0_i32_0 : i32, i32, i32
  }
  func.func @transform_9(%arg0: i32, %arg1: i32) -> (i32, i32, i32) {
    %c0_i32 = arith.constant 0 : i32
    %c0_i32_0 = arith.constant 0 : i32
    %c0_i32_1 = arith.constant 0 : i32
    return %arg1, %c0_i32, %c0_i32_0 : i32, i32, i32
  }
  func.func @transform_10(%arg0: i32, %arg1: i32) -> (i32, i32, i32) {
    %c0_i32 = arith.constant 0 : i32
    %c0_i32_0 = arith.constant 0 : i32
    %c0_i32_1 = arith.constant 0 : i32
    return %arg1, %c0_i32, %c0_i32_0 : i32, i32, i32
  }
  func.func @transform_11(%arg0: i32, %arg1: i32) -> (i32, i32, i32) {
    %c0_i32 = arith.constant 0 : i32
    %c0_i32_0 = arith.constant 0 : i32
    %c0_i32_1 = arith.constant 0 : i32
    return %arg0, %c0_i32, %c0_i32_0 : i32, i32, i32
  }
}

module attributes {stable_mosaic.version = 11 : i64} {
  func.func @_ln_head_kernel(%arg0: i32, %arg1: memref<14x32xbf16, #tpu.memory_space<vmem>>, %arg2: memref<1x32xf32, #tpu.memory_space<vmem>>, %arg3: memref<1x32xf32, #tpu.memory_space<vmem>>, %arg4: memref<32x128xbf16, #tpu.memory_space<vmem>>, %arg5: memref<1x128xf32, #tpu.memory_space<vmem>>, %arg6: memref<14x32xbf16, #tpu.memory_space<vmem>>, %arg7: memref<14x128xf32, #tpu.memory_space<vmem>>) attributes {dimension_semantics = [#tpu.dimension_semantics<arbitrary>], iteration_bounds = array<i64: 1>, scalar_prefetch = 0 : i64, scratch_operands = 0 : i64, tpu.core_type = #tpu.core_type<tc>, window_params = [{pipeline_mode = #tpu.pipeline_mode<synchronous>, transform_indices = @transform_0, window_bounds = array<i64: 14, 32>}, {pipeline_mode = #tpu.pipeline_mode<synchronous>, transform_indices = @transform_1, window_bounds = array<i64: 1, 32>}, {pipeline_mode = #tpu.pipeline_mode<synchronous>, transform_indices = @transform_2, window_bounds = array<i64: 1, 32>}, {pipeline_mode = #tpu.pipeline_mode<synchronous>, transform_indices = @transform_3, window_bounds = array<i64: 32, 128>}, {pipeline_mode = #tpu.pipeline_mode<synchronous>, transform_indices = @transform_4, window_bounds = array<i64: 1, 128>}, {pipeline_mode = #tpu.pipeline_mode<synchronous>, transform_indices = @transform_5, window_bounds = array<i64: 14, 32>}, {pipeline_mode = #tpu.pipeline_mode<synchronous>, transform_indices = @transform_6, window_bounds = array<i64: 14, 128>}]} {
    %c0 = arith.constant 0 : index
    %c0_0 = arith.constant 0 : index
    %0 = vector.load %arg1[%c0, %c0_0] : memref<14x32xbf16, #tpu.memory_space<vmem>>, vector<14x32xbf16>
    %1 = arith.extf %0 : vector<14x32xbf16> to vector<14x32xf32>
    %c0_1 = arith.constant 0 : index
    %c0_2 = arith.constant 0 : index
    %2 = vector.load %arg2[%c0_1, %c0_2] : memref<1x32xf32, #tpu.memory_space<vmem>>, vector<1x32xf32>
    %c0_3 = arith.constant 0 : index
    %c0_4 = arith.constant 0 : index
    %3 = vector.load %arg3[%c0_3, %c0_4] : memref<1x32xf32, #tpu.memory_space<vmem>>, vector<1x32xf32>
    %cst = arith.constant dense<0.000000e+00> : vector<14xf32>
    %4 = vector.multi_reduction <add>, %1, %cst [1] : vector<14x32xf32> to vector<14xf32>
    %5 = vector.shape_cast %4 : vector<14xf32> to vector<14x1xf32>
    %cst_5 = arith.constant 3.200000e+01 : f32
    %6 = vector.broadcast %cst_5 : f32 to vector<14x1xf32>
    %7 = arith.divf %5, %6 : vector<14x1xf32>
    %8 = vector.broadcast %7 : vector<14x1xf32> to vector<14x32xf32>
    %9 = arith.subf %1, %8 : vector<14x32xf32>
    %10 = arith.mulf %9, %9 : vector<14x32xf32>
    %cst_6 = arith.constant dense<0.000000e+00> : vector<14xf32>
    %11 = vector.multi_reduction <add>, %10, %cst_6 [1] : vector<14x32xf32> to vector<14xf32>
    %12 = vector.shape_cast %11 : vector<14xf32> to vector<14x1xf32>
    %cst_7 = arith.constant 3.200000e+01 : f32
    %13 = vector.broadcast %cst_7 : f32 to vector<14x1xf32>
    %14 = arith.divf %12, %13 : vector<14x1xf32>
    %15 = vector.broadcast %7 : vector<14x1xf32> to vector<14x32xf32>
    %16 = arith.subf %1, %15 : vector<14x32xf32>
    %cst_8 = arith.constant 9.99999996E-13 : f32
    %17 = vector.broadcast %cst_8 : f32 to vector<14x1xf32>
    %18 = arith.addf %14, %17 : vector<14x1xf32>
    %19 = math.rsqrt %18 : vector<14x1xf32>
    %20 = vector.broadcast %19 : vector<14x1xf32> to vector<14x32xf32>
    %21 = arith.mulf %16, %20 : vector<14x32xf32>
    %22 = vector.broadcast %2 : vector<1x32xf32> to vector<14x32xf32>
    %23 = arith.mulf %21, %22 : vector<14x32xf32>
    %24 = vector.broadcast %3 : vector<1x32xf32> to vector<14x32xf32>
    %25 = arith.addf %23, %24 : vector<14x32xf32>
    %26 = arith.truncf %25 : vector<14x32xf32> to vector<14x32xbf16>
    %c0_9 = arith.constant 0 : index
    %c0_10 = arith.constant 0 : index
    %27 = vector.load %arg6[%c0_9, %c0_10] : memref<14x32xbf16, #tpu.memory_space<vmem>>, vector<14x32xbf16>
    tpu.vector_store %arg6[%c0_9, %c0_10], %26 {strides = array<i32>} : memref<14x32xbf16, #tpu.memory_space<vmem>>, vector<14x32xbf16>,
    %28 = arith.truncf %25 : vector<14x32xf32> to vector<14x32xbf16>
    %c0_11 = arith.constant 0 : index
    %c0_12 = arith.constant 0 : index
    %29 = vector.load %arg4[%c0_11, %c0_12] : memref<32x128xbf16, #tpu.memory_space<vmem>>, vector<32x128xbf16>
    %cst_13 = arith.constant dense<0.000000e+00> : vector<14x128xf32>
    %30 = tpu.matmul %28, %29, %cst_13 {dimension_numbers = #tpu.dot_dimension_numbers<[1], [0], [0], [1], [0, 0, 1, 1], [], []>} : vector<14x32xbf16>, vector<32x128xbf16>, vector<14x128xf32> -> vector<14x128xf32>
    %c0_14 = arith.constant 0 : index
    %c0_15 = arith.constant 0 : index
    %31 = vector.load %arg5[%c0_14, %c0_15] : memref<1x128xf32, #tpu.memory_space<vmem>>, vector<1x128xf32>
    %32 = vector.broadcast %31 : vector<1x128xf32> to vector<14x128xf32>
    %33 = arith.addf %30, %32 : vector<14x128xf32>
    %cst_16 = arith.constant dense<0xFF800000> : vector<14xf32>
    %34 = vector.multi_reduction <maximumf>, %33, %cst_16 [1] : vector<14x128xf32> to vector<14xf32>
    %35 = vector.shape_cast %34 : vector<14xf32> to vector<14x1xf32>
    %36 = vector.broadcast %35 : vector<14x1xf32> to vector<14x128xf32>
    %37 = arith.subf %33, %36 : vector<14x128xf32>
    %38 = math.exp %37 : vector<14x128xf32>
    %cst_17 = arith.constant dense<0.000000e+00> : vector<14xf32>
    %39 = vector.multi_reduction <add>, %38, %cst_17 [1] : vector<14x128xf32> to vector<14xf32>
    %40 = vector.shape_cast %39 : vector<14xf32> to vector<14x1xf32>
    %41 = math.log %40 : vector<14x1xf32>
    %42 = vector.broadcast %41 : vector<14x1xf32> to vector<14x128xf32>
    %43 = arith.subf %37, %42 : vector<14x128xf32>
    %c0_18 = arith.constant 0 : index
    %c0_19 = arith.constant 0 : index
    %44 = vector.load %arg7[%c0_18, %c0_19] : memref<14x128xf32, #tpu.memory_space<vmem>>, vector<14x128xf32>
    tpu.vector_store %arg7[%c0_18, %c0_19], %43 {strides = array<i32>} : memref<14x128xf32, #tpu.memory_space<vmem>>, vector<14x128xf32>,
    return
  }
  func.func @transform_0(%arg0: i32) -> (i32, i32) {
    %c0_i32 = arith.constant 0 : i32
    %c0_i32_0 = arith.constant 0 : i32
    %c0_i32_1 = arith.constant 0 : i32
    return %c0_i32, %c0_i32_0 : i32, i32
  }
  func.func @transform_1(%arg0: i32) -> (i32, i32) {
    %c0_i32 = arith.constant 0 : i32
    %c0_i32_0 = arith.constant 0 : i32
    %c0_i32_1 = arith.constant 0 : i32
    return %c0_i32, %c0_i32_0 : i32, i32
  }
  func.func @transform_2(%arg0: i32) -> (i32, i32) {
    %c0_i32 = arith.constant 0 : i32
    %c0_i32_0 = arith.constant 0 : i32
    %c0_i32_1 = arith.constant 0 : i32
    return %c0_i32, %c0_i32_0 : i32, i32
  }
  func.func @transform_3(%arg0: i32) -> (i32, i32) {
    %c0_i32 = arith.constant 0 : i32
    %c0_i32_0 = arith.constant 0 : i32
    %c0_i32_1 = arith.constant 0 : i32
    return %c0_i32, %c0_i32_0 : i32, i32
  }
  func.func @transform_4(%arg0: i32) -> (i32, i32) {
    %c0_i32 = arith.constant 0 : i32
    %c0_i32_0 = arith.constant 0 : i32
    %c0_i32_1 = arith.constant 0 : i32
    return %c0_i32, %c0_i32_0 : i32, i32
  }
  func.func @transform_5(%arg0: i32) -> (i32, i32) {
    %c0_i32 = arith.constant 0 : i32
    %c0_i32_0 = arith.constant 0 : i32
    %c0_i32_1 = arith.constant 0 : i32
    return %c0_i32, %c0_i32_0 : i32, i32
  }
  func.func @transform_6(%arg0: i32) -> (i32, i32) {
    %c0_i32 = arith.constant 0 : i32
    %c0_i32_0 = arith.constant 0 : i32
    %c0_i32_1 = arith.constant 0 : i32
    return %c0_i32, %c0_i32_0 : i32, i32
  }
}

module attributes {stable_mosaic.version = 11 : i64} {
  func.func @_ln_head_kernel(%arg0: i32, %arg1: memref<22x32xbf16, #tpu.memory_space<vmem>>, %arg2: memref<1x32xf32, #tpu.memory_space<vmem>>, %arg3: memref<1x32xf32, #tpu.memory_space<vmem>>, %arg4: memref<32x128xbf16, #tpu.memory_space<vmem>>, %arg5: memref<1x128xf32, #tpu.memory_space<vmem>>, %arg6: memref<22x128xf32, #tpu.memory_space<vmem>>) attributes {dimension_semantics = [#tpu.dimension_semantics<arbitrary>], iteration_bounds = array<i64: 1>, scalar_prefetch = 0 : i64, scratch_operands = 0 : i64, tpu.core_type = #tpu.core_type<tc>, window_params = [{pipeline_mode = #tpu.pipeline_mode<synchronous>, transform_indices = @transform_0, window_bounds = array<i64: 22, 32>}, {pipeline_mode = #tpu.pipeline_mode<synchronous>, transform_indices = @transform_1, window_bounds = array<i64: 1, 32>}, {pipeline_mode = #tpu.pipeline_mode<synchronous>, transform_indices = @transform_2, window_bounds = array<i64: 1, 32>}, {pipeline_mode = #tpu.pipeline_mode<synchronous>, transform_indices = @transform_3, window_bounds = array<i64: 32, 128>}, {pipeline_mode = #tpu.pipeline_mode<synchronous>, transform_indices = @transform_4, window_bounds = array<i64: 1, 128>}, {pipeline_mode = #tpu.pipeline_mode<synchronous>, transform_indices = @transform_5, window_bounds = array<i64: 22, 128>}]} {
    %c0 = arith.constant 0 : index
    %c0_0 = arith.constant 0 : index
    %0 = vector.load %arg1[%c0, %c0_0] : memref<22x32xbf16, #tpu.memory_space<vmem>>, vector<22x32xbf16>
    %1 = arith.extf %0 : vector<22x32xbf16> to vector<22x32xf32>
    %c0_1 = arith.constant 0 : index
    %c0_2 = arith.constant 0 : index
    %2 = vector.load %arg2[%c0_1, %c0_2] : memref<1x32xf32, #tpu.memory_space<vmem>>, vector<1x32xf32>
    %c0_3 = arith.constant 0 : index
    %c0_4 = arith.constant 0 : index
    %3 = vector.load %arg3[%c0_3, %c0_4] : memref<1x32xf32, #tpu.memory_space<vmem>>, vector<1x32xf32>
    %cst = arith.constant dense<0.000000e+00> : vector<22xf32>
    %4 = vector.multi_reduction <add>, %1, %cst [1] : vector<22x32xf32> to vector<22xf32>
    %5 = vector.shape_cast %4 : vector<22xf32> to vector<22x1xf32>
    %cst_5 = arith.constant 3.200000e+01 : f32
    %6 = vector.broadcast %cst_5 : f32 to vector<22x1xf32>
    %7 = arith.divf %5, %6 : vector<22x1xf32>
    %8 = vector.broadcast %7 : vector<22x1xf32> to vector<22x32xf32>
    %9 = arith.subf %1, %8 : vector<22x32xf32>
    %10 = arith.mulf %9, %9 : vector<22x32xf32>
    %cst_6 = arith.constant dense<0.000000e+00> : vector<22xf32>
    %11 = vector.multi_reduction <add>, %10, %cst_6 [1] : vector<22x32xf32> to vector<22xf32>
    %12 = vector.shape_cast %11 : vector<22xf32> to vector<22x1xf32>
    %cst_7 = arith.constant 3.200000e+01 : f32
    %13 = vector.broadcast %cst_7 : f32 to vector<22x1xf32>
    %14 = arith.divf %12, %13 : vector<22x1xf32>
    %15 = vector.broadcast %7 : vector<22x1xf32> to vector<22x32xf32>
    %16 = arith.subf %1, %15 : vector<22x32xf32>
    %cst_8 = arith.constant 9.99999996E-13 : f32
    %17 = vector.broadcast %cst_8 : f32 to vector<22x1xf32>
    %18 = arith.addf %14, %17 : vector<22x1xf32>
    %19 = math.rsqrt %18 : vector<22x1xf32>
    %20 = vector.broadcast %19 : vector<22x1xf32> to vector<22x32xf32>
    %21 = arith.mulf %16, %20 : vector<22x32xf32>
    %22 = vector.broadcast %2 : vector<1x32xf32> to vector<22x32xf32>
    %23 = arith.mulf %21, %22 : vector<22x32xf32>
    %24 = vector.broadcast %3 : vector<1x32xf32> to vector<22x32xf32>
    %25 = arith.addf %23, %24 : vector<22x32xf32>
    %26 = arith.truncf %25 : vector<22x32xf32> to vector<22x32xbf16>
    %c0_9 = arith.constant 0 : index
    %c0_10 = arith.constant 0 : index
    %27 = vector.load %arg4[%c0_9, %c0_10] : memref<32x128xbf16, #tpu.memory_space<vmem>>, vector<32x128xbf16>
    %cst_11 = arith.constant dense<0.000000e+00> : vector<22x128xf32>
    %28 = tpu.matmul %26, %27, %cst_11 {dimension_numbers = #tpu.dot_dimension_numbers<[1], [0], [0], [1], [0, 0, 1, 1], [], []>} : vector<22x32xbf16>, vector<32x128xbf16>, vector<22x128xf32> -> vector<22x128xf32>
    %c0_12 = arith.constant 0 : index
    %c0_13 = arith.constant 0 : index
    %29 = vector.load %arg5[%c0_12, %c0_13] : memref<1x128xf32, #tpu.memory_space<vmem>>, vector<1x128xf32>
    %30 = vector.broadcast %29 : vector<1x128xf32> to vector<22x128xf32>
    %31 = arith.addf %28, %30 : vector<22x128xf32>
    %cst_14 = arith.constant dense<0xFF800000> : vector<22xf32>
    %32 = vector.multi_reduction <maximumf>, %31, %cst_14 [1] : vector<22x128xf32> to vector<22xf32>
    %33 = vector.shape_cast %32 : vector<22xf32> to vector<22x1xf32>
    %34 = vector.broadcast %33 : vector<22x1xf32> to vector<22x128xf32>
    %35 = arith.subf %31, %34 : vector<22x128xf32>
    %36 = math.exp %35 : vector<22x128xf32>
    %cst_15 = arith.constant dense<0.000000e+00> : vector<22xf32>
    %37 = vector.multi_reduction <add>, %36, %cst_15 [1] : vector<22x128xf32> to vector<22xf32>
    %38 = vector.shape_cast %37 : vector<22xf32> to vector<22x1xf32>
    %39 = math.log %38 : vector<22x1xf32>
    %40 = vector.broadcast %39 : vector<22x1xf32> to vector<22x128xf32>
    %41 = arith.subf %35, %40 : vector<22x128xf32>
    %c0_16 = arith.constant 0 : index
    %c0_17 = arith.constant 0 : index
    %42 = vector.load %arg6[%c0_16, %c0_17] : memref<22x128xf32, #tpu.memory_space<vmem>>, vector<22x128xf32>
    tpu.vector_store %arg6[%c0_16, %c0_17], %41 {strides = array<i32>} : memref<22x128xf32, #tpu.memory_space<vmem>>, vector<22x128xf32>,
    return
  }
  func.func @transform_0(%arg0: i32) -> (i32, i32) {
    %c0_i32 = arith.constant 0 : i32
    %c0_i32_0 = arith.constant 0 : i32
    %c0_i32_1 = arith.constant 0 : i32
    return %c0_i32, %c0_i32_0 : i32, i32
  }
  func.func @transform_1(%arg0: i32) -> (i32, i32) {
    %c0_i32 = arith.constant 0 : i32
    %c0_i32_0 = arith.constant 0 : i32
    %c0_i32_1 = arith.constant 0 : i32
    return %c0_i32, %c0_i32_0 : i32, i32
  }
  func.func @transform_2(%arg0: i32) -> (i32, i32) {
    %c0_i32 = arith.constant 0 : i32
    %c0_i32_0 = arith.constant 0 : i32
    %c0_i32_1 = arith.constant 0 : i32
    return %c0_i32, %c0_i32_0 : i32, i32
  }
  func.func @transform_3(%arg0: i32) -> (i32, i32) {
    %c0_i32 = arith.constant 0 : i32
    %c0_i32_0 = arith.constant 0 : i32
    %c0_i32_1 = arith.constant 0 : i32
    return %c0_i32, %c0_i32_0 : i32, i32
  }
  func.func @transform_4(%arg0: i32) -> (i32, i32) {
    %c0_i32 = arith.constant 0 : i32
    %c0_i32_0 = arith.constant 0 : i32
    %c0_i32_1 = arith.constant 0 : i32
    return %c0_i32, %c0_i32_0 : i32, i32
  }
  func.func @transform_5(%arg0: i32) -> (i32, i32) {
    %c0_i32 = arith.constant 0 : i32
    %c0_i32_0 = arith.constant 0 : i32
    %c0_i32_1 = arith.constant 0 : i32
    return %c0_i32, %c0_i32_0 : i32, i32
  }
}

module attributes {stable_mosaic.version = 11 : i64} {
  func.func @_dec_stack_kernel(%arg0: i32, %arg1: i32, %arg2: memref<1x11x32xbf16, #tpu.memory_space<vmem>>, %arg3: memref<1x7x32xbf16, #tpu.memory_space<vmem>>, %arg4: memref<1x1x11xf32, #tpu.memory_space<vmem>>, %arg5: memref<1x1x7xf32, #tpu.memory_space<vmem>>, %arg6: memref<1x6x32xf32, #tpu.memory_space<vmem>>, %arg7: memref<1x32x96xbf16, #tpu.memory_space<vmem>>, %arg8: memref<1x1x96xf32, #tpu.memory_space<vmem>>, %arg9: memref<1x32x32xbf16, #tpu.memory_space<vmem>>, %arg10: memref<1x1x32xf32, #tpu.memory_space<vmem>>, %arg11: memref<1x32x96xbf16, #tpu.memory_space<vmem>>, %arg12: memref<1x1x96xf32, #tpu.memory_space<vmem>>, %arg13: memref<1x32x32xbf16, #tpu.memory_space<vmem>>, %arg14: memref<1x1x32xf32, #tpu.memory_space<vmem>>, %arg15: memref<1x32x64xbf16, #tpu.memory_space<vmem>>, %arg16: memref<1x1x64xf32, #tpu.memory_space<vmem>>, %arg17: memref<1x64x32xbf16, #tpu.memory_space<vmem>>, %arg18: memref<1x1x32xf32, #tpu.memory_space<vmem>>, %arg19: memref<1x11x32xbf16, #tpu.memory_space<vmem>>, %arg20: memref<11x32xf32, #tpu.memory_space<vmem>>) attributes {dimension_semantics = [#tpu.dimension_semantics<parallel>, #tpu.dimension_semantics<arbitrary>], iteration_bounds = array<i64: 2, 2>, scalar_prefetch = 0 : i64, scratch_operands = 1 : i64, tpu.core_type = #tpu.core_type<tc>, window_params = [{transform_indices = @transform_0, window_bounds = array<i64: 1, 11, 32>}, {transform_indices = @transform_1, window_bounds = array<i64: 1, 7, 32>}, {transform_indices = @transform_2, window_bounds = array<i64: 1, 1, 11>}, {transform_indices = @transform_3, window_bounds = array<i64: 1, 1, 7>}, {transform_indices = @transform_4, window_bounds = array<i64: 1, 6, 32>}, {transform_indices = @transform_5, window_bounds = array<i64: 1, 32, 96>}, {transform_indices = @transform_6, window_bounds = array<i64: 1, 1, 96>}, {transform_indices = @transform_7, window_bounds = array<i64: 1, 32, 32>}, {transform_indices = @transform_8, window_bounds = array<i64: 1, 1, 32>}, {transform_indices = @transform_9, window_bounds = array<i64: 1, 32, 96>}, {transform_indices = @transform_10, window_bounds = array<i64: 1, 1, 96>}, {transform_indices = @transform_11, window_bounds = array<i64: 1, 32, 32>}, {transform_indices = @transform_12, window_bounds = array<i64: 1, 1, 32>}, {transform_indices = @transform_13, window_bounds = array<i64: 1, 32, 64>}, {transform_indices = @transform_14, window_bounds = array<i64: 1, 1, 64>}, {transform_indices = @transform_15, window_bounds = array<i64: 1, 64, 32>}, {transform_indices = @transform_16, window_bounds = array<i64: 1, 1, 32>}, {transform_indices = @transform_17, window_bounds = array<i64: 1, 11, 32>}]} {
    %c0_i32 = arith.constant 0 : i32
    %0 = arith.cmpi eq, %arg1, %c0_i32 : i32
    %1 = arith.extui %0 : i1 to i32
    %c0_i32_0 = arith.constant 0 : i32
    %2 = arith.cmpi ne, %1, %c0_i32_0 : i32
    scf.if %2 {
      %c0_117 = arith.constant 0 : index
      %c0_118 = arith.constant 0 : index
      %c0_119 = arith.constant 0 : index
      %345 = vector.load %arg2[%c0_117, %c0_118, %c0_119] : memref<1x11x32xbf16, #tpu.memory_space<vmem>>, vector<1x11x32xbf16>
      %346 = vector.shape_cast %345 : vector<1x11x32xbf16> to vector<11x32xbf16>
      %347 = arith.extf %346 : vector<11x32xbf16> to vector<11x32xf32>
      %c0_120 = arith.constant 0 : index
      %c0_121 = arith.constant 0 : index
      %348 = vector.load %arg20[%c0_120, %c0_121] : memref<11x32xf32, #tpu.memory_space<vmem>>, vector<11x32xf32>
      tpu.vector_store %arg20[%c0_120, %c0_121], %347 {strides = array<i32>} : memref<11x32xf32, #tpu.memory_space<vmem>>, vector<11x32xf32>,
    } else {
    }
    %c0 = arith.constant 0 : index
    %c0_1 = arith.constant 0 : index
    %3 = vector.load %arg20[%c0, %c0_1] : memref<11x32xf32, #tpu.memory_space<vmem>>, vector<11x32xf32>
    %c0_2 = arith.constant 0 : index
    %c0_3 = arith.constant 0 : index
    %c0_4 = arith.constant 0 : index
    %4 = vector.load %arg3[%c0_2, %c0_3, %c0_4] : memref<1x7x32xbf16, #tpu.memory_space<vmem>>, vector<1x7x32xbf16>
    %5 = vector.shape_cast %4 : vector<1x7x32xbf16> to vector<7x32xbf16>
    %6 = arith.extf %5 : vector<7x32xbf16> to vector<7x32xf32>
    %c0_5 = arith.constant 0 : index
    %c0_6 = arith.constant 0 : index
    %c0_7 = arith.constant 0 : index
    %7 = vector.load %arg4[%c0_5, %c0_6, %c0_7] : memref<1x1x11xf32, #tpu.memory_space<vmem>>, vector<1x1x11xf32>
    %8 = vector.shape_cast %7 : vector<1x1x11xf32> to vector<1x11xf32>
    %c0_8 = arith.constant 0 : index
    %c0_9 = arith.constant 0 : index
    %c0_10 = arith.constant 0 : index
    %9 = vector.load %arg5[%c0_8, %c0_9, %c0_10] : memref<1x1x7xf32, #tpu.memory_space<vmem>>, vector<1x1x7xf32>
    %10 = vector.shape_cast %9 : vector<1x1x7xf32> to vector<1x7xf32>
    %11 = tpu.iota {dimensions = array<i32: 0>} : vector<11x11xi32>
    %12 = tpu.iota {dimensions = array<i32: 1>} : vector<11x11xi32>
    %13 = arith.cmpi sle, %12, %11 : vector<11x11xi32>
    %cst = arith.constant 0.000000e+00 : f32
    %cst_11 = arith.constant -1.000000e+09 : f32
    %14 = vector.broadcast %cst : f32 to vector<11x11xf32>
    %15 = vector.broadcast %cst_11 : f32 to vector<11x11xf32>
    %16 = arith.select %13, %14, %15 : vector<11x11xi1>, vector<11x11xf32>
    %17 = vector.broadcast %8 : vector<1x11xf32> to vector<11x11xf32>
    %18 = arith.addf %16, %17 : vector<11x11xf32>
    %c0_12 = arith.constant 0 : index
    %c0_13 = arith.constant 0 : index
    %c0_14 = arith.constant 0 : index
    %19 = vector.load %arg6[%c0_12, %c0_13, %c0_14] : memref<1x6x32xf32, #tpu.memory_space<vmem>>, vector<1x6x32xf32>
    %20 = vector.shape_cast %19 : vector<1x6x32xf32> to vector<6x32xf32>
    %21 = vector.extract_strided_slice %20 {offsets = [0, 0], sizes = [1, 32], strides = [1, 1]} : vector<6x32xf32> to vector<1x32xf32>
    %22 = vector.extract_strided_slice %20 {offsets = [1, 0], sizes = [1, 32], strides = [1, 1]} : vector<6x32xf32> to vector<1x32xf32>
    %cst_15 = arith.constant dense<0.000000e+00> : vector<11xf32>
    %23 = vector.multi_reduction <add>, %3, %cst_15 [1] : vector<11x32xf32> to vector<11xf32>
    %24 = vector.shape_cast %23 : vector<11xf32> to vector<11x1xf32>
    %cst_16 = arith.constant 3.200000e+01 : f32
    %25 = vector.broadcast %cst_16 : f32 to vector<11x1xf32>
    %26 = arith.divf %24, %25 : vector<11x1xf32>
    %27 = vector.broadcast %26 : vector<11x1xf32> to vector<11x32xf32>
    %28 = arith.subf %3, %27 : vector<11x32xf32>
    %29 = arith.mulf %28, %28 : vector<11x32xf32>
    %cst_17 = arith.constant dense<0.000000e+00> : vector<11xf32>
    %30 = vector.multi_reduction <add>, %29, %cst_17 [1] : vector<11x32xf32> to vector<11xf32>
    %31 = vector.shape_cast %30 : vector<11xf32> to vector<11x1xf32>
    %cst_18 = arith.constant 3.200000e+01 : f32
    %32 = vector.broadcast %cst_18 : f32 to vector<11x1xf32>
    %33 = arith.divf %31, %32 : vector<11x1xf32>
    %34 = vector.broadcast %26 : vector<11x1xf32> to vector<11x32xf32>
    %35 = arith.subf %3, %34 : vector<11x32xf32>
    %cst_19 = arith.constant 9.99999996E-13 : f32
    %36 = vector.broadcast %cst_19 : f32 to vector<11x1xf32>
    %37 = arith.addf %33, %36 : vector<11x1xf32>
    %38 = math.rsqrt %37 : vector<11x1xf32>
    %39 = vector.broadcast %38 : vector<11x1xf32> to vector<11x32xf32>
    %40 = arith.mulf %35, %39 : vector<11x32xf32>
    %41 = vector.broadcast %21 : vector<1x32xf32> to vector<11x32xf32>
    %42 = arith.mulf %40, %41 : vector<11x32xf32>
    %43 = vector.broadcast %22 : vector<1x32xf32> to vector<11x32xf32>
    %44 = arith.addf %42, %43 : vector<11x32xf32>
    %c0_20 = arith.constant 0 : index
    %c0_21 = arith.constant 0 : index
    %c0_22 = arith.constant 0 : index
    %45 = vector.load %arg7[%c0_20, %c0_21, %c0_22] : memref<1x32x96xbf16, #tpu.memory_space<vmem>>, vector<1x32x96xbf16>
    %46 = vector.shape_cast %45 : vector<1x32x96xbf16> to vector<32x96xbf16>
    %c0_23 = arith.constant 0 : index
    %c0_24 = arith.constant 0 : index
    %c0_25 = arith.constant 0 : index
    %47 = vector.load %arg8[%c0_23, %c0_24, %c0_25] : memref<1x1x96xf32, #tpu.memory_space<vmem>>, vector<1x1x96xf32>
    %48 = vector.shape_cast %47 : vector<1x1x96xf32> to vector<1x96xf32>
    %c0_26 = arith.constant 0 : index
    %c0_27 = arith.constant 0 : index
    %c0_28 = arith.constant 0 : index
    %49 = vector.load %arg9[%c0_26, %c0_27, %c0_28] : memref<1x32x32xbf16, #tpu.memory_space<vmem>>, vector<1x32x32xbf16>
    %50 = vector.shape_cast %49 : vector<1x32x32xbf16> to vector<32x32xbf16>
    %c0_29 = arith.constant 0 : index
    %c0_30 = arith.constant 0 : index
    %c0_31 = arith.constant 0 : index
    %51 = vector.load %arg10[%c0_29, %c0_30, %c0_31] : memref<1x1x32xf32, #tpu.memory_space<vmem>>, vector<1x1x32xf32>
    %52 = vector.shape_cast %51 : vector<1x1x32xf32> to vector<1x32xf32>
    %53 = arith.truncf %44 : vector<11x32xf32> to vector<11x32xbf16>
    %cst_32 = arith.constant dense<0.000000e+00> : vector<11x96xf32>
    %54 = tpu.matmul %53, %46, %cst_32 {dimension_numbers = #tpu.dot_dimension_numbers<[1], [0], [0], [1], [0, 0, 1, 1], [], []>} : vector<11x32xbf16>, vector<32x96xbf16>, vector<11x96xf32> -> vector<11x96xf32>
    %55 = vector.broadcast %48 : vector<1x96xf32> to vector<11x96xf32>
    %56 = arith.addf %54, %55 : vector<11x96xf32>
    %57 = vector.extract_strided_slice %56 {offsets = [0, 0], sizes = [11, 32], strides = [1, 1]} : vector<11x96xf32> to vector<11x32xf32>
    %58 = vector.extract_strided_slice %56 {offsets = [0, 32], sizes = [11, 32], strides = [1, 1]} : vector<11x96xf32> to vector<11x32xf32>
    %59 = vector.extract_strided_slice %56 {offsets = [0, 64], sizes = [11, 32], strides = [1, 1]} : vector<11x96xf32> to vector<11x32xf32>
    %60 = vector.extract_strided_slice %57 {offsets = [0, 0], sizes = [11, 8], strides = [1, 1]} : vector<11x32xf32> to vector<11x8xf32>
    %61 = arith.truncf %60 : vector<11x8xf32> to vector<11x8xbf16>
    %62 = vector.extract_strided_slice %58 {offsets = [0, 0], sizes = [11, 8], strides = [1, 1]} : vector<11x32xf32> to vector<11x8xf32>
    %63 = arith.truncf %62 : vector<11x8xf32> to vector<11x8xbf16>
    %64 = vector.extract_strided_slice %59 {offsets = [0, 0], sizes = [11, 8], strides = [1, 1]} : vector<11x32xf32> to vector<11x8xf32>
    %65 = arith.truncf %64 : vector<11x8xf32> to vector<11x8xbf16>
    %cst_33 = arith.constant dense<0.000000e+00> : vector<11x11xf32>
    %66 = tpu.matmul %61, %63, %cst_33 {dimension_numbers = #tpu.dot_dimension_numbers<[1], [1], [0], [0], [0, 0, 1, 0], [], []>} : vector<11x8xbf16>, vector<11x8xbf16>, vector<11x11xf32> -> vector<11x11xf32>
    %cst_34 = arith.constant 0.353553385 : f32
    %67 = vector.broadcast %cst_34 : f32 to vector<11x11xf32>
    %68 = arith.mulf %66, %67 : vector<11x11xf32>
    %69 = arith.addf %68, %18 : vector<11x11xf32>
    %cst_35 = arith.constant dense<0xFF800000> : vector<11xf32>
    %70 = vector.multi_reduction <maximumf>, %69, %cst_35 [1] : vector<11x11xf32> to vector<11xf32>
    %71 = vector.shape_cast %70 : vector<11xf32> to vector<11x1xf32>
    %72 = vector.broadcast %71 : vector<11x1xf32> to vector<11x11xf32>
    %73 = arith.subf %69, %72 : vector<11x11xf32>
    %74 = math.exp %73 : vector<11x11xf32>
    %cst_36 = arith.constant dense<0.000000e+00> : vector<11xf32>
    %75 = vector.multi_reduction <add>, %74, %cst_36 [1] : vector<11x11xf32> to vector<11xf32>
    %76 = vector.shape_cast %75 : vector<11xf32> to vector<11x1xf32>
    %77 = tpu.reciprocal %76 {approx = true} : vector<11x1xf32> -> vector<11x1xf32>
    %78 = vector.broadcast %77 : vector<11x1xf32> to vector<11x11xf32>
    %79 = arith.mulf %74, %78 : vector<11x11xf32>
    %80 = arith.truncf %79 : vector<11x11xf32> to vector<11x11xbf16>
    %cst_37 = arith.constant dense<0.000000e+00> : vector<11x8xf32>
    %81 = tpu.matmul %80, %65, %cst_37 {dimension_numbers = #tpu.dot_dimension_numbers<[1], [0], [0], [1], [0, 0, 1, 1], [], []>} : vector<11x11xbf16>, vector<11x8xbf16>, vector<11x8xf32> -> vector<11x8xf32>
    %82 = vector.extract_strided_slice %57 {offsets = [0, 8], sizes = [11, 8], strides = [1, 1]} : vector<11x32xf32> to vector<11x8xf32>
    %83 = arith.truncf %82 : vector<11x8xf32> to vector<11x8xbf16>
    %84 = vector.extract_strided_slice %58 {offsets = [0, 8], sizes = [11, 8], strides = [1, 1]} : vector<11x32xf32> to vector<11x8xf32>
    %85 = arith.truncf %84 : vector<11x8xf32> to vector<11x8xbf16>
    %86 = vector.extract_strided_slice %59 {offsets = [0, 8], sizes = [11, 8], strides = [1, 1]} : vector<11x32xf32> to vector<11x8xf32>
    %87 = arith.truncf %86 : vector<11x8xf32> to vector<11x8xbf16>
    %cst_38 = arith.constant dense<0.000000e+00> : vector<11x11xf32>
    %88 = tpu.matmul %83, %85, %cst_38 {dimension_numbers = #tpu.dot_dimension_numbers<[1], [1], [0], [0], [0, 0, 1, 0], [], []>} : vector<11x8xbf16>, vector<11x8xbf16>, vector<11x11xf32> -> vector<11x11xf32>
    %cst_39 = arith.constant 0.353553385 : f32
    %89 = vector.broadcast %cst_39 : f32 to vector<11x11xf32>
    %90 = arith.mulf %88, %89 : vector<11x11xf32>
    %91 = arith.addf %90, %18 : vector<11x11xf32>
    %cst_40 = arith.constant dense<0xFF800000> : vector<11xf32>
    %92 = vector.multi_reduction <maximumf>, %91, %cst_40 [1] : vector<11x11xf32> to vector<11xf32>
    %93 = vector.shape_cast %92 : vector<11xf32> to vector<11x1xf32>
    %94 = vector.broadcast %93 : vector<11x1xf32> to vector<11x11xf32>
    %95 = arith.subf %91, %94 : vector<11x11xf32>
    %96 = math.exp %95 : vector<11x11xf32>
    %cst_41 = arith.constant dense<0.000000e+00> : vector<11xf32>
    %97 = vector.multi_reduction <add>, %96, %cst_41 [1] : vector<11x11xf32> to vector<11xf32>
    %98 = vector.shape_cast %97 : vector<11xf32> to vector<11x1xf32>
    %99 = tpu.reciprocal %98 {approx = true} : vector<11x1xf32> -> vector<11x1xf32>
    %100 = vector.broadcast %99 : vector<11x1xf32> to vector<11x11xf32>
    %101 = arith.mulf %96, %100 : vector<11x11xf32>
    %102 = arith.truncf %101 : vector<11x11xf32> to vector<11x11xbf16>
    %cst_42 = arith.constant dense<0.000000e+00> : vector<11x8xf32>
    %103 = tpu.matmul %102, %87, %cst_42 {dimension_numbers = #tpu.dot_dimension_numbers<[1], [0], [0], [1], [0, 0, 1, 1], [], []>} : vector<11x11xbf16>, vector<11x8xbf16>, vector<11x8xf32> -> vector<11x8xf32>
    %104 = vector.extract_strided_slice %57 {offsets = [0, 16], sizes = [11, 8], strides = [1, 1]} : vector<11x32xf32> to vector<11x8xf32>
    %105 = arith.truncf %104 : vector<11x8xf32> to vector<11x8xbf16>
    %106 = vector.extract_strided_slice %58 {offsets = [0, 16], sizes = [11, 8], strides = [1, 1]} : vector<11x32xf32> to vector<11x8xf32>
    %107 = arith.truncf %106 : vector<11x8xf32> to vector<11x8xbf16>
    %108 = vector.extract_strided_slice %59 {offsets = [0, 16], sizes = [11, 8], strides = [1, 1]} : vector<11x32xf32> to vector<11x8xf32>
    %109 = arith.truncf %108 : vector<11x8xf32> to vector<11x8xbf16>
    %cst_43 = arith.constant dense<0.000000e+00> : vector<11x11xf32>
    %110 = tpu.matmul %105, %107, %cst_43 {dimension_numbers = #tpu.dot_dimension_numbers<[1], [1], [0], [0], [0, 0, 1, 0], [], []>} : vector<11x8xbf16>, vector<11x8xbf16>, vector<11x11xf32> -> vector<11x11xf32>
    %cst_44 = arith.constant 0.353553385 : f32
    %111 = vector.broadcast %cst_44 : f32 to vector<11x11xf32>
    %112 = arith.mulf %110, %111 : vector<11x11xf32>
    %113 = arith.addf %112, %18 : vector<11x11xf32>
    %cst_45 = arith.constant dense<0xFF800000> : vector<11xf32>
    %114 = vector.multi_reduction <maximumf>, %113, %cst_45 [1] : vector<11x11xf32> to vector<11xf32>
    %115 = vector.shape_cast %114 : vector<11xf32> to vector<11x1xf32>
    %116 = vector.broadcast %115 : vector<11x1xf32> to vector<11x11xf32>
    %117 = arith.subf %113, %116 : vector<11x11xf32>
    %118 = math.exp %117 : vector<11x11xf32>
    %cst_46 = arith.constant dense<0.000000e+00> : vector<11xf32>
    %119 = vector.multi_reduction <add>, %118, %cst_46 [1] : vector<11x11xf32> to vector<11xf32>
    %120 = vector.shape_cast %119 : vector<11xf32> to vector<11x1xf32>
    %121 = tpu.reciprocal %120 {approx = true} : vector<11x1xf32> -> vector<11x1xf32>
    %122 = vector.broadcast %121 : vector<11x1xf32> to vector<11x11xf32>
    %123 = arith.mulf %118, %122 : vector<11x11xf32>
    %124 = arith.truncf %123 : vector<11x11xf32> to vector<11x11xbf16>
    %cst_47 = arith.constant dense<0.000000e+00> : vector<11x8xf32>
    %125 = tpu.matmul %124, %109, %cst_47 {dimension_numbers = #tpu.dot_dimension_numbers<[1], [0], [0], [1], [0, 0, 1, 1], [], []>} : vector<11x11xbf16>, vector<11x8xbf16>, vector<11x8xf32> -> vector<11x8xf32>
    %126 = vector.extract_strided_slice %57 {offsets = [0, 24], sizes = [11, 8], strides = [1, 1]} : vector<11x32xf32> to vector<11x8xf32>
    %127 = arith.truncf %126 : vector<11x8xf32> to vector<11x8xbf16>
    %128 = vector.extract_strided_slice %58 {offsets = [0, 24], sizes = [11, 8], strides = [1, 1]} : vector<11x32xf32> to vector<11x8xf32>
    %129 = arith.truncf %128 : vector<11x8xf32> to vector<11x8xbf16>
    %130 = vector.extract_strided_slice %59 {offsets = [0, 24], sizes = [11, 8], strides = [1, 1]} : vector<11x32xf32> to vector<11x8xf32>
    %131 = arith.truncf %130 : vector<11x8xf32> to vector<11x8xbf16>
    %cst_48 = arith.constant dense<0.000000e+00> : vector<11x11xf32>
    %132 = tpu.matmul %127, %129, %cst_48 {dimension_numbers = #tpu.dot_dimension_numbers<[1], [1], [0], [0], [0, 0, 1, 0], [], []>} : vector<11x8xbf16>, vector<11x8xbf16>, vector<11x11xf32> -> vector<11x11xf32>
    %cst_49 = arith.constant 0.353553385 : f32
    %133 = vector.broadcast %cst_49 : f32 to vector<11x11xf32>
    %134 = arith.mulf %132, %133 : vector<11x11xf32>
    %135 = arith.addf %134, %18 : vector<11x11xf32>
    %cst_50 = arith.constant dense<0xFF800000> : vector<11xf32>
    %136 = vector.multi_reduction <maximumf>, %135, %cst_50 [1] : vector<11x11xf32> to vector<11xf32>
    %137 = vector.shape_cast %136 : vector<11xf32> to vector<11x1xf32>
    %138 = vector.broadcast %137 : vector<11x1xf32> to vector<11x11xf32>
    %139 = arith.subf %135, %138 : vector<11x11xf32>
    %140 = math.exp %139 : vector<11x11xf32>
    %cst_51 = arith.constant dense<0.000000e+00> : vector<11xf32>
    %141 = vector.multi_reduction <add>, %140, %cst_51 [1] : vector<11x11xf32> to vector<11xf32>
    %142 = vector.shape_cast %141 : vector<11xf32> to vector<11x1xf32>
    %143 = tpu.reciprocal %142 {approx = true} : vector<11x1xf32> -> vector<11x1xf32>
    %144 = vector.broadcast %143 : vector<11x1xf32> to vector<11x11xf32>
    %145 = arith.mulf %140, %144 : vector<11x11xf32>
    %146 = arith.truncf %145 : vector<11x11xf32> to vector<11x11xbf16>
    %cst_52 = arith.constant dense<0.000000e+00> : vector<11x8xf32>
    %147 = tpu.matmul %146, %131, %cst_52 {dimension_numbers = #tpu.dot_dimension_numbers<[1], [0], [0], [1], [0, 0, 1, 1], [], []>} : vector<11x11xbf16>, vector<11x8xbf16>, vector<11x8xf32> -> vector<11x8xf32>
    %148 = tpu.concatenate %81, %103, %125, %147 in 1 : vector<11x8xf32>, vector<11x8xf32>, vector<11x8xf32>, vector<11x8xf32> -> vector<11x32xf32>
    %149 = arith.truncf %148 : vector<11x32xf32> to vector<11x32xbf16>
    %cst_53 = arith.constant dense<0.000000e+00> : vector<11x32xf32>
    %150 = tpu.matmul %149, %50, %cst_53 {dimension_numbers = #tpu.dot_dimension_numbers<[1], [0], [0], [1], [0, 0, 1, 1], [], []>} : vector<11x32xbf16>, vector<32x32xbf16>, vector<11x32xf32> -> vector<11x32xf32>
    %151 = vector.broadcast %52 : vector<1x32xf32> to vector<11x32xf32>
    %152 = arith.addf %150, %151 : vector<11x32xf32>
    %153 = arith.addf %3, %152 : vector<11x32xf32>
    %154 = vector.extract_strided_slice %20 {offsets = [2, 0], sizes = [1, 32], strides = [1, 1]} : vector<6x32xf32> to vector<1x32xf32>
    %155 = vector.extract_strided_slice %20 {offsets = [3, 0], sizes = [1, 32], strides = [1, 1]} : vector<6x32xf32> to vector<1x32xf32>
    %cst_54 = arith.constant dense<0.000000e+00> : vector<11xf32>
    %156 = vector.multi_reduction <add>, %153, %cst_54 [1] : vector<11x32xf32> to vector<11xf32>
    %157 = vector.shape_cast %156 : vector<11xf32> to vector<11x1xf32>
    %cst_55 = arith.constant 3.200000e+01 : f32
    %158 = vector.broadcast %cst_55 : f32 to vector<11x1xf32>
    %159 = arith.divf %157, %158 : vector<11x1xf32>
    %160 = vector.broadcast %159 : vector<11x1xf32> to vector<11x32xf32>
    %161 = arith.subf %153, %160 : vector<11x32xf32>
    %162 = arith.mulf %161, %161 : vector<11x32xf32>
    %cst_56 = arith.constant dense<0.000000e+00> : vector<11xf32>
    %163 = vector.multi_reduction <add>, %162, %cst_56 [1] : vector<11x32xf32> to vector<11xf32>
    %164 = vector.shape_cast %163 : vector<11xf32> to vector<11x1xf32>
    %cst_57 = arith.constant 3.200000e+01 : f32
    %165 = vector.broadcast %cst_57 : f32 to vector<11x1xf32>
    %166 = arith.divf %164, %165 : vector<11x1xf32>
    %167 = vector.broadcast %159 : vector<11x1xf32> to vector<11x32xf32>
    %168 = arith.subf %153, %167 : vector<11x32xf32>
    %cst_58 = arith.constant 9.99999996E-13 : f32
    %169 = vector.broadcast %cst_58 : f32 to vector<11x1xf32>
    %170 = arith.addf %166, %169 : vector<11x1xf32>
    %171 = math.rsqrt %170 : vector<11x1xf32>
    %172 = vector.broadcast %171 : vector<11x1xf32> to vector<11x32xf32>
    %173 = arith.mulf %168, %172 : vector<11x32xf32>
    %174 = vector.broadcast %154 : vector<1x32xf32> to vector<11x32xf32>
    %175 = arith.mulf %173, %174 : vector<11x32xf32>
    %176 = vector.broadcast %155 : vector<1x32xf32> to vector<11x32xf32>
    %177 = arith.addf %175, %176 : vector<11x32xf32>
    %c0_59 = arith.constant 0 : index
    %c0_60 = arith.constant 0 : index
    %c0_61 = arith.constant 0 : index
    %178 = vector.load %arg11[%c0_59, %c0_60, %c0_61] : memref<1x32x96xbf16, #tpu.memory_space<vmem>>, vector<1x32x96xbf16>
    %179 = vector.shape_cast %178 : vector<1x32x96xbf16> to vector<32x96xbf16>
    %c0_62 = arith.constant 0 : index
    %c0_63 = arith.constant 0 : index
    %c0_64 = arith.constant 0 : index
    %180 = vector.load %arg12[%c0_62, %c0_63, %c0_64] : memref<1x1x96xf32, #tpu.memory_space<vmem>>, vector<1x1x96xf32>
    %181 = vector.shape_cast %180 : vector<1x1x96xf32> to vector<1x96xf32>
    %c0_65 = arith.constant 0 : index
    %c0_66 = arith.constant 0 : index
    %c0_67 = arith.constant 0 : index
    %182 = vector.load %arg13[%c0_65, %c0_66, %c0_67] : memref<1x32x32xbf16, #tpu.memory_space<vmem>>, vector<1x32x32xbf16>
    %183 = vector.shape_cast %182 : vector<1x32x32xbf16> to vector<32x32xbf16>
    %c0_68 = arith.constant 0 : index
    %c0_69 = arith.constant 0 : index
    %c0_70 = arith.constant 0 : index
    %184 = vector.load %arg14[%c0_68, %c0_69, %c0_70] : memref<1x1x32xf32, #tpu.memory_space<vmem>>, vector<1x1x32xf32>
    %185 = vector.shape_cast %184 : vector<1x1x32xf32> to vector<1x32xf32>
    %186 = arith.truncf %177 : vector<11x32xf32> to vector<11x32xbf16>
    %187 = vector.extract_strided_slice %179 {offsets = [0, 0], sizes = [32, 32], strides = [1, 1]} : vector<32x96xbf16> to vector<32x32xbf16>
    %cst_71 = arith.constant dense<0.000000e+00> : vector<11x32xf32>
    %188 = tpu.matmul %186, %187, %cst_71 {dimension_numbers = #tpu.dot_dimension_numbers<[1], [0], [0], [1], [0, 0, 1, 1], [], []>} : vector<11x32xbf16>, vector<32x32xbf16>, vector<11x32xf32> -> vector<11x32xf32>
    %189 = vector.extract_strided_slice %181 {offsets = [0, 0], sizes = [1, 32], strides = [1, 1]} : vector<1x96xf32> to vector<1x32xf32>
    %190 = vector.broadcast %189 : vector<1x32xf32> to vector<11x32xf32>
    %191 = arith.addf %188, %190 : vector<11x32xf32>
    %192 = arith.truncf %6 : vector<7x32xf32> to vector<7x32xbf16>
    %193 = vector.extract_strided_slice %179 {offsets = [0, 32], sizes = [32, 64], strides = [1, 1]} : vector<32x96xbf16> to vector<32x64xbf16>
    %cst_72 = arith.constant dense<0.000000e+00> : vector<7x64xf32>
    %194 = tpu.matmul %192, %193, %cst_72 {dimension_numbers = #tpu.dot_dimension_numbers<[1], [0], [0], [1], [0, 0, 1, 1], [], []>} : vector<7x32xbf16>, vector<32x64xbf16>, vector<7x64xf32> -> vector<7x64xf32>
    %195 = vector.extract_strided_slice %181 {offsets = [0, 32], sizes = [1, 64], strides = [1, 1]} : vector<1x96xf32> to vector<1x64xf32>
    %196 = vector.broadcast %195 : vector<1x64xf32> to vector<7x64xf32>
    %197 = arith.addf %194, %196 : vector<7x64xf32>
    %198 = vector.extract_strided_slice %197 {offsets = [0, 0], sizes = [7, 32], strides = [1, 1]} : vector<7x64xf32> to vector<7x32xf32>
    %199 = vector.extract_strided_slice %197 {offsets = [0, 32], sizes = [7, 32], strides = [1, 1]} : vector<7x64xf32> to vector<7x32xf32>
    %200 = vector.extract_strided_slice %191 {offsets = [0, 0], sizes = [11, 8], strides = [1, 1]} : vector<11x32xf32> to vector<11x8xf32>
    %201 = arith.truncf %200 : vector<11x8xf32> to vector<11x8xbf16>
    %202 = vector.extract_strided_slice %198 {offsets = [0, 0], sizes = [7, 8], strides = [1, 1]} : vector<7x32xf32> to vector<7x8xf32>
    %203 = arith.truncf %202 : vector<7x8xf32> to vector<7x8xbf16>
    %204 = vector.extract_strided_slice %199 {offsets = [0, 0], sizes = [7, 8], strides = [1, 1]} : vector<7x32xf32> to vector<7x8xf32>
    %205 = arith.truncf %204 : vector<7x8xf32> to vector<7x8xbf16>
    %cst_73 = arith.constant dense<0.000000e+00> : vector<11x7xf32>
    %206 = tpu.matmul %201, %203, %cst_73 {dimension_numbers = #tpu.dot_dimension_numbers<[1], [1], [0], [0], [0, 0, 1, 0], [], []>} : vector<11x8xbf16>, vector<7x8xbf16>, vector<11x7xf32> -> vector<11x7xf32>
    %cst_74 = arith.constant 0.353553385 : f32
    %207 = vector.broadcast %cst_74 : f32 to vector<11x7xf32>
    %208 = arith.mulf %206, %207 : vector<11x7xf32>
    %209 = vector.broadcast %10 : vector<1x7xf32> to vector<11x7xf32>
    %210 = arith.addf %208, %209 : vector<11x7xf32>
    %cst_75 = arith.constant dense<0xFF800000> : vector<11xf32>
    %211 = vector.multi_reduction <maximumf>, %210, %cst_75 [1] : vector<11x7xf32> to vector<11xf32>
    %212 = vector.shape_cast %211 : vector<11xf32> to vector<11x1xf32>
    %213 = vector.broadcast %212 : vector<11x1xf32> to vector<11x7xf32>
    %214 = arith.subf %210, %213 : vector<11x7xf32>
    %215 = math.exp %214 : vector<11x7xf32>
    %cst_76 = arith.constant dense<0.000000e+00> : vector<11xf32>
    %216 = vector.multi_reduction <add>, %215, %cst_76 [1] : vector<11x7xf32> to vector<11xf32>
    %217 = vector.shape_cast %216 : vector<11xf32> to vector<11x1xf32>
    %218 = tpu.reciprocal %217 {approx = true} : vector<11x1xf32> -> vector<11x1xf32>
    %219 = vector.broadcast %218 : vector<11x1xf32> to vector<11x7xf32>
    %220 = arith.mulf %215, %219 : vector<11x7xf32>
    %221 = arith.truncf %220 : vector<11x7xf32> to vector<11x7xbf16>
    %cst_77 = arith.constant dense<0.000000e+00> : vector<11x8xf32>
    %222 = tpu.matmul %221, %205, %cst_77 {dimension_numbers = #tpu.dot_dimension_numbers<[1], [0], [0], [1], [0, 0, 1, 1], [], []>} : vector<11x7xbf16>, vector<7x8xbf16>, vector<11x8xf32> -> vector<11x8xf32>
    %223 = vector.extract_strided_slice %191 {offsets = [0, 8], sizes = [11, 8], strides = [1, 1]} : vector<11x32xf32> to vector<11x8xf32>
    %224 = arith.truncf %223 : vector<11x8xf32> to vector<11x8xbf16>
    %225 = vector.extract_strided_slice %198 {offsets = [0, 8], sizes = [7, 8], strides = [1, 1]} : vector<7x32xf32> to vector<7x8xf32>
    %226 = arith.truncf %225 : vector<7x8xf32> to vector<7x8xbf16>
    %227 = vector.extract_strided_slice %199 {offsets = [0, 8], sizes = [7, 8], strides = [1, 1]} : vector<7x32xf32> to vector<7x8xf32>
    %228 = arith.truncf %227 : vector<7x8xf32> to vector<7x8xbf16>
    %cst_78 = arith.constant dense<0.000000e+00> : vector<11x7xf32>
    %229 = tpu.matmul %224, %226, %cst_78 {dimension_numbers = #tpu.dot_dimension_numbers<[1], [1], [0], [0], [0, 0, 1, 0], [], []>} : vector<11x8xbf16>, vector<7x8xbf16>, vector<11x7xf32> -> vector<11x7xf32>
    %cst_79 = arith.constant 0.353553385 : f32
    %230 = vector.broadcast %cst_79 : f32 to vector<11x7xf32>
    %231 = arith.mulf %229, %230 : vector<11x7xf32>
    %232 = vector.broadcast %10 : vector<1x7xf32> to vector<11x7xf32>
    %233 = arith.addf %231, %232 : vector<11x7xf32>
    %cst_80 = arith.constant dense<0xFF800000> : vector<11xf32>
    %234 = vector.multi_reduction <maximumf>, %233, %cst_80 [1] : vector<11x7xf32> to vector<11xf32>
    %235 = vector.shape_cast %234 : vector<11xf32> to vector<11x1xf32>
    %236 = vector.broadcast %235 : vector<11x1xf32> to vector<11x7xf32>
    %237 = arith.subf %233, %236 : vector<11x7xf32>
    %238 = math.exp %237 : vector<11x7xf32>
    %cst_81 = arith.constant dense<0.000000e+00> : vector<11xf32>
    %239 = vector.multi_reduction <add>, %238, %cst_81 [1] : vector<11x7xf32> to vector<11xf32>
    %240 = vector.shape_cast %239 : vector<11xf32> to vector<11x1xf32>
    %241 = tpu.reciprocal %240 {approx = true} : vector<11x1xf32> -> vector<11x1xf32>
    %242 = vector.broadcast %241 : vector<11x1xf32> to vector<11x7xf32>
    %243 = arith.mulf %238, %242 : vector<11x7xf32>
    %244 = arith.truncf %243 : vector<11x7xf32> to vector<11x7xbf16>
    %cst_82 = arith.constant dense<0.000000e+00> : vector<11x8xf32>
    %245 = tpu.matmul %244, %228, %cst_82 {dimension_numbers = #tpu.dot_dimension_numbers<[1], [0], [0], [1], [0, 0, 1, 1], [], []>} : vector<11x7xbf16>, vector<7x8xbf16>, vector<11x8xf32> -> vector<11x8xf32>
    %246 = vector.extract_strided_slice %191 {offsets = [0, 16], sizes = [11, 8], strides = [1, 1]} : vector<11x32xf32> to vector<11x8xf32>
    %247 = arith.truncf %246 : vector<11x8xf32> to vector<11x8xbf16>
    %248 = vector.extract_strided_slice %198 {offsets = [0, 16], sizes = [7, 8], strides = [1, 1]} : vector<7x32xf32> to vector<7x8xf32>
    %249 = arith.truncf %248 : vector<7x8xf32> to vector<7x8xbf16>
    %250 = vector.extract_strided_slice %199 {offsets = [0, 16], sizes = [7, 8], strides = [1, 1]} : vector<7x32xf32> to vector<7x8xf32>
    %251 = arith.truncf %250 : vector<7x8xf32> to vector<7x8xbf16>
    %cst_83 = arith.constant dense<0.000000e+00> : vector<11x7xf32>
    %252 = tpu.matmul %247, %249, %cst_83 {dimension_numbers = #tpu.dot_dimension_numbers<[1], [1], [0], [0], [0, 0, 1, 0], [], []>} : vector<11x8xbf16>, vector<7x8xbf16>, vector<11x7xf32> -> vector<11x7xf32>
    %cst_84 = arith.constant 0.353553385 : f32
    %253 = vector.broadcast %cst_84 : f32 to vector<11x7xf32>
    %254 = arith.mulf %252, %253 : vector<11x7xf32>
    %255 = vector.broadcast %10 : vector<1x7xf32> to vector<11x7xf32>
    %256 = arith.addf %254, %255 : vector<11x7xf32>
    %cst_85 = arith.constant dense<0xFF800000> : vector<11xf32>
    %257 = vector.multi_reduction <maximumf>, %256, %cst_85 [1] : vector<11x7xf32> to vector<11xf32>
    %258 = vector.shape_cast %257 : vector<11xf32> to vector<11x1xf32>
    %259 = vector.broadcast %258 : vector<11x1xf32> to vector<11x7xf32>
    %260 = arith.subf %256, %259 : vector<11x7xf32>
    %261 = math.exp %260 : vector<11x7xf32>
    %cst_86 = arith.constant dense<0.000000e+00> : vector<11xf32>
    %262 = vector.multi_reduction <add>, %261, %cst_86 [1] : vector<11x7xf32> to vector<11xf32>
    %263 = vector.shape_cast %262 : vector<11xf32> to vector<11x1xf32>
    %264 = tpu.reciprocal %263 {approx = true} : vector<11x1xf32> -> vector<11x1xf32>
    %265 = vector.broadcast %264 : vector<11x1xf32> to vector<11x7xf32>
    %266 = arith.mulf %261, %265 : vector<11x7xf32>
    %267 = arith.truncf %266 : vector<11x7xf32> to vector<11x7xbf16>
    %cst_87 = arith.constant dense<0.000000e+00> : vector<11x8xf32>
    %268 = tpu.matmul %267, %251, %cst_87 {dimension_numbers = #tpu.dot_dimension_numbers<[1], [0], [0], [1], [0, 0, 1, 1], [], []>} : vector<11x7xbf16>, vector<7x8xbf16>, vector<11x8xf32> -> vector<11x8xf32>
    %269 = vector.extract_strided_slice %191 {offsets = [0, 24], sizes = [11, 8], strides = [1, 1]} : vector<11x32xf32> to vector<11x8xf32>
    %270 = arith.truncf %269 : vector<11x8xf32> to vector<11x8xbf16>
    %271 = vector.extract_strided_slice %198 {offsets = [0, 24], sizes = [7, 8], strides = [1, 1]} : vector<7x32xf32> to vector<7x8xf32>
    %272 = arith.truncf %271 : vector<7x8xf32> to vector<7x8xbf16>
    %273 = vector.extract_strided_slice %199 {offsets = [0, 24], sizes = [7, 8], strides = [1, 1]} : vector<7x32xf32> to vector<7x8xf32>
    %274 = arith.truncf %273 : vector<7x8xf32> to vector<7x8xbf16>
    %cst_88 = arith.constant dense<0.000000e+00> : vector<11x7xf32>
    %275 = tpu.matmul %270, %272, %cst_88 {dimension_numbers = #tpu.dot_dimension_numbers<[1], [1], [0], [0], [0, 0, 1, 0], [], []>} : vector<11x8xbf16>, vector<7x8xbf16>, vector<11x7xf32> -> vector<11x7xf32>
    %cst_89 = arith.constant 0.353553385 : f32
    %276 = vector.broadcast %cst_89 : f32 to vector<11x7xf32>
    %277 = arith.mulf %275, %276 : vector<11x7xf32>
    %278 = vector.broadcast %10 : vector<1x7xf32> to vector<11x7xf32>
    %279 = arith.addf %277, %278 : vector<11x7xf32>
    %cst_90 = arith.constant dense<0xFF800000> : vector<11xf32>
    %280 = vector.multi_reduction <maximumf>, %279, %cst_90 [1] : vector<11x7xf32> to vector<11xf32>
    %281 = vector.shape_cast %280 : vector<11xf32> to vector<11x1xf32>
    %282 = vector.broadcast %281 : vector<11x1xf32> to vector<11x7xf32>
    %283 = arith.subf %279, %282 : vector<11x7xf32>
    %284 = math.exp %283 : vector<11x7xf32>
    %cst_91 = arith.constant dense<0.000000e+00> : vector<11xf32>
    %285 = vector.multi_reduction <add>, %284, %cst_91 [1] : vector<11x7xf32> to vector<11xf32>
    %286 = vector.shape_cast %285 : vector<11xf32> to vector<11x1xf32>
    %287 = tpu.reciprocal %286 {approx = true} : vector<11x1xf32> -> vector<11x1xf32>
    %288 = vector.broadcast %287 : vector<11x1xf32> to vector<11x7xf32>
    %289 = arith.mulf %284, %288 : vector<11x7xf32>
    %290 = arith.truncf %289 : vector<11x7xf32> to vector<11x7xbf16>
    %cst_92 = arith.constant dense<0.000000e+00> : vector<11x8xf32>
    %291 = tpu.matmul %290, %274, %cst_92 {dimension_numbers = #tpu.dot_dimension_numbers<[1], [0], [0], [1], [0, 0, 1, 1], [], []>} : vector<11x7xbf16>, vector<7x8xbf16>, vector<11x8xf32> -> vector<11x8xf32>
    %292 = tpu.concatenate %222, %245, %268, %291 in 1 : vector<11x8xf32>, vector<11x8xf32>, vector<11x8xf32>, vector<11x8xf32> -> vector<11x32xf32>
    %293 = arith.truncf %292 : vector<11x32xf32> to vector<11x32xbf16>
    %cst_93 = arith.constant dense<0.000000e+00> : vector<11x32xf32>
    %294 = tpu.matmul %293, %183, %cst_93 {dimension_numbers = #tpu.dot_dimension_numbers<[1], [0], [0], [1], [0, 0, 1, 1], [], []>} : vector<11x32xbf16>, vector<32x32xbf16>, vector<11x32xf32> -> vector<11x32xf32>
    %295 = vector.broadcast %185 : vector<1x32xf32> to vector<11x32xf32>
    %296 = arith.addf %294, %295 : vector<11x32xf32>
    %297 = arith.addf %153, %296 : vector<11x32xf32>
    %298 = vector.extract_strided_slice %20 {offsets = [4, 0], sizes = [1, 32], strides = [1, 1]} : vector<6x32xf32> to vector<1x32xf32>
    %299 = vector.extract_strided_slice %20 {offsets = [5, 0], sizes = [1, 32], strides = [1, 1]} : vector<6x32xf32> to vector<1x32xf32>
    %cst_94 = arith.constant dense<0.000000e+00> : vector<11xf32>
    %300 = vector.multi_reduction <add>, %297, %cst_94 [1] : vector<11x32xf32> to vector<11xf32>
    %301 = vector.shape_cast %300 : vector<11xf32> to vector<11x1xf32>
    %cst_95 = arith.constant 3.200000e+01 : f32
    %302 = vector.broadcast %cst_95 : f32 to vector<11x1xf32>
    %303 = arith.divf %301, %302 : vector<11x1xf32>
    %304 = vector.broadcast %303 : vector<11x1xf32> to vector<11x32xf32>
    %305 = arith.subf %297, %304 : vector<11x32xf32>
    %306 = arith.mulf %305, %305 : vector<11x32xf32>
    %cst_96 = arith.constant dense<0.000000e+00> : vector<11xf32>
    %307 = vector.multi_reduction <add>, %306, %cst_96 [1] : vector<11x32xf32> to vector<11xf32>
    %308 = vector.shape_cast %307 : vector<11xf32> to vector<11x1xf32>
    %cst_97 = arith.constant 3.200000e+01 : f32
    %309 = vector.broadcast %cst_97 : f32 to vector<11x1xf32>
    %310 = arith.divf %308, %309 : vector<11x1xf32>
    %311 = vector.broadcast %303 : vector<11x1xf32> to vector<11x32xf32>
    %312 = arith.subf %297, %311 : vector<11x32xf32>
    %cst_98 = arith.constant 9.99999996E-13 : f32
    %313 = vector.broadcast %cst_98 : f32 to vector<11x1xf32>
    %314 = arith.addf %310, %313 : vector<11x1xf32>
    %315 = math.rsqrt %314 : vector<11x1xf32>
    %316 = vector.broadcast %315 : vector<11x1xf32> to vector<11x32xf32>
    %317 = arith.mulf %312, %316 : vector<11x32xf32>
    %318 = vector.broadcast %298 : vector<1x32xf32> to vector<11x32xf32>
    %319 = arith.mulf %317, %318 : vector<11x32xf32>
    %320 = vector.broadcast %299 : vector<1x32xf32> to vector<11x32xf32>
    %321 = arith.addf %319, %320 : vector<11x32xf32>
    %c0_99 = arith.constant 0 : index
    %c0_100 = arith.constant 0 : index
    %c0_101 = arith.constant 0 : index
    %322 = vector.load %arg15[%c0_99, %c0_100, %c0_101] : memref<1x32x64xbf16, #tpu.memory_space<vmem>>, vector<1x32x64xbf16>
    %323 = vector.shape_cast %322 : vector<1x32x64xbf16> to vector<32x64xbf16>
    %c0_102 = arith.constant 0 : index
    %c0_103 = arith.constant 0 : index
    %c0_104 = arith.constant 0 : index
    %324 = vector.load %arg16[%c0_102, %c0_103, %c0_104] : memref<1x1x64xf32, #tpu.memory_space<vmem>>, vector<1x1x64xf32>
    %325 = vector.shape_cast %324 : vector<1x1x64xf32> to vector<1x64xf32>
    %c0_105 = arith.constant 0 : index
    %c0_106 = arith.constant 0 : index
    %c0_107 = arith.constant 0 : index
    %326 = vector.load %arg17[%c0_105, %c0_106, %c0_107] : memref<1x64x32xbf16, #tpu.memory_space<vmem>>, vector<1x64x32xbf16>
    %327 = vector.shape_cast %326 : vector<1x64x32xbf16> to vector<64x32xbf16>
    %c0_108 = arith.constant 0 : index
    %c0_109 = arith.constant 0 : index
    %c0_110 = arith.constant 0 : index
    %328 = vector.load %arg18[%c0_108, %c0_109, %c0_110] : memref<1x1x32xf32, #tpu.memory_space<vmem>>, vector<1x1x32xf32>
    %329 = vector.shape_cast %328 : vector<1x1x32xf32> to vector<1x32xf32>
    %330 = arith.truncf %321 : vector<11x32xf32> to vector<11x32xbf16>
    %cst_111 = arith.constant dense<0.000000e+00> : vector<11x64xf32>
    %331 = tpu.matmul %330, %323, %cst_111 {dimension_numbers = #tpu.dot_dimension_numbers<[1], [0], [0], [1], [0, 0, 1, 1], [], []>} : vector<11x32xbf16>, vector<32x64xbf16>, vector<11x64xf32> -> vector<11x64xf32>
    %332 = vector.broadcast %325 : vector<1x64xf32> to vector<11x64xf32>
    %333 = arith.addf %331, %332 : vector<11x64xf32>
    %cst_112 = arith.constant 0.000000e+00 : f32
    %334 = vector.broadcast %cst_112 : f32 to vector<11x64xf32>
    %335 = arith.maximumf %333, %334 : vector<11x64xf32>
    %336 = arith.truncf %335 : vector<11x64xf32> to vector<11x64xbf16>
    %cst_113 = arith.constant dense<0.000000e+00> : vector<11x32xf32>
    %337 = tpu.matmul %336, %327, %cst_113 {dimension_numbers = #tpu.dot_dimension_numbers<[1], [0], [0], [1], [0, 0, 1, 1], [], []>} : vector<11x64xbf16>, vector<64x32xbf16>, vector<11x32xf32> -> vector<11x32xf32>
    %338 = vector.broadcast %329 : vector<1x32xf32> to vector<11x32xf32>
    %339 = arith.addf %337, %338 : vector<11x32xf32>
    %340 = arith.addf %297, %339 : vector<11x32xf32>
    %c0_114 = arith.constant 0 : index
    %c0_115 = arith.constant 0 : index
    %341 = vector.load %arg20[%c0_114, %c0_115] : memref<11x32xf32, #tpu.memory_space<vmem>>, vector<11x32xf32>
    tpu.vector_store %arg20[%c0_114, %c0_115], %340 {strides = array<i32>} : memref<11x32xf32, #tpu.memory_space<vmem>>, vector<11x32xf32>,
    %c1_i32 = arith.constant 1 : i32
    %342 = arith.cmpi eq, %arg1, %c1_i32 : i32
    %343 = arith.extui %342 : i1 to i32
    %c0_i32_116 = arith.constant 0 : i32
    %344 = arith.cmpi ne, %343, %c0_i32_116 : i32
    scf.if %344 {
      %345 = arith.truncf %340 : vector<11x32xf32> to vector<11x32xbf16>
      %c0_117 = arith.constant 0 : index
      %c0_118 = arith.constant 0 : index
      %c0_119 = arith.constant 0 : index
      %346 = vector.load %arg19[%c0_117, %c0_118, %c0_119] : memref<1x11x32xbf16, #tpu.memory_space<vmem>>, vector<1x11x32xbf16>
      %347 = vector.shape_cast %346 : vector<1x11x32xbf16> to vector<11x32xbf16>
      %348 = vector.shape_cast %345 : vector<11x32xbf16> to vector<1x11x32xbf16>
      tpu.vector_store %arg19[%c0_117, %c0_118, %c0_119], %348 {strides = array<i32>} : memref<1x11x32xbf16, #tpu.memory_space<vmem>>, vector<1x11x32xbf16>,
    } else {
    }
    return
  }
  func.func @transform_0(%arg0: i32, %arg1: i32) -> (i32, i32, i32) {
    %c0_i32 = arith.constant 0 : i32
    %c0_i32_0 = arith.constant 0 : i32
    %c0_i32_1 = arith.constant 0 : i32
    return %arg0, %c0_i32, %c0_i32_0 : i32, i32, i32
  }
  func.func @transform_1(%arg0: i32, %arg1: i32) -> (i32, i32, i32) {
    %c0_i32 = arith.constant 0 : i32
    %c0_i32_0 = arith.constant 0 : i32
    %c0_i32_1 = arith.constant 0 : i32
    return %arg0, %c0_i32, %c0_i32_0 : i32, i32, i32
  }
  func.func @transform_2(%arg0: i32, %arg1: i32) -> (i32, i32, i32) {
    %c0_i32 = arith.constant 0 : i32
    %c0_i32_0 = arith.constant 0 : i32
    %c0_i32_1 = arith.constant 0 : i32
    return %arg0, %c0_i32, %c0_i32_0 : i32, i32, i32
  }
  func.func @transform_3(%arg0: i32, %arg1: i32) -> (i32, i32, i32) {
    %c0_i32 = arith.constant 0 : i32
    %c0_i32_0 = arith.constant 0 : i32
    %c0_i32_1 = arith.constant 0 : i32
    return %arg0, %c0_i32, %c0_i32_0 : i32, i32, i32
  }
  func.func @transform_4(%arg0: i32, %arg1: i32) -> (i32, i32, i32) {
    %c0_i32 = arith.constant 0 : i32
    %c0_i32_0 = arith.constant 0 : i32
    %c0_i32_1 = arith.constant 0 : i32
    return %arg1, %c0_i32, %c0_i32_0 : i32, i32, i32
  }
  func.func @transform_5(%arg0: i32, %arg1: i32) -> (i32, i32, i32) {
    %c0_i32 = arith.constant 0 : i32
    %c0_i32_0 = arith.constant 0 : i32
    %c0_i32_1 = arith.constant 0 : i32
    return %arg1, %c0_i32, %c0_i32_0 : i32, i32, i32
  }
  func.func @transform_6(%arg0: i32, %arg1: i32) -> (i32, i32, i32) {
    %c0_i32 = arith.constant 0 : i32
    %c0_i32_0 = arith.constant 0 : i32
    %c0_i32_1 = arith.constant 0 : i32
    return %arg1, %c0_i32, %c0_i32_0 : i32, i32, i32
  }
  func.func @transform_7(%arg0: i32, %arg1: i32) -> (i32, i32, i32) {
    %c0_i32 = arith.constant 0 : i32
    %c0_i32_0 = arith.constant 0 : i32
    %c0_i32_1 = arith.constant 0 : i32
    return %arg1, %c0_i32, %c0_i32_0 : i32, i32, i32
  }
  func.func @transform_8(%arg0: i32, %arg1: i32) -> (i32, i32, i32) {
    %c0_i32 = arith.constant 0 : i32
    %c0_i32_0 = arith.constant 0 : i32
    %c0_i32_1 = arith.constant 0 : i32
    return %arg1, %c0_i32, %c0_i32_0 : i32, i32, i32
  }
  func.func @transform_9(%arg0: i32, %arg1: i32) -> (i32, i32, i32) {
    %c0_i32 = arith.constant 0 : i32
    %c0_i32_0 = arith.constant 0 : i32
    %c0_i32_1 = arith.constant 0 : i32
    return %arg1, %c0_i32, %c0_i32_0 : i32, i32, i32
  }
  func.func @transform_10(%arg0: i32, %arg1: i32) -> (i32, i32, i32) {
    %c0_i32 = arith.constant 0 : i32
    %c0_i32_0 = arith.constant 0 : i32
    %c0_i32_1 = arith.constant 0 : i32
    return %arg1, %c0_i32, %c0_i32_0 : i32, i32, i32
  }
  func.func @transform_11(%arg0: i32, %arg1: i32) -> (i32, i32, i32) {
    %c0_i32 = arith.constant 0 : i32
    %c0_i32_0 = arith.constant 0 : i32
    %c0_i32_1 = arith.constant 0 : i32
    return %arg1, %c0_i32, %c0_i32_0 : i32, i32, i32
  }
  func.func @transform_12(%arg0: i32, %arg1: i32) -> (i32, i32, i32) {
    %c0_i32 = arith.constant 0 : i32
    %c0_i32_0 = arith.constant 0 : i32
    %c0_i32_1 = arith.constant 0 : i32
    return %arg1, %c0_i32, %c0_i32_0 : i32, i32, i32
  }
  func.func @transform_13(%arg0: i32, %arg1: i32) -> (i32, i32, i32) {
    %c0_i32 = arith.constant 0 : i32
    %c0_i32_0 = arith.constant 0 : i32
    %c0_i32_1 = arith.constant 0 : i32
    return %arg1, %c0_i32, %c0_i32_0 : i32, i32, i32
  }
  func.func @transform_14(%arg0: i32, %arg1: i32) -> (i32, i32, i32) {
    %c0_i32 = arith.constant 0 : i32
    %c0_i32_0 = arith.constant 0 : i32
    %c0_i32_1 = arith.constant 0 : i32
    return %arg1, %c0_i32, %c0_i32_0 : i32, i32, i32
  }
  func.func @transform_15(%arg0: i32, %arg1: i32) -> (i32, i32, i32) {
    %c0_i32 = arith.constant 0 : i32
    %c0_i32_0 = arith.constant 0 : i32
    %c0_i32_1 = arith.constant 0 : i32
    return %arg1, %c0_i32, %c0_i32_0 : i32, i32, i32
  }
  func.func @transform_16(%arg0: i32, %arg1: i32) -> (i32, i32, i32) {
    %c0_i32 = arith.constant 0 : i32
    %c0_i32_0 = arith.constant 0 : i32
    %c0_i32_1 = arith.constant 0 : i32
    return %arg1, %c0_i32, %c0_i32_0 : i32, i32, i32
  }
  func.func @transform_17(%arg0: i32, %arg1: i32) -> (i32, i32, i32) {
    %c0_i32 = arith.constant 0 : i32
    %c0_i32_0 = arith.constant 0 : i32
    %c0_i32_1 = arith.constant 0 : i32
    return %arg0, %c0_i32, %c0_i32_0 : i32, i32, i32
  }
}

</mosaic_0001>

<llo_original>
// kernel: forward.7
$region0: #{forward.7}
  #allocation0 [shape = 'u32[]', space=smem, size = 0x4, offset = 0x4, fixed_abs, tag = 'smem constant byte address 0x4 - core index']
  #allocation1 [shape = 'u32[144,128]{1,0:T(1,128)}', space=vmem, size = 0x12000, scoped, tag = 'internal scratch']
  %s0 = inlined_call_operand.vmem [shape: f32[270,9], index: 0, kind: input, shape index: {}]
  %s1 = inlined_call_operand.vmem [shape: bf16[9,32], index: 1, kind: input, shape index: {}]
  %s2 = inlined_call_operand.vmem [shape: f32[1,32], index: 2, kind: input, shape index: {}]
  %s3 = inlined_call_operand.vmem [shape: f32[270,32], index: 3, kind: output, shape index: {}]
  %s4 = sld [smem:[#allocation0]]
  $region22: #{forward.7} parent=0
    _
  %s6 = ssub.s32 1, %s4
  %s7 = scalar_select 0, %s6, %s4
  // Predicated region
  $region2: #{forward.7} parent=0 // pred_check
    _
  $region3: #{forward.7} parent=0 // pred_check_branch
    %9 = sbr.rel (0) target = $region5
  $region4: #{forward.7} parent=0 // pred_region
    _
  $region5: #{forward.7} parent=0 // pred_fallthru
    _
  // Predicated region
  $region6: #{forward.7} parent=0 // pred_check
    _
  $region7: #{forward.7} parent=0 // pred_check_branch
    %11 = sbr.rel (0) target = $region9
  $region8: #{forward.7} parent=0 // pred_region
    _
  $region9: #{forward.7} parent=0 // pred_fallthru
    _
  // Predicated region
  $region10: #{forward.7} parent=0 // pred_check
    _
  $region11: #{forward.7} parent=0 // pred_check_branch
    %13 = sbr.rel (0) target = $region13
  $region12: #{forward.7} parent=0 // pred_region
    _
  $region13: #{forward.7} parent=0 // pred_fallthru
    _
  %v15 = vld [vmem:[%s0] sm:$0xff]
  %v16 = vld [vmem:[%s0 + $0x8] sm:$0xff]
  %v17 = vld [vmem:[%s0 + $0x10] sm:$0xff]
  %v18 = vld [vmem:[%s0 + $0x18] sm:$0xff]
  %v19 = vld [vmem:[%s0 + $0x20] sm:$0xff]
  %v20 = vld [vmem:[%s0 + $0x28] sm:$0xff]
  %v21 = vld [vmem:[%s0 + $0x30] sm:$0xff]
  %v22 = vld [vmem:[%s0 + $0x38] sm:$0xff]
  %v23 = vld [vmem:[%s0 + $0x40] sm:$0xff]
  %v24 = vld [vmem:[%s0 + $0x48] sm:$0xff]
  %v25 = vld [vmem:[%s0 + $0x50] sm:$0xff]
  %v26 = vld [vmem:[%s0 + $0x58] sm:$0xff]
  %v27 = vld [vmem:[%s0 + $0x60] sm:$0xff]
  %v28 = vld [vmem:[%s0 + $0x68] sm:$0xff]
  %v29 = vld [vmem:[%s0 + $0x70] sm:$0xff]
  %v30 = vld [vmem:[%s0 + $0x78] sm:$0xff]
  %v31 = vld [vmem:[%s0 + $0x80] sm:$0xff]
  %v32 = vld [vmem:[%s0 + $0x88] sm:$0xff]
  %v33 = vld [vmem:[%s0 + $0x90] sm:$0xff]
  %v34 = vld [vmem:[%s0 + $0x98] sm:$0xff]
  %v35 = vld [vmem:[%s0 + $0xa0] sm:$0xff]
  %v36 = vld [vmem:[%s0 + $0xa8] sm:$0xff]
  %v37 = vld [vmem:[%s0 + $0xb0] sm:$0xff]
  %v38 = vld [vmem:[%s0 + $0xb8] sm:$0xff]
  %v39 = vld [vmem:[%s0 + $0xc0] sm:$0xff]
  %v40 = vld [vmem:[%s0 + $0xc8] sm:$0xff]
  %v41 = vld [vmem:[%s0 + $0xd0] sm:$0xff]
  %v42 = vld [vmem:[%s0 + $0xd8] sm:$0xff]
  %v43 = vld [vmem:[%s0 + $0xe0] sm:$0xff]
  %v44 = vld [vmem:[%s0 + $0xe8] sm:$0xff]
  %v45 = vld [vmem:[%s0 + $0xf0] sm:$0xff]
  %v46 = vld [vmem:[%s0 + $0xf8] sm:$0xff]
  %v47 = vld [vmem:[%s0 + $0x100] sm:$0xff]
  %v48 = vld [vmem:[%s0 + $0x108] sm:$0x3f]
  %v49 = vpack.c.bf16 %v16, %v15
  %v50 = vpack.c.bf16 %v18, %v17
  %v51 = vpack.c.bf16 %v20, %v19
  %v52 = vpack.c.bf16 %v22, %v21
  %v53 = vpack.c.bf16 %v24, %v23
  %v54 = vpack.c.bf16 %v26, %v25
  %v55 = vpack.c.bf16 %v28, %v27
  %v56 = vpack.c.bf16 %v30, %v29
  %v57 = vpack.c.bf16 %v32, %v31
  %v58 = vpack.c.bf16 %v34, %v33
  %v59 = vpack.c.bf16 %v36, %v35
  %v60 = vpack.c.bf16 %v38, %v37
  %v61 = vpack.c.bf16 %v40, %v39
  %v62 = vpack.c.bf16 %v42, %v41
  %v63 = vpack.c.bf16 %v44, %v43
  %v64 = vpack.c.bf16 %v46, %v45
  %v65 = vpack.c.bf16 %v48, %v47
  %v66 = vld [vmem:[%s1] sm:$0xf]
  %v67 = vld [vmem:[%s1 + $0x4] sm:$0x1]
  %v68 = vld [vmem:[%s2] sm:$0x1]
  %v70 = vlaneseq
  %v71 = vshrl.u32 %v70, 7
  %v72 = vsub.s32 0, %v71
  %v73 = vrot.slane %v68, %v72
  %v77 = vunpack.c.l.b16 %v66
  %v78 = vunpack.c.l.b16 %v67
  %v79 = vpack.c.b16 %v78, %v77
  %vm80 = vcmask 72704
  %v82 = vsel %vm80, %v49, 0
  %v85 = vsel %vm80, %v50, 0
  %v88 = vsel %vm80, %v51, 0
  %v91 = vsel %vm80, %v52, 0
  %v94 = vsel %vm80, %v53, 0
  %v97 = vsel %vm80, %v54, 0
  %v100 = vsel %vm80, %v55, 0
  %v103 = vsel %vm80, %v56, 0
  %v106 = vsel %vm80, %v57, 0
  %v109 = vsel %vm80, %v58, 0
  %v112 = vsel %vm80, %v59, 0
  %v115 = vsel %vm80, %v60, 0
  %v118 = vsel %vm80, %v61, 0
  %v121 = vsel %vm80, %v62, 0
  %v124 = vsel %vm80, %v63, 0
  %v127 = vsel %vm80, %v64, 0
  %v130 = vsel %vm80, %v65, 0
  %vm132 = vcmask 1043456
  %vm133 = vcmask 1044480
  %v134 = vsel %vm132, 4294967295, 65535
  %v135 = vsel %vm133, %v134, 0
  %v137 = vand.u32 %v79, %v135
  %139 = vmatprep.subr.bf16.mxu0 0
  %140 = vmatpush1.bf16.msra.mxu0 0
  %141 = vmatprep.subr.bf16.mxu0 0
  %142 = vmatpush1.bf16.msra.mxu0 0
  %143 = vmatprep.subr.bf16.mxu0 0
  %144 = vmatpush1.bf16.msra.mxu0 0
  %145 = vmatprep.subr.bf16.mxu0 0
  %146 = vmatpush1.bf16.msra.mxu0 0
  %147 = vmatprep.subr.bf16.mxu0 0
  %148 = vmatpush1.bf16.msra.mxu0 0
  %149 = vmatprep.subr.bf16.mxu0 0
  %150 = vmatpush1.bf16.msra.mxu0 0
  %151 = vmatprep.subr.bf16.mxu0 0
  %152 = vmatpush1.bf16.msra.mxu0 0
  %153 = vmatprep.subr.bf16.mxu0 0
  %154 = vmatpush1.bf16.msra.mxu0 %v137
  %155 = vmatprep.subr.bf16.mxu0 0
  %156 = vmatpush2.bf16.msra.mxu0 0
  %157 = vmatprep.subr.bf16.mxu0 0
  %158 = vmatpush2.bf16.msra.mxu0 0
  %159 = vmatprep.subr.bf16.mxu0 0
  %160 = vmatpush2.bf16.msra.mxu0 0
  %161 = vmatprep.subr.bf16.mxu0 0
  %162 = vmatpush2.bf16.msra.mxu0 0
  %163 = vmatprep.subr.bf16.mxu0 0
  %164 = vmatpush2.bf16.msra.mxu0 0
  %165 = vmatprep.subr.bf16.mxu0 0
  %166 = vmatpush2.bf16.msra.mxu0 0
  %167 = vmatprep.subr.bf16.mxu0 0
  %168 = vmatpush2.bf16.msra.mxu0 0
  %169 = vmatprep.subr.bf16.mxu0 0
  %170 = vmatpush2.bf16.msra.mxu0 0
  %171 = vmatprep.mubr.bf16.mxu0 0
  %172 = vmatmul.mubr.bf16.gmra.mxu0 %v82
  %v173 = vpop.f32.mrf.mxu0
  %v174 = vadd.f32 %v73, %v173
  %v175 = vpop.f32.mrf.mxu0
  %v176 = vpop.f32.mrf.mxu0
  %v177 = vadd.f32 %v73, %v176
  %v178 = vpop.f32.mrf.mxu0
  %179 = vmatprep.mubr.bf16.mxu0 0
  %180 = vmatmul.mubr.bf16.gmra.mxu0 %v85
  %v181 = vpop.f32.mrf.mxu0
  %v182 = vadd.f32 %v73, %v181
  %v183 = vpop.f32.mrf.mxu0
  %v184 = vpop.f32.mrf.mxu0
  %v185 = vadd.f32 %v73, %v184
  %v186 = vpop.f32.mrf.mxu0
  %187 = vmatprep.mubr.bf16.mxu0 0
  %188 = vmatmul.mubr.bf16.gmra.mxu0 %v88
  %v189 = vpop.f32.mrf.mxu0
  %v190 = vadd.f32 %v73, %v189
  %v191 = vpop.f32.mrf.mxu0
  %v192 = vpop.f32.mrf.mxu0
  %v193 = vadd.f32 %v73, %v192
  %v194 = vpop.f32.mrf.mxu0
  %195 = vmatprep.mubr.bf16.mxu0 0
  %196 = vmatmul.mubr.bf16.gmra.mxu0 %v91
  %v197 = vpop.f32.mrf.mxu0
  %v198 = vadd.f32 %v73, %v197
  %v199 = vpop.f32.mrf.mxu0
  %v200 = vpop.f32.mrf.mxu0
  %v201 = vadd.f32 %v73, %v200
  %v202 = vpop.f32.mrf.mxu0
  %203 = vmatprep.mubr.bf16.mxu0 0
  %204 = vmatmul.mubr.bf16.gmra.mxu0 %v94
  %v205 = vpop.f32.mrf.mxu0
  %v206 = vadd.f32 %v73, %v205
  %v207 = vpop.f32.mrf.mxu0
  %v208 = vpop.f32.mrf.mxu0
  %v209 = vadd.f32 %v73, %v208
  %v210 = vpop.f32.mrf.mxu0
  %211 = vmatprep.mubr.bf16.mxu0 0
  %212 = vmatmul.mubr.bf16.gmra.mxu0 %v97
  %v213 = vpop.f32.mrf.mxu0
  %v214 = vadd.f32 %v73, %v213
  %v215 = vpop.f32.mrf.mxu0
  %v216 = vpop.f32.mrf.mxu0
  %v217 = vadd.f32 %v73, %v216
  %v218 = vpop.f32.mrf.mxu0
  %219 = vmatprep.mubr.bf16.mxu0 0
  %220 = vmatmul.mubr.bf16.gmra.mxu0 %v100
  %v221 = vpop.f32.mrf.mxu0
  %v222 = vadd.f32 %v73, %v221
  %v223 = vpop.f32.mrf.mxu0
  %v224 = vpop.f32.mrf.mxu0
  %v225 = vadd.f32 %v73, %v224
  %v226 = vpop.f32.mrf.mxu0
  %227 = vmatprep.mubr.bf16.mxu0 0
  %228 = vmatmul.mubr.bf16.gmra.mxu0 %v103
  %v229 = vpop.f32.mrf.mxu0
  %v230 = vadd.f32 %v73, %v229
  %v231 = vpop.f32.mrf.mxu0
  %v232 = vpop.f32.mrf.mxu0
  %v233 = vadd.f32 %v73, %v232
  %v234 = vpop.f32.mrf.mxu0
  %235 = vmatprep.mubr.bf16.mxu0 0
  %236 = vmatmul.mubr.bf16.gmra.mxu0 %v106
  %v237 = vpop.f32.mrf.mxu0
  %v238 = vadd.f32 %v73, %v237
  %v239 = vpop.f32.mrf.mxu0
  %v240 = vpop.f32.mrf.mxu0
  %v241 = vadd.f32 %v73, %v240
  %v242 = vpop.f32.mrf.mxu0
  %243 = vmatprep.mubr.bf16.mxu0 0
  %244 = vmatmul.mubr.bf16.gmra.mxu0 %v109
  %v245 = vpop.f32.mrf.mxu0
  %v246 = vadd.f32 %v73, %v245
  %v247 = vpop.f32.mrf.mxu0
  %v248 = vpop.f32.mrf.mxu0
  %v249 = vadd.f32 %v73, %v248
  %v250 = vpop.f32.mrf.mxu0
  %251 = vmatprep.mubr.bf16.mxu0 0
  %252 = vmatmul.mubr.bf16.gmra.mxu0 %v112
  %v253 = vpop.f32.mrf.mxu0
  %v254 = vadd.f32 %v73, %v253
  %v255 = vpop.f32.mrf.mxu0
  %v256 = vpop.f32.mrf.mxu0
  %v257 = vadd.f32 %v73, %v256
  %v258 = vpop.f32.mrf.mxu0
  %259 = vmatprep.mubr.bf16.mxu0 0
  %260 = vmatmul.mubr.bf16.gmra.mxu0 %v115
  %v261 = vpop.f32.mrf.mxu0
  %v262 = vadd.f32 %v73, %v261
  %v263 = vpop.f32.mrf.mxu0
  %v264 = vpop.f32.mrf.mxu0
  %v265 = vadd.f32 %v73, %v264
  %v266 = vpop.f32.mrf.mxu0
  %267 = vmatprep.mubr.bf16.mxu0 0
  %268 = vmatmul.mubr.bf16.gmra.mxu0 %v118
  %v269 = vpop.f32.mrf.mxu0
  %v270 = vadd.f32 %v73, %v269
  %v271 = vpop.f32.mrf.mxu0
  %v272 = vpop.f32.mrf.mxu0
  %v273 = vadd.f32 %v73, %v272
  %v274 = vpop.f32.mrf.mxu0
  %275 = vmatprep.mubr.bf16.mxu0 0
  %276 = vmatmul.mubr.bf16.gmra.mxu0 %v121
  %v277 = vpop.f32.mrf.mxu0
  %v278 = vadd.f32 %v73, %v277
  %v279 = vpop.f32.mrf.mxu0
  %v280 = vpop.f32.mrf.mxu0
  %v281 = vadd.f32 %v73, %v280
  %v282 = vpop.f32.mrf.mxu0
  %283 = vmatprep.mubr.bf16.mxu0 0
  %284 = vmatmul.mubr.bf16.gmra.mxu0 %v124
  %v285 = vpop.f32.mrf.mxu0
  %v286 = vadd.f32 %v73, %v285
  %v287 = vpop.f32.mrf.mxu0
  %v288 = vpop.f32.mrf.mxu0
  %v289 = vadd.f32 %v73, %v288
  %v290 = vpop.f32.mrf.mxu0
  %291 = vmatprep.mubr.bf16.mxu0 0
  %292 = vmatmul.mubr.bf16.gmra.mxu0 %v127
  %v293 = vpop.f32.mrf.mxu0
  %v294 = vadd.f32 %v73, %v293
  %v295 = vpop.f32.mrf.mxu0
  %v296 = vpop.f32.mrf.mxu0
  %v297 = vadd.f32 %v73, %v296
  %v298 = vpop.f32.mrf.mxu0
  %299 = vmatprep.mubr.bf16.mxu0 0
  %300 = vmatmul.mubr.bf16.gmra.mxu0 %v130
  %v301 = vpop.f32.mrf.mxu0
  %v302 = vadd.f32 %v73, %v301
  %v303 = vpop.f32.mrf.mxu0
  %v304 = vpop.f32.mrf.mxu0
  %v305 = vadd.f32 %v73, %v304
  %v306 = vpop.f32.mrf.mxu0
  %307 = vdwg.mxu0
  %v308 = vmax.f32 %v174, 0.0
  %v309 = vmax.f32 %v177, 0.0
  %v310 = vmax.f32 %v182, 0.0
  %v311 = vmax.f32 %v185, 0.0
  %v312 = vmax.f32 %v190, 0.0
  %v313 = vmax.f32 %v193, 0.0
  %v314 = vmax.f32 %v198, 0.0
  %v315 = vmax.f32 %v201, 0.0
  %v316 = vmax.f32 %v206, 0.0
  %v317 = vmax.f32 %v209, 0.0
  %v318 = vmax.f32 %v214, 0.0
  %v319 = vmax.f32 %v217, 0.0
  %v320 = vmax.f32 %v222, 0.0
  %v321 = vmax.f32 %v225, 0.0
  %v322 = vmax.f32 %v230, 0.0
  %v323 = vmax.f32 %v233, 0.0
  %v324 = vmax.f32 %v238, 0.0
  %v325 = vmax.f32 %v241, 0.0
  %v326 = vmax.f32 %v246, 0.0
  %v327 = vmax.f32 %v249, 0.0
  %v328 = vmax.f32 %v254, 0.0
  %v329 = vmax.f32 %v257, 0.0
  %v330 = vmax.f32 %v262, 0.0
  %v331 = vmax.f32 %v265, 0.0
  %v332 = vmax.f32 %v270, 0.0
  %v333 = vmax.f32 %v273, 0.0
  %v334 = vmax.f32 %v278, 0.0
  %v335 = vmax.f32 %v281, 0.0
  %v336 = vmax.f32 %v286, 0.0
  %v337 = vmax.f32 %v289, 0.0
  %v338 = vmax.f32 %v294, 0.0
  %v339 = vmax.f32 %v297, 0.0
  %v340 = vmax.f32 %v302, 0.0
  %v341 = vmax.f32 %v305, 0.0
  %vm342 = vcmask 261120
  %343 = vst.msk [vmem:[%s3] sm:$0xff] %vm342, %v308
  %344 = vst.msk [vmem:[%s3 + $0x8] sm:$0xff] %vm342, %v309
  %345 = vst.msk [vmem:[%s3 + $0x10] sm:$0xff] %vm342, %v310
  %346 = vst.msk [vmem:[%s3 + $0x18] sm:$0xff] %vm342, %v311
  %347 = vst.msk [vmem:[%s3 + $0x20] sm:$0xff] %vm342, %v312
  %348 = vst.msk [vmem:[%s3 + $0x28] sm:$0xff] %vm342, %v313
  %349 = vst.msk [vmem:[%s3 + $0x30] sm:$0xff] %vm342, %v314
  %350 = vst.msk [vmem:[%s3 + $0x38] sm:$0xff] %vm342, %v315
  %351 = vst.msk [vmem:[%s3 + $0x40] sm:$0xff] %vm342, %v316
  %352 = vst.msk [vmem:[%s3 + $0x48] sm:$0xff] %vm342, %v317
  %353 = vst.msk [vmem:[%s3 + $0x50] sm:$0xff] %vm342, %v318
  %354 = vst.msk [vmem:[%s3 + $0x58] sm:$0xff] %vm342, %v319
  %355 = vst.msk [vmem:[%s3 + $0x60] sm:$0xff] %vm342, %v320
  %356 = vst.msk [vmem:[%s3 + $0x68] sm:$0xff] %vm342, %v321
  %357 = vst.msk [vmem:[%s3 + $0x70] sm:$0xff] %vm342, %v322
  %358 = vst.msk [vmem:[%s3 + $0x78] sm:$0xff] %vm342, %v323
  %359 = vst.msk [vmem:[%s3 + $0x80] sm:$0xff] %vm342, %v324
  %360 = vst.msk [vmem:[%s3 + $0x88] sm:$0xff] %vm342, %v325
  %361 = vst.msk [vmem:[%s3 + $0x90] sm:$0xff] %vm342, %v326
  %362 = vst.msk [vmem:[%s3 + $0x98] sm:$0xff] %vm342, %v327
  %363 = vst.msk [vmem:[%s3 + $0xa0] sm:$0xff] %vm342, %v328
  %364 = vst.msk [vmem:[%s3 + $0xa8] sm:$0xff] %vm342, %v329
  %365 = vst.msk [vmem:[%s3 + $0xb0] sm:$0xff] %vm342, %v330
  %366 = vst.msk [vmem:[%s3 + $0xb8] sm:$0xff] %vm342, %v331
  %367 = vst.msk [vmem:[%s3 + $0xc0] sm:$0xff] %vm342, %v332
  %368 = vst.msk [vmem:[%s3 + $0xc8] sm:$0xff] %vm342, %v333
  %369 = vst.msk [vmem:[%s3 + $0xd0] sm:$0xff] %vm342, %v334
  %370 = vst.msk [vmem:[%s3 + $0xd8] sm:$0xff] %vm342, %v335
  %371 = vst.msk [vmem:[%s3 + $0xe0] sm:$0xff] %vm342, %v336
  %372 = vst.msk [vmem:[%s3 + $0xe8] sm:$0xff] %vm342, %v337
  %373 = vst.msk [vmem:[%s3 + $0xf0] sm:$0xff] %vm342, %v338
  %374 = vst.msk [vmem:[%s3 + $0xf8] sm:$0xff] %vm342, %v339
  %375 = vst.msk [vmem:[%s3 + $0x100] sm:$0xff] %vm342, %v340
  %vm376 = vcmask 259072
  %377 = vst.msk [vmem:[%s3 + $0x108] sm:$0x3f] %vm376, %v341
  // Predicated region
  $region14: #{forward.7} parent=0 // pred_check
    _
  $region15: #{forward.7} parent=0 // pred_check_branch
    %379 = sbr.rel (0) target = $region17
  $region16: #{forward.7} parent=0 // pred_region
    _
  $region17: #{forward.7} parent=0 // pred_fallthru
    _
  // Predicated region
  $region18: #{forward.7} parent=0 // pred_check
    _
  $region19: #{forward.7} parent=0 // pred_check_branch
    %381 = sbr.rel (0) target = $region21
  $region20: #{forward.7} parent=0 // pred_region
    _
  $region21: #{forward.7} parent=0 // pred_fallthru
    _

// kernel: forward.8
$region0: #{forward.8}
  #allocation0 [shape = 'u32[]', space=smem, size = 0x4, offset = 0x4, fixed_abs, tag = 'smem constant byte address 0x4 - core index']
  #allocation1 [shape = 'u32[144,128]{1,0:T(1,128)}', space=vmem, size = 0x12000, scoped, tag = 'internal scratch']
  %s0 = inlined_call_operand.vmem [shape: f32[56,288], index: 0, kind: input, shape index: {}]
  %s1 = inlined_call_operand.vmem [shape: bf16[288,32], index: 1, kind: input, shape index: {}]
  %s2 = inlined_call_operand.vmem [shape: f32[1,32], index: 2, kind: input, shape index: {}]
  %s3 = inlined_call_operand.vmem [shape: f32[56,32], index: 3, kind: output, shape index: {}]
  %s4 = sld [smem:[#allocation0]]
  $region22: #{forward.8} parent=0
    _
  %s6 = ssub.s32 1, %s4
  %s7 = scalar_select 0, %s6, %s4
  // Predicated region
  $region2: #{forward.8} parent=0 // pred_check
    _
  $region3: #{forward.8} parent=0 // pred_check_branch
    %9 = sbr.rel (0) target = $region5
  $region4: #{forward.8} parent=0 // pred_region
    _
  $region5: #{forward.8} parent=0 // pred_fallthru
    _
  // Predicated region
  $region6: #{forward.8} parent=0 // pred_check
    _
  $region7: #{forward.8} parent=0 // pred_check_branch
    %11 = sbr.rel (0) target = $region9
  $region8: #{forward.8} parent=0 // pred_region
    _
  $region9: #{forward.8} parent=0 // pred_fallthru
    _
  // Predicated region
  $region10: #{forward.8} parent=0 // pred_check
    _
  $region11: #{forward.8} parent=0 // pred_check_branch
    %13 = sbr.rel (0) target = $region13
  $region12: #{forward.8} parent=0 // pred_region
    _
  $region13: #{forward.8} parent=0 // pred_fallthru
    _
  %v15 = vld [vmem:[%s0] sm:$0xff]
  %v16 = vld [vmem:[%s0 + $0x8] sm:$0xff]
  %v17 = vld [vmem:[%s0 + $0x10] sm:$0xff]
  %v18 = vld [vmem:[%s0 + $0x18] sm:$0xff]
  %v19 = vld [vmem:[%s0 + $0x20] sm:$0xff]
  %v20 = vld [vmem:[%s0 + $0x28] sm:$0xff]
  %v21 = vld [vmem:[%s0 + $0x30] sm:$0xff]
  %v22 = vld [vmem:[%s0 + $0x38] sm:$0xff]
  %v23 = vld [vmem:[%s0 + $0x40] sm:$0xff]
  %v24 = vld [vmem:[%s0 + $0x48] sm:$0xff]
  %v25 = vld [vmem:[%s0 + $0x50] sm:$0xff]
  %v26 = vld [vmem:[%s0 + $0x58] sm:$0xff]
  %v27 = vld [vmem:[%s0 + $0x60] sm:$0xff]
  %v28 = vld [vmem:[%s0 + $0x68] sm:$0xff]
  %v29 = vld [vmem:[%s0 + $0x70] sm:$0xff]
  %v30 = vld [vmem:[%s0 + $0x78] sm:$0xff]
  %v31 = vld [vmem:[%s0 + $0x80] sm:$0xff]
  %v32 = vld [vmem:[%s0 + $0x88] sm:$0xff]
  %v33 = vld [vmem:[%s0 + $0x90] sm:$0xff]
  %v34 = vld [vmem:[%s0 + $0x98] sm:$0xff]
  %v35 = vld [vmem:[%s0 + $0xa0] sm:$0xff]
  %v36 = vpack.c.bf16 %v18, %v15
  %v37 = vpack.c.bf16 %v19, %v16
  %v38 = vpack.c.bf16 %v20, %v17
  %v39 = vpack.c.bf16 %v24, %v21
  %v40 = vpack.c.bf16 %v25, %v22
  %v41 = vpack.c.bf16 %v26, %v23
  %v42 = vpack.c.bf16 %v30, %v27
  %v43 = vpack.c.bf16 %v31, %v28
  %v44 = vpack.c.bf16 %v32, %v29
  %v45 = vpack.c.bf16 %v33, %v33
  %v46 = vpack.c.bf16 %v34, %v34
  %v47 = vpack.c.bf16 %v35, %v35
  %v48 = vld [vmem:[%s1] sm:$0xf]
  %v49 = vld [vmem:[%s1 + $0x4] sm:$0xf]
  %v50 = vld [vmem:[%s1 + $0x8] sm:$0xf]
  %v51 = vld [vmem:[%s1 + $0xc] sm:$0xf]
  %v52 = vld [vmem:[%s1 + $0x10] sm:$0xf]
  %v53 = vld [vmem:[%s1 + $0x14] sm:$0xf]
  %v54 = vld [vmem:[%s1 + $0x18] sm:$0xf]
  %v55 = vld [vmem:[%s1 + $0x1c] sm:$0xf]
  %v56 = vld [vmem:[%s1 + $0x20] sm:$0xf]
  %v57 = vld [vmem:[%s1 + $0x24] sm:$0xf]
  %v58 = vld [vmem:[%s1 + $0x28] sm:$0xf]
  %v59 = vld [vmem:[%s1 + $0x2c] sm:$0xf]
  %v60 = vld [vmem:[%s1 + $0x30] sm:$0xf]
  %v61 = vld [vmem:[%s1 + $0x34] sm:$0xf]
  %v62 = vld [vmem:[%s1 + $0x38] sm:$0xf]
  %v63 = vld [vmem:[%s1 + $0x3c] sm:$0xf]
  %v64 = vld [vmem:[%s1 + $0x40] sm:$0xf]
  %v65 = vld [vmem:[%s1 + $0x44] sm:$0xf]
  %v66 = vld [vmem:[%s1 + $0x48] sm:$0xf]
  %v67 = vld [vmem:[%s1 + $0x4c] sm:$0xf]
  %v68 = vld [vmem:[%s1 + $0x50] sm:$0xf]
  %v69 = vld [vmem:[%s1 + $0x54] sm:$0xf]
  %v70 = vld [vmem:[%s1 + $0x58] sm:$0xf]
  %v71 = vld [vmem:[%s1 + $0x5c] sm:$0xf]
  %v72 = vld [vmem:[%s1 + $0x60] sm:$0xf]
  %v73 = vld [vmem:[%s1 + $0x64] sm:$0xf]
  %v74 = vld [vmem:[%s1 + $0x68] sm:$0xf]
  %v75 = vld [vmem:[%s1 + $0x6c] sm:$0xf]
  %v76 = vld [vmem:[%s1 + $0x70] sm:$0xf]
  %v77 = vld [vmem:[%s1 + $0x74] sm:$0xf]
  %v78 = vld [vmem:[%s1 + $0x78] sm:$0xf]
  %v79 = vld [vmem:[%s1 + $0x7c] sm:$0xf]
  %v80 = vld [vmem:[%s1 + $0x80] sm:$0xf]
  %v81 = vld [vmem:[%s1 + $0x84] sm:$0xf]
  %v82 = vld [vmem:[%s1 + $0x88] sm:$0xf]
  %v83 = vld [vmem:[%s1 + $0x8c] sm:$0xf]
  %v84 = vld [vmem:[%s2] sm:$0x1]
  %v86 = vlaneseq
  %v87 = vshrl.u32 %v86, 7
  %v88 = vsub.s32 0, %v87
  %v89 = vrot.slane %v84, %v88
  %v127 = vunpack.c.l.b16 %v48
  %v128 = vunpack.c.l.b16 %v49
  %v129 = vunpack.c.l.b16 %v50
  %v130 = vunpack.c.l.b16 %v51
  %v131 = vunpack.c.l.b16 %v52
  %v132 = vunpack.c.l.b16 %v53
  %v133 = vunpack.c.l.b16 %v54
  %v134 = vunpack.c.l.b16 %v55
  %v135 = vunpack.c.l.b16 %v56
  %v136 = vunpack.c.l.b16 %v57
  %v137 = vunpack.c.l.b16 %v58
  %v138 = vunpack.c.l.b16 %v59
  %v139 = vunpack.c.l.b16 %v60
  %v140 = vunpack.c.l.b16 %v61
  %v141 = vunpack.c.l.b16 %v62
  %v142 = vunpack.c.l.b16 %v63
  %v143 = vunpack.c.l.b16 %v64
  %v144 = vunpack.c.l.b16 %v65
  %v145 = vunpack.c.l.b16 %v66
  %v146 = vunpack.c.l.b16 %v67
  %v147 = vunpack.c.l.b16 %v68
  %v148 = vunpack.c.l.b16 %v69
  %v149 = vunpack.c.l.b16 %v70
  %v150 = vunpack.c.l.b16 %v71
  %v151 = vunpack.c.l.b16 %v72
  %v152 = vunpack.c.l.b16 %v73
  %v153 = vunpack.c.l.b16 %v74
  %v154 = vunpack.c.l.b16 %v75
  %v155 = vunpack.c.l.b16 %v76
  %v156 = vunpack.c.l.b16 %v77
  %v157 = vunpack.c.l.b16 %v78
  %v158 = vunpack.c.l.b16 %v79
  %v159 = vunpack.c.l.b16 %v80
  %v160 = vunpack.c.l.b16 %v81
  %v161 = vunpack.c.l.b16 %v82
  %v162 = vunpack.c.l.b16 %v83
  %v163 = vpack.c.b16 %v128, %v127
  %v164 = vpack.c.b16 %v130, %v129
  %v165 = vpack.c.b16 %v132, %v131
  %v166 = vpack.c.b16 %v134, %v133
  %v167 = vpack.c.b16 %v136, %v135
  %v168 = vpack.c.b16 %v138, %v137
  %v169 = vpack.c.b16 %v140, %v139
  %v170 = vpack.c.b16 %v142, %v141
  %v171 = vpack.c.b16 %v144, %v143
  %v172 = vpack.c.b16 %v146, %v145
  %v173 = vpack.c.b16 %v148, %v147
  %v174 = vpack.c.b16 %v150, %v149
  %v175 = vpack.c.b16 %v152, %v151
  %v176 = vpack.c.b16 %v154, %v153
  %v177 = vpack.c.b16 %v156, %v155
  %v178 = vpack.c.b16 %v158, %v157
  %v179 = vpack.c.b16 %v160, %v159
  %v180 = vpack.c.b16 %v162, %v161
  %vm199 = vcmask 261120
  %v201 = vsel %vm199, %v38, 0
  %v204 = vsel %vm199, %v41, 0
  %v207 = vsel %vm199, %v44, 0
  %v210 = vsel %vm199, %v47, 0
  %212 = vmatprep.subr.bf16.mxu0 0
  %213 = vmatpush1.bf16.msra.mxu0 %v170
  %214 = vmatprep.subr.bf16.mxu0 0
  %215 = vmatpush1.bf16.msra.mxu0 %v169
  %216 = vmatprep.subr.bf16.mxu0 0
  %217 = vmatpush1.bf16.msra.mxu0 %v168
  %218 = vmatprep.subr.bf16.mxu0 0
  %219 = vmatpush1.bf16.msra.mxu0 %v167
  %220 = vmatprep.subr.bf16.mxu0 0
  %221 = vmatpush1.bf16.msra.mxu0 %v166
  %222 = vmatprep.subr.bf16.mxu0 0
  %223 = vmatpush1.bf16.msra.mxu0 %v165
  %224 = vmatprep.subr.bf16.mxu0 0
  %225 = vmatpush1.bf16.msra.mxu0 %v164
  %226 = vmatprep.subr.bf16.mxu0 0
  %227 = vmatpush1.bf16.msra.mxu0 %v163
  %228 = vmatprep.subr.bf16.mxu0 0
  %229 = vmatpush2.bf16.msra.mxu0 %v178
  %230 = vmatprep.subr.bf16.mxu0 0
  %231 = vmatpush2.bf16.msra.mxu0 %v177
  %232 = vmatprep.subr.bf16.mxu0 0
  %233 = vmatpush2.bf16.msra.mxu0 %v176
  %234 = vmatprep.subr.bf16.mxu0 0
  %235 = vmatpush2.bf16.msra.mxu0 %v175
  %236 = vmatprep.subr.bf16.mxu0 0
  %237 = vmatpush2.bf16.msra.mxu0 %v174
  %238 = vmatprep.subr.bf16.mxu0 0
  %239 = vmatpush2.bf16.msra.mxu0 %v173
  %240 = vmatprep.subr.bf16.mxu0 0
  %241 = vmatpush2.bf16.msra.mxu0 %v172
  %242 = vmatprep.subr.bf16.mxu0 0
  %243 = vmatpush2.bf16.msra.mxu0 %v171
  %244 = vmatprep.mubr.bf16.mxu0 %v37
  %245 = vmatmul.mubr.bf16.gmra.mxu0 %v36
  %v246 = vpop.f32.mrf.mxu0
  %v247 = vadd.f32 %v89, %v246
  %v248 = vpop.f32.mrf.mxu0
  %v249 = vpop.f32.mrf.mxu0
  %v250 = vadd.f32 %v89, %v249
  %v251 = vpop.f32.mrf.mxu0
  %252 = vmatprep.mubr.bf16.mxu0 %v40
  %253 = vmatmul.mubr.bf16.gmra.mxu0 %v39
  %v254 = vpop.f32.mrf.mxu0
  %v255 = vadd.f32 %v89, %v254
  %v256 = vpop.f32.mrf.mxu0
  %v257 = vpop.f32.mrf.mxu0
  %v258 = vadd.f32 %v89, %v257
  %v259 = vpop.f32.mrf.mxu0
  %260 = vmatprep.mubr.bf16.mxu0 %v43
  %261 = vmatmul.mubr.bf16.gmra.mxu0 %v42
  %v262 = vpop.f32.mrf.mxu0
  %v263 = vadd.f32 %v89, %v262
  %v264 = vpop.f32.mrf.mxu0
  %v265 = vpop.f32.mrf.mxu0
  %v266 = vadd.f32 %v89, %v265
  %v267 = vpop.f32.mrf.mxu0
  %268 = vmatprep.mubr.bf16.mxu0 %v46
  %269 = vmatmul.mubr.bf16.gmra.mxu0 %v45
  %v270 = vpop.f32.mrf.mxu0
  %v271 = vadd.f32 %v89, %v270
  %v272 = vpop.f32.mrf.mxu0
  %v273 = vpop.f32.mrf.mxu0
  %v274 = vpop.f32.mrf.mxu0
  %275 = vdwg.mxu0
  %276 = vmatprep.subr.bf16.mxu0 0
  %277 = vmatpush1.bf16.msra.mxu0 0
  %278 = vmatprep.subr.bf16.mxu0 0
  %279 = vmatpush1.bf16.msra.mxu0 0
  %280 = vmatprep.subr.bf16.mxu0 0
  %281 = vmatpush1.bf16.msra.mxu0 0
  %282 = vmatprep.subr.bf16.mxu0 0
  %283 = vmatpush1.bf16.msra.mxu0 0
  %284 = vmatprep.subr.bf16.mxu0 0
  %285 = vmatpush1.bf16.msra.mxu0 0
  %286 = vmatprep.subr.bf16.mxu0 0
  %287 = vmatpush1.bf16.msra.mxu0 0
  %288 = vmatprep.subr.bf16.mxu0 0
  %289 = vmatpush1.bf16.msra.mxu0 %v180
  %290 = vmatprep.subr.bf16.mxu0 0
  %291 = vmatpush1.bf16.msra.mxu0 %v179
  %292 = vmatprep.subr.bf16.mxu0 0
  %293 = vmatpush2.bf16.msra.mxu0 0
  %294 = vmatprep.subr.bf16.mxu0 0
  %295 = vmatpush2.bf16.msra.mxu0 0
  %296 = vmatprep.subr.bf16.mxu0 0
  %297 = vmatpush2.bf16.msra.mxu0 0
  %298 = vmatprep.subr.bf16.mxu0 0
  %299 = vmatpush2.bf16.msra.mxu0 0
  %300 = vmatprep.subr.bf16.mxu0 0
  %301 = vmatpush2.bf16.msra.mxu0 0
  %302 = vmatprep.subr.bf16.mxu0 0
  %303 = vmatpush2.bf16.msra.mxu0 0
  %304 = vmatprep.subr.bf16.mxu0 0
  %305 = vmatpush2.bf16.msra.mxu0 0
  %306 = vmatprep.subr.bf16.mxu0 0
  %307 = vmatpush2.bf16.msra.mxu0 0
  %308 = vmatprep.mubr.bf16.mxu0 0
  %309 = vmatmul.mubr.bf16.gmra.mxu0 %v201
  %v310 = vpop.f32.mrf.mxu0
  %v311 = vadd.f32 %v247, %v310
  %v312 = vpop.f32.mrf.mxu0
  %v313 = vpop.f32.mrf.mxu0
  %v314 = vadd.f32 %v250, %v313
  %v315 = vpop.f32.mrf.mxu0
  %316 = vmatprep.mubr.bf16.mxu0 0
  %317 = vmatmul.mubr.bf16.gmra.mxu0 %v204
  %v318 = vpop.f32.mrf.mxu0
  %v319 = vadd.f32 %v255, %v318
  %v320 = vpop.f32.mrf.mxu0
  %v321 = vpop.f32.mrf.mxu0
  %v322 = vadd.f32 %v258, %v321
  %v323 = vpop.f32.mrf.mxu0
  %324 = vmatprep.mubr.bf16.mxu0 0
  %325 = vmatmul.mubr.bf16.gmra.mxu0 %v207
  %v326 = vpop.f32.mrf.mxu0
  %v327 = vadd.f32 %v263, %v326
  %v328 = vpop.f32.mrf.mxu0
  %v329 = vpop.f32.mrf.mxu0
  %v330 = vadd.f32 %v266, %v329
  %v331 = vpop.f32.mrf.mxu0
  %332 = vmatprep.mubr.bf16.mxu0 0
  %333 = vmatmul.mubr.bf16.gmra.mxu0 %v210
  %v334 = vpop.f32.mrf.mxu0
  %v335 = vadd.f32 %v271, %v334
  %v336 = vpop.f32.mrf.mxu0
  %v337 = vpop.f32.mrf.mxu0
  %v338 = vpop.f32.mrf.mxu0
  %339 = vdwg.mxu0
  %v340 = vmax.f32 %v311, 0.0
  %v341 = vmax.f32 %v314, 0.0
  %v342 = vmax.f32 %v319, 0.0
  %v343 = vmax.f32 %v322, 0.0
  %v344 = vmax.f32 %v327, 0.0
  %v345 = vmax.f32 %v330, 0.0
  %v346 = vmax.f32 %v335, 0.0
  %347 = vst.msk [vmem:[%s3] sm:$0xff] %vm199, %v340
  %348 = vst.msk [vmem:[%s3 + $0x8] sm:$0xff] %vm199, %v341
  %349 = vst.msk [vmem:[%s3 + $0x10] sm:$0xff] %vm199, %v342
  %350 = vst.msk [vmem:[%s3 + $0x18] sm:$0xff] %vm199, %v343
  %351 = vst.msk [vmem:[%s3 + $0x20] sm:$0xff] %vm199, %v344
  %352 = vst.msk [vmem:[%s3 + $0x28] sm:$0xff] %vm199, %v345
  %353 = vst.msk [vmem:[%s3 + $0x30] sm:$0xff] %vm199, %v346
  // Predicated region
  $region14: #{forward.8} parent=0 // pred_check
    _
  $region15: #{forward.8} parent=0 // pred_check_branch
    %355 = sbr.rel (0) target = $region17
  $region16: #{forward.8} parent=0 // pred_region
    _
  $region17: #{forward.8} parent=0 // pred_fallthru
    _
  // Predicated region
  $region18: #{forward.8} parent=0 // pred_check
    _
  $region19: #{forward.8} parent=0 // pred_check_branch
    %357 = sbr.rel (0) target = $region21
  $region20: #{forward.8} parent=0 // pred_region
    _
  $region21: #{forward.8} parent=0 // pred_fallthru
    _

// kernel: forward.9
$region0: #{forward.9}
  #allocation0 [shape = 'u32[]', space=smem, size = 0x4, offset = 0x4, fixed_abs, tag = 'smem constant byte address 0x4 - core index']
  #allocation1 [shape = 'u32[144,128]{1,0:T(1,128)}', space=vmem, size = 0x12000, scoped, tag = 'internal scratch']
  %s0 = inlined_call_operand.vmem [shape: f32[14,128], index: 0, kind: input, shape index: {}]
  %s1 = inlined_call_operand.vmem [shape: bf16[128,32], index: 1, kind: input, shape index: {}]
  %s2 = inlined_call_operand.vmem [shape: f32[1,32], index: 2, kind: input, shape index: {}]
  %s3 = inlined_call_operand.vmem [shape: f32[14,32], index: 3, kind: output, shape index: {}]
  %s4 = sld [smem:[#allocation0]]
  $region22: #{forward.9} parent=0
    _
  %s6 = ssub.s32 1, %s4
  %s7 = scalar_select 0, %s6, %s4
  // Predicated region
  $region2: #{forward.9} parent=0 // pred_check
    _
  $region3: #{forward.9} parent=0 // pred_check_branch
    %9 = sbr.rel (0) target = $region5
  $region4: #{forward.9} parent=0 // pred_region
    _
  $region5: #{forward.9} parent=0 // pred_fallthru
    _
  // Predicated region
  $region6: #{forward.9} parent=0 // pred_check
    _
  $region7: #{forward.9} parent=0 // pred_check_branch
    %11 = sbr.rel (0) target = $region9
  $region8: #{forward.9} parent=0 // pred_region
    _
  $region9: #{forward.9} parent=0 // pred_fallthru
    _
  // Predicated region
  $region10: #{forward.9} parent=0 // pred_check
    _
  $region11: #{forward.9} parent=0 // pred_check_branch
    %13 = sbr.rel (0) target = $region13
  $region12: #{forward.9} parent=0 // pred_region
    _
  $region13: #{forward.9} parent=0 // pred_fallthru
    _
  %v15 = vld [vmem:[%s0] sm:$0xff]
  %v16 = vld [vmem:[%s0 + $0x8] sm:$0x3f]
  %v17 = vpack.c.bf16 %v16, %v15
  %v18 = vld [vmem:[%s1] sm:$0xf]
  %v19 = vld [vmem:[%s1 + $0x4] sm:$0xf]
  %v20 = vld [vmem:[%s1 + $0x8] sm:$0xf]
  %v21 = vld [vmem:[%s1 + $0xc] sm:$0xf]
  %v22 = vld [vmem:[%s1 + $0x10] sm:$0xf]
  %v23 = vld [vmem:[%s1 + $0x14] sm:$0xf]
  %v24 = vld [vmem:[%s1 + $0x18] sm:$0xf]
  %v25 = vld [vmem:[%s1 + $0x1c] sm:$0xf]
  %v26 = vld [vmem:[%s1 + $0x20] sm:$0xf]
  %v27 = vld [vmem:[%s1 + $0x24] sm:$0xf]
  %v28 = vld [vmem:[%s1 + $0x28] sm:$0xf]
  %v29 = vld [vmem:[%s1 + $0x2c] sm:$0xf]
  %v30 = vld [vmem:[%s1 + $0x30] sm:$0xf]
  %v31 = vld [vmem:[%s1 + $0x34] sm:$0xf]
  %v32 = vld [vmem:[%s1 + $0x38] sm:$0xf]
  %v33 = vld [vmem:[%s1 + $0x3c] sm:$0xf]
  %v34 = vld [vmem:[%s2] sm:$0x1]
  %v36 = vlaneseq
  %v37 = vshrl.u32 %v36, 7
  %v38 = vsub.s32 0, %v37
  %v39 = vrot.slane %v34, %v38
  %v57 = vunpack.c.l.b16 %v18
  %v58 = vunpack.c.l.b16 %v19
  %v59 = vunpack.c.l.b16 %v20
  %v60 = vunpack.c.l.b16 %v21
  %v61 = vunpack.c.l.b16 %v22
  %v62 = vunpack.c.l.b16 %v23
  %v63 = vunpack.c.l.b16 %v24
  %v64 = vunpack.c.l.b16 %v25
  %v65 = vunpack.c.l.b16 %v26
  %v66 = vunpack.c.l.b16 %v27
  %v67 = vunpack.c.l.b16 %v28
  %v68 = vunpack.c.l.b16 %v29
  %v69 = vunpack.c.l.b16 %v30
  %v70 = vunpack.c.l.b16 %v31
  %v71 = vunpack.c.l.b16 %v32
  %v72 = vunpack.c.l.b16 %v33
  %v73 = vpack.c.b16 %v58, %v57
  %v74 = vpack.c.b16 %v60, %v59
  %v75 = vpack.c.b16 %v62, %v61
  %v76 = vpack.c.b16 %v64, %v63
  %v77 = vpack.c.b16 %v66, %v65
  %v78 = vpack.c.b16 %v68, %v67
  %v79 = vpack.c.b16 %v70, %v69
  %v80 = vpack.c.b16 %v72, %v71
  %89 = vmatprep.subr.bf16.mxu0 0
  %90 = vmatpush1.bf16.msra.mxu0 %v80
  %91 = vmatprep.subr.bf16.mxu0 0
  %92 = vmatpush1.bf16.msra.mxu0 %v79
  %93 = vmatprep.subr.bf16.mxu0 0
  %94 = vmatpush1.bf16.msra.mxu0 %v78
  %95 = vmatprep.subr.bf16.mxu0 0
  %96 = vmatpush1.bf16.msra.mxu0 %v77
  %97 = vmatprep.subr.bf16.mxu0 0
  %98 = vmatpush1.bf16.msra.mxu0 %v76
  %99 = vmatprep.subr.bf16.mxu0 0
  %100 = vmatpush1.bf16.msra.mxu0 %v75
  %101 = vmatprep.subr.bf16.mxu0 0
  %102 = vmatpush1.bf16.msra.mxu0 %v74
  %103 = vmatprep.subr.bf16.mxu0 0
  %104 = vmatpush1.bf16.msra.mxu0 %v73
  %105 = vmatprep.subr.bf16.mxu0 0
  %106 = vmatpush2.bf16.msra.mxu0 0
  %107 = vmatprep.subr.bf16.mxu0 0
  %108 = vmatpush2.bf16.msra.mxu0 0
  %109 = vmatprep.subr.bf16.mxu0 0
  %110 = vmatpush2.bf16.msra.mxu0 0
  %111 = vmatprep.subr.bf16.mxu0 0
  %112 = vmatpush2.bf16.msra.mxu0 0
  %113 = vmatprep.subr.bf16.mxu0 0
  %114 = vmatpush2.bf16.msra.mxu0 0
  %115 = vmatprep.subr.bf16.mxu0 0
  %116 = vmatpush2.bf16.msra.mxu0 0
  %117 = vmatprep.subr.bf16.mxu0 0
  %118 = vmatpush2.bf16.msra.mxu0 0
  %119 = vmatprep.subr.bf16.mxu0 0
  %120 = vmatpush2.bf16.msra.mxu0 0
  %121 = vmatprep.mubr.bf16.mxu0 0
  %122 = vmatmul.mubr.bf16.gmra.mxu0 %v17
  %v123 = vpop.f32.mrf.mxu0
  %v124 = vadd.f32 %v39, %v123
  %v125 = vpop.f32.mrf.mxu0
  %v126 = vpop.f32.mrf.mxu0
  %v127 = vadd.f32 %v39, %v126
  %v128 = vpop.f32.mrf.mxu0
  %129 = vdwg.mxu0
  %vm130 = vcmask 261120
  %131 = vst.msk [vmem:[%s3] sm:$0xff] %vm130, %v124
  %vm132 = vcmask 259072
  %133 = vst.msk [vmem:[%s3 + $0x8] sm:$0x3f] %vm132, %v127
  // Predicated region
  $region14: #{forward.9} parent=0 // pred_check
    _
  $region15: #{forward.9} parent=0 // pred_check_branch
    %135 = sbr.rel (0) target = $region17
  $region16: #{forward.9} parent=0 // pred_region
    _
  $region17: #{forward.9} parent=0 // pred_fallthru
    _
  // Predicated region
  $region18: #{forward.9} parent=0 // pred_check
    _
  $region19: #{forward.9} parent=0 // pred_check_branch
    %137 = sbr.rel (0) target = $region21
  $region20: #{forward.9} parent=0 // pred_region
    _
  $region21: #{forward.9} parent=0 // pred_fallthru
    _

// kernel: forward.11
$region0: #{forward.11}
  #allocation0 [shape = 'u32[]', space=smem, size = 0x4, offset = 0x4, fixed_abs, tag = 'smem constant byte address 0x4 - core index']
  #allocation1 [shape = 'u32[144,128]{1,0:T(1,128)}', space=vmem, size = 0x12000, scoped, tag = 'internal scratch']
  %s0 = inlined_call_operand.vmem [shape: bf16[14,32], index: 0, kind: input, shape index: {}]
  %s1 = inlined_call_operand.vmem [shape: f32[1,32], index: 1, kind: input, shape index: {}]
  %s2 = inlined_call_operand.vmem [shape: f32[1,32], index: 2, kind: input, shape index: {}]
  %s3 = inlined_call_operand.vmem [shape: bf16[32,128], index: 3, kind: input, shape index: {}]
  %s4 = inlined_call_operand.vmem [shape: f32[1,128], index: 4, kind: input, shape index: {}]
  %s5 = inlined_call_operand.vmem [shape: bf16[14,32], index: 5, kind: output, shape index: {0}]
  %s6 = inlined_call_operand.vmem [shape: f32[14,128], index: 6, kind: output, shape index: {1}]
  %7 = xla_tuple %s5, %s6
  %s8 = sld [smem:[#allocation0]]
  $region38: #{forward.11} parent=0
    _
  %s10 = ssub.s32 1, %s8
  %s11 = scalar_select 0, %s10, %s8
  // Predicated region
  $region2: #{forward.11} parent=0 // pred_check
    _
  $region3: #{forward.11} parent=0 // pred_check_branch
    %13 = sbr.rel (0) target = $region5
  $region4: #{forward.11} parent=0 // pred_region
    _
  $region5: #{forward.11} parent=0 // pred_fallthru
    _
  // Predicated region
  $region6: #{forward.11} parent=0 // pred_check
    _
  $region7: #{forward.11} parent=0 // pred_check_branch
    %15 = sbr.rel (0) target = $region9
  $region8: #{forward.11} parent=0 // pred_region
    _
  $region9: #{forward.11} parent=0 // pred_fallthru
    _
  // Predicated region
  $region10: #{forward.11} parent=0 // pred_check
    _
  $region11: #{forward.11} parent=0 // pred_check_branch
    %17 = sbr.rel (0) target = $region13
  $region12: #{forward.11} parent=0 // pred_region
    _
  $region13: #{forward.11} parent=0 // pred_fallthru
    _
  // Predicated region
  $region14: #{forward.11} parent=0 // pred_check
    _
  $region15: #{forward.11} parent=0 // pred_check_branch
    %19 = sbr.rel (0) target = $region17
  $region16: #{forward.11} parent=0 // pred_region
    _
  $region17: #{forward.11} parent=0 // pred_fallthru
    _
  // Predicated region
  $region18: #{forward.11} parent=0 // pred_check
    _
  $region19: #{forward.11} parent=0 // pred_check_branch
    %21 = sbr.rel (0) target = $region21
  $region20: #{forward.11} parent=0 // pred_region
    _
  $region21: #{forward.11} parent=0 // pred_fallthru
    _
  %v23 = vld [vmem:[%s0] sm:$0xf]
  %v24 = vld [vmem:[%s0 + $0x4] sm:$0x7]
  %v25 = vunpack.c.l.bf16 %v23
  %v26 = vunpack.c.l.bf16 %v24
  %v27 = vld [vmem:[%s1] sm:$0x1]
  %v28 = vld [vmem:[%s2] sm:$0x1]
  %vm29 = vcmask 261120
  %v30 = vsel %vm29, %v25, 0.0
  %31 = vadd.xlane.f32.xlu0 %v30
  %v32 = vpop.xlane.xlu0 %31
  %vm33 = vcmask 259072
  %v34 = vsel %vm33, %v26, 0.0
  %35 = vadd.xlane.f32.xlu0 %v34
  %v36 = vpop.xlane.xlu0 %35
  %v37 = vrcp.pop 32.0
  %v38 = vmul.f32 %v32, %v37
  %v39 = vmul.f32 %v36, %v37
  %v40 = vsub.f32 %v25, %v38
  %v41 = vsub.f32 %v26, %v39
  %v42 = vmul.f32 %v40, %v40
  %v43 = vmul.f32 %v41, %v41
  %v44 = vsel %vm29, %v42, 0.0
  %45 = vadd.xlane.f32.xlu0 %v44
  %v46 = vpop.xlane.xlu0 %45
  %v47 = vsel %vm33, %v43, 0.0
  %48 = vadd.xlane.f32.xlu0 %v47
  %v49 = vpop.xlane.xlu0 %48
  %v50 = vmul.f32 %v46, %v37
  %v51 = vmul.f32 %v49, %v37
  %v52 = vadd.f32 %v50, 1e-12
  %v53 = vadd.f32 %v51, 1e-12
  %v54 = vrsqrt.pop %v52
  %v55 = vrsqrt.pop %v53
  %v56 = vmul.f32 %v40, %v54
  %v57 = vmul.f32 %v41, %v55
  %v59 = vlaneseq
  %v60 = vshrl.u32 %v59, 7
  %v61 = vsub.s32 0, %v60
  %v62 = vrot.slane %v27, %v61
  %v64 = vmul.f32 %v56, %v62
  %v65 = vmul.f32 %v57, %v62
  %v67 = vlaneseq
  %v68 = vshrl.u32 %v67, 7
  %v69 = vsub.s32 0, %v68
  %v70 = vrot.slane %v28, %v69
  %v72 = vadd.f32 %v64, %v70
  %v73 = vadd.f32 %v65, %v70
  %v74 = vpack.c.bf16 %v73, %v72
  %v76 = vunpack.c.l.b16 %v74
  %v77 = vunpack.c.h.b16 %v74
  %v78 = vpack.c.b16 %v76, %v76
  %v79 = vpack.c.b16 %v77, %v77
  %vm82 = vcmask 257024
  %83 = vst.msk [vmem:[%s5] sm:$0xf] %vm82, %v78
  %vm84 = vcmask 256000
  %85 = vst.msk [vmem:[%s5 + $0x4] sm:$0x7] %vm84, %v79
  %v86 = vld [vmem:[%s3] sm:$0xf]
  %v87 = vld [vmem:[%s3 + $0x4] sm:$0xf]
  %v88 = vld [vmem:[%s3 + $0x8] sm:$0xf]
  %v89 = vld [vmem:[%s3 + $0xc] sm:$0xf]
  %v90 = vld [vmem:[%s4] sm:$0x1]
  %v92 = vlaneseq
  %v93 = vshrl.u32 %v92, 7
  %v94 = vsub.s32 0, %v93
  %v95 = vrot.slane %v90, %v94
  %v101 = vunpack.c.l.b16 %v86
  %v102 = vunpack.c.l.b16 %v87
  %v103 = vunpack.c.l.b16 %v88
  %v104 = vunpack.c.l.b16 %v89
  %v105 = vpack.c.b16 %v102, %v101
  %v106 = vpack.c.b16 %v104, %v103
  %v110 = vsel %vm29, %v74, 0
  %112 = vmatprep.subr.bf16.mxu0 0
  %113 = vmatpush1.bf16.msra.mxu0 0
  %114 = vmatprep.subr.bf16.mxu0 0
  %115 = vmatpush1.bf16.msra.mxu0 0
  %116 = vmatprep.subr.bf16.mxu0 0
  %117 = vmatpush1.bf16.msra.mxu0 0
  %118 = vmatprep.subr.bf16.mxu0 0
  %119 = vmatpush1.bf16.msra.mxu0 0
  %120 = vmatprep.subr.bf16.mxu0 0
  %121 = vmatpush1.bf16.msra.mxu0 0
  %122 = vmatprep.subr.bf16.mxu0 0
  %123 = vmatpush1.bf16.msra.mxu0 0
  %124 = vmatprep.subr.bf16.mxu0 0
  %125 = vmatpush1.bf16.msra.mxu0 %v106
  %126 = vmatprep.subr.bf16.mxu0 0
  %127 = vmatpush1.bf16.msra.mxu0 %v105
  %128 = vmatprep.subr.bf16.mxu0 0
  %129 = vmatpush2.bf16.msra.mxu0 0
  %130 = vmatprep.subr.bf16.mxu0 0
  %131 = vmatpush2.bf16.msra.mxu0 0
  %132 = vmatprep.subr.bf16.mxu0 0
  %133 = vmatpush2.bf16.msra.mxu0 0
  %134 = vmatprep.subr.bf16.mxu0 0
  %135 = vmatpush2.bf16.msra.mxu0 0
  %136 = vmatprep.subr.bf16.mxu0 0
  %137 = vmatpush2.bf16.msra.mxu0 0
  %138 = vmatprep.subr.bf16.mxu0 0
  %139 = vmatpush2.bf16.msra.mxu0 0
  %140 = vmatprep.subr.bf16.mxu0 0
  %141 = vmatpush2.bf16.msra.mxu0 0
  %142 = vmatprep.subr.bf16.mxu0 0
  %143 = vmatpush2.bf16.msra.mxu0 0
  %144 = vmatprep.mubr.bf16.mxu0 0
  %145 = vmatmul.mubr.bf16.gmra.mxu0 %v110
  %v146 = vpop.f32.mrf.mxu0
  %v147 = vadd.f32 %v95, %v146
  %v148 = vpop.f32.mrf.mxu0
  %v149 = vpop.f32.mrf.mxu0
  %v150 = vadd.f32 %v95, %v149
  %v151 = vpop.f32.mrf.mxu0
  %152 = vdwg.mxu0
  %153 = vmax.xlane.f32.xlu0 %v147
  %v154 = vpop.xlane.xlu0 %153
  %vm155 = vcmask 1045504
  %v156 = vsel %vm155, %v150, -inf
  %157 = vmax.xlane.f32.xlu0 %v156
  %v158 = vpop.xlane.xlu0 %157
  %v159 = vsub.f32 %v147, %v154
  %v160 = vsub.f32 %v150, %v158
  %v161 = vmul.f32 %v159, 1.442695
  %v162 = vpow.pop %v161
  %v163 = vmul.f32 %v160, 1.442695
  %v164 = vpow.pop %v163
  %165 = vadd.xlane.f32.xlu0 %v162
  %v166 = vpop.xlane.xlu0 %165
  %v167 = vsel %vm155, %v164, 0.0
  %168 = vadd.xlane.f32.xlu0 %v167
  %v169 = vpop.xlane.xlu0 %168
  %v170 = vlog2.pop %v166
  %v171 = vmul.f32 %v170, 0.6931472
  %v172 = vlog2.pop %v169
  %v173 = vmul.f32 %v172, 0.6931472
  %v174 = vsub.f32 %v159, %v171
  %v175 = vsub.f32 %v160, %v173
  %176 = vst [vmem:[%s6] sm:$0xff] %v174
  %177 = vst [vmem:[%s6 + $0x8] sm:$0x3f] %v175
  // Predicated region
  $region22: #{forward.11} parent=0 // pred_check
    _
  $region23: #{forward.11} parent=0 // pred_check_branch
    %179 = sbr.rel (0) target = $region25
  $region24: #{forward.11} parent=0 // pred_region
    _
  $region25: #{forward.11} parent=0 // pred_fallthru
    _
  // Predicated region
  $region26: #{forward.11} parent=0 // pred_check
    _
  $region27: #{forward.11} parent=0 // pred_check_branch
    %181 = sbr.rel (0) target = $region29
  $region28: #{forward.11} parent=0 // pred_region
    _
  $region29: #{forward.11} parent=0 // pred_fallthru
    _
  // Predicated region
  $region30: #{forward.11} parent=0 // pred_check
    _
  $region31: #{forward.11} parent=0 // pred_check_branch
    %183 = sbr.rel (0) target = $region33
  $region32: #{forward.11} parent=0 // pred_region
    _
  $region33: #{forward.11} parent=0 // pred_fallthru
    _
  // Predicated region
  $region34: #{forward.11} parent=0 // pred_check
    _
  $region35: #{forward.11} parent=0 // pred_check_branch
    %185 = sbr.rel (0) target = $region37
  $region36: #{forward.11} parent=0 // pred_region
    _
  $region37: #{forward.11} parent=0 // pred_fallthru
    _

// kernel: forward.10
$region0: #{forward.10}
  #allocation0 [shape = 'u32[]', space=smem, size = 0x4, offset = 0x4, fixed_abs, tag = 'smem constant byte address 0x4 - core index']
  #allocation1 [shape = 'u32[144,128]{1,0:T(1,128)}', space=vmem, size = 0x12000, scoped, tag = 'internal scratch']
  #allocation2 [shape = 'f32[7,32]{1,0:T(8,128)}', space=vmem, size = 0x1000, scoped, tag = 'scratch operand']
  %s0 = inlined_call_operand.vmem [shape: bf16[2,7,32], index: 0, kind: input, shape index: {}]
  %s1 = inlined_call_operand.vmem [shape: f32[2,1,7], index: 1, kind: input, shape index: {}]
  %s2 = inlined_call_operand.vmem [shape: f32[2,4,32], index: 2, kind: input, shape index: {}]
  %s3 = inlined_call_operand.vmem [shape: bf16[2,32,96], index: 3, kind: input, shape index: {}]
  %s4 = inlined_call_operand.vmem [shape: f32[2,1,96], index: 4, kind: input, shape index: {}]
  %s5 = inlined_call_operand.vmem [shape: bf16[2,32,32], index: 5, kind: input, shape index: {}]
  %s6 = inlined_call_operand.vmem [shape: f32[2,1,32], index: 6, kind: input, shape index: {}]
  %s7 = inlined_call_operand.vmem [shape: bf16[2,32,64], index: 7, kind: input, shape index: {}]
  %s8 = inlined_call_operand.vmem [shape: f32[2,1,64], index: 8, kind: input, shape index: {}]
  %s9 = inlined_call_operand.vmem [shape: bf16[2,64,32], index: 9, kind: input, shape index: {}]
  %s10 = inlined_call_operand.vmem [shape: f32[2,1,32], index: 10, kind: input, shape index: {}]
  %s11 = inlined_call_operand.vmem [shape: bf16[2,7,32], index: 11, kind: output, shape index: {}]
  %s12 = sld [smem:[#allocation0]]
  $region85: #{forward.10} parent=0
    _
  %s14 = ssub.s32 1, %s12
  %s15 = scalar_select 0, %s14, %s12
  loop: start=0, step=1, limit=6
  $region2: #{forward.10} parent=0 // loop_pre_header
    _
  $region3: #{forward.10} parent=0 // loop_header
    %s17 = sphi 0, %s21
    %p18 = scmp.ge.s32.totalorder %s17, 6
    %s24 = sphi 0, %s36
    %s25 = sphi 0, %s32
    %s26 = sphi 0, %s24
    %s27 = sphi 0, %s25
    %s28 = sphi 0, %s26
    %s29 = sphi 0, %s27
    %s39 = sphi 0, %s41
    %s42 = sphi 0, %s39
    %s43 = sphi 0, %s42
    %s59 = sphi 0, %s43
    %s65 = sphi 0, %s67
    %s68 = sphi 0, %s65
    %s69 = sphi 0, %s68
    %s85 = sphi 0, %s69
    %s91 = sphi 0, %s93
    %s94 = sphi 0, %s91
    %s95 = sphi 0, %s94
    %s111 = sphi 0, %s95
    %s117 = sphi 0, %s119
    %s120 = sphi 0, %s117
    %s121 = sphi 0, %s120
    %s137 = sphi 0, %s121
    %s143 = sphi 0, %s145
    %s146 = sphi 0, %s143
    %s147 = sphi 0, %s146
    %s163 = sphi 0, %s147
    %s169 = sphi 0, %s171
    %s172 = sphi 0, %s169
    %s173 = sphi 0, %s172
    %s189 = sphi 0, %s173
    %s195 = sphi 0, %s197
    %s198 = sphi 0, %s195
    %s199 = sphi 0, %s198
    %s215 = sphi 0, %s199
    %s221 = sphi 0, %s223
    %s224 = sphi 0, %s221
    %s225 = sphi 0, %s224
    %s241 = sphi 0, %s225
    %s247 = sphi 0, %s249
    %s250 = sphi 0, %s247
    %s251 = sphi 0, %s250
    %s267 = sphi 0, %s251
    %s273 = sphi 0, %s275
    %s276 = sphi 0, %s273
    %s277 = sphi 0, %s276
    %s293 = sphi 0, %s277
    %s299 = sphi 0, %s301
    %s302 = sphi 0, %s299
    %s303 = sphi 0, %s302
    %s319 = sphi 0, %s303
    %s325 = sphi 0, %s327
    %s328 = sphi 0, %s325
    %s329 = sphi 0, %s328
    %s345 = sphi 0, %s329
  $region4: #{forward.10} parent=0 // loop_header_branch
    %20 = sbr.rel (%p18) target = $region8
  $region5: #{forward.10} parent=0 // loop_body
    %s22 = ssub.s32 %s17, 1
    %s23 = ssub.s32 %s17, 2
    %s30 = sadd.s32 1, %s25
    %p31 = scmp.ge.s32.totalorder %s30, 2
    %s32 = scalar_select %p31, 0, %s30
    %s33 = sadd.s32 1, %s24
    %s34 = scalar_select %p31, %s33, %s24
    %p35 = scmp.ge.s32.totalorder %s34, 2
    %s36 = scalar_select %p35, 0, %s34
    %s37 = ssub.s32 %s24, %s36
    %p38 = scmp.eq.s32.totalorder %s37, 0
    %s40 = sadd.s32 %s39, 1
    %s41 = scalar_select %p38, %s39, %s40
    %p44 = pneg %p38
    %p45 = scmp.eq.s32.totalorder %s17, 3
    %p46 = por %p44, %p45
    %p47 = scmp.ne.s32.totalorder %s39, %s42
    %p48 = scmp.eq.s32.totalorder %s17, 0
    %p49 = por %p47, %p48
    %p50 = scmp.ne.s32.totalorder %s39, %s42
    %p51 = scmp.eq.s32.totalorder %s22, 3
    %p52 = por %p50, %p51
    %p53 = scmp.ne.s32.totalorder %s42, %s43
    %p54 = scmp.eq.s32.totalorder %s22, 0
    %p55 = por %p53, %p54
    %p56 = scmp.ne.s32.totalorder %s42, %s43
    %p57 = scmp.eq.s32.totalorder %s23, 3
    %p58 = por %p56, %p57
    %p60 = scmp.ne.s32.totalorder %s43, %s59
    %p61 = scmp.eq.s32.totalorder %s23, 0
    %p62 = por %p60, %p61
    %s63 = ssub.s32 %s24, %s36
    %p64 = scmp.eq.s32.totalorder %s63, 0
    %s66 = sadd.s32 %s65, 1
    %s67 = scalar_select %p64, %s65, %s66
    %p70 = pneg %p64
    %p71 = scmp.eq.s32.totalorder %s17, 3
    %p72 = por %p70, %p71
    %p73 = scmp.ne.s32.totalorder %s65, %s68
    %p74 = scmp.eq.s32.totalorder %s17, 0
    %p75 = por %p73, %p74
    %p76 = scmp.ne.s32.totalorder %s65, %s68
    %p77 = scmp.eq.s32.totalorder %s22, 3
    %p78 = por %p76, %p77
    %p79 = scmp.ne.s32.totalorder %s68, %s69
    %p80 = scmp.eq.s32.totalorder %s22, 0
    %p81 = por %p79, %p80
    %p82 = scmp.ne.s32.totalorder %s68, %s69
    %p83 = scmp.eq.s32.totalorder %s23, 3
    %p84 = por %p82, %p83
    %p86 = scmp.ne.s32.totalorder %s69, %s85
    %p87 = scmp.eq.s32.totalorder %s23, 0
    %p88 = por %p86, %p87
    %s89 = ssub.s32 %s25, %s32
    %p90 = scmp.eq.s32.totalorder %s89, 0
    %s92 = sadd.s32 %s91, 1
    %s93 = scalar_select %p90, %s91, %s92
    %p96 = pneg %p90
    %p97 = scmp.eq.s32.totalorder %s17, 3
    %p98 = por %p96, %p97
    %p99 = scmp.ne.s32.totalorder %s91, %s94
    %p100 = scmp.eq.s32.totalorder %s17, 0
    %p101 = por %p99, %p100
    %p102 = scmp.ne.s32.totalorder %s91, %s94
    %p103 = scmp.eq.s32.totalorder %s22, 3
    %p104 = por %p102, %p103
    %p105 = scmp.ne.s32.totalorder %s94, %s95
    %p106 = scmp.eq.s32.totalorder %s22, 0
    %p107 = por %p105, %p106
    %p108 = scmp.ne.s32.totalorder %s94, %s95
    %p109 = scmp.eq.s32.totalorder %s23, 3
    %p110 = por %p108, %p109
    %p112 = scmp.ne.s32.totalorder %s95, %s111
    %p113 = scmp.eq.s32.totalorder %s23, 0
    %p114 = por %p112, %p113
    %s115 = ssub.s32 %s25, %s32
    %p116 = scmp.eq.s32.totalorder %s115, 0
    %s118 = sadd.s32 %s117, 1
    %s119 = scalar_select %p116, %s117, %s118
    %p122 = pneg %p116
    %p123 = scmp.eq.s32.totalorder %s17, 3
    %p124 = por %p122, %p123
    %p125 = scmp.ne.s32.totalorder %s117, %s120
    %p126 = scmp.eq.s32.totalorder %s17, 0
    %p127 = por %p125, %p126
    %p128 = scmp.ne.s32.totalorder %s117, %s120
    %p129 = scmp.eq.s32.totalorder %s22, 3
    %p130 = por %p128, %p129
    %p131 = scmp.ne.s32.totalorder %s120, %s121
    %p132 = scmp.eq.s32.totalorder %s22, 0
    %p133 = por %p131, %p132
    %p134 = scmp.ne.s32.totalorder %s120, %s121
    %p135 = scmp.eq.s32.totalorder %s23, 3
    %p136 = por %p134, %p135
    %p138 = scmp.ne.s32.totalorder %s121, %s137
    %p139 = scmp.eq.s32.totalorder %s23, 0
    %p140 = por %p138, %p139
    %s141 = ssub.s32 %s25, %s32
    %p142 = scmp.eq.s32.totalorder %s141, 0
    %s144 = sadd.s32 %s143, 1
    %s145 = scalar_select %p142, %s143, %s144
    %p148 = pneg %p142
    %p149 = scmp.eq.s32.totalorder %s17, 3
    %p150 = por %p148, %p149
    %p151 = scmp.ne.s32.totalorder %s143, %s146
    %p152 = scmp.eq.s32.totalorder %s17, 0
    %p153 = por %p151, %p152
    %p154 = scmp.ne.s32.totalorder %s143, %s146
    %p155 = scmp.eq.s32.totalorder %s22, 3
    %p156 = por %p154, %p155
    %p157 = scmp.ne.s32.totalorder %s146, %s147
    %p158 = scmp.eq.s32.totalorder %s22, 0
    %p159 = por %p157, %p158
    %p160 = scmp.ne.s32.totalorder %s146, %s147
    %p161 = scmp.eq.s32.totalorder %s23, 3
    %p162 = por %p160, %p161
    %p164 = scmp.ne.s32.totalorder %s147, %s163
    %p165 = scmp.eq.s32.totalorder %s23, 0
    %p166 = por %p164, %p165
    %s167 = ssub.s32 %s25, %s32
    %p168 = scmp.eq.s32.totalorder %s167, 0
    %s170 = sadd.s32 %s169, 1
    %s171 = scalar_select %p168, %s169, %s170
    %p174 = pneg %p168
    %p175 = scmp.eq.s32.totalorder %s17, 3
    %p176 = por %p174, %p175
    %p177 = scmp.ne.s32.totalorder %s169, %s172
    %p178 = scmp.eq.s32.totalorder %s17, 0
    %p179 = por %p177, %p178
    %p180 = scmp.ne.s32.totalorder %s169, %s172
    %p181 = scmp.eq.s32.totalorder %s22, 3
    %p182 = por %p180, %p181
    %p183 = scmp.ne.s32.totalorder %s172, %s173
    %p184 = scmp.eq.s32.totalorder %s22, 0
    %p185 = por %p183, %p184
    %p186 = scmp.ne.s32.totalorder %s172, %s173
    %p187 = scmp.eq.s32.totalorder %s23, 3
    %p188 = por %p186, %p187
    %p190 = scmp.ne.s32.totalorder %s173, %s189
    %p191 = scmp.eq.s32.totalorder %s23, 0
    %p192 = por %p190, %p191
    %s193 = ssub.s32 %s25, %s32
    %p194 = scmp.eq.s32.totalorder %s193, 0
    %s196 = sadd.s32 %s195, 1
    %s197 = scalar_select %p194, %s195, %s196
    %p200 = pneg %p194
    %p201 = scmp.eq.s32.totalorder %s17, 3
    %p202 = por %p200, %p201
    %p203 = scmp.ne.s32.totalorder %s195, %s198
    %p204 = scmp.eq.s32.totalorder %s17, 0
    %p205 = por %p203, %p204
    %p206 = scmp.ne.s32.totalorder %s195, %s198
    %p207 = scmp.eq.s32.totalorder %s22, 3
    %p208 = por %p206, %p207
    %p209 = scmp.ne.s32.totalorder %s198, %s199
    %p210 = scmp.eq.s32.totalorder %s22, 0
    %p211 = por %p209, %p210
    %p212 = scmp.ne.s32.totalorder %s198, %s199
    %p213 = scmp.eq.s32.totalorder %s23, 3
    %p214 = por %p212, %p213
    %p216 = scmp.ne.s32.totalorder %s199, %s215
    %p217 = scmp.eq.s32.totalorder %s23, 0
    %p218 = por %p216, %p217
    %s219 = ssub.s32 %s25, %s32
    %p220 = scmp.eq.s32.totalorder %s219, 0
    %s222 = sadd.s32 %s221, 1
    %s223 = scalar_select %p220, %s221, %s222
    %p226 = pneg %p220
    %p227 = scmp.eq.s32.totalorder %s17, 3
    %p228 = por %p226, %p227
    %p229 = scmp.ne.s32.totalorder %s221, %s224
    %p230 = scmp.eq.s32.totalorder %s17, 0
    %p231 = por %p229, %p230
    %p232 = scmp.ne.s32.totalorder %s221, %s224
    %p233 = scmp.eq.s32.totalorder %s22, 3
    %p234 = por %p232, %p233
    %p235 = scmp.ne.s32.totalorder %s224, %s225
    %p236 = scmp.eq.s32.totalorder %s22, 0
    %p237 = por %p235, %p236
    %p238 = scmp.ne.s32.totalorder %s224, %s225
    %p239 = scmp.eq.s32.totalorder %s23, 3
    %p240 = por %p238, %p239
    %p242 = scmp.ne.s32.totalorder %s225, %s241
    %p243 = scmp.eq.s32.totalorder %s23, 0
    %p244 = por %p242, %p243
    %s245 = ssub.s32 %s25, %s32
    %p246 = scmp.eq.s32.totalorder %s245, 0
    %s248 = sadd.s32 %s247, 1
    %s249 = scalar_select %p246, %s247, %s248
    %p252 = pneg %p246
    %p253 = scmp.eq.s32.totalorder %s17, 3
    %p254 = por %p252, %p253
    %p255 = scmp.ne.s32.totalorder %s247, %s250
    %p256 = scmp.eq.s32.totalorder %s17, 0
    %p257 = por %p255, %p256
    %p258 = scmp.ne.s32.totalorder %s247, %s250
    %p259 = scmp.eq.s32.totalorder %s22, 3
    %p260 = por %p258, %p259
    %p261 = scmp.ne.s32.totalorder %s250, %s251
    %p262 = scmp.eq.s32.totalorder %s22, 0
    %p263 = por %p261, %p262
    %p264 = scmp.ne.s32.totalorder %s250, %s251
    %p265 = scmp.eq.s32.totalorder %s23, 3
    %p266 = por %p264, %p265
    %p268 = scmp.ne.s32.totalorder %s251, %s267
    %p269 = scmp.eq.s32.totalorder %s23, 0
    %p270 = por %p268, %p269
    %s271 = ssub.s32 %s25, %s32
    %p272 = scmp.eq.s32.totalorder %s271, 0
    %s274 = sadd.s32 %s273, 1
    %s275 = scalar_select %p272, %s273, %s274
    %p278 = pneg %p272
    %p279 = scmp.eq.s32.totalorder %s17, 3
    %p280 = por %p278, %p279
    %p281 = scmp.ne.s32.totalorder %s273, %s276
    %p282 = scmp.eq.s32.totalorder %s17, 0
    %p283 = por %p281, %p282
    %p284 = scmp.ne.s32.totalorder %s273, %s276
    %p285 = scmp.eq.s32.totalorder %s22, 3
    %p286 = por %p284, %p285
    %p287 = scmp.ne.s32.totalorder %s276, %s277
    %p288 = scmp.eq.s32.totalorder %s22, 0
    %p289 = por %p287, %p288
    %p290 = scmp.ne.s32.totalorder %s276, %s277
    %p291 = scmp.eq.s32.totalorder %s23, 3
    %p292 = por %p290, %p291
    %p294 = scmp.ne.s32.totalorder %s277, %s293
    %p295 = scmp.eq.s32.totalorder %s23, 0
    %p296 = por %p294, %p295
    %s297 = ssub.s32 %s25, %s32
    %p298 = scmp.eq.s32.totalorder %s297, 0
    %s300 = sadd.s32 %s299, 1
    %s301 = scalar_select %p298, %s299, %s300
    %p304 = pneg %p298
    %p305 = scmp.eq.s32.totalorder %s17, 3
    %p306 = por %p304, %p305
    %p307 = scmp.ne.s32.totalorder %s299, %s302
    %p308 = scmp.eq.s32.totalorder %s17, 0
    %p309 = por %p307, %p308
    %p310 = scmp.ne.s32.totalorder %s299, %s302
    %p311 = scmp.eq.s32.totalorder %s22, 3
    %p312 = por %p310, %p311
    %p313 = scmp.ne.s32.totalorder %s302, %s303
    %p314 = scmp.eq.s32.totalorder %s22, 0
    %p315 = por %p313, %p314
    %p316 = scmp.ne.s32.totalorder %s302, %s303
    %p317 = scmp.eq.s32.totalorder %s23, 3
    %p318 = por %p316, %p317
    %p320 = scmp.ne.s32.totalorder %s303, %s319
    %p321 = scmp.eq.s32.totalorder %s23, 0
    %p322 = por %p320, %p321
    %s323 = ssub.s32 %s24, %s36
    %p324 = scmp.eq.s32.totalorder %s323, 0
    %s326 = sadd.s32 %s325, 1
    %s327 = scalar_select %p324, %s325, %s326
    %p330 = pneg %p324
    %p331 = scmp.eq.s32.totalorder %s17, 3
    %p332 = por %p330, %p331
    %p333 = scmp.ne.s32.totalorder %s325, %s328
    %p334 = scmp.eq.s32.totalorder %s17, 0
    %p335 = por %p333, %p334
    %p336 = scmp.ne.s32.totalorder %s325, %s328
    %p337 = scmp.eq.s32.totalorder %s22, 3
    %p338 = por %p336, %p337
    %p339 = scmp.ne.s32.totalorder %s328, %s329
    %p340 = scmp.eq.s32.totalorder %s22, 0
    %p341 = por %p339, %p340
    %p342 = scmp.ne.s32.totalorder %s328, %s329
    %p343 = scmp.eq.s32.totalorder %s23, 3
    %p344 = por %p342, %p343
    %p346 = scmp.ne.s32.totalorder %s329, %s345
    %p347 = scmp.eq.s32.totalorder %s23, 0
    %p348 = por %p346, %p347
    %p349 = scmp.le.s32.totalorder 1, %s17
    %p350 = scmp.lt.s32.totalorder %s17, 5
    %p351 = pnand %p349, %p350
    %p352 = pneg %p351
    // Predicated region
    $region9: #{forward.10} parent=5 // pred_check
      _
    $region10: #{forward.10} parent=5 // pred_check_branch
      %354 = sbr.rel (%p351) target = $region12
    $region11: #{forward.10} parent=5 // pred_region
      %s355 = ssub.s32 %s17, 1
    $region12: #{forward.10} parent=5 // pred_fallthru
      _
    %p356 = scmp.lt.s32.totalorder %s17, 4
    // Predicated region
    $region13: #{forward.10} parent=5 // pred_check
      %p357 = pneg %p356
    $region14: #{forward.10} parent=5 // pred_check_branch
      %359 = sbr.rel (%p357) target = $region16
    $region15: #{forward.10} parent=5 // pred_region
      // Predicated region
      $region17: #{forward.10} parent=15 // pred_check
        %p360 = pneg %p49
      $region18: #{forward.10} parent=15 // pred_check_branch
        %362 = sbr.rel (%p360) target = $region20
      $region19: #{forward.10} parent=15 // pred_region
        %p363 = scmp.lt.s32.totalorder %s24, 1
        %s364 = scalar_select %p363, %s24, 1
        %s365 = smul.addr %s364, 4
        %s366 = scalar_lea.vmem %s0, %s365
      $region20: #{forward.10} parent=15 // pred_fallthru
        _
      // Predicated region
      $region21: #{forward.10} parent=15 // pred_check
        %p367 = pneg %p75
      $region22: #{forward.10} parent=15 // pred_check_branch
        %369 = sbr.rel (%p367) target = $region24
      $region23: #{forward.10} parent=15 // pred_region
        %p370 = scmp.lt.s32.totalorder %s24, 1
        %s371 = scalar_select %p370, %s24, 1
        %s372 = scalar_lea.vmem %s1, %s371
      $region24: #{forward.10} parent=15 // pred_fallthru
        _
      // Predicated region
      $region25: #{forward.10} parent=15 // pred_check
        %p373 = pneg %p101
      $region26: #{forward.10} parent=15 // pred_check_branch
        %375 = sbr.rel (%p373) target = $region28
      $region27: #{forward.10} parent=15 // pred_region
        %p376 = scmp.lt.s32.totalorder %s25, 1
        %s377 = scalar_select %p376, %s25, 1
        %s378 = smul.addr %s377, 4
        %s379 = scalar_lea.vmem %s2, %s378
      $region28: #{forward.10} parent=15 // pred_fallthru
        _
      // Predicated region
      $region29: #{forward.10} parent=15 // pred_check
        %p380 = pneg %p127
      $region30: #{forward.10} parent=15 // pred_check_branch
        %382 = sbr.rel (%p380) target = $region32
      $region31: #{forward.10} parent=15 // pred_region
        %p383 = scmp.lt.s32.totalorder %s25, 1
        %s384 = scalar_select %p383, %s25, 1
        %s385 = smul.addr %s384, 4
        %s386 = smul.addr %s385, 4
        %s387 = scalar_lea.vmem %s3, %s386
      $region32: #{forward.10} parent=15 // pred_fallthru
        _
      // Predicated region
      $region33: #{forward.10} parent=15 // pred_check
        %p388 = pneg %p153
      $region34: #{forward.10} parent=15 // pred_check_branch
        %390 = sbr.rel (%p388) target = $region36
      $region35: #{forward.10} parent=15 // pred_region
        %p391 = scmp.lt.s32.totalorder %s25, 1
        %s392 = scalar_select %p391, %s25, 1
        %s393 = scalar_lea.vmem %s4, %s392
      $region36: #{forward.10} parent=15 // pred_fallthru
        _
      // Predicated region
      $region37: #{forward.10} parent=15 // pred_check
        %p394 = pneg %p179
      $region38: #{forward.10} parent=15 // pred_check_branch
        %396 = sbr.rel (%p394) target = $region40
      $region39: #{forward.10} parent=15 // pred_region
        %p397 = scmp.lt.s32.totalorder %s25, 1
        %s398 = scalar_select %p397, %s25, 1
        %s399 = smul.addr %s398, 4
        %s400 = smul.addr %s399, 4
        %s401 = scalar_lea.vmem %s5, %s400
      $region40: #{forward.10} parent=15 // pred_fallthru
        _
      // Predicated region
      $region41: #{forward.10} parent=15 // pred_check
        %p402 = pneg %p205
      $region42: #{forward.10} parent=15 // pred_check_branch
        %404 = sbr.rel (%p402) target = $region44
      $region43: #{forward.10} parent=15 // pred_region
        %p405 = scmp.lt.s32.totalorder %s25, 1
        %s406 = scalar_select %p405, %s25, 1
        %s407 = scalar_lea.vmem %s6, %s406
      $region44: #{forward.10} parent=15 // pred_fallthru
        _
      // Predicated region
      $region45: #{forward.10} parent=15 // pred_check
        %p408 = pneg %p231
      $region46: #{forward.10} parent=15 // pred_check_branch
        %410 = sbr.rel (%p408) target = $region48
      $region47: #{forward.10} parent=15 // pred_region
        %p411 = scmp.lt.s32.totalorder %s25, 1
        %s412 = scalar_select %p411, %s25, 1
        %s413 = smul.addr %s412, 4
        %s414 = smul.addr %s413, 4
        %s415 = scalar_lea.vmem %s7, %s414
      $region48: #{forward.10} parent=15 // pred_fallthru
        _
      // Predicated region
      $region49: #{forward.10} parent=15 // pred_check
        %p416 = pneg %p257
      $region50: #{forward.10} parent=15 // pred_check_branch
        %418 = sbr.rel (%p416) target = $region52
      $region51: #{forward.10} parent=15 // pred_region
        %p419 = scmp.lt.s32.totalorder %s25, 1
        %s420 = scalar_select %p419, %s25, 1
        %s421 = scalar_lea.vmem %s8, %s420
      $region52: #{forward.10} parent=15 // pred_fallthru
        _
      // Predicated region
      $region53: #{forward.10} parent=15 // pred_check
        %p422 = pneg %p283
      $region54: #{forward.10} parent=15 // pred_check_branch
        %424 = sbr.rel (%p422) target = $region56
      $region55: #{forward.10} parent=15 // pred_region
        %p425 = scmp.lt.s32.totalorder %s25, 1
        %s426 = scalar_select %p425, %s25, 1
        %s427 = smul.addr %s426, 8
        %s428 = smul.addr %s427, 4
        %s429 = scalar_lea.vmem %s9, %s428
      $region56: #{forward.10} parent=15 // pred_fallthru
        _
      // Predicated region
      $region57: #{forward.10} parent=15 // pred_check
        %p430 = pneg %p309
      $region58: #{forward.10} parent=15 // pred_check_branch
        %432 = sbr.rel (%p430) target = $region60
      $region59: #{forward.10} parent=15 // pred_region
        %p433 = scmp.lt.s32.totalorder %s25, 1
        %s434 = scalar_select %p433, %s25, 1
        %s435 = scalar_lea.vmem %s10, %s434
      $region60: #{forward.10} parent=15 // pred_fallthru
        _
    $region16: #{forward.10} parent=5 // pred_fallthru
      _
    %p436 = scmp.le.s32.totalorder 1, %s17
    %p437 = scmp.lt.s32.totalorder %s17, 5
    %p438 = pnand %p436, %p437
    %p439 = pneg %p438
    // Predicated region
    $region61: #{forward.10} parent=5 // pred_check
      _
    $region62: #{forward.10} parent=5 // pred_check_branch
      %441 = sbr.rel (%p438) target = $region64
    $region63: #{forward.10} parent=5 // pred_region
      %s442 = ssub.s32 %s17, 1
      %p443 = scmp.lt.s32.totalorder %s26, 1
      %s444 = scalar_select %p443, %s26, 1
      %s445 = smul.addr %s444, 4
      %s446 = scalar_lea.vmem %s0, %s445
      %p447 = pneg %p55
      %p448 = pneg %p52
      %p449 = scmp.lt.s32.totalorder %s26, 1
      %s450 = scalar_select %p449, %s26, 1
      %s451 = scalar_lea.vmem %s1, %s450
      %p452 = pneg %p81
      %p453 = pneg %p78
      %p454 = scmp.lt.s32.totalorder %s27, 1
      %s455 = scalar_select %p454, %s27, 1
      %s456 = smul.addr %s455, 4
      %s457 = scalar_lea.vmem %s2, %s456
      %p458 = pneg %p107
      %p459 = pneg %p104
      %p460 = scmp.lt.s32.totalorder %s27, 1
      %s461 = scalar_select %p460, %s27, 1
      %s462 = smul.addr %s461, 4
      %s463 = smul.addr %s462, 4
      %s464 = scalar_lea.vmem %s3, %s463
      %p465 = pneg %p133
      %p466 = pneg %p130
      %p467 = scmp.lt.s32.totalorder %s27, 1
      %s468 = scalar_select %p467, %s27, 1
      %s469 = scalar_lea.vmem %s4, %s468
      %p470 = pneg %p159
      %p471 = pneg %p156
      %p472 = scmp.lt.s32.totalorder %s27, 1
      %s473 = scalar_select %p472, %s27, 1
      %s474 = smul.addr %s473, 4
      %s475 = smul.addr %s474, 4
      %s476 = scalar_lea.vmem %s5, %s475
      %p477 = pneg %p185
      %p478 = pneg %p182
      %p479 = scmp.lt.s32.totalorder %s27, 1
      %s480 = scalar_select %p479, %s27, 1
      %s481 = scalar_lea.vmem %s6, %s480
      %p482 = pneg %p211
      %p483 = pneg %p208
      %p484 = scmp.lt.s32.totalorder %s27, 1
      %s485 = scalar_select %p484, %s27, 1
      %s486 = smul.addr %s485, 4
      %s487 = smul.addr %s486, 4
      %s488 = scalar_lea.vmem %s7, %s487
      %p489 = pneg %p237
      %p490 = pneg %p234
      %p491 = scmp.lt.s32.totalorder %s27, 1
      %s492 = scalar_select %p491, %s27, 1
      %s493 = scalar_lea.vmem %s8, %s492
      %p494 = pneg %p263
      %p495 = pneg %p260
      %p496 = scmp.lt.s32.totalorder %s27, 1
      %s497 = scalar_select %p496, %s27, 1
      %s498 = smul.addr %s497, 8
      %s499 = smul.addr %s498, 4
      %s500 = scalar_lea.vmem %s9, %s499
      %p501 = pneg %p289
      %p502 = pneg %p286
      %p503 = scmp.lt.s32.totalorder %s27, 1
      %s504 = scalar_select %p503, %s27, 1
      %s505 = scalar_lea.vmem %s10, %s504
      %p506 = pneg %p315
      %p507 = pneg %p312
      %p508 = pneg %p341
      %p509 = pneg %p338
      %p510 = scmp.lt.s32.totalorder %s26, 1
      %s511 = scalar_select %p510, %s26, 1
      %s512 = smul.addr %s511, 4
      %s513 = scalar_lea.vmem %s11, %s512
      %p514 = scmp.lt.s32.totalorder %s26, 1
      %s515 = scalar_select %p514, %s26, 1
      %s516 = smul.addr %s515, 4
      %s517 = scalar_lea.vmem %s0, %s516
      %p518 = scmp.lt.s32.totalorder %s26, 1
      %s519 = scalar_select %p518, %s26, 1
      %s520 = scalar_lea.vmem %s1, %s519
      %p521 = scmp.lt.s32.totalorder %s27, 1
      %s522 = scalar_select %p521, %s27, 1
      %s523 = smul.addr %s522, 4
      %s524 = scalar_lea.vmem %s2, %s523
      %p525 = scmp.lt.s32.totalorder %s27, 1
      %s526 = scalar_select %p525, %s27, 1
      %s527 = smul.addr %s526, 4
      %s528 = smul.addr %s527, 4
      %s529 = scalar_lea.vmem %s3, %s528
      %p530 = scmp.lt.s32.totalorder %s27, 1
      %s531 = scalar_select %p530, %s27, 1
      %s532 = scalar_lea.vmem %s4, %s531
      %p533 = scmp.lt.s32.totalorder %s27, 1
      %s534 = scalar_select %p533, %s27, 1
      %s535 = smul.addr %s534, 4
      %s536 = smul.addr %s535, 4
      %s537 = scalar_lea.vmem %s5, %s536
      %p538 = scmp.lt.s32.totalorder %s27, 1
      %s539 = scalar_select %p538, %s27, 1
      %s540 = scalar_lea.vmem %s6, %s539
      %p541 = scmp.lt.s32.totalorder %s27, 1
      %s542 = scalar_select %p541, %s27, 1
      %s543 = smul.addr %s542, 4
      %s544 = smul.addr %s543, 4
      %s545 = scalar_lea.vmem %s7, %s544
      %p546 = scmp.lt.s32.totalorder %s27, 1
      %s547 = scalar_select %p546, %s27, 1
      %s548 = scalar_lea.vmem %s8, %s547
      %p549 = scmp.lt.s32.totalorder %s27, 1
      %s550 = scalar_select %p549, %s27, 1
      %s551 = smul.addr %s550, 8
      %s552 = smul.addr %s551, 4
      %s553 = scalar_lea.vmem %s9, %s552
      %p554 = scmp.lt.s32.totalorder %s27, 1
      %s555 = scalar_select %p554, %s27, 1
      %s556 = scalar_lea.vmem %s10, %s555
      %p557 = scmp.lt.s32.totalorder %s26, 1
      %s558 = scalar_select %p557, %s26, 1
      %s559 = smul.addr %s558, 4
      %s560 = scalar_lea.vmem %s11, %s559
      %p562 = scmp.eq.s32.totalorder %s27, 0
      // Predicated region
      $region65: #{forward.10} parent=63 // pred_check
        %p563 = pneg %p562
      $region66: #{forward.10} parent=63 // pred_check_branch
        %565 = sbr.rel (%p563) target = $region68
      $region67: #{forward.10} parent=63 // pred_region
        %v566 = vld [vmem:[%s517] sm:$0xf]
        %v567 = vunpack.c.l.bf16 %v566
        %vm568 = vcmask 260096
        %569 = vst.msk [vmem:[#allocation2] sm:$0x7f] %vm568, %v567
      $region68: #{forward.10} parent=63 // pred_fallthru
        _
      %v570 = vld [vmem:[#allocation2] sm:$0x7f]
      %v571 = vld [vmem:[%s520] sm:$0x1]
      %v572 = vld [vmem:[%s524] sm:$0xf]
      %vm573 = vcmask 260096
      %v574 = vsel %vm573, %v570, 0.0
      %575 = vadd.xlane.f32.xlu0 %v574
      %v576 = vpop.xlane.xlu0 %575
      %v577 = vrcp.pop 32.0
      %v578 = vmul.f32 %v576, %v577
      %v579 = vsub.f32 %v570, %v578
      %v580 = vmul.f32 %v579, %v579
      %v581 = vsel %vm573, %v580, 0.0
      %582 = vadd.xlane.f32.xlu0 %v581
      %v583 = vpop.xlane.xlu0 %582
      %v584 = vmul.f32 %v583, %v577
      %v585 = vadd.f32 %v584, 1e-12
      %v586 = vrsqrt.pop %v585
      %v587 = vmul.f32 %v579, %v586
      %v588 = vlaneseq
      %v589 = vshrl.u32 %v588, 7
      %v590 = vsub.s32 0, %v589
      %v591 = vrot.slane %v572, %v590
      %v592 = vmul.f32 %v587, %v591
      %v593 = vlaneseq
      %v594 = vshrl.u32 %v593, 7
      %v595 = vsub.s32 1, %v594
      %v596 = vrot.slane %v572, %v595
      %v597 = vadd.f32 %v592, %v596
      %v598 = vld [vmem:[%s529] sm:$0xf]
      %v599 = vld [vmem:[%s529 + $0x4] sm:$0xf]
      %v600 = vld [vmem:[%s529 + $0x8] sm:$0xf]
      %v601 = vld [vmem:[%s529 + $0xc] sm:$0xf]
      %v602 = vld [vmem:[%s532] sm:$0x1]
      %v603 = vld [vmem:[%s537] sm:$0xf]
      %v604 = vld [vmem:[%s537 + $0x4] sm:$0xf]
      %v605 = vld [vmem:[%s537 + $0x8] sm:$0xf]
      %v606 = vld [vmem:[%s537 + $0xc] sm:$0xf]
      %v607 = vld [vmem:[%s540] sm:$0x1]
      %v608 = vpack.c.bf16 %v597, %v597
      %v610 = vlaneseq
      %v611 = vshrl.u32 %v610, 7
      %v612 = vsub.s32 0, %v611
      %v613 = vrot.slane %v602, %v612
      %v619 = vunpack.c.l.b16 %v598
      %v620 = vunpack.c.l.b16 %v599
      %v621 = vunpack.c.l.b16 %v600
      %v622 = vunpack.c.l.b16 %v601
      %v623 = vpack.c.b16 %v620, %v619
      %v624 = vpack.c.b16 %v622, %v621
      %vm627 = vcmask 261120
      %v629 = vsel %vm627, %v608, 0
      %631 = vmatprep.subr.bf16.mxu0 0
      %632 = vmatpush1.bf16.msra.mxu0 0
      %633 = vmatprep.subr.bf16.mxu0 0
      %634 = vmatpush1.bf16.msra.mxu0 0
      %635 = vmatprep.subr.bf16.mxu0 0
      %636 = vmatpush1.bf16.msra.mxu0 0
      %637 = vmatprep.subr.bf16.mxu0 0
      %638 = vmatpush1.bf16.msra.mxu0 0
      %639 = vmatprep.subr.bf16.mxu0 0
      %640 = vmatpush1.bf16.msra.mxu0 0
      %641 = vmatprep.subr.bf16.mxu0 0
      %642 = vmatpush1.bf16.msra.mxu0 0
      %643 = vmatprep.subr.bf16.mxu0 0
      %644 = vmatpush1.bf16.msra.mxu0 %v624
      %645 = vmatprep.subr.bf16.mxu0 0
      %646 = vmatpush1.bf16.msra.mxu0 %v623
      %647 = vmatprep.subr.bf16.mxu0 0
      %648 = vmatpush2.bf16.msra.mxu0 0
      %649 = vmatprep.subr.bf16.mxu0 0
      %650 = vmatpush2.bf16.msra.mxu0 0
      %651 = vmatprep.subr.bf16.mxu0 0
      %652 = vmatpush2.bf16.msra.mxu0 0
      %653 = vmatprep.subr.bf16.mxu0 0
      %654 = vmatpush2.bf16.msra.mxu0 0
      %655 = vmatprep.subr.bf16.mxu0 0
      %656 = vmatpush2.bf16.msra.mxu0 0
      %657 = vmatprep.subr.bf16.mxu0 0
      %658 = vmatpush2.bf16.msra.mxu0 0
      %659 = vmatprep.subr.bf16.mxu0 0
      %660 = vmatpush2.bf16.msra.mxu0 0
      %661 = vmatprep.subr.bf16.mxu0 0
      %662 = vmatpush2.bf16.msra.mxu0 0
      %663 = vmatprep.mubr.bf16.mxu0 0
      %664 = vmatmul.mubr.bf16.gmra.mxu0 %v629
      %v665 = vpop.f32.mrf.mxu0
      %v666 = vadd.f32 %v613, %v665
      %v667 = vpop.f32.mrf.mxu0
      %v668 = vpop.f32.mrf.mxu0
      %v669 = vpop.f32.mrf.mxu0
      %670 = vdwg.mxu0
      %v671 = vpack.c.bf16 %v666, %v666
      %673 = vrot.lane.b32.xlu0 %v671, 96
      %v674 = vpop.permute.xlu0 %673
      %vm675 = vcmask 64512
      %v677 = vsel %vm675, %v671, 0
      %v680 = vsel %vm675, %v674, 0
      %682 = vmatprep.subr.bf16.mxu0 0
      %683 = vmatpush1.bf16.xpose.msra.mxu0 0
      %684 = vmatprep.subr.bf16.mxu0 0
      %685 = vmatpush1.bf16.xpose.msra.mxu0 0
      %686 = vmatprep.subr.bf16.mxu0 0
      %687 = vmatpush1.bf16.xpose.msra.mxu0 0
      %688 = vmatprep.subr.bf16.mxu0 0
      %689 = vmatpush1.bf16.xpose.msra.mxu0 0
      %690 = vmatprep.subr.bf16.mxu0 0
      %691 = vmatpush1.bf16.xpose.msra.mxu0 0
      %692 = vmatprep.subr.bf16.mxu0 0
      %693 = vmatpush1.bf16.xpose.msra.mxu0 0
      %694 = vmatprep.subr.bf16.mxu0 0
      %695 = vmatpush1.bf16.xpose.msra.mxu0 0
      %696 = vmatprep.subr.bf16.mxu0 0
      %697 = vmatpush1.bf16.xpose.msra.mxu0 %v680
      %698 = vmatprep.subr.bf16.mxu0 0
      %699 = vmatpush2.bf16.xpose.msra.mxu0 0
      %700 = vmatprep.subr.bf16.mxu0 0
      %701 = vmatpush2.bf16.xpose.msra.mxu0 0
      %702 = vmatprep.subr.bf16.mxu0 0
      %703 = vmatpush2.bf16.xpose.msra.mxu0 0
      %704 = vmatprep.subr.bf16.mxu0 0
      %705 = vmatpush2.bf16.xpose.msra.mxu0 0
      %706 = vmatprep.subr.bf16.mxu0 0
      %707 = vmatpush2.bf16.xpose.msra.mxu0 0
      %708 = vmatprep.subr.bf16.mxu0 0
      %709 = vmatpush2.bf16.xpose.msra.mxu0 0
      %710 = vmatprep.subr.bf16.mxu0 0
      %711 = vmatpush2.bf16.xpose.msra.mxu0 0
      %712 = vmatprep.subr.bf16.mxu0 0
      %713 = vmatpush2.bf16.xpose.msra.mxu0 0
      %714 = vmatprep.mubr.bf16.mxu0 0
      %715 = vmatmul.mubr.bf16.gmra.mxu0 %v677
      %v716 = vpop.f32.mrf.mxu0
      %v717 = vadd.f32 0.0, %v716
      %v718 = vpop.f32.mrf.mxu0
      %v719 = vpop.f32.mrf.mxu0
      %v720 = vpop.f32.mrf.mxu0
      %721 = vdwg.mxu0
      %v722 = vmul.f32 %v717, 0.35355338
      %v724 = vlaneseq
      %v725 = vshrl.u32 %v724, 7
      %v726 = vsub.s32 0, %v725
      %v727 = vrot.slane %v571, %v726
      %v729 = vadd.f32 %v722, %v727
      %vm730 = vcmask 55296
      %v731 = vsel %vm730, %v729, -inf
      %732 = vmax.xlane.f32.xlu0 %v731
      %v733 = vpop.xlane.xlu0 %732
      %v734 = vsub.f32 %v729, %v733
      %v735 = vmul.f32 %v734, 1.442695
      %v736 = vpow.pop %v735
      %v737 = vsel %vm730, %v736, 0.0
      %738 = vadd.xlane.f32.xlu0 %v737
      %v739 = vpop.xlane.xlu0 %738
      %v740 = vrcp.pop %v739
      %v741 = vmul.f32 %v736, %v740
      %v742 = vpack.c.bf16 %v741, %v741
      %743 = vrot.lane.b32.xlu0 %v671, 64
      %v744 = vpop.permute.xlu0 %743
      %vm745 = vcmask 56320
      %v747 = vsel %vm745, %v742, 0
      %vm749 = vcmask 1042432
      %vm750 = vcmask 1043456
      %v751 = vsel %vm749, 4294967295, 65535
      %v752 = vsel %vm750, %v751, 0
      %v754 = vand.u32 %v744, %v752
      %756 = vmatprep.subr.bf16.mxu0 0
      %757 = vmatpush1.bf16.msra.mxu0 0
      %758 = vmatprep.subr.bf16.mxu0 0
      %759 = vmatpush1.bf16.msra.mxu0 0
      %760 = vmatprep.subr.bf16.mxu0 0
      %761 = vmatpush1.bf16.msra.mxu0 0
      %762 = vmatprep.subr.bf16.mxu0 0
      %763 = vmatpush1.bf16.msra.mxu0 0
      %764 = vmatprep.subr.bf16.mxu0 0
      %765 = vmatpush1.bf16.msra.mxu0 0
      %766 = vmatprep.subr.bf16.mxu0 0
      %767 = vmatpush1.bf16.msra.mxu0 0
      %768 = vmatprep.subr.bf16.mxu0 0
      %769 = vmatpush1.bf16.msra.mxu0 0
      %770 = vmatprep.subr.bf16.mxu0 0
      %771 = vmatpush1.bf16.msra.mxu0 %v754
      %772 = vmatprep.subr.bf16.mxu0 0
      %773 = vmatpush2.bf16.msra.mxu0 0
      %774 = vmatprep.subr.bf16.mxu0 0
      %775 = vmatpush2.bf16.msra.mxu0 0
      %776 = vmatprep.subr.bf16.mxu0 0
      %777 = vmatpush2.bf16.msra.mxu0 0
      %778 = vmatprep.subr.bf16.mxu0 0
      %779 = vmatpush2.bf16.msra.mxu0 0
      %780 = vmatprep.subr.bf16.mxu0 0
      %781 = vmatpush2.bf16.msra.mxu0 0
      %782 = vmatprep.subr.bf16.mxu0 0
      %783 = vmatpush2.bf16.msra.mxu0 0
      %784 = vmatprep.subr.bf16.mxu0 0
      %785 = vmatpush2.bf16.msra.mxu0 0
      %786 = vmatprep.subr.bf16.mxu0 0
      %787 = vmatpush2.bf16.msra.mxu0 0
      %788 = vmatprep.mubr.bf16.mxu0 0
      %789 = vmatmul.mubr.bf16.gmra.mxu0 %v747
      %v790 = vpop.f32.mrf.mxu0
      %v791 = vadd.f32 0.0, %v790
      %v792 = vpop.f32.mrf.mxu0
      %v793 = vpop.f32.mrf.mxu0
      %v794 = vpop.f32.mrf.mxu0
      %795 = vdwg.mxu0
      %796 = vrot.lane.b32.xlu0 %v671, 120
      %v797 = vpop.permute.xlu0 %796
      %798 = vrot.lane.b32.xlu0 %v671, 88
      %v799 = vpop.permute.xlu0 %798
      %v801 = vsel %vm675, %v797, 0
      %v804 = vsel %vm675, %v799, 0
      %806 = vmatprep.subr.bf16.mxu0 0
      %807 = vmatpush1.bf16.xpose.msra.mxu0 0
      %808 = vmatprep.subr.bf16.mxu0 0
      %809 = vmatpush1.bf16.xpose.msra.mxu0 0
      %810 = vmatprep.subr.bf16.mxu0 0
      %811 = vmatpush1.bf16.xpose.msra.mxu0 0
      %812 = vmatprep.subr.bf16.mxu0 0
      %813 = vmatpush1.bf16.xpose.msra.mxu0 0
      %814 = vmatprep.subr.bf16.mxu0 0
      %815 = vmatpush1.bf16.xpose.msra.mxu0 0
      %816 = vmatprep.subr.bf16.mxu0 0
      %817 = vmatpush1.bf16.xpose.msra.mxu0 0
      %818 = vmatprep.subr.bf16.mxu0 0
      %819 = vmatpush1.bf16.xpose.msra.mxu0 0
      %820 = vmatprep.subr.bf16.mxu0 0
      %821 = vmatpush1.bf16.xpose.msra.mxu0 %v804
      %822 = vmatprep.subr.bf16.mxu0 0
      %823 = vmatpush2.bf16.xpose.msra.mxu0 0
      %824 = vmatprep.subr.bf16.mxu0 0
      %825 = vmatpush2.bf16.xpose.msra.mxu0 0
      %826 = vmatprep.subr.bf16.mxu0 0
      %827 = vmatpush2.bf16.xpose.msra.mxu0 0
      %828 = vmatprep.subr.bf16.mxu0 0
      %829 = vmatpush2.bf16.xpose.msra.mxu0 0
      %830 = vmatprep.subr.bf16.mxu0 0
      %831 = vmatpush2.bf16.xpose.msra.mxu0 0
      %832 = vmatprep.subr.bf16.mxu0 0
      %833 = vmatpush2.bf16.xpose.msra.mxu0 0
      %834 = vmatprep.subr.bf16.mxu0 0
      %835 = vmatpush2.bf16.xpose.msra.mxu0 0
      %836 = vmatprep.subr.bf16.mxu0 0
      %837 = vmatpush2.bf16.xpose.msra.mxu0 0
      %838 = vmatprep.mubr.bf16.mxu0 0
      %839 = vmatmul.mubr.bf16.gmra.mxu0 %v801
      %v840 = vpop.f32.mrf.mxu0
      %v841 = vadd.f32 0.0, %v840
      %v842 = vpop.f32.mrf.mxu0
      %v843 = vpop.f32.mrf.mxu0
      %v844 = vpop.f32.mrf.mxu0
      %845 = vdwg.mxu0
      %v846 = vmul.f32 %v841, 0.35355338
      %v847 = vadd.f32 %v846, %v727
      %v848 = vsel %vm730, %v847, -inf
      %849 = vmax.xlane.f32.xlu0 %v848
      %v850 = vpop.xlane.xlu0 %849
      %v851 = vsub.f32 %v847, %v850
      %v852 = vmul.f32 %v851, 1.442695
      %v853 = vpow.pop %v852
      %v854 = vsel %vm730, %v853, 0.0
      %855 = vadd.xlane.f32.xlu0 %v854
      %v856 = vpop.xlane.xlu0 %855
      %v857 = vrcp.pop %v856
      %v858 = vmul.f32 %v853, %v857
      %v859 = vpack.c.bf16 %v858, %v858
      %860 = vrot.lane.b32.xlu0 %v671, 56
      %v861 = vpop.permute.xlu0 %860
      %v863 = vsel %vm745, %v859, 0
      %v866 = vand.u32 %v861, %v752
      %868 = vmatprep.subr.bf16.mxu0 0
      %869 = vmatpush1.bf16.msra.mxu0 0
      %870 = vmatprep.subr.bf16.mxu0 0
      %871 = vmatpush1.bf16.msra.mxu0 0
      %872 = vmatprep.subr.bf16.mxu0 0
      %873 = vmatpush1.bf16.msra.mxu0 0
      %874 = vmatprep.subr.bf16.mxu0 0
      %875 = vmatpush1.bf16.msra.mxu0 0
      %876 = vmatprep.subr.bf16.mxu0 0
      %877 = vmatpush1.bf16.msra.mxu0 0
      %878 = vmatprep.subr.bf16.mxu0 0
      %879 = vmatpush1.bf16.msra.mxu0 0
      %880 = vmatprep.subr.bf16.mxu0 0
      %881 = vmatpush1.bf16.msra.mxu0 0
      %882 = vmatprep.subr.bf16.mxu0 0
      %883 = vmatpush1.bf16.msra.mxu0 %v866
      %884 = vmatprep.subr.bf16.mxu0 0
      %885 = vmatpush2.bf16.msra.mxu0 0
      %886 = vmatprep.subr.bf16.mxu0 0
      %887 = vmatpush2.bf16.msra.mxu0 0
      %888 = vmatprep.subr.bf16.mxu0 0
      %889 = vmatpush2.bf16.msra.mxu0 0
      %890 = vmatprep.subr.bf16.mxu0 0
      %891 = vmatpush2.bf16.msra.mxu0 0
      %892 = vmatprep.subr.bf16.mxu0 0
      %893 = vmatpush2.bf16.msra.mxu0 0
      %894 = vmatprep.subr.bf16.mxu0 0
      %895 = vmatpush2.bf16.msra.mxu0 0
      %896 = vmatprep.subr.bf16.mxu0 0
      %897 = vmatpush2.bf16.msra.mxu0 0
      %898 = vmatprep.subr.bf16.mxu0 0
      %899 = vmatpush2.bf16.msra.mxu0 0
      %900 = vmatprep.mubr.bf16.mxu0 0
      %901 = vmatmul.mubr.bf16.gmra.mxu0 %v863
      %v902 = vpop.f32.mrf.mxu0
      %v903 = vadd.f32 0.0, %v902
      %v904 = vpop.f32.mrf.mxu0
      %v905 = vpop.f32.mrf.mxu0
      %v906 = vpop.f32.mrf.mxu0
      %907 = vdwg.mxu0
      %908 = vrot.lane.b32.xlu0 %v671, 112
      %v909 = vpop.permute.xlu0 %908
      %910 = vrot.lane.b32.xlu0 %v671, 80
      %v911 = vpop.permute.xlu0 %910
      %v913 = vsel %vm675, %v909, 0
      %v916 = vsel %vm675, %v911, 0
      %918 = vmatprep.subr.bf16.mxu0 0
      %919 = vmatpush1.bf16.xpose.msra.mxu0 0
      %920 = vmatprep.subr.bf16.mxu0 0
      %921 = vmatpush1.bf16.xpose.msra.mxu0 0
      %922 = vmatprep.subr.bf16.mxu0 0
      %923 = vmatpush1.bf16.xpose.msra.mxu0 0
      %924 = vmatprep.subr.bf16.mxu0 0
      %925 = vmatpush1.bf16.xpose.msra.mxu0 0
      %926 = vmatprep.subr.bf16.mxu0 0
      %927 = vmatpush1.bf16.xpose.msra.mxu0 0
      %928 = vmatprep.subr.bf16.mxu0 0
      %929 = vmatpush1.bf16.xpose.msra.mxu0 0
      %930 = vmatprep.subr.bf16.mxu0 0
      %931 = vmatpush1.bf16.xpose.msra.mxu0 0
      %932 = vmatprep.subr.bf16.mxu0 0
      %933 = vmatpush1.bf16.xpose.msra.mxu0 %v916
      %934 = vmatprep.subr.bf16.mxu0 0
      %935 = vmatpush2.bf16.xpose.msra.mxu0 0
      %936 = vmatprep.subr.bf16.mxu0 0
      %937 = vmatpush2.bf16.xpose.msra.mxu0 0
      %938 = vmatprep.subr.bf16.mxu0 0
      %939 = vmatpush2.bf16.xpose.msra.mxu0 0
      %940 = vmatprep.subr.bf16.mxu0 0
      %941 = vmatpush2.bf16.xpose.msra.mxu0 0
      %942 = vmatprep.subr.bf16.mxu0 0
      %943 = vmatpush2.bf16.xpose.msra.mxu0 0
      %944 = vmatprep.subr.bf16.mxu0 0
      %945 = vmatpush2.bf16.xpose.msra.mxu0 0
      %946 = vmatprep.subr.bf16.mxu0 0
      %947 = vmatpush2.bf16.xpose.msra.mxu0 0
      %948 = vmatprep.subr.bf16.mxu0 0
      %949 = vmatpush2.bf16.xpose.msra.mxu0 0
      %950 = vmatprep.mubr.bf16.mxu0 0
      %951 = vmatmul.mubr.bf16.gmra.mxu0 %v913
      %v952 = vpop.f32.mrf.mxu0
      %v953 = vadd.f32 0.0, %v952
      %v954 = vpop.f32.mrf.mxu0
      %v955 = vpop.f32.mrf.mxu0
      %v956 = vpop.f32.mrf.mxu0
      %957 = vdwg.mxu0
      %v958 = vmul.f32 %v953, 0.35355338
      %v959 = vadd.f32 %v958, %v727
      %v960 = vsel %vm730, %v959, -inf
      %961 = vmax.xlane.f32.xlu0 %v960
      %v962 = vpop.xlane.xlu0 %961
      %v963 = vsub.f32 %v959, %v962
      %v964 = vmul.f32 %v963, 1.442695
      %v965 = vpow.pop %v964
      %v966 = vsel %vm730, %v965, 0.0
      %967 = vadd.xlane.f32.xlu0 %v966
      %v968 = vpop.xlane.xlu0 %967
      %v969 = vrcp.pop %v968
      %v970 = vmul.f32 %v965, %v969
      %v971 = vpack.c.bf16 %v970, %v970
      %972 = vrot.lane.b32.xlu0 %v671, 48
      %v973 = vpop.permute.xlu0 %972
      %v975 = vsel %vm745, %v971, 0
      %v978 = vand.u32 %v973, %v752
      %980 = vmatprep.subr.bf16.mxu0 0
      %981 = vmatpush1.bf16.msra.mxu0 0
      %982 = vmatprep.subr.bf16.mxu0 0
      %983 = vmatpush1.bf16.msra.mxu0 0
      %984 = vmatprep.subr.bf16.mxu0 0
      %985 = vmatpush1.bf16.msra.mxu0 0
      %986 = vmatprep.subr.bf16.mxu0 0
      %987 = vmatpush1.bf16.msra.mxu0 0
      %988 = vmatprep.subr.bf16.mxu0 0
      %989 = vmatpush1.bf16.msra.mxu0 0
      %990 = vmatprep.subr.bf16.mxu0 0
      %991 = vmatpush1.bf16.msra.mxu0 0
      %992 = vmatprep.subr.bf16.mxu0 0
      %993 = vmatpush1.bf16.msra.mxu0 0
      %994 = vmatprep.subr.bf16.mxu0 0
      %995 = vmatpush1.bf16.msra.mxu0 %v978
      %996 = vmatprep.subr.bf16.mxu0 0
      %997 = vmatpush2.bf16.msra.mxu0 0
      %998 = vmatprep.subr.bf16.mxu0 0
      %999 = vmatpush2.bf16.msra.mxu0 0
      %1000 = vmatprep.subr.bf16.mxu0 0
      %1001 = vmatpush2.bf16.msra.mxu0 0
      %1002 = vmatprep.subr.bf16.mxu0 0
      %1003 = vmatpush2.bf16.msra.mxu0 0
      %1004 = vmatprep.subr.bf16.mxu0 0
      %1005 = vmatpush2.bf16.msra.mxu0 0
      %1006 = vmatprep.subr.bf16.mxu0 0
      %1007 = vmatpush2.bf16.msra.mxu0 0
      %1008 = vmatprep.subr.bf16.mxu0 0
      %1009 = vmatpush2.bf16.msra.mxu0 0
      %1010 = vmatprep.subr.bf16.mxu0 0
      %1011 = vmatpush2.bf16.msra.mxu0 0
      %1012 = vmatprep.mubr.bf16.mxu0 0
      %1013 = vmatmul.mubr.bf16.gmra.mxu0 %v975
      %v1014 = vpop.f32.mrf.mxu0
      %v1015 = vadd.f32 0.0, %v1014
      %v1016 = vpop.f32.mrf.mxu0
      %v1017 = vpop.f32.mrf.mxu0
      %v1018 = vpop.f32.mrf.mxu0
      %1019 = vdwg.mxu0
      %1020 = vrot.lane.b32.xlu0 %v671, 104
      %v1021 = vpop.permute.xlu0 %1020
      %1022 = vrot.lane.b32.xlu0 %v671, 72
      %v1023 = vpop.permute.xlu0 %1022
      %v1025 = vsel %vm675, %v1021, 0
      %v1028 = vsel %vm675, %v1023, 0
      %1030 = vmatprep.subr.bf16.mxu0 0
      %1031 = vmatpush1.bf16.xpose.msra.mxu0 0
      %1032 = vmatprep.subr.bf16.mxu0 0
      %1033 = vmatpush1.bf16.xpose.msra.mxu0 0
      %1034 = vmatprep.subr.bf16.mxu0 0
      %1035 = vmatpush1.bf16.xpose.msra.mxu0 0
      %1036 = vmatprep.subr.bf16.mxu0 0
      %1037 = vmatpush1.bf16.xpose.msra.mxu0 0
      %1038 = vmatprep.subr.bf16.mxu0 0
      %1039 = vmatpush1.bf16.xpose.msra.mxu0 0
      %1040 = vmatprep.subr.bf16.mxu0 0
      %1041 = vmatpush1.bf16.xpose.msra.mxu0 0
      %1042 = vmatprep.subr.bf16.mxu0 0
      %1043 = vmatpush1.bf16.xpose.msra.mxu0 0
      %1044 = vmatprep.subr.bf16.mxu0 0
      %1045 = vmatpush1.bf16.xpose.msra.mxu0 %v1028
      %1046 = vmatprep.subr.bf16.mxu0 0
      %1047 = vmatpush2.bf16.xpose.msra.mxu0 0
      %1048 = vmatprep.subr.bf16.mxu0 0
      %1049 = vmatpush2.bf16.xpose.msra.mxu0 0
      %1050 = vmatprep.subr.bf16.mxu0 0
      %1051 = vmatpush2.bf16.xpose.msra.mxu0 0
      %1052 = vmatprep.subr.bf16.mxu0 0
      %1053 = vmatpush2.bf16.xpose.msra.mxu0 0
      %1054 = vmatprep.subr.bf16.mxu0 0
      %1055 = vmatpush2.bf16.xpose.msra.mxu0 0
      %1056 = vmatprep.subr.bf16.mxu0 0
      %1057 = vmatpush2.bf16.xpose.msra.mxu0 0
      %1058 = vmatprep.subr.bf16.mxu0 0
      %1059 = vmatpush2.bf16.xpose.msra.mxu0 0
      %1060 = vmatprep.subr.bf16.mxu0 0
      %1061 = vmatpush2.bf16.xpose.msra.mxu0 0
      %1062 = vmatprep.mubr.bf16.mxu0 0
      %1063 = vmatmul.mubr.bf16.gmra.mxu0 %v1025
      %v1064 = vpop.f32.mrf.mxu0
      %v1065 = vadd.f32 0.0, %v1064
      %v1066 = vpop.f32.mrf.mxu0
      %v1067 = vpop.f32.mrf.mxu0
      %v1068 = vpop.f32.mrf.mxu0
      %1069 = vdwg.mxu0
      %v1070 = vmul.f32 %v1065, 0.35355338
      %v1071 = vadd.f32 %v1070, %v727
      %v1072 = vsel %vm730, %v1071, -inf
      %1073 = vmax.xlane.f32.xlu0 %v1072
      %v1074 = vpop.xlane.xlu0 %1073
      %v1075 = vsub.f32 %v1071, %v1074
      %v1076 = vmul.f32 %v1075, 1.442695
      %v1077 = vpow.pop %v1076
      %v1078 = vsel %vm730, %v1077, 0.0
      %1079 = vadd.xlane.f32.xlu0 %v1078
      %v1080 = vpop.xlane.xlu0 %1079
      %v1081 = vrcp.pop %v1080
      %v1082 = vmul.f32 %v1077, %v1081
      %v1083 = vpack.c.bf16 %v1082, %v1082
      %1084 = vrot.lane.b32.xlu0 %v671, 40
      %v1085 = vpop.permute.xlu0 %1084
      %v1087 = vsel %vm745, %v1083, 0
      %v1090 = vand.u32 %v1085, %v752
      %1092 = vmatprep.subr.bf16.mxu0 0
      %1093 = vmatpush1.bf16.msra.mxu0 0
      %1094 = vmatprep.subr.bf16.mxu0 0
      %1095 = vmatpush1.bf16.msra.mxu0 0
      %1096 = vmatprep.subr.bf16.mxu0 0
      %1097 = vmatpush1.bf16.msra.mxu0 0
      %1098 = vmatprep.subr.bf16.mxu0 0
      %1099 = vmatpush1.bf16.msra.mxu0 0
      %1100 = vmatprep.subr.bf16.mxu0 0
      %1101 = vmatpush1.bf16.msra.mxu0 0
      %1102 = vmatprep.subr.bf16.mxu0 0
      %1103 = vmatpush1.bf16.msra.mxu0 0
      %1104 = vmatprep.subr.bf16.mxu0 0
      %1105 = vmatpush1.bf16.msra.mxu0 0
      %1106 = vmatprep.subr.bf16.mxu0 0
      %1107 = vmatpush1.bf16.msra.mxu0 %v1090
      %1108 = vmatprep.subr.bf16.mxu0 0
      %1109 = vmatpush2.bf16.msra.mxu0 0
      %1110 = vmatprep.subr.bf16.mxu0 0
      %1111 = vmatpush2.bf16.msra.mxu0 0
      %1112 = vmatprep.subr.bf16.mxu0 0
      %1113 = vmatpush2.bf16.msra.mxu0 0
      %1114 = vmatprep.subr.bf16.mxu0 0
      %1115 = vmatpush2.bf16.msra.mxu0 0
      %1116 = vmatprep.subr.bf16.mxu0 0
      %1117 = vmatpush2.bf16.msra.mxu0 0
      %1118 = vmatprep.subr.bf16.mxu0 0
      %1119 = vmatpush2.bf16.msra.mxu0 0
      %1120 = vmatprep.subr.bf16.mxu0 0
      %1121 = vmatpush2.bf16.msra.mxu0 0
      %1122 = vmatprep.subr.bf16.mxu0 0
      %1123 = vmatpush2.bf16.msra.mxu0 0
      %1124 = vmatprep.mubr.bf16.mxu0 0
      %1125 = vmatmul.mubr.bf16.gmra.mxu0 %v1087
      %v1126 = vpop.f32.mrf.mxu0
      %v1127 = vadd.f32 0.0, %v1126
      %v1128 = vpop.f32.mrf.mxu0
      %v1129 = vpop.f32.mrf.mxu0
      %v1130 = vpop.f32.mrf.mxu0
      %1131 = vdwg.mxu0
      %1133 = vrot.lane.b32.xlu0 %v903, 8
      %v1134 = vpop.permute.xlu0 %1133
      %1137 = vrot.lane.b32.xlu0 %v1015, 16
      %v1138 = vpop.permute.xlu0 %1137
      %1141 = vrot.lane.b32.xlu0 %v1127, 24
      %v1142 = vpop.permute.xlu0 %1141
      %v1144 = vsel %vm675, %v791, %v1134
      %vm1145 = vcmask 130048
      %v1146 = vsel %vm1145, %v1144, %v1138
      %vm1147 = vcmask 195584
      %v1148 = vsel %vm1147, %v1146, %v1142
      %v1149 = vpack.c.bf16 %v1148, %v1148
      %v1151 = vlaneseq
      %v1152 = vshrl.u32 %v1151, 7
      %v1153 = vsub.s32 0, %v1152
      %v1154 = vrot.slane %v607, %v1153
      %v1160 = vunpack.c.l.b16 %v603
      %v1161 = vunpack.c.l.b16 %v604
      %v1162 = vunpack.c.l.b16 %v605
      %v1163 = vunpack.c.l.b16 %v606
      %v1164 = vpack.c.b16 %v1161, %v1160
      %v1165 = vpack.c.b16 %v1163, %v1162
      %v1169 = vsel %vm627, %v1149, 0
      %1171 = vmatprep.subr.bf16.mxu0 0
      %1172 = vmatpush1.bf16.msra.mxu0 0
      %1173 = vmatprep.subr.bf16.mxu0 0
      %1174 = vmatpush1.bf16.msra.mxu0 0
      %1175 = vmatprep.subr.bf16.mxu0 0
      %1176 = vmatpush1.bf16.msra.mxu0 0
      %1177 = vmatprep.subr.bf16.mxu0 0
      %1178 = vmatpush1.bf16.msra.mxu0 0
      %1179 = vmatprep.subr.bf16.mxu0 0
      %1180 = vmatpush1.bf16.msra.mxu0 0
      %1181 = vmatprep.subr.bf16.mxu0 0
      %1182 = vmatpush1.bf16.msra.mxu0 0
      %1183 = vmatprep.subr.bf16.mxu0 0
      %1184 = vmatpush1.bf16.msra.mxu0 %v1165
      %1185 = vmatprep.subr.bf16.mxu0 0
      %1186 = vmatpush1.bf16.msra.mxu0 %v1164
      %1187 = vmatprep.subr.bf16.mxu0 0
      %1188 = vmatpush2.bf16.msra.mxu0 0
      %1189 = vmatprep.subr.bf16.mxu0 0
      %1190 = vmatpush2.bf16.msra.mxu0 0
      %1191 = vmatprep.subr.bf16.mxu0 0
      %1192 = vmatpush2.bf16.msra.mxu0 0
      %1193 = vmatprep.subr.bf16.mxu0 0
      %1194 = vmatpush2.bf16.msra.mxu0 0
      %1195 = vmatprep.subr.bf16.mxu0 0
      %1196 = vmatpush2.bf16.msra.mxu0 0
      %1197 = vmatprep.subr.bf16.mxu0 0
      %1198 = vmatpush2.bf16.msra.mxu0 0
      %1199 = vmatprep.subr.bf16.mxu0 0
      %1200 = vmatpush2.bf16.msra.mxu0 0
      %1201 = vmatprep.subr.bf16.mxu0 0
      %1202 = vmatpush2.bf16.msra.mxu0 0
      %1203 = vmatprep.mubr.bf16.mxu0 0
      %1204 = vmatmul.mubr.bf16.gmra.mxu0 %v1169
      %v1205 = vpop.f32.mrf.mxu0
      %v1206 = vadd.f32 %v1154, %v1205
      %v1207 = vpop.f32.mrf.mxu0
      %v1208 = vpop.f32.mrf.mxu0
      %v1209 = vpop.f32.mrf.mxu0
      %1210 = vdwg.mxu0
      %v1211 = vadd.f32 %v570, %v1206
      %v1212 = vsel %vm573, %v1211, 0.0
      %1213 = vadd.xlane.f32.xlu0 %v1212
      %v1214 = vpop.xlane.xlu0 %1213
      %v1215 = vmul.f32 %v1214, %v577
      %v1216 = vsub.f32 %v1211, %v1215
      %v1217 = vmul.f32 %v1216, %v1216
      %v1218 = vsel %vm573, %v1217, 0.0
      %1219 = vadd.xlane.f32.xlu0 %v1218
      %v1220 = vpop.xlane.xlu0 %1219
      %v1221 = vmul.f32 %v1220, %v577
      %v1222 = vadd.f32 %v1221, 1e-12
      %v1223 = vrsqrt.pop %v1222
      %v1224 = vmul.f32 %v1216, %v1223
      %v1225 = vlaneseq
      %v1226 = vshrl.u32 %v1225, 7
      %v1227 = vsub.s32 2, %v1226
      %v1228 = vrot.slane %v572, %v1227
      %v1229 = vmul.f32 %v1224, %v1228
      %v1230 = vlaneseq
      %v1231 = vshrl.u32 %v1230, 7
      %v1232 = vsub.s32 3, %v1231
      %v1233 = vrot.slane %v572, %v1232
      %v1234 = vadd.f32 %v1229, %v1233
      %v1235 = vld [vmem:[%s545] sm:$0xf]
      %v1236 = vld [vmem:[%s545 + $0x4] sm:$0xf]
      %v1237 = vld [vmem:[%s545 + $0x8] sm:$0xf]
      %v1238 = vld [vmem:[%s545 + $0xc] sm:$0xf]
      %v1239 = vld [vmem:[%s548] sm:$0x1]
      %v1240 = vld [vmem:[%s553] sm:$0xf]
      %v1241 = vld [vmem:[%s553 + $0x4] sm:$0xf]
      %v1242 = vld [vmem:[%s553 + $0x8] sm:$0xf]
      %v1243 = vld [vmem:[%s553 + $0xc] sm:$0xf]
      %v1244 = vld [vmem:[%s553 + $0x10] sm:$0xf]
      %v1245 = vld [vmem:[%s553 + $0x14] sm:$0xf]
      %v1246 = vld [vmem:[%s553 + $0x18] sm:$0xf]
      %v1247 = vld [vmem:[%s553 + $0x1c] sm:$0xf]
      %v1248 = vld [vmem:[%s556] sm:$0x1]
      %v1249 = vpack.c.bf16 %v1234, %v1234
      %v1251 = vlaneseq
      %v1252 = vshrl.u32 %v1251, 7
      %v1253 = vsub.s32 0, %v1252
      %v1254 = vrot.slane %v1239, %v1253
      %v1260 = vunpack.c.l.b16 %v1235
      %v1261 = vunpack.c.l.b16 %v1236
      %v1262 = vunpack.c.l.b16 %v1237
      %v1263 = vunpack.c.l.b16 %v1238
      %v1264 = vpack.c.b16 %v1261, %v1260
      %v1265 = vpack.c.b16 %v1263, %v1262
      %v1269 = vsel %vm627, %v1249, 0
      %1271 = vmatprep.subr.bf16.mxu0 0
      %1272 = vmatpush1.bf16.msra.mxu0 0
      %1273 = vmatprep.subr.bf16.mxu0 0
      %1274 = vmatpush1.bf16.msra.mxu0 0
      %1275 = vmatprep.subr.bf16.mxu0 0
      %1276 = vmatpush1.bf16.msra.mxu0 0
      %1277 = vmatprep.subr.bf16.mxu0 0
      %1278 = vmatpush1.bf16.msra.mxu0 0
      %1279 = vmatprep.subr.bf16.mxu0 0
      %1280 = vmatpush1.bf16.msra.mxu0 0
      %1281 = vmatprep.subr.bf16.mxu0 0
      %1282 = vmatpush1.bf16.msra.mxu0 0
      %1283 = vmatprep.subr.bf16.mxu0 0
      %1284 = vmatpush1.bf16.msra.mxu0 %v1265
      %1285 = vmatprep.subr.bf16.mxu0 0
      %1286 = vmatpush1.bf16.msra.mxu0 %v1264
      %1287 = vmatprep.subr.bf16.mxu0 0
      %1288 = vmatpush2.bf16.msra.mxu0 0
      %1289 = vmatprep.subr.bf16.mxu0 0
      %1290 = vmatpush2.bf16.msra.mxu0 0
      %1291 = vmatprep.subr.bf16.mxu0 0
      %1292 = vmatpush2.bf16.msra.mxu0 0
      %1293 = vmatprep.subr.bf16.mxu0 0
      %1294 = vmatpush2.bf16.msra.mxu0 0
      %1295 = vmatprep.subr.bf16.mxu0 0
      %1296 = vmatpush2.bf16.msra.mxu0 0
      %1297 = vmatprep.subr.bf16.mxu0 0
      %1298 = vmatpush2.bf16.msra.mxu0 0
      %1299 = vmatprep.subr.bf16.mxu0 0
      %1300 = vmatpush2.bf16.msra.mxu0 0
      %1301 = vmatprep.subr.bf16.mxu0 0
      %1302 = vmatpush2.bf16.msra.mxu0 0
      %1303 = vmatprep.mubr.bf16.mxu0 0
      %1304 = vmatmul.mubr.bf16.gmra.mxu0 %v1269
      %v1305 = vpop.f32.mrf.mxu0
      %v1306 = vadd.f32 %v1254, %v1305
      %v1307 = vpop.f32.mrf.mxu0
      %v1308 = vpop.f32.mrf.mxu0
      %v1309 = vpop.f32.mrf.mxu0
      %1310 = vdwg.mxu0
      %v1311 = vmax.f32 %v1306, 0.0
      %v1312 = vpack.c.bf16 %v1311, %v1311
      %v1314 = vlaneseq
      %v1315 = vshrl.u32 %v1314, 7
      %v1316 = vsub.s32 0, %v1315
      %v1317 = vrot.slane %v1248, %v1316
      %v1327 = vunpack.c.l.b16 %v1240
      %v1328 = vunpack.c.l.b16 %v1241
      %v1329 = vunpack.c.l.b16 %v1242
      %v1330 = vunpack.c.l.b16 %v1243
      %v1331 = vunpack.c.l.b16 %v1244
      %v1332 = vunpack.c.l.b16 %v1245
      %v1333 = vunpack.c.l.b16 %v1246
      %v1334 = vunpack.c.l.b16 %v1247
      %v1335 = vpack.c.b16 %v1328, %v1327
      %v1336 = vpack.c.b16 %v1330, %v1329
      %v1337 = vpack.c.b16 %v1332, %v1331
      %v1338 = vpack.c.b16 %v1334, %v1333
      %vm1343 = vcmask 523264
      %v1345 = vsel %vm1343, %v1312, 0
      %1347 = vmatprep.subr.bf16.mxu0 0
      %1348 = vmatpush1.bf16.msra.mxu0 0
      %1349 = vmatprep.subr.bf16.mxu0 0
      %1350 = vmatpush1.bf16.msra.mxu0 0
      %1351 = vmatprep.subr.bf16.mxu0 0
      %1352 = vmatpush1.bf16.msra.mxu0 0
      %1353 = vmatprep.subr.bf16.mxu0 0
      %1354 = vmatpush1.bf16.msra.mxu0 0
      %1355 = vmatprep.subr.bf16.mxu0 0
      %1356 = vmatpush1.bf16.msra.mxu0 %v1338
      %1357 = vmatprep.subr.bf16.mxu0 0
      %1358 = vmatpush1.bf16.msra.mxu0 %v1337
      %1359 = vmatprep.subr.bf16.mxu0 0
      %1360 = vmatpush1.bf16.msra.mxu0 %v1336
      %1361 = vmatprep.subr.bf16.mxu0 0
      %1362 = vmatpush1.bf16.msra.mxu0 %v1335
      %1363 = vmatprep.subr.bf16.mxu0 0
      %1364 = vmatpush2.bf16.msra.mxu0 0
      %1365 = vmatprep.subr.bf16.mxu0 0
      %1366 = vmatpush2.bf16.msra.mxu0 0
      %1367 = vmatprep.subr.bf16.mxu0 0
      %1368 = vmatpush2.bf16.msra.mxu0 0
      %1369 = vmatprep.subr.bf16.mxu0 0
      %1370 = vmatpush2.bf16.msra.mxu0 0
      %1371 = vmatprep.subr.bf16.mxu0 0
      %1372 = vmatpush2.bf16.msra.mxu0 0
      %1373 = vmatprep.subr.bf16.mxu0 0
      %1374 = vmatpush2.bf16.msra.mxu0 0
      %1375 = vmatprep.subr.bf16.mxu0 0
      %1376 = vmatpush2.bf16.msra.mxu0 0
      %1377 = vmatprep.subr.bf16.mxu0 0
      %1378 = vmatpush2.bf16.msra.mxu0 0
      %1379 = vmatprep.mubr.bf16.mxu0 0
      %1380 = vmatmul.mubr.bf16.gmra.mxu0 %v1345
      %v1381 = vpop.f32.mrf.mxu0
      %v1382 = vadd.f32 %v1317, %v1381
      %v1383 = vpop.f32.mrf.mxu0
      %v1384 = vpop.f32.mrf.mxu0
      %v1385 = vpop.f32.mrf.mxu0
      %1386 = vdwg.mxu0
      %v1387 = vadd.f32 %v1211, %v1382
      %1388 = vst.msk [vmem:[#allocation2] sm:$0x7f] %vm573, %v1387
      %p1389 = scmp.eq.s32.totalorder %s27, 1
      // Predicated region
      $region69: #{forward.10} parent=63 // pred_check
        %p1390 = pneg %p1389
      $region70: #{forward.10} parent=63 // pred_check_branch
        %1392 = sbr.rel (%p1390) target = $region72
      $region71: #{forward.10} parent=63 // pred_region
        %v1393 = vpack.c.bf16 %v1387, %v1387
        %vm1394 = vcmask 257024
        %vm1395 = vsmask.f32 3328
        %vm1396 = vmand %vm1394, %vm1395
        %v1397 = vld [vmem:[%s560] sm:$0xf]
        %v1398 = vsel %vm1396, %v1393, %v1397
        %1399 = vst [vmem:[%s560] sm:$0xf] %v1398
      $region72: #{forward.10} parent=63 // pred_fallthru
        _
      %p1400 = scmp.lt.s32.totalorder %s26, 1
      %s1401 = scalar_select %p1400, %s26, 1
      %s1402 = smul.addr %s1401, 4
      %s1403 = scalar_lea.vmem %s11, %s1402
      // Predicated region
      $region73: #{forward.10} parent=63 // pred_check
        %p1404 = pneg %p338
      $region74: #{forward.10} parent=63 // pred_check_branch
        %1406 = sbr.rel (%p1404) target = $region76
      $region75: #{forward.10} parent=63 // pred_region
        _
      $region76: #{forward.10} parent=63 // pred_fallthru
        _
    $region64: #{forward.10} parent=5 // pred_fallthru
      _
    %p1407 = scmp.le.s32.totalorder 2, %s17
    // Predicated region
    $region77: #{forward.10} parent=5 // pred_check
      %p1408 = pneg %p1407
    $region78: #{forward.10} parent=5 // pred_check_branch
      %1410 = sbr.rel (%p1408) target = $region80
    $region79: #{forward.10} parent=5 // pred_region
      %s1411 = ssub.s32 %s17, 2
      // Predicated region
      $region81: #{forward.10} parent=79 // pred_check
        %p1412 = pneg %p344
      $region82: #{forward.10} parent=79 // pred_check_branch
        %1414 = sbr.rel (%p1412) target = $region84
      $region83: #{forward.10} parent=79 // pred_region
        %p1415 = scmp.lt.s32.totalorder %s28, 1
        %s1416 = scalar_select %p1415, %s28, 1
        %s1417 = smul.addr %s1416, 4
        %s1418 = scalar_lea.vmem %s11, %s1417
      $region84: #{forward.10} parent=79 // pred_fallthru
        _
    $region80: #{forward.10} parent=5 // pred_fallthru
      _
  $region6: #{forward.10} parent=0 // loop_footer
    %s21 = sadd.s32 1, %s17
  $region7: #{forward.10} parent=0 // loop_footer_branch
    %16 = sbr.rel target = $region3
  $region8: #{forward.10} parent=0 // loop_exit
    _

// kernel: forward.13
$region0: #{forward.13}
  #allocation0 [shape = 'u32[]', space=smem, size = 0x4, offset = 0x4, fixed_abs, tag = 'smem constant byte address 0x4 - core index']
  #allocation1 [shape = 'u32[144,128]{1,0:T(1,128)}', space=vmem, size = 0x12000, scoped, tag = 'internal scratch']
  %s0 = inlined_call_operand.vmem [shape: bf16[22,32], index: 0, kind: input, shape index: {}]
  %s1 = inlined_call_operand.vmem [shape: f32[1,32], index: 1, kind: input, shape index: {}]
  %s2 = inlined_call_operand.vmem [shape: f32[1,32], index: 2, kind: input, shape index: {}]
  %s3 = inlined_call_operand.vmem [shape: bf16[32,128], index: 3, kind: input, shape index: {}]
  %s4 = inlined_call_operand.vmem [shape: f32[1,128], index: 4, kind: input, shape index: {}]
  %s5 = inlined_call_operand.vmem [shape: f32[22,128], index: 5, kind: output, shape index: {}]
  %s6 = sld [smem:[#allocation0]]
  $region30: #{forward.13} parent=0
    _
  %s8 = ssub.s32 1, %s6
  %s9 = scalar_select 0, %s8, %s6
  // Predicated region
  $region2: #{forward.13} parent=0 // pred_check
    _
  $region3: #{forward.13} parent=0 // pred_check_branch
    %11 = sbr.rel (0) target = $region5
  $region4: #{forward.13} parent=0 // pred_region
    _
  $region5: #{forward.13} parent=0 // pred_fallthru
    _
  // Predicated region
  $region6: #{forward.13} parent=0 // pred_check
    _
  $region7: #{forward.13} parent=0 // pred_check_branch
    %13 = sbr.rel (0) target = $region9
  $region8: #{forward.13} parent=0 // pred_region
    _
  $region9: #{forward.13} parent=0 // pred_fallthru
    _
  // Predicated region
  $region10: #{forward.13} parent=0 // pred_check
    _
  $region11: #{forward.13} parent=0 // pred_check_branch
    %15 = sbr.rel (0) target = $region13
  $region12: #{forward.13} parent=0 // pred_region
    _
  $region13: #{forward.13} parent=0 // pred_fallthru
    _
  // Predicated region
  $region14: #{forward.13} parent=0 // pred_check
    _
  $region15: #{forward.13} parent=0 // pred_check_branch
    %17 = sbr.rel (0) target = $region17
  $region16: #{forward.13} parent=0 // pred_region
    _
  $region17: #{forward.13} parent=0 // pred_fallthru
    _
  // Predicated region
  $region18: #{forward.13} parent=0 // pred_check
    _
  $region19: #{forward.13} parent=0 // pred_check_branch
    %19 = sbr.rel (0) target = $region21
  $region20: #{forward.13} parent=0 // pred_region
    _
  $region21: #{forward.13} parent=0 // pred_fallthru
    _
  %v21 = vld [vmem:[%s0] sm:$0xf]
  %v22 = vld [vmem:[%s0 + $0x4] sm:$0xf]
  %v23 = vld [vmem:[%s0 + $0x8] sm:$0x7]
  %v24 = vunpack.c.l.bf16 %v21
  %v25 = vunpack.c.l.bf16 %v22
  %v26 = vunpack.c.l.bf16 %v23
  %v27 = vld [vmem:[%s1] sm:$0x1]
  %v28 = vld [vmem:[%s2] sm:$0x1]
  %vm29 = vcmask 261120
  %v30 = vsel %vm29, %v24, 0.0
  %31 = vadd.xlane.f32.xlu0 %v30
  %v32 = vpop.xlane.xlu0 %31
  %v33 = vsel %vm29, %v25, 0.0
  %34 = vadd.xlane.f32.xlu0 %v33
  %v35 = vpop.xlane.xlu0 %34
  %vm36 = vcmask 259072
  %v37 = vsel %vm36, %v26, 0.0
  %38 = vadd.xlane.f32.xlu0 %v37
  %v39 = vpop.xlane.xlu0 %38
  %v40 = vrcp.pop 32.0
  %v41 = vmul.f32 %v32, %v40
  %v42 = vmul.f32 %v35, %v40
  %v43 = vmul.f32 %v39, %v40
  %v44 = vsub.f32 %v24, %v41
  %v45 = vsub.f32 %v25, %v42
  %v46 = vsub.f32 %v26, %v43
  %v47 = vmul.f32 %v44, %v44
  %v48 = vmul.f32 %v45, %v45
  %v49 = vmul.f32 %v46, %v46
  %v50 = vsel %vm29, %v47, 0.0
  %51 = vadd.xlane.f32.xlu0 %v50
  %v52 = vpop.xlane.xlu0 %51
  %v53 = vsel %vm29, %v48, 0.0
  %54 = vadd.xlane.f32.xlu0 %v53
  %v55 = vpop.xlane.xlu0 %54
  %v56 = vsel %vm36, %v49, 0.0
  %57 = vadd.xlane.f32.xlu0 %v56
  %v58 = vpop.xlane.xlu0 %57
  %v59 = vmul.f32 %v52, %v40
  %v60 = vmul.f32 %v55, %v40
  %v61 = vmul.f32 %v58, %v40
  %v62 = vadd.f32 %v59, 1e-12
  %v63 = vadd.f32 %v60, 1e-12
  %v64 = vadd.f32 %v61, 1e-12
  %v65 = vrsqrt.pop %v62
  %v66 = vrsqrt.pop %v63
  %v67 = vrsqrt.pop %v64
  %v68 = vmul.f32 %v44, %v65
  %v69 = vmul.f32 %v45, %v66
  %v70 = vmul.f32 %v46, %v67
  %v72 = vlaneseq
  %v73 = vshrl.u32 %v72, 7
  %v74 = vsub.s32 0, %v73
  %v75 = vrot.slane %v27, %v74
  %v77 = vmul.f32 %v68, %v75
  %v78 = vmul.f32 %v69, %v75
  %v79 = vmul.f32 %v70, %v75
  %v81 = vlaneseq
  %v82 = vshrl.u32 %v81, 7
  %v83 = vsub.s32 0, %v82
  %v84 = vrot.slane %v28, %v83
  %v86 = vadd.f32 %v77, %v84
  %v87 = vadd.f32 %v78, %v84
  %v88 = vadd.f32 %v79, %v84
  %v89 = vpack.c.bf16 %v87, %v86
  %v90 = vpack.c.bf16 %v88, %v88
  %v91 = vld [vmem:[%s3] sm:$0xf]
  %v92 = vld [vmem:[%s3 + $0x4] sm:$0xf]
  %v93 = vld [vmem:[%s3 + $0x8] sm:$0xf]
  %v94 = vld [vmem:[%s3 + $0xc] sm:$0xf]
  %v95 = vld [vmem:[%s4] sm:$0x1]
  %v97 = vlaneseq
  %v98 = vshrl.u32 %v97, 7
  %v99 = vsub.s32 0, %v98
  %v100 = vrot.slane %v95, %v99
  %v106 = vunpack.c.l.b16 %v91
  %v107 = vunpack.c.l.b16 %v92
  %v108 = vunpack.c.l.b16 %v93
  %v109 = vunpack.c.l.b16 %v94
  %v110 = vpack.c.b16 %v107, %v106
  %v111 = vpack.c.b16 %v109, %v108
  %v115 = vsel %vm29, %v89, 0
  %v118 = vsel %vm29, %v90, 0
  %120 = vmatprep.subr.bf16.mxu0 0
  %121 = vmatpush1.bf16.msra.mxu0 0
  %122 = vmatprep.subr.bf16.mxu0 0
  %123 = vmatpush1.bf16.msra.mxu0 0
  %124 = vmatprep.subr.bf16.mxu0 0
  %125 = vmatpush1.bf16.msra.mxu0 0
  %126 = vmatprep.subr.bf16.mxu0 0
  %127 = vmatpush1.bf16.msra.mxu0 0
  %128 = vmatprep.subr.bf16.mxu0 0
  %129 = vmatpush1.bf16.msra.mxu0 0
  %130 = vmatprep.subr.bf16.mxu0 0
  %131 = vmatpush1.bf16.msra.mxu0 0
  %132 = vmatprep.subr.bf16.mxu0 0
  %133 = vmatpush1.bf16.msra.mxu0 %v111
  %134 = vmatprep.subr.bf16.mxu0 0
  %135 = vmatpush1.bf16.msra.mxu0 %v110
  %136 = vmatprep.subr.bf16.mxu0 0
  %137 = vmatpush2.bf16.msra.mxu0 0
  %138 = vmatprep.subr.bf16.mxu0 0
  %139 = vmatpush2.bf16.msra.mxu0 0
  %140 = vmatprep.subr.bf16.mxu0 0
  %141 = vmatpush2.bf16.msra.mxu0 0
  %142 = vmatprep.subr.bf16.mxu0 0
  %143 = vmatpush2.bf16.msra.mxu0 0
  %144 = vmatprep.subr.bf16.mxu0 0
  %145 = vmatpush2.bf16.msra.mxu0 0
  %146 = vmatprep.subr.bf16.mxu0 0
  %147 = vmatpush2.bf16.msra.mxu0 0
  %148 = vmatprep.subr.bf16.mxu0 0
  %149 = vmatpush2.bf16.msra.mxu0 0
  %150 = vmatprep.subr.bf16.mxu0 0
  %151 = vmatpush2.bf16.msra.mxu0 0
  %152 = vmatprep.mubr.bf16.mxu0 0
  %153 = vmatmul.mubr.bf16.gmra.mxu0 %v115
  %v154 = vpop.f32.mrf.mxu0
  %v155 = vadd.f32 %v100, %v154
  %v156 = vpop.f32.mrf.mxu0
  %v157 = vpop.f32.mrf.mxu0
  %v158 = vadd.f32 %v100, %v157
  %v159 = vpop.f32.mrf.mxu0
  %160 = vmatprep.mubr.bf16.mxu0 0
  %161 = vmatmul.mubr.bf16.gmra.mxu0 %v118
  %v162 = vpop.f32.mrf.mxu0
  %v163 = vadd.f32 %v100, %v162
  %v164 = vpop.f32.mrf.mxu0
  %v165 = vpop.f32.mrf.mxu0
  %v166 = vpop.f32.mrf.mxu0
  %167 = vdwg.mxu0
  %168 = vmax.xlane.f32.xlu0 %v155
  %v169 = vpop.xlane.xlu0 %168
  %170 = vmax.xlane.f32.xlu0 %v158
  %v171 = vpop.xlane.xlu0 %170
  %vm172 = vcmask 1045504
  %v173 = vsel %vm172, %v163, -inf
  %174 = vmax.xlane.f32.xlu0 %v173
  %v175 = vpop.xlane.xlu0 %174
  %v176 = vsub.f32 %v155, %v169
  %v177 = vsub.f32 %v158, %v171
  %v178 = vsub.f32 %v163, %v175
  %v179 = vmul.f32 %v176, 1.442695
  %v180 = vpow.pop %v179
  %v181 = vmul.f32 %v177, 1.442695
  %v182 = vpow.pop %v181
  %v183 = vmul.f32 %v178, 1.442695
  %v184 = vpow.pop %v183
  %185 = vadd.xlane.f32.xlu0 %v180
  %v186 = vpop.xlane.xlu0 %185
  %187 = vadd.xlane.f32.xlu0 %v182
  %v188 = vpop.xlane.xlu0 %187
  %v189 = vsel %vm172, %v184, 0.0
  %190 = vadd.xlane.f32.xlu0 %v189
  %v191 = vpop.xlane.xlu0 %190
  %v192 = vlog2.pop %v186
  %v193 = vmul.f32 %v192, 0.6931472
  %v194 = vlog2.pop %v188
  %v195 = vmul.f32 %v194, 0.6931472
  %v196 = vlog2.pop %v191
  %v197 = vmul.f32 %v196, 0.6931472
  %v198 = vsub.f32 %v176, %v193
  %v199 = vsub.f32 %v177, %v195
  %v200 = vsub.f32 %v178, %v197
  %201 = vst [vmem:[%s5] sm:$0xff] %v198
  %202 = vst [vmem:[%s5 + $0x8] sm:$0xff] %v199
  %203 = vst [vmem:[%s5 + $0x10] sm:$0x3f] %v200
  // Predicated region
  $region22: #{forward.13} parent=0 // pred_check
    _
  $region23: #{forward.13} parent=0 // pred_check_branch
    %205 = sbr.rel (0) target = $region25
  $region24: #{forward.13} parent=0 // pred_region
    _
  $region25: #{forward.13} parent=0 // pred_fallthru
    _
  // Predicated region
  $region26: #{forward.13} parent=0 // pred_check
    _
  $region27: #{forward.13} parent=0 // pred_check_branch
    %207 = sbr.rel (0) target = $region29
  $region28: #{forward.13} parent=0 // pred_region
    _
  $region29: #{forward.13} parent=0 // pred_fallthru
    _

// kernel: forward.12
$region0: #{forward.12}
  #allocation0 [shape = 'u32[]', space=smem, size = 0x4, offset = 0x4, fixed_abs, tag = 'smem constant byte address 0x4 - core index']
  #allocation1 [shape = 'u32[144,128]{1,0:T(1,128)}', space=vmem, size = 0x12000, scoped, tag = 'internal scratch']
  #allocation2 [shape = 'f32[11,32]{1,0:T(8,128)}', space=vmem, size = 0x2000, scoped, tag = 'scratch operand']
  %s0 = inlined_call_operand.vmem [shape: bf16[2,11,32], index: 0, kind: input, shape index: {}]
  %s1 = inlined_call_operand.vmem [shape: bf16[2,7,32], index: 1, kind: input, shape index: {}]
  %s2 = inlined_call_operand.vmem [shape: f32[2,1,11], index: 2, kind: input, shape index: {}]
  %s3 = inlined_call_operand.vmem [shape: f32[2,1,7], index: 3, kind: input, shape index: {}]
  %s4 = inlined_call_operand.vmem [shape: f32[2,6,32], index: 4, kind: input, shape index: {}]
  %s5 = inlined_call_operand.vmem [shape: bf16[2,32,96], index: 5, kind: input, shape index: {}]
  %s6 = inlined_call_operand.vmem [shape: f32[2,1,96], index: 6, kind: input, shape index: {}]
  %s7 = inlined_call_operand.vmem [shape: bf16[2,32,32], index: 7, kind: input, shape index: {}]
  %s8 = inlined_call_operand.vmem [shape: f32[2,1,32], index: 8, kind: input, shape index: {}]
  %s9 = inlined_call_operand.vmem [shape: bf16[2,32,96], index: 9, kind: input, shape index: {}]
  %s10 = inlined_call_operand.vmem [shape: f32[2,1,96], index: 10, kind: input, shape index: {}]
  %s11 = inlined_call_operand.vmem [shape: bf16[2,32,32], index: 11, kind: input, shape index: {}]
  %s12 = inlined_call_operand.vmem [shape: f32[2,1,32], index: 12, kind: input, shape index: {}]
  %s13 = inlined_call_operand.vmem [shape: bf16[2,32,64], index: 13, kind: input, shape index: {}]
  %s14 = inlined_call_operand.vmem [shape: f32[2,1,64], index: 14, kind: input, shape index: {}]
  %s15 = inlined_call_operand.vmem [shape: bf16[2,64,32], index: 15, kind: input, shape index: {}]
  %s16 = inlined_call_operand.vmem [shape: f32[2,1,32], index: 16, kind: input, shape index: {}]
  %s17 = inlined_call_operand.vmem [shape: bf16[2,11,32], index: 17, kind: output, shape index: {}]
  %s18 = sld [smem:[#allocation0]]
  $region109: #{forward.12} parent=0
    _
  %s20 = ssub.s32 1, %s18
  %s21 = scalar_select 0, %s20, %s18
  loop: start=0, step=1, limit=6
  $region2: #{forward.12} parent=0 // loop_pre_header
    _
  $region3: #{forward.12} parent=0 // loop_header
    %s23 = sphi 0, %s27
    %p24 = scmp.ge.s32.totalorder %s23, 6
    %s30 = sphi 0, %s42
    %s31 = sphi 0, %s38
    %s32 = sphi 0, %s30
    %s33 = sphi 0, %s31
    %s34 = sphi 0, %s32
    %s35 = sphi 0, %s33
    %s45 = sphi 0, %s47
    %s48 = sphi 0, %s45
    %s49 = sphi 0, %s48
    %s65 = sphi 0, %s49
    %s71 = sphi 0, %s73
    %s74 = sphi 0, %s71
    %s75 = sphi 0, %s74
    %s91 = sphi 0, %s75
    %s97 = sphi 0, %s99
    %s100 = sphi 0, %s97
    %s101 = sphi 0, %s100
    %s117 = sphi 0, %s101
    %s123 = sphi 0, %s125
    %s126 = sphi 0, %s123
    %s127 = sphi 0, %s126
    %s143 = sphi 0, %s127
    %s149 = sphi 0, %s151
    %s152 = sphi 0, %s149
    %s153 = sphi 0, %s152
    %s169 = sphi 0, %s153
    %s175 = sphi 0, %s177
    %s178 = sphi 0, %s175
    %s179 = sphi 0, %s178
    %s195 = sphi 0, %s179
    %s201 = sphi 0, %s203
    %s204 = sphi 0, %s201
    %s205 = sphi 0, %s204
    %s221 = sphi 0, %s205
    %s227 = sphi 0, %s229
    %s230 = sphi 0, %s227
    %s231 = sphi 0, %s230
    %s247 = sphi 0, %s231
    %s253 = sphi 0, %s255
    %s256 = sphi 0, %s253
    %s257 = sphi 0, %s256
    %s273 = sphi 0, %s257
    %s279 = sphi 0, %s281
    %s282 = sphi 0, %s279
    %s283 = sphi 0, %s282
    %s299 = sphi 0, %s283
    %s305 = sphi 0, %s307
    %s308 = sphi 0, %s305
    %s309 = sphi 0, %s308
    %s325 = sphi 0, %s309
    %s331 = sphi 0, %s333
    %s334 = sphi 0, %s331
    %s335 = sphi 0, %s334
    %s351 = sphi 0, %s335
    %s357 = sphi 0, %s359
    %s360 = sphi 0, %s357
    %s361 = sphi 0, %s360
    %s377 = sphi 0, %s361
    %s383 = sphi 0, %s385
    %s386 = sphi 0, %s383
    %s387 = sphi 0, %s386
    %s403 = sphi 0, %s387
    %s409 = sphi 0, %s411
    %s412 = sphi 0, %s409
    %s413 = sphi 0, %s412
    %s429 = sphi 0, %s413
    %s435 = sphi 0, %s437
    %s438 = sphi 0, %s435
    %s439 = sphi 0, %s438
    %s455 = sphi 0, %s439
    %s461 = sphi 0, %s463
    %s464 = sphi 0, %s461
    %s465 = sphi 0, %s464
    %s481 = sphi 0, %s465
    %s487 = sphi 0, %s489
    %s490 = sphi 0, %s487
    %s491 = sphi 0, %s490
    %s507 = sphi 0, %s491
  $region4: #{forward.12} parent=0 // loop_header_branch
    %26 = sbr.rel (%p24) target = $region8
  $region5: #{forward.12} parent=0 // loop_body
    %s28 = ssub.s32 %s23, 1
    %s29 = ssub.s32 %s23, 2
    %s36 = sadd.s32 1, %s31
    %p37 = scmp.ge.s32.totalorder %s36, 2
    %s38 = scalar_select %p37, 0, %s36
    %s39 = sadd.s32 1, %s30
    %s40 = scalar_select %p37, %s39, %s30
    %p41 = scmp.ge.s32.totalorder %s40, 2
    %s42 = scalar_select %p41, 0, %s40
    %s43 = ssub.s32 %s30, %s42
    %p44 = scmp.eq.s32.totalorder %s43, 0
    %s46 = sadd.s32 %s45, 1
    %s47 = scalar_select %p44, %s45, %s46
    %p50 = pneg %p44
    %p51 = scmp.eq.s32.totalorder %s23, 3
    %p52 = por %p50, %p51
    %p53 = scmp.ne.s32.totalorder %s45, %s48
    %p54 = scmp.eq.s32.totalorder %s23, 0
    %p55 = por %p53, %p54
    %p56 = scmp.ne.s32.totalorder %s45, %s48
    %p57 = scmp.eq.s32.totalorder %s28, 3
    %p58 = por %p56, %p57
    %p59 = scmp.ne.s32.totalorder %s48, %s49
    %p60 = scmp.eq.s32.totalorder %s28, 0
    %p61 = por %p59, %p60
    %p62 = scmp.ne.s32.totalorder %s48, %s49
    %p63 = scmp.eq.s32.totalorder %s29, 3
    %p64 = por %p62, %p63
    %p66 = scmp.ne.s32.totalorder %s49, %s65
    %p67 = scmp.eq.s32.totalorder %s29, 0
    %p68 = por %p66, %p67
    %s69 = ssub.s32 %s30, %s42
    %p70 = scmp.eq.s32.totalorder %s69, 0
    %s72 = sadd.s32 %s71, 1
    %s73 = scalar_select %p70, %s71, %s72
    %p76 = pneg %p70
    %p77 = scmp.eq.s32.totalorder %s23, 3
    %p78 = por %p76, %p77
    %p79 = scmp.ne.s32.totalorder %s71, %s74
    %p80 = scmp.eq.s32.totalorder %s23, 0
    %p81 = por %p79, %p80
    %p82 = scmp.ne.s32.totalorder %s71, %s74
    %p83 = scmp.eq.s32.totalorder %s28, 3
    %p84 = por %p82, %p83
    %p85 = scmp.ne.s32.totalorder %s74, %s75
    %p86 = scmp.eq.s32.totalorder %s28, 0
    %p87 = por %p85, %p86
    %p88 = scmp.ne.s32.totalorder %s74, %s75
    %p89 = scmp.eq.s32.totalorder %s29, 3
    %p90 = por %p88, %p89
    %p92 = scmp.ne.s32.totalorder %s75, %s91
    %p93 = scmp.eq.s32.totalorder %s29, 0
    %p94 = por %p92, %p93
    %s95 = ssub.s32 %s30, %s42
    %p96 = scmp.eq.s32.totalorder %s95, 0
    %s98 = sadd.s32 %s97, 1
    %s99 = scalar_select %p96, %s97, %s98
    %p102 = pneg %p96
    %p103 = scmp.eq.s32.totalorder %s23, 3
    %p104 = por %p102, %p103
    %p105 = scmp.ne.s32.totalorder %s97, %s100
    %p106 = scmp.eq.s32.totalorder %s23, 0
    %p107 = por %p105, %p106
    %p108 = scmp.ne.s32.totalorder %s97, %s100
    %p109 = scmp.eq.s32.totalorder %s28, 3
    %p110 = por %p108, %p109
    %p111 = scmp.ne.s32.totalorder %s100, %s101
    %p112 = scmp.eq.s32.totalorder %s28, 0
    %p113 = por %p111, %p112
    %p114 = scmp.ne.s32.totalorder %s100, %s101
    %p115 = scmp.eq.s32.totalorder %s29, 3
    %p116 = por %p114, %p115
    %p118 = scmp.ne.s32.totalorder %s101, %s117
    %p119 = scmp.eq.s32.totalorder %s29, 0
    %p120 = por %p118, %p119
    %s121 = ssub.s32 %s30, %s42
    %p122 = scmp.eq.s32.totalorder %s121, 0
    %s124 = sadd.s32 %s123, 1
    %s125 = scalar_select %p122, %s123, %s124
    %p128 = pneg %p122
    %p129 = scmp.eq.s32.totalorder %s23, 3
    %p130 = por %p128, %p129
    %p131 = scmp.ne.s32.totalorder %s123, %s126
    %p132 = scmp.eq.s32.totalorder %s23, 0
    %p133 = por %p131, %p132
    %p134 = scmp.ne.s32.totalorder %s123, %s126
    %p135 = scmp.eq.s32.totalorder %s28, 3
    %p136 = por %p134, %p135
    %p137 = scmp.ne.s32.totalorder %s126, %s127
    %p138 = scmp.eq.s32.totalorder %s28, 0
    %p139 = por %p137, %p138
    %p140 = scmp.ne.s32.totalorder %s126, %s127
    %p141 = scmp.eq.s32.totalorder %s29, 3
    %p142 = por %p140, %p141
    %p144 = scmp.ne.s32.totalorder %s127, %s143
    %p145 = scmp.eq.s32.totalorder %s29, 0
    %p146 = por %p144, %p145
    %s147 = ssub.s32 %s31, %s38
    %p148 = scmp.eq.s32.totalorder %s147, 0
    %s150 = sadd.s32 %s149, 1
    %s151 = scalar_select %p148, %s149, %s150
    %p154 = pneg %p148
    %p155 = scmp.eq.s32.totalorder %s23, 3
    %p156 = por %p154, %p155
    %p157 = scmp.ne.s32.totalorder %s149, %s152
    %p158 = scmp.eq.s32.totalorder %s23, 0
    %p159 = por %p157, %p158
    %p160 = scmp.ne.s32.totalorder %s149, %s152
    %p161 = scmp.eq.s32.totalorder %s28, 3
    %p162 = por %p160, %p161
    %p163 = scmp.ne.s32.totalorder %s152, %s153
    %p164 = scmp.eq.s32.totalorder %s28, 0
    %p165 = por %p163, %p164
    %p166 = scmp.ne.s32.totalorder %s152, %s153
    %p167 = scmp.eq.s32.totalorder %s29, 3
    %p168 = por %p166, %p167
    %p170 = scmp.ne.s32.totalorder %s153, %s169
    %p171 = scmp.eq.s32.totalorder %s29, 0
    %p172 = por %p170, %p171
    %s173 = ssub.s32 %s31, %s38
    %p174 = scmp.eq.s32.totalorder %s173, 0
    %s176 = sadd.s32 %s175, 1
    %s177 = scalar_select %p174, %s175, %s176
    %p180 = pneg %p174
    %p181 = scmp.eq.s32.totalorder %s23, 3
    %p182 = por %p180, %p181
    %p183 = scmp.ne.s32.totalorder %s175, %s178
    %p184 = scmp.eq.s32.totalorder %s23, 0
    %p185 = por %p183, %p184
    %p186 = scmp.ne.s32.totalorder %s175, %s178
    %p187 = scmp.eq.s32.totalorder %s28, 3
    %p188 = por %p186, %p187
    %p189 = scmp.ne.s32.totalorder %s178, %s179
    %p190 = scmp.eq.s32.totalorder %s28, 0
    %p191 = por %p189, %p190
    %p192 = scmp.ne.s32.totalorder %s178, %s179
    %p193 = scmp.eq.s32.totalorder %s29, 3
    %p194 = por %p192, %p193
    %p196 = scmp.ne.s32.totalorder %s179, %s195
    %p197 = scmp.eq.s32.totalorder %s29, 0
    %p198 = por %p196, %p197
    %s199 = ssub.s32 %s31, %s38
    %p200 = scmp.eq.s32.totalorder %s199, 0
    %s202 = sadd.s32 %s201, 1
    %s203 = scalar_select %p200, %s201, %s202
    %p206 = pneg %p200
    %p207 = scmp.eq.s32.totalorder %s23, 3
    %p208 = por %p206, %p207
    %p209 = scmp.ne.s32.totalorder %s201, %s204
    %p210 = scmp.eq.s32.totalorder %s23, 0
    %p211 = por %p209, %p210
    %p212 = scmp.ne.s32.totalorder %s201, %s204
    %p213 = scmp.eq.s32.totalorder %s28, 3
    %p214 = por %p212, %p213
    %p215 = scmp.ne.s32.totalorder %s204, %s205
    %p216 = scmp.eq.s32.totalorder %s28, 0
    %p217 = por %p215, %p216
    %p218 = scmp.ne.s32.totalorder %s204, %s205
    %p219 = scmp.eq.s32.totalorder %s29, 3
    %p220 = por %p218, %p219
    %p222 = scmp.ne.s32.totalorder %s205, %s221
    %p223 = scmp.eq.s32.totalorder %s29, 0
    %p224 = por %p222, %p223
    %s225 = ssub.s32 %s31, %s38
    %p226 = scmp.eq.s32.totalorder %s225, 0
    %s228 = sadd.s32 %s227, 1
    %s229 = scalar_select %p226, %s227, %s228
    %p232 = pneg %p226
    %p233 = scmp.eq.s32.totalorder %s23, 3
    %p234 = por %p232, %p233
    %p235 = scmp.ne.s32.totalorder %s227, %s230
    %p236 = scmp.eq.s32.totalorder %s23, 0
    %p237 = por %p235, %p236
    %p238 = scmp.ne.s32.totalorder %s227, %s230
    %p239 = scmp.eq.s32.totalorder %s28, 3
    %p240 = por %p238, %p239
    %p241 = scmp.ne.s32.totalorder %s230, %s231
    %p242 = scmp.eq.s32.totalorder %s28, 0
    %p243 = por %p241, %p242
    %p244 = scmp.ne.s32.totalorder %s230, %s231
    %p245 = scmp.eq.s32.totalorder %s29, 3
    %p246 = por %p244, %p245
    %p248 = scmp.ne.s32.totalorder %s231, %s247
    %p249 = scmp.eq.s32.totalorder %s29, 0
    %p250 = por %p248, %p249
    %s251 = ssub.s32 %s31, %s38
    %p252 = scmp.eq.s32.totalorder %s251, 0
    %s254 = sadd.s32 %s253, 1
    %s255 = scalar_select %p252, %s253, %s254
    %p258 = pneg %p252
    %p259 = scmp.eq.s32.totalorder %s23, 3
    %p260 = por %p258, %p259
    %p261 = scmp.ne.s32.totalorder %s253, %s256
    %p262 = scmp.eq.s32.totalorder %s23, 0
    %p263 = por %p261, %p262
    %p264 = scmp.ne.s32.totalorder %s253, %s256
    %p265 = scmp.eq.s32.totalorder %s28, 3
    %p266 = por %p264, %p265
    %p267 = scmp.ne.s32.totalorder %s256, %s257
    %p268 = scmp.eq.s32.totalorder %s28, 0
    %p269 = por %p267, %p268
    %p270 = scmp.ne.s32.totalorder %s256, %s257
    %p271 = scmp.eq.s32.totalorder %s29, 3
    %p272 = por %p270, %p271
    %p274 = scmp.ne.s32.totalorder %s257, %s273
    %p275 = scmp.eq.s32.totalorder %s29, 0
    %p276 = por %p274, %p275
    %s277 = ssub.s32 %s31, %s38
    %p278 = scmp.eq.s32.totalorder %s277, 0
    %s280 = sadd.s32 %s279, 1
    %s281 = scalar_select %p278, %s279, %s280
    %p284 = pneg %p278
    %p285 = scmp.eq.s32.totalorder %s23, 3
    %p286 = por %p284, %p285
    %p287 = scmp.ne.s32.totalorder %s279, %s282
    %p288 = scmp.eq.s32.totalorder %s23, 0
    %p289 = por %p287, %p288
    %p290 = scmp.ne.s32.totalorder %s279, %s282
    %p291 = scmp.eq.s32.totalorder %s28, 3
    %p292 = por %p290, %p291
    %p293 = scmp.ne.s32.totalorder %s282, %s283
    %p294 = scmp.eq.s32.totalorder %s28, 0
    %p295 = por %p293, %p294
    %p296 = scmp.ne.s32.totalorder %s282, %s283
    %p297 = scmp.eq.s32.totalorder %s29, 3
    %p298 = por %p296, %p297
    %p300 = scmp.ne.s32.totalorder %s283, %s299
    %p301 = scmp.eq.s32.totalorder %s29, 0
    %p302 = por %p300, %p301
    %s303 = ssub.s32 %s31, %s38
    %p304 = scmp.eq.s32.totalorder %s303, 0
    %s306 = sadd.s32 %s305, 1
    %s307 = scalar_select %p304, %s305, %s306
    %p310 = pneg %p304
    %p311 = scmp.eq.s32.totalorder %s23, 3
    %p312 = por %p310, %p311
    %p313 = scmp.ne.s32.totalorder %s305, %s308
    %p314 = scmp.eq.s32.totalorder %s23, 0
    %p315 = por %p313, %p314
    %p316 = scmp.ne.s32.totalorder %s305, %s308
    %p317 = scmp.eq.s32.totalorder %s28, 3
    %p318 = por %p316, %p317
    %p319 = scmp.ne.s32.totalorder %s308, %s309
    %p320 = scmp.eq.s32.totalorder %s28, 0
    %p321 = por %p319, %p320
    %p322 = scmp.ne.s32.totalorder %s308, %s309
    %p323 = scmp.eq.s32.totalorder %s29, 3
    %p324 = por %p322, %p323
    %p326 = scmp.ne.s32.totalorder %s309, %s325
    %p327 = scmp.eq.s32.totalorder %s29, 0
    %p328 = por %p326, %p327
    %s329 = ssub.s32 %s31, %s38
    %p330 = scmp.eq.s32.totalorder %s329, 0
    %s332 = sadd.s32 %s331, 1
    %s333 = scalar_select %p330, %s331, %s332
    %p336 = pneg %p330
    %p337 = scmp.eq.s32.totalorder %s23, 3
    %p338 = por %p336, %p337
    %p339 = scmp.ne.s32.totalorder %s331, %s334
    %p340 = scmp.eq.s32.totalorder %s23, 0
    %p341 = por %p339, %p340
    %p342 = scmp.ne.s32.totalorder %s331, %s334
    %p343 = scmp.eq.s32.totalorder %s28, 3
    %p344 = por %p342, %p343
    %p345 = scmp.ne.s32.totalorder %s334, %s335
    %p346 = scmp.eq.s32.totalorder %s28, 0
    %p347 = por %p345, %p346
    %p348 = scmp.ne.s32.totalorder %s334, %s335
    %p349 = scmp.eq.s32.totalorder %s29, 3
    %p350 = por %p348, %p349
    %p352 = scmp.ne.s32.totalorder %s335, %s351
    %p353 = scmp.eq.s32.totalorder %s29, 0
    %p354 = por %p352, %p353
    %s355 = ssub.s32 %s31, %s38
    %p356 = scmp.eq.s32.totalorder %s355, 0
    %s358 = sadd.s32 %s357, 1
    %s359 = scalar_select %p356, %s357, %s358
    %p362 = pneg %p356
    %p363 = scmp.eq.s32.totalorder %s23, 3
    %p364 = por %p362, %p363
    %p365 = scmp.ne.s32.totalorder %s357, %s360
    %p366 = scmp.eq.s32.totalorder %s23, 0
    %p367 = por %p365, %p366
    %p368 = scmp.ne.s32.totalorder %s357, %s360
    %p369 = scmp.eq.s32.totalorder %s28, 3
    %p370 = por %p368, %p369
    %p371 = scmp.ne.s32.totalorder %s360, %s361
    %p372 = scmp.eq.s32.totalorder %s28, 0
    %p373 = por %p371, %p372
    %p374 = scmp.ne.s32.totalorder %s360, %s361
    %p375 = scmp.eq.s32.totalorder %s29, 3
    %p376 = por %p374, %p375
    %p378 = scmp.ne.s32.totalorder %s361, %s377
    %p379 = scmp.eq.s32.totalorder %s29, 0
    %p380 = por %p378, %p379
    %s381 = ssub.s32 %s31, %s38
    %p382 = scmp.eq.s32.totalorder %s381, 0
    %s384 = sadd.s32 %s383, 1
    %s385 = scalar_select %p382, %s383, %s384
    %p388 = pneg %p382
    %p389 = scmp.eq.s32.totalorder %s23, 3
    %p390 = por %p388, %p389
    %p391 = scmp.ne.s32.totalorder %s383, %s386
    %p392 = scmp.eq.s32.totalorder %s23, 0
    %p393 = por %p391, %p392
    %p394 = scmp.ne.s32.totalorder %s383, %s386
    %p395 = scmp.eq.s32.totalorder %s28, 3
    %p396 = por %p394, %p395
    %p397 = scmp.ne.s32.totalorder %s386, %s387
    %p398 = scmp.eq.s32.totalorder %s28, 0
    %p399 = por %p397, %p398
    %p400 = scmp.ne.s32.totalorder %s386, %s387
    %p401 = scmp.eq.s32.totalorder %s29, 3
    %p402 = por %p400, %p401
    %p404 = scmp.ne.s32.totalorder %s387, %s403
    %p405 = scmp.eq.s32.totalorder %s29, 0
    %p406 = por %p404, %p405
    %s407 = ssub.s32 %s31, %s38
    %p408 = scmp.eq.s32.totalorder %s407, 0
    %s410 = sadd.s32 %s409, 1
    %s411 = scalar_select %p408, %s409, %s410
    %p414 = pneg %p408
    %p415 = scmp.eq.s32.totalorder %s23, 3
    %p416 = por %p414, %p415
    %p417 = scmp.ne.s32.totalorder %s409, %s412
    %p418 = scmp.eq.s32.totalorder %s23, 0
    %p419 = por %p417, %p418
    %p420 = scmp.ne.s32.totalorder %s409, %s412
    %p421 = scmp.eq.s32.totalorder %s28, 3
    %p422 = por %p420, %p421
    %p423 = scmp.ne.s32.totalorder %s412, %s413
    %p424 = scmp.eq.s32.totalorder %s28, 0
    %p425 = por %p423, %p424
    %p426 = scmp.ne.s32.totalorder %s412, %s413
    %p427 = scmp.eq.s32.totalorder %s29, 3
    %p428 = por %p426, %p427
    %p430 = scmp.ne.s32.totalorder %s413, %s429
    %p431 = scmp.eq.s32.totalorder %s29, 0
    %p432 = por %p430, %p431
    %s433 = ssub.s32 %s31, %s38
    %p434 = scmp.eq.s32.totalorder %s433, 0
    %s436 = sadd.s32 %s435, 1
    %s437 = scalar_select %p434, %s435, %s436
    %p440 = pneg %p434
    %p441 = scmp.eq.s32.totalorder %s23, 3
    %p442 = por %p440, %p441
    %p443 = scmp.ne.s32.totalorder %s435, %s438
    %p444 = scmp.eq.s32.totalorder %s23, 0
    %p445 = por %p443, %p444
    %p446 = scmp.ne.s32.totalorder %s435, %s438
    %p447 = scmp.eq.s32.totalorder %s28, 3
    %p448 = por %p446, %p447
    %p449 = scmp.ne.s32.totalorder %s438, %s439
    %p450 = scmp.eq.s32.totalorder %s28, 0
    %p451 = por %p449, %p450
    %p452 = scmp.ne.s32.totalorder %s438, %s439
    %p453 = scmp.eq.s32.totalorder %s29, 3
    %p454 = por %p452, %p453
    %p456 = scmp.ne.s32.totalorder %s439, %s455
    %p457 = scmp.eq.s32.totalorder %s29, 0
    %p458 = por %p456, %p457
    %s459 = ssub.s32 %s31, %s38
    %p460 = scmp.eq.s32.totalorder %s459, 0
    %s462 = sadd.s32 %s461, 1
    %s463 = scalar_select %p460, %s461, %s462
    %p466 = pneg %p460
    %p467 = scmp.eq.s32.totalorder %s23, 3
    %p468 = por %p466, %p467
    %p469 = scmp.ne.s32.totalorder %s461, %s464
    %p470 = scmp.eq.s32.totalorder %s23, 0
    %p471 = por %p469, %p470
    %p472 = scmp.ne.s32.totalorder %s461, %s464
    %p473 = scmp.eq.s32.totalorder %s28, 3
    %p474 = por %p472, %p473
    %p475 = scmp.ne.s32.totalorder %s464, %s465
    %p476 = scmp.eq.s32.totalorder %s28, 0
    %p477 = por %p475, %p476
    %p478 = scmp.ne.s32.totalorder %s464, %s465
    %p479 = scmp.eq.s32.totalorder %s29, 3
    %p480 = por %p478, %p479
    %p482 = scmp.ne.s32.totalorder %s465, %s481
    %p483 = scmp.eq.s32.totalorder %s29, 0
    %p484 = por %p482, %p483
    %s485 = ssub.s32 %s30, %s42
    %p486 = scmp.eq.s32.totalorder %s485, 0
    %s488 = sadd.s32 %s487, 1
    %s489 = scalar_select %p486, %s487, %s488
    %p492 = pneg %p486
    %p493 = scmp.eq.s32.totalorder %s23, 3
    %p494 = por %p492, %p493
    %p495 = scmp.ne.s32.totalorder %s487, %s490
    %p496 = scmp.eq.s32.totalorder %s23, 0
    %p497 = por %p495, %p496
    %p498 = scmp.ne.s32.totalorder %s487, %s490
    %p499 = scmp.eq.s32.totalorder %s28, 3
    %p500 = por %p498, %p499
    %p501 = scmp.ne.s32.totalorder %s490, %s491
    %p502 = scmp.eq.s32.totalorder %s28, 0
    %p503 = por %p501, %p502
    %p504 = scmp.ne.s32.totalorder %s490, %s491
    %p505 = scmp.eq.s32.totalorder %s29, 3
    %p506 = por %p504, %p505
    %p508 = scmp.ne.s32.totalorder %s491, %s507
    %p509 = scmp.eq.s32.totalorder %s29, 0
    %p510 = por %p508, %p509
    %p511 = scmp.le.s32.totalorder 1, %s23
    %p512 = scmp.lt.s32.totalorder %s23, 5
    %p513 = pnand %p511, %p512
    %p514 = pneg %p513
    // Predicated region
    $region9: #{forward.12} parent=5 // pred_check
      _
    $region10: #{forward.12} parent=5 // pred_check_branch
      %516 = sbr.rel (%p513) target = $region12
    $region11: #{forward.12} parent=5 // pred_region
      %s517 = ssub.s32 %s23, 1
    $region12: #{forward.12} parent=5 // pred_fallthru
      _
    %p518 = scmp.lt.s32.totalorder %s23, 4
    // Predicated region
    $region13: #{forward.12} parent=5 // pred_check
      %p519 = pneg %p518
    $region14: #{forward.12} parent=5 // pred_check_branch
      %521 = sbr.rel (%p519) target = $region16
    $region15: #{forward.12} parent=5 // pred_region
      // Predicated region
      $region17: #{forward.12} parent=15 // pred_check
        %p522 = pneg %p55
      $region18: #{forward.12} parent=15 // pred_check_branch
        %524 = sbr.rel (%p522) target = $region20
      $region19: #{forward.12} parent=15 // pred_region
        %p525 = scmp.lt.s32.totalorder %s30, 1
        %s526 = scalar_select %p525, %s30, 1
        %s527 = smul.addr %s526, 2
        %s528 = smul.addr %s527, 4
        %s529 = scalar_lea.vmem %s0, %s528
      $region20: #{forward.12} parent=15 // pred_fallthru
        _
      // Predicated region
      $region21: #{forward.12} parent=15 // pred_check
        %p530 = pneg %p81
      $region22: #{forward.12} parent=15 // pred_check_branch
        %532 = sbr.rel (%p530) target = $region24
      $region23: #{forward.12} parent=15 // pred_region
        %p533 = scmp.lt.s32.totalorder %s30, 1
        %s534 = scalar_select %p533, %s30, 1
        %s535 = smul.addr %s534, 4
        %s536 = scalar_lea.vmem %s1, %s535
      $region24: #{forward.12} parent=15 // pred_fallthru
        _
      // Predicated region
      $region25: #{forward.12} parent=15 // pred_check
        %p537 = pneg %p107
      $region26: #{forward.12} parent=15 // pred_check_branch
        %539 = sbr.rel (%p537) target = $region28
      $region27: #{forward.12} parent=15 // pred_region
        %p540 = scmp.lt.s32.totalorder %s30, 1
        %s541 = scalar_select %p540, %s30, 1
        %s542 = scalar_lea.vmem %s2, %s541
      $region28: #{forward.12} parent=15 // pred_fallthru
        _
      // Predicated region
      $region29: #{forward.12} parent=15 // pred_check
        %p543 = pneg %p133
      $region30: #{forward.12} parent=15 // pred_check_branch
        %545 = sbr.rel (%p543) target = $region32
      $region31: #{forward.12} parent=15 // pred_region
        %p546 = scmp.lt.s32.totalorder %s30, 1
        %s547 = scalar_select %p546, %s30, 1
        %s548 = scalar_lea.vmem %s3, %s547
      $region32: #{forward.12} parent=15 // pred_fallthru
        _
      // Predicated region
      $region33: #{forward.12} parent=15 // pred_check
        %p549 = pneg %p159
      $region34: #{forward.12} parent=15 // pred_check_branch
        %551 = sbr.rel (%p549) target = $region36
      $region35: #{forward.12} parent=15 // pred_region
        %p552 = scmp.lt.s32.totalorder %s31, 1
        %s553 = scalar_select %p552, %s31, 1
        %s554 = smul.addr %s553, 8
        %s555 = scalar_lea.vmem %s4, %s554
      $region36: #{forward.12} parent=15 // pred_fallthru
        _
      // Predicated region
      $region37: #{forward.12} parent=15 // pred_check
        %p556 = pneg %p185
      $region38: #{forward.12} parent=15 // pred_check_branch
        %558 = sbr.rel (%p556) target = $region40
      $region39: #{forward.12} parent=15 // pred_region
        %p559 = scmp.lt.s32.totalorder %s31, 1
        %s560 = scalar_select %p559, %s31, 1
        %s561 = smul.addr %s560, 4
        %s562 = smul.addr %s561, 4
        %s563 = scalar_lea.vmem %s5, %s562
      $region40: #{forward.12} parent=15 // pred_fallthru
        _
      // Predicated region
      $region41: #{forward.12} parent=15 // pred_check
        %p564 = pneg %p211
      $region42: #{forward.12} parent=15 // pred_check_branch
        %566 = sbr.rel (%p564) target = $region44
      $region43: #{forward.12} parent=15 // pred_region
        %p567 = scmp.lt.s32.totalorder %s31, 1
        %s568 = scalar_select %p567, %s31, 1
        %s569 = scalar_lea.vmem %s6, %s568
      $region44: #{forward.12} parent=15 // pred_fallthru
        _
      // Predicated region
      $region45: #{forward.12} parent=15 // pred_check
        %p570 = pneg %p237
      $region46: #{forward.12} parent=15 // pred_check_branch
        %572 = sbr.rel (%p570) target = $region48
      $region47: #{forward.12} parent=15 // pred_region
        %p573 = scmp.lt.s32.totalorder %s31, 1
        %s574 = scalar_select %p573, %s31, 1
        %s575 = smul.addr %s574, 4
        %s576 = smul.addr %s575, 4
        %s577 = scalar_lea.vmem %s7, %s576
      $region48: #{forward.12} parent=15 // pred_fallthru
        _
      // Predicated region
      $region49: #{forward.12} parent=15 // pred_check
        %p578 = pneg %p263
      $region50: #{forward.12} parent=15 // pred_check_branch
        %580 = sbr.rel (%p578) target = $region52
      $region51: #{forward.12} parent=15 // pred_region
        %p581 = scmp.lt.s32.totalorder %s31, 1
        %s582 = scalar_select %p581, %s31, 1
        %s583 = scalar_lea.vmem %s8, %s582
      $region52: #{forward.12} parent=15 // pred_fallthru
        _
      // Predicated region
      $region53: #{forward.12} parent=15 // pred_check
        %p584 = pneg %p289
      $region54: #{forward.12} parent=15 // pred_check_branch
        %586 = sbr.rel (%p584) target = $region56
      $region55: #{forward.12} parent=15 // pred_region
        %p587 = scmp.lt.s32.totalorder %s31, 1
        %s588 = scalar_select %p587, %s31, 1
        %s589 = smul.addr %s588, 4
        %s590 = smul.addr %s589, 4
        %s591 = scalar_lea.vmem %s9, %s590
      $region56: #{forward.12} parent=15 // pred_fallthru
        _
      // Predicated region
      $region57: #{forward.12} parent=15 // pred_check
        %p592 = pneg %p315
      $region58: #{forward.12} parent=15 // pred_check_branch
        %594 = sbr.rel (%p592) target = $region60
      $region59: #{forward.12} parent=15 // pred_region
        %p595 = scmp.lt.s32.totalorder %s31, 1
        %s596 = scalar_select %p595, %s31, 1
        %s597 = scalar_lea.vmem %s10, %s596
      $region60: #{forward.12} parent=15 // pred_fallthru
        _
      // Predicated region
      $region61: #{forward.12} parent=15 // pred_check
        %p598 = pneg %p341
      $region62: #{forward.12} parent=15 // pred_check_branch
        %600 = sbr.rel (%p598) target = $region64
      $region63: #{forward.12} parent=15 // pred_region
        %p601 = scmp.lt.s32.totalorder %s31, 1
        %s602 = scalar_select %p601, %s31, 1
        %s603 = smul.addr %s602, 4
        %s604 = smul.addr %s603, 4
        %s605 = scalar_lea.vmem %s11, %s604
      $region64: #{forward.12} parent=15 // pred_fallthru
        _
      // Predicated region
      $region65: #{forward.12} parent=15 // pred_check
        %p606 = pneg %p367
      $region66: #{forward.12} parent=15 // pred_check_branch
        %608 = sbr.rel (%p606) target = $region68
      $region67: #{forward.12} parent=15 // pred_region
        %p609 = scmp.lt.s32.totalorder %s31, 1
        %s610 = scalar_select %p609, %s31, 1
        %s611 = scalar_lea.vmem %s12, %s610
      $region68: #{forward.12} parent=15 // pred_fallthru
        _
      // Predicated region
      $region69: #{forward.12} parent=15 // pred_check
        %p612 = pneg %p393
      $region70: #{forward.12} parent=15 // pred_check_branch
        %614 = sbr.rel (%p612) target = $region72
      $region71: #{forward.12} parent=15 // pred_region
        %p615 = scmp.lt.s32.totalorder %s31, 1
        %s616 = scalar_select %p615, %s31, 1
        %s617 = smul.addr %s616, 4
        %s618 = smul.addr %s617, 4
        %s619 = scalar_lea.vmem %s13, %s618
      $region72: #{forward.12} parent=15 // pred_fallthru
        _
      // Predicated region
      $region73: #{forward.12} parent=15 // pred_check
        %p620 = pneg %p419
      $region74: #{forward.12} parent=15 // pred_check_branch
        %622 = sbr.rel (%p620) target = $region76
      $region75: #{forward.12} parent=15 // pred_region
        %p623 = scmp.lt.s32.totalorder %s31, 1
        %s624 = scalar_select %p623, %s31, 1
        %s625 = scalar_lea.vmem %s14, %s624
      $region76: #{forward.12} parent=15 // pred_fallthru
        _
      // Predicated region
      $region77: #{forward.12} parent=15 // pred_check
        %p626 = pneg %p445
      $region78: #{forward.12} parent=15 // pred_check_branch
        %628 = sbr.rel (%p626) target = $region80
      $region79: #{forward.12} parent=15 // pred_region
        %p629 = scmp.lt.s32.totalorder %s31, 1
        %s630 = scalar_select %p629, %s31, 1
        %s631 = smul.addr %s630, 8
        %s632 = smul.addr %s631, 4
        %s633 = scalar_lea.vmem %s15, %s632
      $region80: #{forward.12} parent=15 // pred_fallthru
        _
      // Predicated region
      $region81: #{forward.12} parent=15 // pred_check
        %p634 = pneg %p471
      $region82: #{forward.12} parent=15 // pred_check_branch
        %636 = sbr.rel (%p634) target = $region84
      $region83: #{forward.12} parent=15 // pred_region
        %p637 = scmp.lt.s32.totalorder %s31, 1
        %s638 = scalar_select %p637, %s31, 1
        %s639 = scalar_lea.vmem %s16, %s638
      $region84: #{forward.12} parent=15 // pred_fallthru
        _
    $region16: #{forward.12} parent=5 // pred_fallthru
      _
    %p640 = scmp.le.s32.totalorder 1, %s23
    %p641 = scmp.lt.s32.totalorder %s23, 5
    %p642 = pnand %p640, %p641
    %p643 = pneg %p642
    // Predicated region
    $region85: #{forward.12} parent=5 // pred_check
      _
    $region86: #{forward.12} parent=5 // pred_check_branch
      %645 = sbr.rel (%p642) target = $region88
    $region87: #{forward.12} parent=5 // pred_region
      %s646 = ssub.s32 %s23, 1
      %p647 = scmp.lt.s32.totalorder %s32, 1
      %s648 = scalar_select %p647, %s32, 1
      %s649 = smul.addr %s648, 2
      %s650 = smul.addr %s649, 4
      %s651 = scalar_lea.vmem %s0, %s650
      %p652 = pneg %p61
      %p653 = pneg %p58
      %p654 = scmp.lt.s32.totalorder %s32, 1
      %s655 = scalar_select %p654, %s32, 1
      %s656 = smul.addr %s655, 4
      %s657 = scalar_lea.vmem %s1, %s656
      %p658 = pneg %p87
      %p659 = pneg %p84
      %p660 = scmp.lt.s32.totalorder %s32, 1
      %s661 = scalar_select %p660, %s32, 1
      %s662 = scalar_lea.vmem %s2, %s661
      %p663 = pneg %p113
      %p664 = pneg %p110
      %p665 = scmp.lt.s32.totalorder %s32, 1
      %s666 = scalar_select %p665, %s32, 1
      %s667 = scalar_lea.vmem %s3, %s666
      %p668 = pneg %p139
      %p669 = pneg %p136
      %p670 = scmp.lt.s32.totalorder %s33, 1
      %s671 = scalar_select %p670, %s33, 1
      %s672 = smul.addr %s671, 8
      %s673 = scalar_lea.vmem %s4, %s672
      %p674 = pneg %p165
      %p675 = pneg %p162
      %p676 = scmp.lt.s32.totalorder %s33, 1
      %s677 = scalar_select %p676, %s33, 1
      %s678 = smul.addr %s677, 4
      %s679 = smul.addr %s678, 4
      %s680 = scalar_lea.vmem %s5, %s679
      %p681 = pneg %p191
      %p682 = pneg %p188
      %p683 = scmp.lt.s32.totalorder %s33, 1
      %s684 = scalar_select %p683, %s33, 1
      %s685 = scalar_lea.vmem %s6, %s684
      %p686 = pneg %p217
      %p687 = pneg %p214
      %p688 = scmp.lt.s32.totalorder %s33, 1
      %s689 = scalar_select %p688, %s33, 1
      %s690 = smul.addr %s689, 4
      %s691 = smul.addr %s690, 4
      %s692 = scalar_lea.vmem %s7, %s691
      %p693 = pneg %p243
      %p694 = pneg %p240
      %p695 = scmp.lt.s32.totalorder %s33, 1
      %s696 = scalar_select %p695, %s33, 1
      %s697 = scalar_lea.vmem %s8, %s696
      %p698 = pneg %p269
      %p699 = pneg %p266
      %p700 = scmp.lt.s32.totalorder %s33, 1
      %s701 = scalar_select %p700, %s33, 1
      %s702 = smul.addr %s701, 4
      %s703 = smul.addr %s702, 4
      %s704 = scalar_lea.vmem %s9, %s703
      %p705 = pneg %p295
      %p706 = pneg %p292
      %p707 = scmp.lt.s32.totalorder %s33, 1
      %s708 = scalar_select %p707, %s33, 1
      %s709 = scalar_lea.vmem %s10, %s708
      %p710 = pneg %p321
      %p711 = pneg %p318
      %p712 = scmp.lt.s32.totalorder %s33, 1
      %s713 = scalar_select %p712, %s33, 1
      %s714 = smul.addr %s713, 4
      %s715 = smul.addr %s714, 4
      %s716 = scalar_lea.vmem %s11, %s715
      %p717 = pneg %p347
      %p718 = pneg %p344
      %p719 = scmp.lt.s32.totalorder %s33, 1
      %s720 = scalar_select %p719, %s33, 1
      %s721 = scalar_lea.vmem %s12, %s720
      %p722 = pneg %p373
      %p723 = pneg %p370
      %p724 = scmp.lt.s32.totalorder %s33, 1
      %s725 = scalar_select %p724, %s33, 1
      %s726 = smul.addr %s725, 4
      %s727 = smul.addr %s726, 4
      %s728 = scalar_lea.vmem %s13, %s727
      %p729 = pneg %p399
      %p730 = pneg %p396
      %p731 = scmp.lt.s32.totalorder %s33, 1
      %s732 = scalar_select %p731, %s33, 1
      %s733 = scalar_lea.vmem %s14, %s732
      %p734 = pneg %p425
      %p735 = pneg %p422
      %p736 = scmp.lt.s32.totalorder %s33, 1
      %s737 = scalar_select %p736, %s33, 1
      %s738 = smul.addr %s737, 8
      %s739 = smul.addr %s738, 4
      %s740 = scalar_lea.vmem %s15, %s739
      %p741 = pneg %p451
      %p742 = pneg %p448
      %p743 = scmp.lt.s32.totalorder %s33, 1
      %s744 = scalar_select %p743, %s33, 1
      %s745 = scalar_lea.vmem %s16, %s744
      %p746 = pneg %p477
      %p747 = pneg %p474
      %p748 = pneg %p503
      %p749 = pneg %p500
      %p750 = scmp.lt.s32.totalorder %s32, 1
      %s751 = scalar_select %p750, %s32, 1
      %s752 = smul.addr %s751, 2
      %s753 = smul.addr %s752, 4
      %s754 = scalar_lea.vmem %s17, %s753
      %p755 = scmp.lt.s32.totalorder %s32, 1
      %s756 = scalar_select %p755, %s32, 1
      %s757 = smul.addr %s756, 2
      %s758 = smul.addr %s757, 4
      %s759 = scalar_lea.vmem %s0, %s758
      %p760 = scmp.lt.s32.totalorder %s32, 1
      %s761 = scalar_select %p760, %s32, 1
      %s762 = smul.addr %s761, 4
      %s763 = scalar_lea.vmem %s1, %s762
      %p764 = scmp.lt.s32.totalorder %s32, 1
      %s765 = scalar_select %p764, %s32, 1
      %s766 = scalar_lea.vmem %s2, %s765
      %p767 = scmp.lt.s32.totalorder %s32, 1
      %s768 = scalar_select %p767, %s32, 1
      %s769 = scalar_lea.vmem %s3, %s768
      %p770 = scmp.lt.s32.totalorder %s33, 1
      %s771 = scalar_select %p770, %s33, 1
      %s772 = smul.addr %s771, 8
      %s773 = scalar_lea.vmem %s4, %s772
      %p774 = scmp.lt.s32.totalorder %s33, 1
      %s775 = scalar_select %p774, %s33, 1
      %s776 = smul.addr %s775, 4
      %s777 = smul.addr %s776, 4
      %s778 = scalar_lea.vmem %s5, %s777
      %p779 = scmp.lt.s32.totalorder %s33, 1
      %s780 = scalar_select %p779, %s33, 1
      %s781 = scalar_lea.vmem %s6, %s780
      %p782 = scmp.lt.s32.totalorder %s33, 1
      %s783 = scalar_select %p782, %s33, 1
      %s784 = smul.addr %s783, 4
      %s785 = smul.addr %s784, 4
      %s786 = scalar_lea.vmem %s7, %s785
      %p787 = scmp.lt.s32.totalorder %s33, 1
      %s788 = scalar_select %p787, %s33, 1
      %s789 = scalar_lea.vmem %s8, %s788
      %p790 = scmp.lt.s32.totalorder %s33, 1
      %s791 = scalar_select %p790, %s33, 1
      %s792 = smul.addr %s791, 4
      %s793 = smul.addr %s792, 4
      %s794 = scalar_lea.vmem %s9, %s793
      %p795 = scmp.lt.s32.totalorder %s33, 1
      %s796 = scalar_select %p795, %s33, 1
      %s797 = scalar_lea.vmem %s10, %s796
      %p798 = scmp.lt.s32.totalorder %s33, 1
      %s799 = scalar_select %p798, %s33, 1
      %s800 = smul.addr %s799, 4
      %s801 = smul.addr %s800, 4
      %s802 = scalar_lea.vmem %s11, %s801
      %p803 = scmp.lt.s32.totalorder %s33, 1
      %s804 = scalar_select %p803, %s33, 1
      %s805 = scalar_lea.vmem %s12, %s804
      %p806 = scmp.lt.s32.totalorder %s33, 1
      %s807 = scalar_select %p806, %s33, 1
      %s808 = smul.addr %s807, 4
      %s809 = smul.addr %s808, 4
      %s810 = scalar_lea.vmem %s13, %s809
      %p811 = scmp.lt.s32.totalorder %s33, 1
      %s812 = scalar_select %p811, %s33, 1
      %s813 = scalar_lea.vmem %s14, %s812
      %p814 = scmp.lt.s32.totalorder %s33, 1
      %s815 = scalar_select %p814, %s33, 1
      %s816 = smul.addr %s815, 8
      %s817 = smul.addr %s816, 4
      %s818 = scalar_lea.vmem %s15, %s817
      %p819 = scmp.lt.s32.totalorder %s33, 1
      %s820 = scalar_select %p819, %s33, 1
      %s821 = scalar_lea.vmem %s16, %s820
      %p822 = scmp.lt.s32.totalorder %s32, 1
      %s823 = scalar_select %p822, %s32, 1
      %s824 = smul.addr %s823, 2
      %s825 = smul.addr %s824, 4
      %s826 = scalar_lea.vmem %s17, %s825
      %p828 = scmp.eq.s32.totalorder %s33, 0
      // Predicated region
      $region89: #{forward.12} parent=87 // pred_check
        %p829 = pneg %p828
      $region90: #{forward.12} parent=87 // pred_check_branch
        %831 = sbr.rel (%p829) target = $region92
      $region91: #{forward.12} parent=87 // pred_region
        %v832 = vld [vmem:[%s759] sm:$0xf]
        %v833 = vld [vmem:[%s759 + $0x4] sm:$0x3]
        %v834 = vunpack.c.l.bf16 %v832
        %v835 = vunpack.c.l.bf16 %v833
        %vm836 = vcmask 261120
        %837 = vst.msk [vmem:[#allocation2] sm:$0xff] %vm836, %v834
        %vm838 = vcmask 256000
        %839 = vst.msk [vmem:[#allocation2 + $0x8] sm:$0x7] %vm838, %v835
      $region92: #{forward.12} parent=87 // pred_fallthru
        _
      %v840 = vld [vmem:[#allocation2] sm:$0xff]
      %v841 = vld [vmem:[#allocation2 + $0x8] sm:$0x7]
      %v842 = vld [vmem:[%s763] sm:$0xf]
      %v843 = vld [vmem:[%s766] sm:$0x1]
      %v844 = vld [vmem:[%s769] sm:$0x1]
      %v845 = vlaneseq
      %v846 = vshrl.u32 %v845, 7
      %v847 = vadd.s32 %v846, 8
      %v848 = vlaneseq
      %v849 = vand.u32 %v848, 127
      %vm850 = vcmp.le.s32.totalorder %v849, %v846
      %vm851 = vcmp.le.s32.totalorder %v849, %v847
      %v852 = vsel %vm850, 0.0, -1e+09
      %v853 = vsel %vm851, 0.0, -1e+09
      %v855 = vlaneseq
      %v856 = vshrl.u32 %v855, 7
      %v857 = vsub.s32 0, %v856
      %v858 = vrot.slane %v843, %v857
      %v860 = vadd.f32 %v852, %v858
      %v861 = vadd.f32 %v853, %v858
      %v862 = vld [vmem:[%s773] sm:$0x3f]
      %vm863 = vcmask 261120
      %v864 = vsel %vm863, %v840, 0.0
      %865 = vadd.xlane.f32.xlu0 %v864
      %v866 = vpop.xlane.xlu0 %865
      %vm867 = vcmask 256000
      %v868 = vsel %vm867, %v841, 0.0
      %869 = vadd.xlane.f32.xlu0 %v868
      %v870 = vpop.xlane.xlu0 %869
      %v871 = vrcp.pop 32.0
      %v872 = vmul.f32 %v866, %v871
      %v873 = vmul.f32 %v870, %v871
      %v874 = vsub.f32 %v840, %v872
      %v875 = vsub.f32 %v841, %v873
      %v876 = vmul.f32 %v874, %v874
      %v877 = vmul.f32 %v875, %v875
      %v878 = vsel %vm863, %v876, 0.0
      %879 = vadd.xlane.f32.xlu0 %v878
      %v880 = vpop.xlane.xlu0 %879
      %v881 = vsel %vm867, %v877, 0.0
      %882 = vadd.xlane.f32.xlu0 %v881
      %v883 = vpop.xlane.xlu0 %882
      %v884 = vmul.f32 %v880, %v871
      %v885 = vmul.f32 %v883, %v871
      %v886 = vadd.f32 %v884, 1e-12
      %v887 = vadd.f32 %v885, 1e-12
      %v888 = vrsqrt.pop %v886
      %v889 = vrsqrt.pop %v887
      %v890 = vmul.f32 %v874, %v888
      %v891 = vmul.f32 %v875, %v889
      %v892 = vlaneseq
      %v893 = vshrl.u32 %v892, 7
      %v894 = vsub.s32 0, %v893
      %v895 = vrot.slane %v862, %v894
      %v896 = vmul.f32 %v890, %v895
      %v897 = vmul.f32 %v891, %v895
      %v898 = vlaneseq
      %v899 = vshrl.u32 %v898, 7
      %v900 = vsub.s32 1, %v899
      %v901 = vrot.slane %v862, %v900
      %v902 = vadd.f32 %v896, %v901
      %v903 = vadd.f32 %v897, %v901
      %v904 = vld [vmem:[%s778] sm:$0xf]
      %v905 = vld [vmem:[%s778 + $0x4] sm:$0xf]
      %v906 = vld [vmem:[%s778 + $0x8] sm:$0xf]
      %v907 = vld [vmem:[%s778 + $0xc] sm:$0xf]
      %v908 = vld [vmem:[%s781] sm:$0x1]
      %v909 = vld [vmem:[%s786] sm:$0xf]
      %v910 = vld [vmem:[%s786 + $0x4] sm:$0xf]
      %v911 = vld [vmem:[%s786 + $0x8] sm:$0xf]
      %v912 = vld [vmem:[%s786 + $0xc] sm:$0xf]
      %v913 = vld [vmem:[%s789] sm:$0x1]
      %v914 = vpack.c.bf16 %v903, %v902
      %v916 = vlaneseq
      %v917 = vshrl.u32 %v916, 7
      %v918 = vsub.s32 0, %v917
      %v919 = vrot.slane %v908, %v918
      %v925 = vunpack.c.l.b16 %v904
      %v926 = vunpack.c.l.b16 %v905
      %v927 = vunpack.c.l.b16 %v906
      %v928 = vunpack.c.l.b16 %v907
      %v929 = vpack.c.b16 %v926, %v925
      %v930 = vpack.c.b16 %v928, %v927
      %v934 = vsel %vm863, %v914, 0
      %936 = vmatprep.subr.bf16.mxu0 0
      %937 = vmatpush1.bf16.msra.mxu0 0
      %938 = vmatprep.subr.bf16.mxu0 0
      %939 = vmatpush1.bf16.msra.mxu0 0
      %940 = vmatprep.subr.bf16.mxu0 0
      %941 = vmatpush1.bf16.msra.mxu0 0
      %942 = vmatprep.subr.bf16.mxu0 0
      %943 = vmatpush1.bf16.msra.mxu0 0
      %944 = vmatprep.subr.bf16.mxu0 0
      %945 = vmatpush1.bf16.msra.mxu0 0
      %946 = vmatprep.subr.bf16.mxu0 0
      %947 = vmatpush1.bf16.msra.mxu0 0
      %948 = vmatprep.subr.bf16.mxu0 0
      %949 = vmatpush1.bf16.msra.mxu0 %v930
      %950 = vmatprep.subr.bf16.mxu0 0
      %951 = vmatpush1.bf16.msra.mxu0 %v929
      %952 = vmatprep.subr.bf16.mxu0 0
      %953 = vmatpush2.bf16.msra.mxu0 0
      %954 = vmatprep.subr.bf16.mxu0 0
      %955 = vmatpush2.bf16.msra.mxu0 0
      %956 = vmatprep.subr.bf16.mxu0 0
      %957 = vmatpush2.bf16.msra.mxu0 0
      %958 = vmatprep.subr.bf16.mxu0 0
      %959 = vmatpush2.bf16.msra.mxu0 0
      %960 = vmatprep.subr.bf16.mxu0 0
      %961 = vmatpush2.bf16.msra.mxu0 0
      %962 = vmatprep.subr.bf16.mxu0 0
      %963 = vmatpush2.bf16.msra.mxu0 0
      %964 = vmatprep.subr.bf16.mxu0 0
      %965 = vmatpush2.bf16.msra.mxu0 0
      %966 = vmatprep.subr.bf16.mxu0 0
      %967 = vmatpush2.bf16.msra.mxu0 0
      %968 = vmatprep.mubr.bf16.mxu0 0
      %969 = vmatmul.mubr.bf16.gmra.mxu0 %v934
      %v970 = vpop.f32.mrf.mxu0
      %v971 = vadd.f32 %v919, %v970
      %v972 = vpop.f32.mrf.mxu0
      %v973 = vpop.f32.mrf.mxu0
      %v974 = vadd.f32 %v919, %v973
      %v975 = vpop.f32.mrf.mxu0
      %976 = vdwg.mxu0
      %v977 = vpack.c.bf16 %v974, %v971
      %979 = vrot.lane.b32.xlu0 %v977, 96
      %v980 = vpop.permute.xlu0 %979
      %vm981 = vcmask 64512
      %v983 = vsel %vm981, %v977, 0
      %v986 = vsel %vm981, %v980, 0
      %988 = vmatprep.subr.bf16.mxu0 0
      %989 = vmatpush1.bf16.xpose.msra.mxu0 0
      %990 = vmatprep.subr.bf16.mxu0 0
      %991 = vmatpush1.bf16.xpose.msra.mxu0 0
      %992 = vmatprep.subr.bf16.mxu0 0
      %993 = vmatpush1.bf16.xpose.msra.mxu0 0
      %994 = vmatprep.subr.bf16.mxu0 0
      %995 = vmatpush1.bf16.xpose.msra.mxu0 0
      %996 = vmatprep.subr.bf16.mxu0 0
      %997 = vmatpush1.bf16.xpose.msra.mxu0 0
      %998 = vmatprep.subr.bf16.mxu0 0
      %999 = vmatpush1.bf16.xpose.msra.mxu0 0
      %1000 = vmatprep.subr.bf16.mxu0 0
      %1001 = vmatpush1.bf16.xpose.msra.mxu0 0
      %1002 = vmatprep.subr.bf16.mxu0 0
      %1003 = vmatpush1.bf16.xpose.msra.mxu0 %v986
      %1004 = vmatprep.subr.bf16.mxu0 0
      %1005 = vmatpush2.bf16.xpose.msra.mxu0 0
      %1006 = vmatprep.subr.bf16.mxu0 0
      %1007 = vmatpush2.bf16.xpose.msra.mxu0 0
      %1008 = vmatprep.subr.bf16.mxu0 0
      %1009 = vmatpush2.bf16.xpose.msra.mxu0 0
      %1010 = vmatprep.subr.bf16.mxu0 0
      %1011 = vmatpush2.bf16.xpose.msra.mxu0 0
      %1012 = vmatprep.subr.bf16.mxu0 0
      %1013 = vmatpush2.bf16.xpose.msra.mxu0 0
      %1014 = vmatprep.subr.bf16.mxu0 0
      %1015 = vmatpush2.bf16.xpose.msra.mxu0 0
      %1016 = vmatprep.subr.bf16.mxu0 0
      %1017 = vmatpush2.bf16.xpose.msra.mxu0 0
      %1018 = vmatprep.subr.bf16.mxu0 0
      %1019 = vmatpush2.bf16.xpose.msra.mxu0 0
      %1020 = vmatprep.mubr.bf16.mxu0 0
      %1021 = vmatmul.mubr.bf16.gmra.mxu0 %v983
      %v1022 = vpop.f32.mrf.mxu0
      %v1023 = vadd.f32 0.0, %v1022
      %v1024 = vpop.f32.mrf.mxu0
      %v1025 = vpop.f32.mrf.mxu0
      %v1026 = vadd.f32 0.0, %v1025
      %v1027 = vpop.f32.mrf.mxu0
      %1028 = vdwg.mxu0
      %v1029 = vmul.f32 %v1023, 0.35355338
      %v1030 = vmul.f32 %v1026, 0.35355338
      %v1031 = vadd.f32 %v1029, %v860
      %v1032 = vadd.f32 %v1030, %v861
      %vm1033 = vcmask 89088
      %v1034 = vsel %vm1033, %v1031, -inf
      %1035 = vmax.xlane.f32.xlu0 %v1034
      %v1036 = vpop.xlane.xlu0 %1035
      %vm1037 = vcmask 83968
      %v1038 = vsel %vm1037, %v1032, -inf
      %1039 = vmax.xlane.f32.xlu0 %v1038
      %v1040 = vpop.xlane.xlu0 %1039
      %v1041 = vsub.f32 %v1031, %v1036
      %v1042 = vsub.f32 %v1032, %v1040
      %v1043 = vmul.f32 %v1041, 1.442695
      %v1044 = vpow.pop %v1043
      %v1045 = vmul.f32 %v1042, 1.442695
      %v1046 = vpow.pop %v1045
      %v1047 = vsel %vm1033, %v1044, 0.0
      %1048 = vadd.xlane.f32.xlu0 %v1047
      %v1049 = vpop.xlane.xlu0 %1048
      %v1050 = vsel %vm1037, %v1046, 0.0
      %1051 = vadd.xlane.f32.xlu0 %v1050
      %v1052 = vpop.xlane.xlu0 %1051
      %v1053 = vrcp.pop %v1049
      %v1054 = vrcp.pop %v1052
      %v1055 = vmul.f32 %v1044, %v1053
      %v1056 = vmul.f32 %v1046, %v1054
      %v1057 = vpack.c.bf16 %v1056, %v1055
      %1058 = vrot.lane.b32.xlu0 %v977, 64
      %v1059 = vpop.permute.xlu0 %1058
      %v1061 = vsel %vm1033, %v1057, 0
      %vm1063 = vcmask 1044480
      %vm1064 = vcmask 1045504
      %v1065 = vsel %vm1063, 4294967295, 65535
      %v1066 = vsel %vm1064, %v1065, 0
      %v1068 = vand.u32 %v1059, %v1066
      %1070 = vmatprep.subr.bf16.mxu0 0
      %1071 = vmatpush1.bf16.msra.mxu0 0
      %1072 = vmatprep.subr.bf16.mxu0 0
      %1073 = vmatpush1.bf16.msra.mxu0 0
      %1074 = vmatprep.subr.bf16.mxu0 0
      %1075 = vmatpush1.bf16.msra.mxu0 0
      %1076 = vmatprep.subr.bf16.mxu0 0
      %1077 = vmatpush1.bf16.msra.mxu0 0
      %1078 = vmatprep.subr.bf16.mxu0 0
      %1079 = vmatpush1.bf16.msra.mxu0 0
      %1080 = vmatprep.subr.bf16.mxu0 0
      %1081 = vmatpush1.bf16.msra.mxu0 0
      %1082 = vmatprep.subr.bf16.mxu0 0
      %1083 = vmatpush1.bf16.msra.mxu0 0
      %1084 = vmatprep.subr.bf16.mxu0 0
      %1085 = vmatpush1.bf16.msra.mxu0 %v1068
      %1086 = vmatprep.subr.bf16.mxu0 0
      %1087 = vmatpush2.bf16.msra.mxu0 0
      %1088 = vmatprep.subr.bf16.mxu0 0
      %1089 = vmatpush2.bf16.msra.mxu0 0
      %1090 = vmatprep.subr.bf16.mxu0 0
      %1091 = vmatpush2.bf16.msra.mxu0 0
      %1092 = vmatprep.subr.bf16.mxu0 0
      %1093 = vmatpush2.bf16.msra.mxu0 0
      %1094 = vmatprep.subr.bf16.mxu0 0
      %1095 = vmatpush2.bf16.msra.mxu0 0
      %1096 = vmatprep.subr.bf16.mxu0 0
      %1097 = vmatpush2.bf16.msra.mxu0 0
      %1098 = vmatprep.subr.bf16.mxu0 0
      %1099 = vmatpush2.bf16.msra.mxu0 0
      %1100 = vmatprep.subr.bf16.mxu0 0
      %1101 = vmatpush2.bf16.msra.mxu0 0
      %1102 = vmatprep.mubr.bf16.mxu0 0
      %1103 = vmatmul.mubr.bf16.gmra.mxu0 %v1061
      %v1104 = vpop.f32.mrf.mxu0
      %v1105 = vadd.f32 0.0, %v1104
      %v1106 = vpop.f32.mrf.mxu0
      %v1107 = vpop.f32.mrf.mxu0
      %v1108 = vadd.f32 0.0, %v1107
      %v1109 = vpop.f32.mrf.mxu0
      %1110 = vdwg.mxu0
      %1111 = vrot.lane.b32.xlu0 %v977, 120
      %v1112 = vpop.permute.xlu0 %1111
      %1113 = vrot.lane.b32.xlu0 %v977, 88
      %v1114 = vpop.permute.xlu0 %1113
      %v1116 = vsel %vm981, %v1112, 0
      %v1119 = vsel %vm981, %v1114, 0
      %1121 = vmatprep.subr.bf16.mxu0 0
      %1122 = vmatpush1.bf16.xpose.msra.mxu0 0
      %1123 = vmatprep.subr.bf16.mxu0 0
      %1124 = vmatpush1.bf16.xpose.msra.mxu0 0
      %1125 = vmatprep.subr.bf16.mxu0 0
      %1126 = vmatpush1.bf16.xpose.msra.mxu0 0
      %1127 = vmatprep.subr.bf16.mxu0 0
      %1128 = vmatpush1.bf16.xpose.msra.mxu0 0
      %1129 = vmatprep.subr.bf16.mxu0 0
      %1130 = vmatpush1.bf16.xpose.msra.mxu0 0
      %1131 = vmatprep.subr.bf16.mxu0 0
      %1132 = vmatpush1.bf16.xpose.msra.mxu0 0
      %1133 = vmatprep.subr.bf16.mxu0 0
      %1134 = vmatpush1.bf16.xpose.msra.mxu0 0
      %1135 = vmatprep.subr.bf16.mxu0 0
      %1136 = vmatpush1.bf16.xpose.msra.mxu0 %v1119
      %1137 = vmatprep.subr.bf16.mxu0 0
      %1138 = vmatpush2.bf16.xpose.msra.mxu0 0
      %1139 = vmatprep.subr.bf16.mxu0 0
      %1140 = vmatpush2.bf16.xpose.msra.mxu0 0
      %1141 = vmatprep.subr.bf16.mxu0 0
      %1142 = vmatpush2.bf16.xpose.msra.mxu0 0
      %1143 = vmatprep.subr.bf16.mxu0 0
      %1144 = vmatpush2.bf16.xpose.msra.mxu0 0
      %1145 = vmatprep.subr.bf16.mxu0 0
      %1146 = vmatpush2.bf16.xpose.msra.mxu0 0
      %1147 = vmatprep.subr.bf16.mxu0 0
      %1148 = vmatpush2.bf16.xpose.msra.mxu0 0
      %1149 = vmatprep.subr.bf16.mxu0 0
      %1150 = vmatpush2.bf16.xpose.msra.mxu0 0
      %1151 = vmatprep.subr.bf16.mxu0 0
      %1152 = vmatpush2.bf16.xpose.msra.mxu0 0
      %1153 = vmatprep.mubr.bf16.mxu0 0
      %1154 = vmatmul.mubr.bf16.gmra.mxu0 %v1116
      %v1155 = vpop.f32.mrf.mxu0
      %v1156 = vadd.f32 0.0, %v1155
      %v1157 = vpop.f32.mrf.mxu0
      %v1158 = vpop.f32.mrf.mxu0
      %v1159 = vadd.f32 0.0, %v1158
      %v1160 = vpop.f32.mrf.mxu0
      %1161 = vdwg.mxu0
      %v1162 = vmul.f32 %v1156, 0.35355338
      %v1163 = vmul.f32 %v1159, 0.35355338
      %v1164 = vadd.f32 %v1162, %v860
      %v1165 = vadd.f32 %v1163, %v861
      %v1166 = vsel %vm1033, %v1164, -inf
      %1167 = vmax.xlane.f32.xlu0 %v1166
      %v1168 = vpop.xlane.xlu0 %1167
      %v1169 = vsel %vm1037, %v1165, -inf
      %1170 = vmax.xlane.f32.xlu0 %v1169
      %v1171 = vpop.xlane.xlu0 %1170
      %v1172 = vsub.f32 %v1164, %v1168
      %v1173 = vsub.f32 %v1165, %v1171
      %v1174 = vmul.f32 %v1172, 1.442695
      %v1175 = vpow.pop %v1174
      %v1176 = vmul.f32 %v1173, 1.442695
      %v1177 = vpow.pop %v1176
      %v1178 = vsel %vm1033, %v1175, 0.0
      %1179 = vadd.xlane.f32.xlu0 %v1178
      %v1180 = vpop.xlane.xlu0 %1179
      %v1181 = vsel %vm1037, %v1177, 0.0
      %1182 = vadd.xlane.f32.xlu0 %v1181
      %v1183 = vpop.xlane.xlu0 %1182
      %v1184 = vrcp.pop %v1180
      %v1185 = vrcp.pop %v1183
      %v1186 = vmul.f32 %v1175, %v1184
      %v1187 = vmul.f32 %v1177, %v1185
      %v1188 = vpack.c.bf16 %v1187, %v1186
      %1189 = vrot.lane.b32.xlu0 %v977, 56
      %v1190 = vpop.permute.xlu0 %1189
      %v1192 = vsel %vm1033, %v1188, 0
      %v1195 = vand.u32 %v1190, %v1066
      %1197 = vmatprep.subr.bf16.mxu0 0
      %1198 = vmatpush1.bf16.msra.mxu0 0
      %1199 = vmatprep.subr.bf16.mxu0 0
      %1200 = vmatpush1.bf16.msra.mxu0 0
      %1201 = vmatprep.subr.bf16.mxu0 0
      %1202 = vmatpush1.bf16.msra.mxu0 0
      %1203 = vmatprep.subr.bf16.mxu0 0
      %1204 = vmatpush1.bf16.msra.mxu0 0
      %1205 = vmatprep.subr.bf16.mxu0 0
      %1206 = vmatpush1.bf16.msra.mxu0 0
      %1207 = vmatprep.subr.bf16.mxu0 0
      %1208 = vmatpush1.bf16.msra.mxu0 0
      %1209 = vmatprep.subr.bf16.mxu0 0
      %1210 = vmatpush1.bf16.msra.mxu0 0
      %1211 = vmatprep.subr.bf16.mxu0 0
      %1212 = vmatpush1.bf16.msra.mxu0 %v1195
      %1213 = vmatprep.subr.bf16.mxu0 0
      %1214 = vmatpush2.bf16.msra.mxu0 0
      %1215 = vmatprep.subr.bf16.mxu0 0
      %1216 = vmatpush2.bf16.msra.mxu0 0
      %1217 = vmatprep.subr.bf16.mxu0 0
      %1218 = vmatpush2.bf16.msra.mxu0 0
      %1219 = vmatprep.subr.bf16.mxu0 0
      %1220 = vmatpush2.bf16.msra.mxu0 0
      %1221 = vmatprep.subr.bf16.mxu0 0
      %1222 = vmatpush2.bf16.msra.mxu0 0
      %1223 = vmatprep.subr.bf16.mxu0 0
      %1224 = vmatpush2.bf16.msra.mxu0 0
      %1225 = vmatprep.subr.bf16.mxu0 0
      %1226 = vmatpush2.bf16.msra.mxu0 0
      %1227 = vmatprep.subr.bf16.mxu0 0
      %1228 = vmatpush2.bf16.msra.mxu0 0
      %1229 = vmatprep.mubr.bf16.mxu0 0
      %1230 = vmatmul.mubr.bf16.gmra.mxu0 %v1192
      %v1231 = vpop.f32.mrf.mxu0
      %v1232 = vadd.f32 0.0, %v1231
      %v1233 = vpop.f32.mrf.mxu0
      %v1234 = vpop.f32.mrf.mxu0
      %v1235 = vadd.f32 0.0, %v1234
      %v1236 = vpop.f32.mrf.mxu0
      %1237 = vdwg.mxu0
      %1238 = vrot.lane.b32.xlu0 %v977, 112
      %v1239 = vpop.permute.xlu0 %1238
      %1240 = vrot.lane.b32.xlu0 %v977, 80
      %v1241 = vpop.permute.xlu0 %1240
      %v1243 = vsel %vm981, %v1239, 0
      %v1246 = vsel %vm981, %v1241, 0
      %1248 = vmatprep.subr.bf16.mxu0 0
      %1249 = vmatpush1.bf16.xpose.msra.mxu0 0
      %1250 = vmatprep.subr.bf16.mxu0 0
      %1251 = vmatpush1.bf16.xpose.msra.mxu0 0
      %1252 = vmatprep.subr.bf16.mxu0 0
      %1253 = vmatpush1.bf16.xpose.msra.mxu0 0
      %1254 = vmatprep.subr.bf16.mxu0 0
      %1255 = vmatpush1.bf16.xpose.msra.mxu0 0
      %1256 = vmatprep.subr.bf16.mxu0 0
      %1257 = vmatpush1.bf16.xpose.msra.mxu0 0
      %1258 = vmatprep.subr.bf16.mxu0 0
      %1259 = vmatpush1.bf16.xpose.msra.mxu0 0
      %1260 = vmatprep.subr.bf16.mxu0 0
      %1261 = vmatpush1.bf16.xpose.msra.mxu0 0
      %1262 = vmatprep.subr.bf16.mxu0 0
      %1263 = vmatpush1.bf16.xpose.msra.mxu0 %v1246
      %1264 = vmatprep.subr.bf16.mxu0 0
      %1265 = vmatpush2.bf16.xpose.msra.mxu0 0
      %1266 = vmatprep.subr.bf16.mxu0 0
      %1267 = vmatpush2.bf16.xpose.msra.mxu0 0
      %1268 = vmatprep.subr.bf16.mxu0 0
      %1269 = vmatpush2.bf16.xpose.msra.mxu0 0
      %1270 = vmatprep.subr.bf16.mxu0 0
      %1271 = vmatpush2.bf16.xpose.msra.mxu0 0
      %1272 = vmatprep.subr.bf16.mxu0 0
      %1273 = vmatpush2.bf16.xpose.msra.mxu0 0
      %1274 = vmatprep.subr.bf16.mxu0 0
      %1275 = vmatpush2.bf16.xpose.msra.mxu0 0
      %1276 = vmatprep.subr.bf16.mxu0 0
      %1277 = vmatpush2.bf16.xpose.msra.mxu0 0
      %1278 = vmatprep.subr.bf16.mxu0 0
      %1279 = vmatpush2.bf16.xpose.msra.mxu0 0
      %1280 = vmatprep.mubr.bf16.mxu0 0
      %1281 = vmatmul.mubr.bf16.gmra.mxu0 %v1243
      %v1282 = vpop.f32.mrf.mxu0
      %v1283 = vadd.f32 0.0, %v1282
      %v1284 = vpop.f32.mrf.mxu0
      %v1285 = vpop.f32.mrf.mxu0
      %v1286 = vadd.f32 0.0, %v1285
      %v1287 = vpop.f32.mrf.mxu0
      %1288 = vdwg.mxu0
      %v1289 = vmul.f32 %v1283, 0.35355338
      %v1290 = vmul.f32 %v1286, 0.35355338
      %v1291 = vadd.f32 %v1289, %v860
      %v1292 = vadd.f32 %v1290, %v861
      %v1293 = vsel %vm1033, %v1291, -inf
      %1294 = vmax.xlane.f32.xlu0 %v1293
      %v1295 = vpop.xlane.xlu0 %1294
      %v1296 = vsel %vm1037, %v1292, -inf
      %1297 = vmax.xlane.f32.xlu0 %v1296
      %v1298 = vpop.xlane.xlu0 %1297
      %v1299 = vsub.f32 %v1291, %v1295
      %v1300 = vsub.f32 %v1292, %v1298
      %v1301 = vmul.f32 %v1299, 1.442695
      %v1302 = vpow.pop %v1301
      %v1303 = vmul.f32 %v1300, 1.442695
      %v1304 = vpow.pop %v1303
      %v1305 = vsel %vm1033, %v1302, 0.0
      %1306 = vadd.xlane.f32.xlu0 %v1305
      %v1307 = vpop.xlane.xlu0 %1306
      %v1308 = vsel %vm1037, %v1304, 0.0
      %1309 = vadd.xlane.f32.xlu0 %v1308
      %v1310 = vpop.xlane.xlu0 %1309
      %v1311 = vrcp.pop %v1307
      %v1312 = vrcp.pop %v1310
      %v1313 = vmul.f32 %v1302, %v1311
      %v1314 = vmul.f32 %v1304, %v1312
      %v1315 = vpack.c.bf16 %v1314, %v1313
      %1316 = vrot.lane.b32.xlu0 %v977, 48
      %v1317 = vpop.permute.xlu0 %1316
      %v1319 = vsel %vm1033, %v1315, 0
      %v1322 = vand.u32 %v1317, %v1066
      %1324 = vmatprep.subr.bf16.mxu0 0
      %1325 = vmatpush1.bf16.msra.mxu0 0
      %1326 = vmatprep.subr.bf16.mxu0 0
      %1327 = vmatpush1.bf16.msra.mxu0 0
      %1328 = vmatprep.subr.bf16.mxu0 0
      %1329 = vmatpush1.bf16.msra.mxu0 0
      %1330 = vmatprep.subr.bf16.mxu0 0
      %1331 = vmatpush1.bf16.msra.mxu0 0
      %1332 = vmatprep.subr.bf16.mxu0 0
      %1333 = vmatpush1.bf16.msra.mxu0 0
      %1334 = vmatprep.subr.bf16.mxu0 0
      %1335 = vmatpush1.bf16.msra.mxu0 0
      %1336 = vmatprep.subr.bf16.mxu0 0
      %1337 = vmatpush1.bf16.msra.mxu0 0
      %1338 = vmatprep.subr.bf16.mxu0 0
      %1339 = vmatpush1.bf16.msra.mxu0 %v1322
      %1340 = vmatprep.subr.bf16.mxu0 0
      %1341 = vmatpush2.bf16.msra.mxu0 0
      %1342 = vmatprep.subr.bf16.mxu0 0
      %1343 = vmatpush2.bf16.msra.mxu0 0
      %1344 = vmatprep.subr.bf16.mxu0 0
      %1345 = vmatpush2.bf16.msra.mxu0 0
      %1346 = vmatprep.subr.bf16.mxu0 0
      %1347 = vmatpush2.bf16.msra.mxu0 0
      %1348 = vmatprep.subr.bf16.mxu0 0
      %1349 = vmatpush2.bf16.msra.mxu0 0
      %1350 = vmatprep.subr.bf16.mxu0 0
      %1351 = vmatpush2.bf16.msra.mxu0 0
      %1352 = vmatprep.subr.bf16.mxu0 0
      %1353 = vmatpush2.bf16.msra.mxu0 0
      %1354 = vmatprep.subr.bf16.mxu0 0
      %1355 = vmatpush2.bf16.msra.mxu0 0
      %1356 = vmatprep.mubr.bf16.mxu0 0
      %1357 = vmatmul.mubr.bf16.gmra.mxu0 %v1319
      %v1358 = vpop.f32.mrf.mxu0
      %v1359 = vadd.f32 0.0, %v1358
      %v1360 = vpop.f32.mrf.mxu0
      %v1361 = vpop.f32.mrf.mxu0
      %v1362 = vadd.f32 0.0, %v1361
      %v1363 = vpop.f32.mrf.mxu0
      %1364 = vdwg.mxu0
      %1365 = vrot.lane.b32.xlu0 %v977, 104
      %v1366 = vpop.permute.xlu0 %1365
      %1367 = vrot.lane.b32.xlu0 %v977, 72
      %v1368 = vpop.permute.xlu0 %1367
      %v1370 = vsel %vm981, %v1366, 0
      %v1373 = vsel %vm981, %v1368, 0
      %1375 = vmatprep.subr.bf16.mxu0 0
      %1376 = vmatpush1.bf16.xpose.msra.mxu0 0
      %1377 = vmatprep.subr.bf16.mxu0 0
      %1378 = vmatpush1.bf16.xpose.msra.mxu0 0
      %1379 = vmatprep.subr.bf16.mxu0 0
      %1380 = vmatpush1.bf16.xpose.msra.mxu0 0
      %1381 = vmatprep.subr.bf16.mxu0 0
      %1382 = vmatpush1.bf16.xpose.msra.mxu0 0
      %1383 = vmatprep.subr.bf16.mxu0 0
      %1384 = vmatpush1.bf16.xpose.msra.mxu0 0
      %1385 = vmatprep.subr.bf16.mxu0 0
      %1386 = vmatpush1.bf16.xpose.msra.mxu0 0
      %1387 = vmatprep.subr.bf16.mxu0 0
      %1388 = vmatpush1.bf16.xpose.msra.mxu0 0
      %1389 = vmatprep.subr.bf16.mxu0 0
      %1390 = vmatpush1.bf16.xpose.msra.mxu0 %v1373
      %1391 = vmatprep.subr.bf16.mxu0 0
      %1392 = vmatpush2.bf16.xpose.msra.mxu0 0
      %1393 = vmatprep.subr.bf16.mxu0 0
      %1394 = vmatpush2.bf16.xpose.msra.mxu0 0
      %1395 = vmatprep.subr.bf16.mxu0 0
      %1396 = vmatpush2.bf16.xpose.msra.mxu0 0
      %1397 = vmatprep.subr.bf16.mxu0 0
      %1398 = vmatpush2.bf16.xpose.msra.mxu0 0
      %1399 = vmatprep.subr.bf16.mxu0 0
      %1400 = vmatpush2.bf16.xpose.msra.mxu0 0
      %1401 = vmatprep.subr.bf16.mxu0 0
      %1402 = vmatpush2.bf16.xpose.msra.mxu0 0
      %1403 = vmatprep.subr.bf16.mxu0 0
      %1404 = vmatpush2.bf16.xpose.msra.mxu0 0
      %1405 = vmatprep.subr.bf16.mxu0 0
      %1406 = vmatpush2.bf16.xpose.msra.mxu0 0
      %1407 = vmatprep.mubr.bf16.mxu0 0
      %1408 = vmatmul.mubr.bf16.gmra.mxu0 %v1370
      %v1409 = vpop.f32.mrf.mxu0
      %v1410 = vadd.f32 0.0, %v1409
      %v1411 = vpop.f32.mrf.mxu0
      %v1412 = vpop.f32.mrf.mxu0
      %v1413 = vadd.f32 0.0, %v1412
      %v1414 = vpop.f32.mrf.mxu0
      %1415 = vdwg.mxu0
      %v1416 = vmul.f32 %v1410, 0.35355338
      %v1417 = vmul.f32 %v1413, 0.35355338
      %v1418 = vadd.f32 %v1416, %v860
      %v1419 = vadd.f32 %v1417, %v861
      %v1420 = vsel %vm1033, %v1418, -inf
      %1421 = vmax.xlane.f32.xlu0 %v1420
      %v1422 = vpop.xlane.xlu0 %1421
      %v1423 = vsel %vm1037, %v1419, -inf
      %1424 = vmax.xlane.f32.xlu0 %v1423
      %v1425 = vpop.xlane.xlu0 %1424
      %v1426 = vsub.f32 %v1418, %v1422
      %v1427 = vsub.f32 %v1419, %v1425
      %v1428 = vmul.f32 %v1426, 1.442695
      %v1429 = vpow.pop %v1428
      %v1430 = vmul.f32 %v1427, 1.442695
      %v1431 = vpow.pop %v1430
      %v1432 = vsel %vm1033, %v1429, 0.0
      %1433 = vadd.xlane.f32.xlu0 %v1432
      %v1434 = vpop.xlane.xlu0 %1433
      %v1435 = vsel %vm1037, %v1431, 0.0
      %1436 = vadd.xlane.f32.xlu0 %v1435
      %v1437 = vpop.xlane.xlu0 %1436
      %v1438 = vrcp.pop %v1434
      %v1439 = vrcp.pop %v1437
      %v1440 = vmul.f32 %v1429, %v1438
      %v1441 = vmul.f32 %v1431, %v1439
      %v1442 = vpack.c.bf16 %v1441, %v1440
      %1443 = vrot.lane.b32.xlu0 %v977, 40
      %v1444 = vpop.permute.xlu0 %1443
      %v1446 = vsel %vm1033, %v1442, 0
      %v1449 = vand.u32 %v1444, %v1066
      %1451 = vmatprep.subr.bf16.mxu0 0
      %1452 = vmatpush1.bf16.msra.mxu0 0
      %1453 = vmatprep.subr.bf16.mxu0 0
      %1454 = vmatpush1.bf16.msra.mxu0 0
      %1455 = vmatprep.subr.bf16.mxu0 0
      %1456 = vmatpush1.bf16.msra.mxu0 0
      %1457 = vmatprep.subr.bf16.mxu0 0
      %1458 = vmatpush1.bf16.msra.mxu0 0
      %1459 = vmatprep.subr.bf16.mxu0 0
      %1460 = vmatpush1.bf16.msra.mxu0 0
      %1461 = vmatprep.subr.bf16.mxu0 0
      %1462 = vmatpush1.bf16.msra.mxu0 0
      %1463 = vmatprep.subr.bf16.mxu0 0
      %1464 = vmatpush1.bf16.msra.mxu0 0
      %1465 = vmatprep.subr.bf16.mxu0 0
      %1466 = vmatpush1.bf16.msra.mxu0 %v1449
      %1467 = vmatprep.subr.bf16.mxu0 0
      %1468 = vmatpush2.bf16.msra.mxu0 0
      %1469 = vmatprep.subr.bf16.mxu0 0
      %1470 = vmatpush2.bf16.msra.mxu0 0
      %1471 = vmatprep.subr.bf16.mxu0 0
      %1472 = vmatpush2.bf16.msra.mxu0 0
      %1473 = vmatprep.subr.bf16.mxu0 0
      %1474 = vmatpush2.bf16.msra.mxu0 0
      %1475 = vmatprep.subr.bf16.mxu0 0
      %1476 = vmatpush2.bf16.msra.mxu0 0
      %1477 = vmatprep.subr.bf16.mxu0 0
      %1478 = vmatpush2.bf16.msra.mxu0 0
      %1479 = vmatprep.subr.bf16.mxu0 0
      %1480 = vmatpush2.bf16.msra.mxu0 0
      %1481 = vmatprep.subr.bf16.mxu0 0
      %1482 = vmatpush2.bf16.msra.mxu0 0
      %1483 = vmatprep.mubr.bf16.mxu0 0
      %1484 = vmatmul.mubr.bf16.gmra.mxu0 %v1446
      %v1485 = vpop.f32.mrf.mxu0
      %v1486 = vadd.f32 0.0, %v1485
      %v1487 = vpop.f32.mrf.mxu0
      %v1488 = vpop.f32.mrf.mxu0
      %v1489 = vadd.f32 0.0, %v1488
      %v1490 = vpop.f32.mrf.mxu0
      %1491 = vdwg.mxu0
      %1494 = vrot.lane.b32.xlu0 %v1232, 8
      %v1495 = vpop.permute.xlu0 %1494
      %1496 = vrot.lane.b32.xlu0 %v1235, 8
      %v1497 = vpop.permute.xlu0 %1496
      %1502 = vrot.lane.b32.xlu0 %v1359, 16
      %v1503 = vpop.permute.xlu0 %1502
      %1504 = vrot.lane.b32.xlu0 %v1362, 16
      %v1505 = vpop.permute.xlu0 %1504
      %1510 = vrot.lane.b32.xlu0 %v1486, 24
      %v1511 = vpop.permute.xlu0 %1510
      %1512 = vrot.lane.b32.xlu0 %v1489, 24
      %v1513 = vpop.permute.xlu0 %1512
      %v1516 = vsel %vm981, %v1105, %v1495
      %v1517 = vsel %vm981, %v1108, %v1497
      %vm1518 = vcmask 130048
      %v1519 = vsel %vm1518, %v1516, %v1503
      %v1520 = vsel %vm1518, %v1517, %v1505
      %vm1521 = vcmask 195584
      %v1522 = vsel %vm1521, %v1519, %v1511
      %v1523 = vsel %vm1521, %v1520, %v1513
      %v1524 = vpack.c.bf16 %v1523, %v1522
      %v1526 = vlaneseq
      %v1527 = vshrl.u32 %v1526, 7
      %v1528 = vsub.s32 0, %v1527
      %v1529 = vrot.slane %v913, %v1528
      %v1535 = vunpack.c.l.b16 %v909
      %v1536 = vunpack.c.l.b16 %v910
      %v1537 = vunpack.c.l.b16 %v911
      %v1538 = vunpack.c.l.b16 %v912
      %v1539 = vpack.c.b16 %v1536, %v1535
      %v1540 = vpack.c.b16 %v1538, %v1537
      %v1544 = vsel %vm863, %v1524, 0
      %1546 = vmatprep.subr.bf16.mxu0 0
      %1547 = vmatpush1.bf16.msra.mxu0 0
      %1548 = vmatprep.subr.bf16.mxu0 0
      %1549 = vmatpush1.bf16.msra.mxu0 0
      %1550 = vmatprep.subr.bf16.mxu0 0
      %1551 = vmatpush1.bf16.msra.mxu0 0
      %1552 = vmatprep.subr.bf16.mxu0 0
      %1553 = vmatpush1.bf16.msra.mxu0 0
      %1554 = vmatprep.subr.bf16.mxu0 0
      %1555 = vmatpush1.bf16.msra.mxu0 0
      %1556 = vmatprep.subr.bf16.mxu0 0
      %1557 = vmatpush1.bf16.msra.mxu0 0
      %1558 = vmatprep.subr.bf16.mxu0 0
      %1559 = vmatpush1.bf16.msra.mxu0 %v1540
      %1560 = vmatprep.subr.bf16.mxu0 0
      %1561 = vmatpush1.bf16.msra.mxu0 %v1539
      %1562 = vmatprep.subr.bf16.mxu0 0
      %1563 = vmatpush2.bf16.msra.mxu0 0
      %1564 = vmatprep.subr.bf16.mxu0 0
      %1565 = vmatpush2.bf16.msra.mxu0 0
      %1566 = vmatprep.subr.bf16.mxu0 0
      %1567 = vmatpush2.bf16.msra.mxu0 0
      %1568 = vmatprep.subr.bf16.mxu0 0
      %1569 = vmatpush2.bf16.msra.mxu0 0
      %1570 = vmatprep.subr.bf16.mxu0 0
      %1571 = vmatpush2.bf16.msra.mxu0 0
      %1572 = vmatprep.subr.bf16.mxu0 0
      %1573 = vmatpush2.bf16.msra.mxu0 0
      %1574 = vmatprep.subr.bf16.mxu0 0
      %1575 = vmatpush2.bf16.msra.mxu0 0
      %1576 = vmatprep.subr.bf16.mxu0 0
      %1577 = vmatpush2.bf16.msra.mxu0 0
      %1578 = vmatprep.mubr.bf16.mxu0 0
      %1579 = vmatmul.mubr.bf16.gmra.mxu0 %v1544
      %v1580 = vpop.f32.mrf.mxu0
      %v1581 = vadd.f32 %v1529, %v1580
      %v1582 = vpop.f32.mrf.mxu0
      %v1583 = vpop.f32.mrf.mxu0
      %v1584 = vadd.f32 %v1529, %v1583
      %v1585 = vpop.f32.mrf.mxu0
      %1586 = vdwg.mxu0
      %v1587 = vadd.f32 %v840, %v1581
      %v1588 = vadd.f32 %v841, %v1584
      %v1589 = vsel %vm863, %v1587, 0.0
      %1590 = vadd.xlane.f32.xlu0 %v1589
      %v1591 = vpop.xlane.xlu0 %1590
      %v1592 = vsel %vm867, %v1588, 0.0
      %1593 = vadd.xlane.f32.xlu0 %v1592
      %v1594 = vpop.xlane.xlu0 %1593
      %v1595 = vmul.f32 %v1591, %v871
      %v1596 = vmul.f32 %v1594, %v871
      %v1597 = vsub.f32 %v1587, %v1595
      %v1598 = vsub.f32 %v1588, %v1596
      %v1599 = vmul.f32 %v1597, %v1597
      %v1600 = vmul.f32 %v1598, %v1598
      %v1601 = vsel %vm863, %v1599, 0.0
      %1602 = vadd.xlane.f32.xlu0 %v1601
      %v1603 = vpop.xlane.xlu0 %1602
      %v1604 = vsel %vm867, %v1600, 0.0
      %1605 = vadd.xlane.f32.xlu0 %v1604
      %v1606 = vpop.xlane.xlu0 %1605
      %v1607 = vmul.f32 %v1603, %v871
      %v1608 = vmul.f32 %v1606, %v871
      %v1609 = vadd.f32 %v1607, 1e-12
      %v1610 = vadd.f32 %v1608, 1e-12
      %v1611 = vrsqrt.pop %v1609
      %v1612 = vrsqrt.pop %v1610
      %v1613 = vmul.f32 %v1597, %v1611
      %v1614 = vmul.f32 %v1598, %v1612
      %v1615 = vlaneseq
      %v1616 = vshrl.u32 %v1615, 7
      %v1617 = vsub.s32 2, %v1616
      %v1618 = vrot.slane %v862, %v1617
      %v1619 = vmul.f32 %v1613, %v1618
      %v1620 = vmul.f32 %v1614, %v1618
      %v1621 = vlaneseq
      %v1622 = vshrl.u32 %v1621, 7
      %v1623 = vsub.s32 3, %v1622
      %v1624 = vrot.slane %v862, %v1623
      %v1625 = vadd.f32 %v1619, %v1624
      %v1626 = vadd.f32 %v1620, %v1624
      %v1627 = vld [vmem:[%s794] sm:$0xf]
      %v1628 = vld [vmem:[%s794 + $0x4] sm:$0xf]
      %v1629 = vld [vmem:[%s794 + $0x8] sm:$0xf]
      %v1630 = vld [vmem:[%s794 + $0xc] sm:$0xf]
      %v1631 = vld [vmem:[%s797] sm:$0x1]
      %v1632 = vld [vmem:[%s802] sm:$0xf]
      %v1633 = vld [vmem:[%s802 + $0x4] sm:$0xf]
      %v1634 = vld [vmem:[%s802 + $0x8] sm:$0xf]
      %v1635 = vld [vmem:[%s802 + $0xc] sm:$0xf]
      %v1636 = vld [vmem:[%s805] sm:$0x1]
      %v1637 = vpack.c.bf16 %v1626, %v1625
      %v1639 = vlaneseq
      %v1640 = vshrl.u32 %v1639, 7
      %v1641 = vsub.s32 0, %v1640
      %v1642 = vrot.slane %v1631, %v1641
      %v1648 = vunpack.c.l.b16 %v1627
      %v1649 = vunpack.c.l.b16 %v1628
      %v1650 = vunpack.c.l.b16 %v1629
      %v1651 = vunpack.c.l.b16 %v1630
      %v1652 = vpack.c.b16 %v1649, %v1648
      %v1653 = vpack.c.b16 %v1651, %v1650
      %v1657 = vsel %vm863, %v1637, 0
      %1659 = vmatprep.subr.bf16.mxu0 0
      %1660 = vmatpush1.bf16.msra.mxu0 0
      %1661 = vmatprep.subr.bf16.mxu0 0
      %1662 = vmatpush1.bf16.msra.mxu0 0
      %1663 = vmatprep.subr.bf16.mxu0 0
      %1664 = vmatpush1.bf16.msra.mxu0 0
      %1665 = vmatprep.subr.bf16.mxu0 0
      %1666 = vmatpush1.bf16.msra.mxu0 0
      %1667 = vmatprep.subr.bf16.mxu0 0
      %1668 = vmatpush1.bf16.msra.mxu0 0
      %1669 = vmatprep.subr.bf16.mxu0 0
      %1670 = vmatpush1.bf16.msra.mxu0 0
      %1671 = vmatprep.subr.bf16.mxu0 0
      %1672 = vmatpush1.bf16.msra.mxu0 %v1653
      %1673 = vmatprep.subr.bf16.mxu0 0
      %1674 = vmatpush1.bf16.msra.mxu0 %v1652
      %1675 = vmatprep.subr.bf16.mxu0 0
      %1676 = vmatpush2.bf16.msra.mxu0 0
      %1677 = vmatprep.subr.bf16.mxu0 0
      %1678 = vmatpush2.bf16.msra.mxu0 0
      %1679 = vmatprep.subr.bf16.mxu0 0
      %1680 = vmatpush2.bf16.msra.mxu0 0
      %1681 = vmatprep.subr.bf16.mxu0 0
      %1682 = vmatpush2.bf16.msra.mxu0 0
      %1683 = vmatprep.subr.bf16.mxu0 0
      %1684 = vmatpush2.bf16.msra.mxu0 0
      %1685 = vmatprep.subr.bf16.mxu0 0
      %1686 = vmatpush2.bf16.msra.mxu0 0
      %1687 = vmatprep.subr.bf16.mxu0 0
      %1688 = vmatpush2.bf16.msra.mxu0 0
      %1689 = vmatprep.subr.bf16.mxu0 0
      %1690 = vmatpush2.bf16.msra.mxu0 0
      %1691 = vmatprep.mubr.bf16.mxu0 0
      %1692 = vmatmul.mubr.bf16.gmra.mxu0 %v1657
      %v1693 = vpop.f32.mrf.mxu0
      %v1694 = vadd.f32 %v1642, %v1693
      %v1695 = vpop.f32.mrf.mxu0
      %v1696 = vpop.f32.mrf.mxu0
      %v1697 = vadd.f32 %v1642, %v1696
      %v1698 = vpop.f32.mrf.mxu0
      %1699 = vdwg.mxu0
      %1700 = vrot.lane.b32.xlu0 %v1652, 96
      %v1701 = vpop.permute.xlu0 %1700
      %1702 = vrot.lane.b32.xlu0 %v1653, 96
      %v1703 = vpop.permute.xlu0 %1702
      %1706 = vrot.lane.b32.xlu0 %v1642, 96
      %v1707 = vpop.permute.xlu0 %1706
      %v1710 = vsel %vm863, %v842, 0
      %1712 = vmatprep.subr.bf16.mxu0 0
      %1713 = vmatpush1.bf16.msra.mxu0 0
      %1714 = vmatprep.subr.bf16.mxu0 0
      %1715 = vmatpush1.bf16.msra.mxu0 0
      %1716 = vmatprep.subr.bf16.mxu0 0
      %1717 = vmatpush1.bf16.msra.mxu0 0
      %1718 = vmatprep.subr.bf16.mxu0 0
      %1719 = vmatpush1.bf16.msra.mxu0 0
      %1720 = vmatprep.subr.bf16.mxu0 0
      %1721 = vmatpush1.bf16.msra.mxu0 0
      %1722 = vmatprep.subr.bf16.mxu0 0
      %1723 = vmatpush1.bf16.msra.mxu0 0
      %1724 = vmatprep.subr.bf16.mxu0 0
      %1725 = vmatpush1.bf16.msra.mxu0 %v1703
      %1726 = vmatprep.subr.bf16.mxu0 0
      %1727 = vmatpush1.bf16.msra.mxu0 %v1701
      %1728 = vmatprep.subr.bf16.mxu0 0
      %1729 = vmatpush2.bf16.msra.mxu0 0
      %1730 = vmatprep.subr.bf16.mxu0 0
      %1731 = vmatpush2.bf16.msra.mxu0 0
      %1732 = vmatprep.subr.bf16.mxu0 0
      %1733 = vmatpush2.bf16.msra.mxu0 0
      %1734 = vmatprep.subr.bf16.mxu0 0
      %1735 = vmatpush2.bf16.msra.mxu0 0
      %1736 = vmatprep.subr.bf16.mxu0 0
      %1737 = vmatpush2.bf16.msra.mxu0 0
      %1738 = vmatprep.subr.bf16.mxu0 0
      %1739 = vmatpush2.bf16.msra.mxu0 0
      %1740 = vmatprep.subr.bf16.mxu0 0
      %1741 = vmatpush2.bf16.msra.mxu0 0
      %1742 = vmatprep.subr.bf16.mxu0 0
      %1743 = vmatpush2.bf16.msra.mxu0 0
      %1744 = vmatprep.mubr.bf16.mxu0 0
      %1745 = vmatmul.mubr.bf16.gmra.mxu0 %v1710
      %v1746 = vpop.f32.mrf.mxu0
      %v1747 = vadd.f32 %v1707, %v1746
      %v1748 = vpop.f32.mrf.mxu0
      %v1749 = vpop.f32.mrf.mxu0
      %v1750 = vpop.f32.mrf.mxu0
      %1751 = vdwg.mxu0
      %v1752 = vpack.c.bf16 %v1697, %v1694
      %v1753 = vpack.c.bf16 %v1747, %v1747
      %v1755 = vsel %vm981, %v1752, 0
      %v1758 = vsel %vm981, %v1753, 0
      %1760 = vmatprep.subr.bf16.mxu0 0
      %1761 = vmatpush1.bf16.xpose.msra.mxu0 0
      %1762 = vmatprep.subr.bf16.mxu0 0
      %1763 = vmatpush1.bf16.xpose.msra.mxu0 0
      %1764 = vmatprep.subr.bf16.mxu0 0
      %1765 = vmatpush1.bf16.xpose.msra.mxu0 0
      %1766 = vmatprep.subr.bf16.mxu0 0
      %1767 = vmatpush1.bf16.xpose.msra.mxu0 0
      %1768 = vmatprep.subr.bf16.mxu0 0
      %1769 = vmatpush1.bf16.xpose.msra.mxu0 0
      %1770 = vmatprep.subr.bf16.mxu0 0
      %1771 = vmatpush1.bf16.xpose.msra.mxu0 0
      %1772 = vmatprep.subr.bf16.mxu0 0
      %1773 = vmatpush1.bf16.xpose.msra.mxu0 0
      %1774 = vmatprep.subr.bf16.mxu0 0
      %1775 = vmatpush1.bf16.xpose.msra.mxu0 %v1758
      %1776 = vmatprep.subr.bf16.mxu0 0
      %1777 = vmatpush2.bf16.xpose.msra.mxu0 0
      %1778 = vmatprep.subr.bf16.mxu0 0
      %1779 = vmatpush2.bf16.xpose.msra.mxu0 0
      %1780 = vmatprep.subr.bf16.mxu0 0
      %1781 = vmatpush2.bf16.xpose.msra.mxu0 0
      %1782 = vmatprep.subr.bf16.mxu0 0
      %1783 = vmatpush2.bf16.xpose.msra.mxu0 0
      %1784 = vmatprep.subr.bf16.mxu0 0
      %1785 = vmatpush2.bf16.xpose.msra.mxu0 0
      %1786 = vmatprep.subr.bf16.mxu0 0
      %1787 = vmatpush2.bf16.xpose.msra.mxu0 0
      %1788 = vmatprep.subr.bf16.mxu0 0
      %1789 = vmatpush2.bf16.xpose.msra.mxu0 0
      %1790 = vmatprep.subr.bf16.mxu0 0
      %1791 = vmatpush2.bf16.xpose.msra.mxu0 0
      %1792 = vmatprep.mubr.bf16.mxu0 0
      %1793 = vmatmul.mubr.bf16.gmra.mxu0 %v1755
      %v1794 = vpop.f32.mrf.mxu0
      %v1795 = vadd.f32 0.0, %v1794
      %v1796 = vpop.f32.mrf.mxu0
      %v1797 = vpop.f32.mrf.mxu0
      %v1798 = vadd.f32 0.0, %v1797
      %v1799 = vpop.f32.mrf.mxu0
      %1800 = vdwg.mxu0
      %v1801 = vmul.f32 %v1795, 0.35355338
      %v1802 = vmul.f32 %v1798, 0.35355338
      %v1804 = vlaneseq
      %v1805 = vshrl.u32 %v1804, 7
      %v1806 = vsub.s32 0, %v1805
      %v1807 = vrot.slane %v844, %v1806
      %v1809 = vadd.f32 %v1801, %v1807
      %v1810 = vadd.f32 %v1802, %v1807
      %vm1811 = vcmask 56320
      %v1812 = vsel %vm1811, %v1809, -inf
      %1813 = vmax.xlane.f32.xlu0 %v1812
      %v1814 = vpop.xlane.xlu0 %1813
      %vm1815 = vcmask 51200
      %v1816 = vsel %vm1815, %v1810, -inf
      %1817 = vmax.xlane.f32.xlu0 %v1816
      %v1818 = vpop.xlane.xlu0 %1817
      %v1819 = vsub.f32 %v1809, %v1814
      %v1820 = vsub.f32 %v1810, %v1818
      %v1821 = vmul.f32 %v1819, 1.442695
      %v1822 = vpow.pop %v1821
      %v1823 = vmul.f32 %v1820, 1.442695
      %v1824 = vpow.pop %v1823
      %v1825 = vsel %vm1811, %v1822, 0.0
      %1826 = vadd.xlane.f32.xlu0 %v1825
      %v1827 = vpop.xlane.xlu0 %1826
      %v1828 = vsel %vm1815, %v1824, 0.0
      %1829 = vadd.xlane.f32.xlu0 %v1828
      %v1830 = vpop.xlane.xlu0 %1829
      %v1831 = vrcp.pop %v1827
      %v1832 = vrcp.pop %v1830
      %v1833 = vmul.f32 %v1822, %v1831
      %v1834 = vmul.f32 %v1824, %v1832
      %v1835 = vpack.c.bf16 %v1834, %v1833
      %1837 = vrot.lane.b32.xlu0 %v1753, 96
      %v1838 = vpop.permute.xlu0 %1837
      %v1840 = vsel %vm1811, %v1835, 0
      %vm1842 = vcmask 1042432
      %vm1843 = vcmask 1043456
      %v1844 = vsel %vm1842, 4294967295, 65535
      %v1845 = vsel %vm1843, %v1844, 0
      %v1847 = vand.u32 %v1838, %v1845
      %1849 = vmatprep.subr.bf16.mxu0 0
      %1850 = vmatpush1.bf16.msra.mxu0 0
      %1851 = vmatprep.subr.bf16.mxu0 0
      %1852 = vmatpush1.bf16.msra.mxu0 0
      %1853 = vmatprep.subr.bf16.mxu0 0
      %1854 = vmatpush1.bf16.msra.mxu0 0
      %1855 = vmatprep.subr.bf16.mxu0 0
      %1856 = vmatpush1.bf16.msra.mxu0 0
      %1857 = vmatprep.subr.bf16.mxu0 0
      %1858 = vmatpush1.bf16.msra.mxu0 0
      %1859 = vmatprep.subr.bf16.mxu0 0
      %1860 = vmatpush1.bf16.msra.mxu0 0
      %1861 = vmatprep.subr.bf16.mxu0 0
      %1862 = vmatpush1.bf16.msra.mxu0 0
      %1863 = vmatprep.subr.bf16.mxu0 0
      %1864 = vmatpush1.bf16.msra.mxu0 %v1847
      %1865 = vmatprep.subr.bf16.mxu0 0
      %1866 = vmatpush2.bf16.msra.mxu0 0
      %1867 = vmatprep.subr.bf16.mxu0 0
      %1868 = vmatpush2.bf16.msra.mxu0 0
      %1869 = vmatprep.subr.bf16.mxu0 0
      %1870 = vmatpush2.bf16.msra.mxu0 0
      %1871 = vmatprep.subr.bf16.mxu0 0
      %1872 = vmatpush2.bf16.msra.mxu0 0
      %1873 = vmatprep.subr.bf16.mxu0 0
      %1874 = vmatpush2.bf16.msra.mxu0 0
      %1875 = vmatprep.subr.bf16.mxu0 0
      %1876 = vmatpush2.bf16.msra.mxu0 0
      %1877 = vmatprep.subr.bf16.mxu0 0
      %1878 = vmatpush2.bf16.msra.mxu0 0
      %1879 = vmatprep.subr.bf16.mxu0 0
      %1880 = vmatpush2.bf16.msra.mxu0 0
      %1881 = vmatprep.mubr.bf16.mxu0 0
      %1882 = vmatmul.mubr.bf16.gmra.mxu0 %v1840
      %v1883 = vpop.f32.mrf.mxu0
      %v1884 = vadd.f32 0.0, %v1883
      %v1885 = vpop.f32.mrf.mxu0
      %v1886 = vpop.f32.mrf.mxu0
      %v1887 = vadd.f32 0.0, %v1886
      %v1888 = vpop.f32.mrf.mxu0
      %1889 = vdwg.mxu0
      %1891 = vrot.lane.b32.xlu0 %v1752, 120
      %v1892 = vpop.permute.xlu0 %1891
      %1893 = vrot.lane.b32.xlu0 %v1753, 120
      %v1894 = vpop.permute.xlu0 %1893
      %v1896 = vsel %vm981, %v1892, 0
      %v1899 = vsel %vm981, %v1894, 0
      %1901 = vmatprep.subr.bf16.mxu0 0
      %1902 = vmatpush1.bf16.xpose.msra.mxu0 0
      %1903 = vmatprep.subr.bf16.mxu0 0
      %1904 = vmatpush1.bf16.xpose.msra.mxu0 0
      %1905 = vmatprep.subr.bf16.mxu0 0
      %1906 = vmatpush1.bf16.xpose.msra.mxu0 0
      %1907 = vmatprep.subr.bf16.mxu0 0
      %1908 = vmatpush1.bf16.xpose.msra.mxu0 0
      %1909 = vmatprep.subr.bf16.mxu0 0
      %1910 = vmatpush1.bf16.xpose.msra.mxu0 0
      %1911 = vmatprep.subr.bf16.mxu0 0
      %1912 = vmatpush1.bf16.xpose.msra.mxu0 0
      %1913 = vmatprep.subr.bf16.mxu0 0
      %1914 = vmatpush1.bf16.xpose.msra.mxu0 0
      %1915 = vmatprep.subr.bf16.mxu0 0
      %1916 = vmatpush1.bf16.xpose.msra.mxu0 %v1899
      %1917 = vmatprep.subr.bf16.mxu0 0
      %1918 = vmatpush2.bf16.xpose.msra.mxu0 0
      %1919 = vmatprep.subr.bf16.mxu0 0
      %1920 = vmatpush2.bf16.xpose.msra.mxu0 0
      %1921 = vmatprep.subr.bf16.mxu0 0
      %1922 = vmatpush2.bf16.xpose.msra.mxu0 0
      %1923 = vmatprep.subr.bf16.mxu0 0
      %1924 = vmatpush2.bf16.xpose.msra.mxu0 0
      %1925 = vmatprep.subr.bf16.mxu0 0
      %1926 = vmatpush2.bf16.xpose.msra.mxu0 0
      %1927 = vmatprep.subr.bf16.mxu0 0
      %1928 = vmatpush2.bf16.xpose.msra.mxu0 0
      %1929 = vmatprep.subr.bf16.mxu0 0
      %1930 = vmatpush2.bf16.xpose.msra.mxu0 0
      %1931 = vmatprep.subr.bf16.mxu0 0
      %1932 = vmatpush2.bf16.xpose.msra.mxu0 0
      %1933 = vmatprep.mubr.bf16.mxu0 0
      %1934 = vmatmul.mubr.bf16.gmra.mxu0 %v1896
      %v1935 = vpop.f32.mrf.mxu0
      %v1936 = vadd.f32 0.0, %v1935
      %v1937 = vpop.f32.mrf.mxu0
      %v1938 = vpop.f32.mrf.mxu0
      %v1939 = vadd.f32 0.0, %v1938
      %v1940 = vpop.f32.mrf.mxu0
      %1941 = vdwg.mxu0
      %v1942 = vmul.f32 %v1936, 0.35355338
      %v1943 = vmul.f32 %v1939, 0.35355338
      %v1944 = vadd.f32 %v1942, %v1807
      %v1945 = vadd.f32 %v1943, %v1807
      %v1946 = vsel %vm1811, %v1944, -inf
      %1947 = vmax.xlane.f32.xlu0 %v1946
      %v1948 = vpop.xlane.xlu0 %1947
      %v1949 = vsel %vm1815, %v1945, -inf
      %1950 = vmax.xlane.f32.xlu0 %v1949
      %v1951 = vpop.xlane.xlu0 %1950
      %v1952 = vsub.f32 %v1944, %v1948
      %v1953 = vsub.f32 %v1945, %v1951
      %v1954 = vmul.f32 %v1952, 1.442695
      %v1955 = vpow.pop %v1954
      %v1956 = vmul.f32 %v1953, 1.442695
      %v1957 = vpow.pop %v1956
      %v1958 = vsel %vm1811, %v1955, 0.0
      %1959 = vadd.xlane.f32.xlu0 %v1958
      %v1960 = vpop.xlane.xlu0 %1959
      %v1961 = vsel %vm1815, %v1957, 0.0
      %1962 = vadd.xlane.f32.xlu0 %v1961
      %v1963 = vpop.xlane.xlu0 %1962
      %v1964 = vrcp.pop %v1960
      %v1965 = vrcp.pop %v1963
      %v1966 = vmul.f32 %v1955, %v1964
      %v1967 = vmul.f32 %v1957, %v1965
      %v1968 = vpack.c.bf16 %v1967, %v1966
      %1969 = vrot.lane.b32.xlu0 %v1753, 88
      %v1970 = vpop.permute.xlu0 %1969
      %v1972 = vsel %vm1811, %v1968, 0
      %v1975 = vand.u32 %v1970, %v1845
      %1977 = vmatprep.subr.bf16.mxu0 0
      %1978 = vmatpush1.bf16.msra.mxu0 0
      %1979 = vmatprep.subr.bf16.mxu0 0
      %1980 = vmatpush1.bf16.msra.mxu0 0
      %1981 = vmatprep.subr.bf16.mxu0 0
      %1982 = vmatpush1.bf16.msra.mxu0 0
      %1983 = vmatprep.subr.bf16.mxu0 0
      %1984 = vmatpush1.bf16.msra.mxu0 0
      %1985 = vmatprep.subr.bf16.mxu0 0
      %1986 = vmatpush1.bf16.msra.mxu0 0
      %1987 = vmatprep.subr.bf16.mxu0 0
      %1988 = vmatpush1.bf16.msra.mxu0 0
      %1989 = vmatprep.subr.bf16.mxu0 0
      %1990 = vmatpush1.bf16.msra.mxu0 0
      %1991 = vmatprep.subr.bf16.mxu0 0
      %1992 = vmatpush1.bf16.msra.mxu0 %v1975
      %1993 = vmatprep.subr.bf16.mxu0 0
      %1994 = vmatpush2.bf16.msra.mxu0 0
      %1995 = vmatprep.subr.bf16.mxu0 0
      %1996 = vmatpush2.bf16.msra.mxu0 0
      %1997 = vmatprep.subr.bf16.mxu0 0
      %1998 = vmatpush2.bf16.msra.mxu0 0
      %1999 = vmatprep.subr.bf16.mxu0 0
      %2000 = vmatpush2.bf16.msra.mxu0 0
      %2001 = vmatprep.subr.bf16.mxu0 0
      %2002 = vmatpush2.bf16.msra.mxu0 0
      %2003 = vmatprep.subr.bf16.mxu0 0
      %2004 = vmatpush2.bf16.msra.mxu0 0
      %2005 = vmatprep.subr.bf16.mxu0 0
      %2006 = vmatpush2.bf16.msra.mxu0 0
      %2007 = vmatprep.subr.bf16.mxu0 0
      %2008 = vmatpush2.bf16.msra.mxu0 0
      %2009 = vmatprep.mubr.bf16.mxu0 0
      %2010 = vmatmul.mubr.bf16.gmra.mxu0 %v1972
      %v2011 = vpop.f32.mrf.mxu0
      %v2012 = vadd.f32 0.0, %v2011
      %v2013 = vpop.f32.mrf.mxu0
      %v2014 = vpop.f32.mrf.mxu0
      %v2015 = vadd.f32 0.0, %v2014
      %v2016 = vpop.f32.mrf.mxu0
      %2017 = vdwg.mxu0
      %2018 = vrot.lane.b32.xlu0 %v1752, 112
      %v2019 = vpop.permute.xlu0 %2018
      %2020 = vrot.lane.b32.xlu0 %v1753, 112
      %v2021 = vpop.permute.xlu0 %2020
      %v2023 = vsel %vm981, %v2019, 0
      %v2026 = vsel %vm981, %v2021, 0
      %2028 = vmatprep.subr.bf16.mxu0 0
      %2029 = vmatpush1.bf16.xpose.msra.mxu0 0
      %2030 = vmatprep.subr.bf16.mxu0 0
      %2031 = vmatpush1.bf16.xpose.msra.mxu0 0
      %2032 = vmatprep.subr.bf16.mxu0 0
      %2033 = vmatpush1.bf16.xpose.msra.mxu0 0
      %2034 = vmatprep.subr.bf16.mxu0 0
      %2035 = vmatpush1.bf16.xpose.msra.mxu0 0
      %2036 = vmatprep.subr.bf16.mxu0 0
      %2037 = vmatpush1.bf16.xpose.msra.mxu0 0
      %2038 = vmatprep.subr.bf16.mxu0 0
      %2039 = vmatpush1.bf16.xpose.msra.mxu0 0
      %2040 = vmatprep.subr.bf16.mxu0 0
      %2041 = vmatpush1.bf16.xpose.msra.mxu0 0
      %2042 = vmatprep.subr.bf16.mxu0 0
      %2043 = vmatpush1.bf16.xpose.msra.mxu0 %v2026
      %2044 = vmatprep.subr.bf16.mxu0 0
      %2045 = vmatpush2.bf16.xpose.msra.mxu0 0
      %2046 = vmatprep.subr.bf16.mxu0 0
      %2047 = vmatpush2.bf16.xpose.msra.mxu0 0
      %2048 = vmatprep.subr.bf16.mxu0 0
      %2049 = vmatpush2.bf16.xpose.msra.mxu0 0
      %2050 = vmatprep.subr.bf16.mxu0 0
      %2051 = vmatpush2.bf16.xpose.msra.mxu0 0
      %2052 = vmatprep.subr.bf16.mxu0 0
      %2053 = vmatpush2.bf16.xpose.msra.mxu0 0
      %2054 = vmatprep.subr.bf16.mxu0 0
      %2055 = vmatpush2.bf16.xpose.msra.mxu0 0
      %2056 = vmatprep.subr.bf16.mxu0 0
      %2057 = vmatpush2.bf16.xpose.msra.mxu0 0
      %2058 = vmatprep.subr.bf16.mxu0 0
      %2059 = vmatpush2.bf16.xpose.msra.mxu0 0
      %2060 = vmatprep.mubr.bf16.mxu0 0
      %2061 = vmatmul.mubr.bf16.gmra.mxu0 %v2023
      %v2062 = vpop.f32.mrf.mxu0
      %v2063 = vadd.f32 0.0, %v2062
      %v2064 = vpop.f32.mrf.mxu0
      %v2065 = vpop.f32.mrf.mxu0
      %v2066 = vadd.f32 0.0, %v2065
      %v2067 = vpop.f32.mrf.mxu0
      %2068 = vdwg.mxu0
      %v2069 = vmul.f32 %v2063, 0.35355338
      %v2070 = vmul.f32 %v2066, 0.35355338
      %v2071 = vadd.f32 %v2069, %v1807
      %v2072 = vadd.f32 %v2070, %v1807
      %v2073 = vsel %vm1811, %v2071, -inf
      %2074 = vmax.xlane.f32.xlu0 %v2073
      %v2075 = vpop.xlane.xlu0 %2074
      %v2076 = vsel %vm1815, %v2072, -inf
      %2077 = vmax.xlane.f32.xlu0 %v2076
      %v2078 = vpop.xlane.xlu0 %2077
      %v2079 = vsub.f32 %v2071, %v2075
      %v2080 = vsub.f32 %v2072, %v2078
      %v2081 = vmul.f32 %v2079, 1.442695
      %v2082 = vpow.pop %v2081
      %v2083 = vmul.f32 %v2080, 1.442695
      %v2084 = vpow.pop %v2083
      %v2085 = vsel %vm1811, %v2082, 0.0
      %2086 = vadd.xlane.f32.xlu0 %v2085
      %v2087 = vpop.xlane.xlu0 %2086
      %v2088 = vsel %vm1815, %v2084, 0.0
      %2089 = vadd.xlane.f32.xlu0 %v2088
      %v2090 = vpop.xlane.xlu0 %2089
      %v2091 = vrcp.pop %v2087
      %v2092 = vrcp.pop %v2090
      %v2093 = vmul.f32 %v2082, %v2091
      %v2094 = vmul.f32 %v2084, %v2092
      %v2095 = vpack.c.bf16 %v2094, %v2093
      %2096 = vrot.lane.b32.xlu0 %v1753, 80
      %v2097 = vpop.permute.xlu0 %2096
      %v2099 = vsel %vm1811, %v2095, 0
      %v2102 = vand.u32 %v2097, %v1845
      %2104 = vmatprep.subr.bf16.mxu0 0
      %2105 = vmatpush1.bf16.msra.mxu0 0
      %2106 = vmatprep.subr.bf16.mxu0 0
      %2107 = vmatpush1.bf16.msra.mxu0 0
      %2108 = vmatprep.subr.bf16.mxu0 0
      %2109 = vmatpush1.bf16.msra.mxu0 0
      %2110 = vmatprep.subr.bf16.mxu0 0
      %2111 = vmatpush1.bf16.msra.mxu0 0
      %2112 = vmatprep.subr.bf16.mxu0 0
      %2113 = vmatpush1.bf16.msra.mxu0 0
      %2114 = vmatprep.subr.bf16.mxu0 0
      %2115 = vmatpush1.bf16.msra.mxu0 0
      %2116 = vmatprep.subr.bf16.mxu0 0
      %2117 = vmatpush1.bf16.msra.mxu0 0
      %2118 = vmatprep.subr.bf16.mxu0 0
      %2119 = vmatpush1.bf16.msra.mxu0 %v2102
      %2120 = vmatprep.subr.bf16.mxu0 0
      %2121 = vmatpush2.bf16.msra.mxu0 0
      %2122 = vmatprep.subr.bf16.mxu0 0
      %2123 = vmatpush2.bf16.msra.mxu0 0
      %2124 = vmatprep.subr.bf16.mxu0 0
      %2125 = vmatpush2.bf16.msra.mxu0 0
      %2126 = vmatprep.subr.bf16.mxu0 0
      %2127 = vmatpush2.bf16.msra.mxu0 0
      %2128 = vmatprep.subr.bf16.mxu0 0
      %2129 = vmatpush2.bf16.msra.mxu0 0
      %2130 = vmatprep.subr.bf16.mxu0 0
      %2131 = vmatpush2.bf16.msra.mxu0 0
      %2132 = vmatprep.subr.bf16.mxu0 0
      %2133 = vmatpush2.bf16.msra.mxu0 0
      %2134 = vmatprep.subr.bf16.mxu0 0
      %2135 = vmatpush2.bf16.msra.mxu0 0
      %2136 = vmatprep.mubr.bf16.mxu0 0
      %2137 = vmatmul.mubr.bf16.gmra.mxu0 %v2099
      %v2138 = vpop.f32.mrf.mxu0
      %v2139 = vadd.f32 0.0, %v2138
      %v2140 = vpop.f32.mrf.mxu0
      %v2141 = vpop.f32.mrf.mxu0
      %v2142 = vadd.f32 0.0, %v2141
      %v2143 = vpop.f32.mrf.mxu0
      %2144 = vdwg.mxu0
      %2145 = vrot.lane.b32.xlu0 %v1752, 104
      %v2146 = vpop.permute.xlu0 %2145
      %2147 = vrot.lane.b32.xlu0 %v1753, 104
      %v2148 = vpop.permute.xlu0 %2147
      %v2150 = vsel %vm981, %v2146, 0
      %v2153 = vsel %vm981, %v2148, 0
      %2155 = vmatprep.subr.bf16.mxu0 0
      %2156 = vmatpush1.bf16.xpose.msra.mxu0 0
      %2157 = vmatprep.subr.bf16.mxu0 0
      %2158 = vmatpush1.bf16.xpose.msra.mxu0 0
      %2159 = vmatprep.subr.bf16.mxu0 0
      %2160 = vmatpush1.bf16.xpose.msra.mxu0 0
      %2161 = vmatprep.subr.bf16.mxu0 0
      %2162 = vmatpush1.bf16.xpose.msra.mxu0 0
      %2163 = vmatprep.subr.bf16.mxu0 0
      %2164 = vmatpush1.bf16.xpose.msra.mxu0 0
      %2165 = vmatprep.subr.bf16.mxu0 0
      %2166 = vmatpush1.bf16.xpose.msra.mxu0 0
      %2167 = vmatprep.subr.bf16.mxu0 0
      %2168 = vmatpush1.bf16.xpose.msra.mxu0 0
      %2169 = vmatprep.subr.bf16.mxu0 0
      %2170 = vmatpush1.bf16.xpose.msra.mxu0 %v2153
      %2171 = vmatprep.subr.bf16.mxu0 0
      %2172 = vmatpush2.bf16.xpose.msra.mxu0 0
      %2173 = vmatprep.subr.bf16.mxu0 0
      %2174 = vmatpush2.bf16.xpose.msra.mxu0 0
      %2175 = vmatprep.subr.bf16.mxu0 0
      %2176 = vmatpush2.bf16.xpose.msra.mxu0 0
      %2177 = vmatprep.subr.bf16.mxu0 0
      %2178 = vmatpush2.bf16.xpose.msra.mxu0 0
      %2179 = vmatprep.subr.bf16.mxu0 0
      %2180 = vmatpush2.bf16.xpose.msra.mxu0 0
      %2181 = vmatprep.subr.bf16.mxu0 0
      %2182 = vmatpush2.bf16.xpose.msra.mxu0 0
      %2183 = vmatprep.subr.bf16.mxu0 0
      %2184 = vmatpush2.bf16.xpose.msra.mxu0 0
      %2185 = vmatprep.subr.bf16.mxu0 0
      %2186 = vmatpush2.bf16.xpose.msra.mxu0 0
      %2187 = vmatprep.mubr.bf16.mxu0 0
      %2188 = vmatmul.mubr.bf16.gmra.mxu0 %v2150
      %v2189 = vpop.f32.mrf.mxu0
      %v2190 = vadd.f32 0.0, %v2189
      %v2191 = vpop.f32.mrf.mxu0
      %v2192 = vpop.f32.mrf.mxu0
      %v2193 = vadd.f32 0.0, %v2192
      %v2194 = vpop.f32.mrf.mxu0
      %2195 = vdwg.mxu0
      %v2196 = vmul.f32 %v2190, 0.35355338
      %v2197 = vmul.f32 %v2193, 0.35355338
      %v2198 = vadd.f32 %v2196, %v1807
      %v2199 = vadd.f32 %v2197, %v1807
      %v2200 = vsel %vm1811, %v2198, -inf
      %2201 = vmax.xlane.f32.xlu0 %v2200
      %v2202 = vpop.xlane.xlu0 %2201
      %v2203 = vsel %vm1815, %v2199, -inf
      %2204 = vmax.xlane.f32.xlu0 %v2203
      %v2205 = vpop.xlane.xlu0 %2204
      %v2206 = vsub.f32 %v2198, %v2202
      %v2207 = vsub.f32 %v2199, %v2205
      %v2208 = vmul.f32 %v2206, 1.442695
      %v2209 = vpow.pop %v2208
      %v2210 = vmul.f32 %v2207, 1.442695
      %v2211 = vpow.pop %v2210
      %v2212 = vsel %vm1811, %v2209, 0.0
      %2213 = vadd.xlane.f32.xlu0 %v2212
      %v2214 = vpop.xlane.xlu0 %2213
      %v2215 = vsel %vm1815, %v2211, 0.0
      %2216 = vadd.xlane.f32.xlu0 %v2215
      %v2217 = vpop.xlane.xlu0 %2216
      %v2218 = vrcp.pop %v2214
      %v2219 = vrcp.pop %v2217
      %v2220 = vmul.f32 %v2209, %v2218
      %v2221 = vmul.f32 %v2211, %v2219
      %v2222 = vpack.c.bf16 %v2221, %v2220
      %2223 = vrot.lane.b32.xlu0 %v1753, 72
      %v2224 = vpop.permute.xlu0 %2223
      %v2226 = vsel %vm1811, %v2222, 0
      %v2229 = vand.u32 %v2224, %v1845
      %2231 = vmatprep.subr.bf16.mxu0 0
      %2232 = vmatpush1.bf16.msra.mxu0 0
      %2233 = vmatprep.subr.bf16.mxu0 0
      %2234 = vmatpush1.bf16.msra.mxu0 0
      %2235 = vmatprep.subr.bf16.mxu0 0
      %2236 = vmatpush1.bf16.msra.mxu0 0
      %2237 = vmatprep.subr.bf16.mxu0 0
      %2238 = vmatpush1.bf16.msra.mxu0 0
      %2239 = vmatprep.subr.bf16.mxu0 0
      %2240 = vmatpush1.bf16.msra.mxu0 0
      %2241 = vmatprep.subr.bf16.mxu0 0
      %2242 = vmatpush1.bf16.msra.mxu0 0
      %2243 = vmatprep.subr.bf16.mxu0 0
      %2244 = vmatpush1.bf16.msra.mxu0 0
      %2245 = vmatprep.subr.bf16.mxu0 0
      %2246 = vmatpush1.bf16.msra.mxu0 %v2229
      %2247 = vmatprep.subr.bf16.mxu0 0
      %2248 = vmatpush2.bf16.msra.mxu0 0
      %2249 = vmatprep.subr.bf16.mxu0 0
      %2250 = vmatpush2.bf16.msra.mxu0 0
      %2251 = vmatprep.subr.bf16.mxu0 0
      %2252 = vmatpush2.bf16.msra.mxu0 0
      %2253 = vmatprep.subr.bf16.mxu0 0
      %2254 = vmatpush2.bf16.msra.mxu0 0
      %2255 = vmatprep.subr.bf16.mxu0 0
      %2256 = vmatpush2.bf16.msra.mxu0 0
      %2257 = vmatprep.subr.bf16.mxu0 0
      %2258 = vmatpush2.bf16.msra.mxu0 0
      %2259 = vmatprep.subr.bf16.mxu0 0
      %2260 = vmatpush2.bf16.msra.mxu0 0
      %2261 = vmatprep.subr.bf16.mxu0 0
      %2262 = vmatpush2.bf16.msra.mxu0 0
      %2263 = vmatprep.mubr.bf16.mxu0 0
      %2264 = vmatmul.mubr.bf16.gmra.mxu0 %v2226
      %v2265 = vpop.f32.mrf.mxu0
      %v2266 = vadd.f32 0.0, %v2265
      %v2267 = vpop.f32.mrf.mxu0
      %v2268 = vpop.f32.mrf.mxu0
      %v2269 = vadd.f32 0.0, %v2268
      %v2270 = vpop.f32.mrf.mxu0
      %2271 = vdwg.mxu0
      %2274 = vrot.lane.b32.xlu0 %v2012, 8
      %v2275 = vpop.permute.xlu0 %2274
      %2276 = vrot.lane.b32.xlu0 %v2015, 8
      %v2277 = vpop.permute.xlu0 %2276
      %2282 = vrot.lane.b32.xlu0 %v2139, 16
      %v2283 = vpop.permute.xlu0 %2282
      %2284 = vrot.lane.b32.xlu0 %v2142, 16
      %v2285 = vpop.permute.xlu0 %2284
      %2290 = vrot.lane.b32.xlu0 %v2266, 24
      %v2291 = vpop.permute.xlu0 %2290
      %2292 = vrot.lane.b32.xlu0 %v2269, 24
      %v2293 = vpop.permute.xlu0 %2292
      %v2296 = vsel %vm981, %v1884, %v2275
      %v2297 = vsel %vm981, %v1887, %v2277
      %v2298 = vsel %vm1518, %v2296, %v2283
      %v2299 = vsel %vm1518, %v2297, %v2285
      %v2300 = vsel %vm1521, %v2298, %v2291
      %v2301 = vsel %vm1521, %v2299, %v2293
      %v2302 = vpack.c.bf16 %v2301, %v2300
      %v2304 = vlaneseq
      %v2305 = vshrl.u32 %v2304, 7
      %v2306 = vsub.s32 0, %v2305
      %v2307 = vrot.slane %v1636, %v2306
      %v2313 = vunpack.c.l.b16 %v1632
      %v2314 = vunpack.c.l.b16 %v1633
      %v2315 = vunpack.c.l.b16 %v1634
      %v2316 = vunpack.c.l.b16 %v1635
      %v2317 = vpack.c.b16 %v2314, %v2313
      %v2318 = vpack.c.b16 %v2316, %v2315
      %v2322 = vsel %vm863, %v2302, 0
      %2324 = vmatprep.subr.bf16.mxu0 0
      %2325 = vmatpush1.bf16.msra.mxu0 0
      %2326 = vmatprep.subr.bf16.mxu0 0
      %2327 = vmatpush1.bf16.msra.mxu0 0
      %2328 = vmatprep.subr.bf16.mxu0 0
      %2329 = vmatpush1.bf16.msra.mxu0 0
      %2330 = vmatprep.subr.bf16.mxu0 0
      %2331 = vmatpush1.bf16.msra.mxu0 0
      %2332 = vmatprep.subr.bf16.mxu0 0
      %2333 = vmatpush1.bf16.msra.mxu0 0
      %2334 = vmatprep.subr.bf16.mxu0 0
      %2335 = vmatpush1.bf16.msra.mxu0 0
      %2336 = vmatprep.subr.bf16.mxu0 0
      %2337 = vmatpush1.bf16.msra.mxu0 %v2318
      %2338 = vmatprep.subr.bf16.mxu0 0
      %2339 = vmatpush1.bf16.msra.mxu0 %v2317
      %2340 = vmatprep.subr.bf16.mxu0 0
      %2341 = vmatpush2.bf16.msra.mxu0 0
      %2342 = vmatprep.subr.bf16.mxu0 0
      %2343 = vmatpush2.bf16.msra.mxu0 0
      %2344 = vmatprep.subr.bf16.mxu0 0
      %2345 = vmatpush2.bf16.msra.mxu0 0
      %2346 = vmatprep.subr.bf16.mxu0 0
      %2347 = vmatpush2.bf16.msra.mxu0 0
      %2348 = vmatprep.subr.bf16.mxu0 0
      %2349 = vmatpush2.bf16.msra.mxu0 0
      %2350 = vmatprep.subr.bf16.mxu0 0
      %2351 = vmatpush2.bf16.msra.mxu0 0
      %2352 = vmatprep.subr.bf16.mxu0 0
      %2353 = vmatpush2.bf16.msra.mxu0 0
      %2354 = vmatprep.subr.bf16.mxu0 0
      %2355 = vmatpush2.bf16.msra.mxu0 0
      %2356 = vmatprep.mubr.bf16.mxu0 0
      %2357 = vmatmul.mubr.bf16.gmra.mxu0 %v2322
      %v2358 = vpop.f32.mrf.mxu0
      %v2359 = vadd.f32 %v2307, %v2358
      %v2360 = vpop.f32.mrf.mxu0
      %v2361 = vpop.f32.mrf.mxu0
      %v2362 = vadd.f32 %v2307, %v2361
      %v2363 = vpop.f32.mrf.mxu0
      %2364 = vdwg.mxu0
      %v2365 = vadd.f32 %v1587, %v2359
      %v2366 = vadd.f32 %v1588, %v2362
      %v2367 = vsel %vm863, %v2365, 0.0
      %2368 = vadd.xlane.f32.xlu0 %v2367
      %v2369 = vpop.xlane.xlu0 %2368
      %v2370 = vsel %vm867, %v2366, 0.0
      %2371 = vadd.xlane.f32.xlu0 %v2370
      %v2372 = vpop.xlane.xlu0 %2371
      %v2373 = vmul.f32 %v2369, %v871
      %v2374 = vmul.f32 %v2372, %v871
      %v2375 = vsub.f32 %v2365, %v2373
      %v2376 = vsub.f32 %v2366, %v2374
      %v2377 = vmul.f32 %v2375, %v2375
      %v2378 = vmul.f32 %v2376, %v2376
      %v2379 = vsel %vm863, %v2377, 0.0
      %2380 = vadd.xlane.f32.xlu0 %v2379
      %v2381 = vpop.xlane.xlu0 %2380
      %v2382 = vsel %vm867, %v2378, 0.0
      %2383 = vadd.xlane.f32.xlu0 %v2382
      %v2384 = vpop.xlane.xlu0 %2383
      %v2385 = vmul.f32 %v2381, %v871
      %v2386 = vmul.f32 %v2384, %v871
      %v2387 = vadd.f32 %v2385, 1e-12
      %v2388 = vadd.f32 %v2386, 1e-12
      %v2389 = vrsqrt.pop %v2387
      %v2390 = vrsqrt.pop %v2388
      %v2391 = vmul.f32 %v2375, %v2389
      %v2392 = vmul.f32 %v2376, %v2390
      %v2393 = vlaneseq
      %v2394 = vshrl.u32 %v2393, 7
      %v2395 = vsub.s32 4, %v2394
      %v2396 = vrot.slane %v862, %v2395
      %v2397 = vmul.f32 %v2391, %v2396
      %v2398 = vmul.f32 %v2392, %v2396
      %v2399 = vlaneseq
      %v2400 = vshrl.u32 %v2399, 7
      %v2401 = vsub.s32 5, %v2400
      %v2402 = vrot.slane %v862, %v2401
      %v2403 = vadd.f32 %v2397, %v2402
      %v2404 = vadd.f32 %v2398, %v2402
      %v2405 = vld [vmem:[%s810] sm:$0xf]
      %v2406 = vld [vmem:[%s810 + $0x4] sm:$0xf]
      %v2407 = vld [vmem:[%s810 + $0x8] sm:$0xf]
      %v2408 = vld [vmem:[%s810 + $0xc] sm:$0xf]
      %v2409 = vld [vmem:[%s813] sm:$0x1]
      %v2410 = vld [vmem:[%s818] sm:$0xf]
      %v2411 = vld [vmem:[%s818 + $0x4] sm:$0xf]
      %v2412 = vld [vmem:[%s818 + $0x8] sm:$0xf]
      %v2413 = vld [vmem:[%s818 + $0xc] sm:$0xf]
      %v2414 = vld [vmem:[%s818 + $0x10] sm:$0xf]
      %v2415 = vld [vmem:[%s818 + $0x14] sm:$0xf]
      %v2416 = vld [vmem:[%s818 + $0x18] sm:$0xf]
      %v2417 = vld [vmem:[%s818 + $0x1c] sm:$0xf]
      %v2418 = vld [vmem:[%s821] sm:$0x1]
      %v2419 = vpack.c.bf16 %v2404, %v2403
      %v2421 = vlaneseq
      %v2422 = vshrl.u32 %v2421, 7
      %v2423 = vsub.s32 0, %v2422
      %v2424 = vrot.slane %v2409, %v2423
      %v2430 = vunpack.c.l.b16 %v2405
      %v2431 = vunpack.c.l.b16 %v2406
      %v2432 = vunpack.c.l.b16 %v2407
      %v2433 = vunpack.c.l.b16 %v2408
      %v2434 = vpack.c.b16 %v2431, %v2430
      %v2435 = vpack.c.b16 %v2433, %v2432
      %v2439 = vsel %vm863, %v2419, 0
      %2441 = vmatprep.subr.bf16.mxu0 0
      %2442 = vmatpush1.bf16.msra.mxu0 0
      %2443 = vmatprep.subr.bf16.mxu0 0
      %2444 = vmatpush1.bf16.msra.mxu0 0
      %2445 = vmatprep.subr.bf16.mxu0 0
      %2446 = vmatpush1.bf16.msra.mxu0 0
      %2447 = vmatprep.subr.bf16.mxu0 0
      %2448 = vmatpush1.bf16.msra.mxu0 0
      %2449 = vmatprep.subr.bf16.mxu0 0
      %2450 = vmatpush1.bf16.msra.mxu0 0
      %2451 = vmatprep.subr.bf16.mxu0 0
      %2452 = vmatpush1.bf16.msra.mxu0 0
      %2453 = vmatprep.subr.bf16.mxu0 0
      %2454 = vmatpush1.bf16.msra.mxu0 %v2435
      %2455 = vmatprep.subr.bf16.mxu0 0
      %2456 = vmatpush1.bf16.msra.mxu0 %v2434
      %2457 = vmatprep.subr.bf16.mxu0 0
      %2458 = vmatpush2.bf16.msra.mxu0 0
      %2459 = vmatprep.subr.bf16.mxu0 0
      %2460 = vmatpush2.bf16.msra.mxu0 0
      %2461 = vmatprep.subr.bf16.mxu0 0
      %2462 = vmatpush2.bf16.msra.mxu0 0
      %2463 = vmatprep.subr.bf16.mxu0 0
      %2464 = vmatpush2.bf16.msra.mxu0 0
      %2465 = vmatprep.subr.bf16.mxu0 0
      %2466 = vmatpush2.bf16.msra.mxu0 0
      %2467 = vmatprep.subr.bf16.mxu0 0
      %2468 = vmatpush2.bf16.msra.mxu0 0
      %2469 = vmatprep.subr.bf16.mxu0 0
      %2470 = vmatpush2.bf16.msra.mxu0 0
      %2471 = vmatprep.subr.bf16.mxu0 0
      %2472 = vmatpush2.bf16.msra.mxu0 0
      %2473 = vmatprep.mubr.bf16.mxu0 0
      %2474 = vmatmul.mubr.bf16.gmra.mxu0 %v2439
      %v2475 = vpop.f32.mrf.mxu0
      %v2476 = vadd.f32 %v2424, %v2475
      %v2477 = vpop.f32.mrf.mxu0
      %v2478 = vpop.f32.mrf.mxu0
      %v2479 = vadd.f32 %v2424, %v2478
      %v2480 = vpop.f32.mrf.mxu0
      %2481 = vdwg.mxu0
      %v2482 = vmax.f32 %v2476, 0.0
      %v2483 = vmax.f32 %v2479, 0.0
      %v2484 = vpack.c.bf16 %v2483, %v2482
      %v2486 = vlaneseq
      %v2487 = vshrl.u32 %v2486, 7
      %v2488 = vsub.s32 0, %v2487
      %v2489 = vrot.slane %v2418, %v2488
      %v2499 = vunpack.c.l.b16 %v2410
      %v2500 = vunpack.c.l.b16 %v2411
      %v2501 = vunpack.c.l.b16 %v2412
      %v2502 = vunpack.c.l.b16 %v2413
      %v2503 = vunpack.c.l.b16 %v2414
      %v2504 = vunpack.c.l.b16 %v2415
      %v2505 = vunpack.c.l.b16 %v2416
      %v2506 = vunpack.c.l.b16 %v2417
      %v2507 = vpack.c.b16 %v2500, %v2499
      %v2508 = vpack.c.b16 %v2502, %v2501
      %v2509 = vpack.c.b16 %v2504, %v2503
      %v2510 = vpack.c.b16 %v2506, %v2505
      %vm2515 = vcmask 523264
      %v2517 = vsel %vm2515, %v2484, 0
      %2519 = vmatprep.subr.bf16.mxu0 0
      %2520 = vmatpush1.bf16.msra.mxu0 0
      %2521 = vmatprep.subr.bf16.mxu0 0
      %2522 = vmatpush1.bf16.msra.mxu0 0
      %2523 = vmatprep.subr.bf16.mxu0 0
      %2524 = vmatpush1.bf16.msra.mxu0 0
      %2525 = vmatprep.subr.bf16.mxu0 0
      %2526 = vmatpush1.bf16.msra.mxu0 0
      %2527 = vmatprep.subr.bf16.mxu0 0
      %2528 = vmatpush1.bf16.msra.mxu0 %v2510
      %2529 = vmatprep.subr.bf16.mxu0 0
      %2530 = vmatpush1.bf16.msra.mxu0 %v2509
      %2531 = vmatprep.subr.bf16.mxu0 0
      %2532 = vmatpush1.bf16.msra.mxu0 %v2508
      %2533 = vmatprep.subr.bf16.mxu0 0
      %2534 = vmatpush1.bf16.msra.mxu0 %v2507
      %2535 = vmatprep.subr.bf16.mxu0 0
      %2536 = vmatpush2.bf16.msra.mxu0 0
      %2537 = vmatprep.subr.bf16.mxu0 0
      %2538 = vmatpush2.bf16.msra.mxu0 0
      %2539 = vmatprep.subr.bf16.mxu0 0
      %2540 = vmatpush2.bf16.msra.mxu0 0
      %2541 = vmatprep.subr.bf16.mxu0 0
      %2542 = vmatpush2.bf16.msra.mxu0 0
      %2543 = vmatprep.subr.bf16.mxu0 0
      %2544 = vmatpush2.bf16.msra.mxu0 0
      %2545 = vmatprep.subr.bf16.mxu0 0
      %2546 = vmatpush2.bf16.msra.mxu0 0
      %2547 = vmatprep.subr.bf16.mxu0 0
      %2548 = vmatpush2.bf16.msra.mxu0 0
      %2549 = vmatprep.subr.bf16.mxu0 0
      %2550 = vmatpush2.bf16.msra.mxu0 0
      %2551 = vmatprep.mubr.bf16.mxu0 0
      %2552 = vmatmul.mubr.bf16.gmra.mxu0 %v2517
      %v2553 = vpop.f32.mrf.mxu0
      %v2554 = vadd.f32 %v2489, %v2553
      %v2555 = vpop.f32.mrf.mxu0
      %v2556 = vpop.f32.mrf.mxu0
      %v2557 = vadd.f32 %v2489, %v2556
      %v2558 = vpop.f32.mrf.mxu0
      %2559 = vdwg.mxu0
      %v2560 = vadd.f32 %v2365, %v2554
      %v2561 = vadd.f32 %v2366, %v2557
      %2562 = vst.msk [vmem:[#allocation2] sm:$0xff] %vm863, %v2560
      %2563 = vst.msk [vmem:[#allocation2 + $0x8] sm:$0x7] %vm867, %v2561
      %p2564 = scmp.eq.s32.totalorder %s33, 1
      // Predicated region
      $region93: #{forward.12} parent=87 // pred_check
        %p2565 = pneg %p2564
      $region94: #{forward.12} parent=87 // pred_check_branch
        %2567 = sbr.rel (%p2565) target = $region96
      $region95: #{forward.12} parent=87 // pred_region
        %v2568 = vpack.c.bf16 %v2561, %v2560
        %v2570 = vunpack.c.l.b16 %v2568
        %v2571 = vunpack.c.h.b16 %v2568
        %v2572 = vpack.c.b16 %v2570, %v2570
        %v2573 = vpack.c.b16 %v2571, %v2571
        %vm2576 = vcmask 257024
        %2577 = vst.msk [vmem:[%s826] sm:$0xf] %vm2576, %v2572
        %vm2578 = vcmask 254976
        %vm2579 = vsmask.f32 1280
        %vm2580 = vmand %vm2578, %vm2579
        %v2581 = vld [vmem:[%s826 + $0x4] sm:$0x3]
        %v2582 = vsel %vm2580, %v2573, %v2581
        %2583 = vst [vmem:[%s826 + $0x4] sm:$0x3] %v2582
      $region96: #{forward.12} parent=87 // pred_fallthru
        _
      %p2584 = scmp.lt.s32.totalorder %s32, 1
      %s2585 = scalar_select %p2584, %s32, 1
      %s2586 = smul.addr %s2585, 2
      %s2587 = smul.addr %s2586, 4
      %s2588 = scalar_lea.vmem %s17, %s2587
      // Predicated region
      $region97: #{forward.12} parent=87 // pred_check
        %p2589 = pneg %p500
      $region98: #{forward.12} parent=87 // pred_check_branch
        %2591 = sbr.rel (%p2589) target = $region100
      $region99: #{forward.12} parent=87 // pred_region
        _
      $region100: #{forward.12} parent=87 // pred_fallthru
        _
    $region88: #{forward.12} parent=5 // pred_fallthru
      _
    %p2592 = scmp.le.s32.totalorder 2, %s23
    // Predicated region
    $region101: #{forward.12} parent=5 // pred_check
      %p2593 = pneg %p2592
    $region102: #{forward.12} parent=5 // pred_check_branch
      %2595 = sbr.rel (%p2593) target = $region104
    $region103: #{forward.12} parent=5 // pred_region
      %s2596 = ssub.s32 %s23, 2
      // Predicated region
      $region105: #{forward.12} parent=103 // pred_check
        %p2597 = pneg %p506
      $region106: #{forward.12} parent=103 // pred_check_branch
        %2599 = sbr.rel (%p2597) target = $region108
      $region107: #{forward.12} parent=103 // pred_region
        %p2600 = scmp.lt.s32.totalorder %s34, 1
        %s2601 = scalar_select %p2600, %s34, 1
        %s2602 = smul.addr %s2601, 2
        %s2603 = smul.addr %s2602, 4
        %s2604 = scalar_lea.vmem %s17, %s2603
      $region108: #{forward.12} parent=103 // pred_fallthru
        _
    $region104: #{forward.12} parent=5 // pred_fallthru
      _
  $region6: #{forward.12} parent=0 // loop_footer
    %s27 = sadd.s32 1, %s23
  $region7: #{forward.12} parent=0 // loop_footer_branch
    %22 = sbr.rel target = $region3
  $region8: #{forward.12} parent=0 // loop_exit
    _

</llo_original>
